<compile_context>
chip_gen: v7x
topology: tpu7x:2x2x1
jax: 0.10.0
libtpu: 0.0.40
codegen_flags: <defaults>
</compile_context>

<pallas_src>
import functools

import jax
import jax.numpy as jnp
from jax.experimental import pallas as pl
from jax.experimental.pallas import tpu as pltpu

LATENT_DIM = 16
FEATURE_MAPS = 8
CHANNELS = 3
BN_EPS = 1e-5
LANE_ALIGN = 256       # 256-wide MXU tile on v6e/v7x
SUBLANE_ALIGN = 8      # f32/bf16 sublane tile


def _round_up(x, m):
    return ((x + m - 1) // m) * m


# ----------------------------- Pallas kernels -----------------------------

def _convt_bn_relu_kernel(w_ref, p_ref, gamma_ref, beta_ref, o_ref, *, inv_m):
    """Fused ConvTranspose (as matmul) + BatchNorm (batch stats) + ReLU.

    w_ref:      (Cout, K)  bf16  packed, flipped ConvT weight
    p_ref:      (K, Mp)    bf16  im2col patches, zero-padded to Mp lanes
    gamma/beta: (Cout, 1)  f32
    o_ref:      (Cout, Mp) bf16  C-major activation (lane-dense)
    """
    y = jnp.dot(w_ref[...], p_ref[...],
                preferred_element_type=jnp.float32)            # (Cout, Mp) f32
    # Padded lanes are exact zeros -> they do not perturb the sums; divide by
    # the true element count M = N*Ho*Wo.  (inv_m is baked in per shape; any
    # new batch/spatial extent recompiles anyway because shapes are static.)
    mean = jnp.sum(y, axis=1, keepdims=True) * inv_m           # (Cout, 1)
    var = jnp.sum(y * y, axis=1, keepdims=True) * inv_m - mean * mean
    var = jnp.maximum(var, 0.0)                                # guard cancellation
    scale = gamma_ref[...] * jax.lax.rsqrt(var + BN_EPS)       # (Cout, 1)
    shift = beta_ref[...] - mean * scale
    o_ref[...] = jnp.maximum(y * scale + shift, 0.0).astype(o_ref.dtype)


def _convt_tanh_kernel(w_ref, p_ref, o_ref):
    """Fused final ConvTranspose (as matmul) + tanh epilogue (EUP slot)."""
    o_ref[...] = jnp.tanh(jnp.dot(w_ref[...], p_ref[...],
                                  preferred_element_type=jnp.float32))


# --------------------------- pallas_call wrappers ---------------------------

def fused_convt_bn_relu(wT, pT, gamma, beta, m_total):
    """wT: (Cout,K) bf16, pT: (K,Mp) bf16, gamma/beta: (Cout,1) f32 -> bf16."""
    Cout, K = wT.shape
    Mp = pT.shape[1]
    kern = functools.partial(_convt_bn_relu_kernel, inv_m=1.0 / float(m_total))
    return pl.pallas_call(
        kern,
        out_shape=jax.ShapeDtypeStruct((Cout, Mp), jnp.bfloat16),
        grid=(1,),
        in_specs=[pl.BlockSpec((Cout, K), lambda i: (0, 0)),
                  pl.BlockSpec((K, Mp), lambda i: (0, 0)),
                  pl.BlockSpec((Cout, 1), lambda i: (0, 0)),
                  pl.BlockSpec((Cout, 1), lambda i: (0, 0))],
        out_specs=pl.BlockSpec((Cout, Mp), lambda i: (0, 0)),
        compiler_params=pltpu.CompilerParams(
            dimension_semantics=("arbitrary",),
            # Fold the XLA-side patch building into this operand (no extra
            # HBM materialization of pT).
            allow_input_fusion=[False, True, False, False]),
    )(wT, pT, gamma, beta)


def fused_convt_tanh(wT, pT):
    """wT: (Cout_pad,K) bf16, pT: (K,Mp) bf16 -> (Cout_pad,Mp) f32 output."""
    Cout, K = wT.shape
    Mp = pT.shape[1]
    # Single grid step: a 2-way lane split is pure overhead on 1-TC v5e/v6e and
    # the layer is latency-bound at this size even on v7x.
    return pl.pallas_call(
        _convt_tanh_kernel,
        out_shape=jax.ShapeDtypeStruct((Cout, Mp), jnp.float32),
        grid=(1,),
        in_specs=[pl.BlockSpec((Cout, K), lambda i: (0, 0)),
                  pl.BlockSpec((K, Mp), lambda i: (0, 0))],
        out_specs=pl.BlockSpec((Cout, Mp), lambda i: (0, 0)),
        compiler_params=pltpu.CompilerParams(
            dimension_semantics=("arbitrary",),
            allow_input_fusion=[False, True]),
    )(wT, pT)


# ------------------------------- JAX glue ----------------------------------

def convt_patches_T(x_cnhw, kh, kw, stride, pad):
    """C-major im2col for ConvTranspose2d.

    x_cnhw: (Cin, N, H, W) bf16.  Returns patchesT of shape
    (Cin*kh*kw, N*Ho*Wo) built from the zero-dilated, edge-padded input, plus
    (N, Ho, Wo).  Stays in XLA; `allow_input_fusion` folds it into the pallas
    operand.
    """
    Cin, N, H, W = x_cnhw.shape
    ph, pw = kh - 1 - pad, kw - 1 - pad
    Hp = (H - 1) * stride + 1 + 2 * ph
    Wp = (W - 1) * stride + 1 + 2 * pw
    padded = jnp.zeros((Cin, N, Hp, Wp), x_cnhw.dtype)
    padded = padded.at[:, :, ph:ph + (H - 1) * stride + 1:stride,
                             pw:pw + (W - 1) * stride + 1:stride].set(x_cnhw)
    Ho, Wo = Hp - kh + 1, Wp - kw + 1
    slices = [padded[:, :, i:i + Ho, j:j + Wo]
              for i in range(kh) for j in range(kw)]
    patches = jnp.stack(slices, axis=1)          # (Cin, kh*kw, N, Ho, Wo)
    return patches.reshape(Cin * kh * kw, N * Ho * Wo), (N, Ho, Wo)


def layer_convt_bn_relu(x, wT, gamma, beta, kh, kw, stride, pad):
    pT, (N, Ho, Wo) = convt_patches_T(x, kh, kw, stride, pad)
    K, M = pT.shape
    Mp = _round_up(M, LANE_ALIGN)
    if Mp != M:                                  # zero pad -> no effect on stats
        pT = jnp.pad(pT, ((0, 0), (0, Mp - M)))
    Cout = wT.shape[0]
    yT = fused_convt_bn_relu(wT, pT, gamma, beta, M)          # (Cout, Mp) bf16
    return yT[:, :M].reshape(Cout, N, Ho, Wo)


def layer_convt_tanh(x, wT, kh, kw, stride, pad, out_channels):
    pT, (N, Ho, Wo) = convt_patches_T(x, kh, kw, stride, pad)
    K, M = pT.shape
    Mp = _round_up(M, LANE_ALIGN)
    if Mp != M:
        pT = jnp.pad(pT, ((0, 0), (0, Mp - M)))
    yT = fused_convt_tanh(wT, pT)                              # (Cout_pad, Mp) f32
    return yT[:out_channels, :M].reshape(out_channels, N, Ho, Wo)


def generator_forward(z, pp):
    """z: (N, LATENT_DIM), pp: packed params.  Returns (N, 3, 48, 64) f32,
    matching the PyTorch module (training-mode BatchNorm, biased variance)."""
    # C-major activation layout (C, N, H, W); bf16 end-to-end between layers.
    x = jnp.transpose(z).astype(jnp.bfloat16)[:, :, None, None]   # (latent,N,1,1)
    x = layer_convt_bn_relu(x, pp['wt1'], pp['g1'], pp['b1'], 3, 4, 1, 0)
    x = layer_convt_bn_relu(x, pp['wt2'], pp['g2'], pp['b2'], 4, 4, 2, 1)
    x = layer_convt_bn_relu(x, pp['wt3'], pp['g3'], pp['b3'], 4, 4, 2, 1)
    x = layer_convt_bn_relu(x, pp['wt4'], pp['g4'], pp['b4'], 4, 4, 2, 1)
    x = layer_convt_tanh(x, pp['wt5'], 4, 4, 2, 1, CHANNELS)      # (3, N, 48, 64)
    return jnp.transpose(x, (1, 0, 2, 3))                         # NCHW f32


# -------------------------- parameter handling ------------------------------

def init_params(key):
    """Deterministic init matching _init_weights: conv ~ N(0, 0.02),
    BN gamma ~ N(1, 0.02), BN beta = 0."""
    fm = FEATURE_MAPS
    ks = jax.random.split(key, 9)

    def conv_w(k, cin, cout, kh, kw):
        return 0.02 * jax.random.normal(k, (cin, cout, kh, kw), jnp.float32)

    def bn(k, c):
        g = 1.0 + 0.02 * jax.random.normal(k, (c,), jnp.float32)
        return g, jnp.zeros((c,), jnp.float32)

    p = {}
    p['w1'] = conv_w(ks[0], LATENT_DIM, fm * 8, 3, 4)
    p['g1'], p['b1'] = bn(ks[1], fm * 8)
    p['w2'] = conv_w(ks[2], fm * 8, fm * 4, 4, 4)
    p['g2'], p['b2'] = bn(ks[3], fm * 4)
    p['w3'] = conv_w(ks[4], fm * 4, fm * 2, 4, 4)
    p['g3'], p['b3'] = bn(ks[5], fm * 2)
    p['w4'] = conv_w(ks[6], fm * 2, fm, 4, 4)
    p['g4'], p['b4'] = bn(ks[7], fm)
    p['w5'] = conv_w(ks[8], fm, CHANNELS, 4, 4)
    return p


def pack_params(params):
    """One-time packing, hoisted out of the forward path:
    ConvT weight (Cin,Cout,kh,kw) -> spatially flipped, transposed, flattened
    (Cout, Cin*kh*kw) bf16; layer-5 Cout padded 3 -> 8 (full-sublane stores);
    BN gamma/beta reshaped to (C, 1) f32."""
    def pack_w(w, pad_cout_to=None):
        Cin, Cout, kh, kw = w.shape
        wf = jnp.transpose(w[:, :, ::-1, ::-1], (1, 0, 2, 3))   # (Cout,Cin,kh,kw)
        wf = wf.reshape(Cout, Cin * kh * kw).astype(jnp.bfloat16)
        if pad_cout_to is not None and pad_cout_to > Cout:
            wf = jnp.pad(wf, ((0, pad_cout_to - Cout), (0, 0)))
        return wf

    pp = {}
    pp['wt1'] = pack_w(params['w1'])
    pp['wt2'] = pack_w(params['w2'])
    pp['wt3'] = pack_w(params['w3'])
    pp['wt4'] = pack_w(params['w4'])
    pp['wt5'] = pack_w(params['w5'], pad_cout_to=SUBLANE_ALIGN)
    for i in range(1, 5):
        pp[f'g{i}'] = params[f'g{i}'].reshape(-1, 1).astype(jnp.float32)
        pp[f'b{i}'] = params[f'b{i}'].reshape(-1, 1).astype(jnp.float32)
    return pp


# ------------------------- f32 XLA reference model --------------------------

def reference_forward(z, params):
    """Pure-XLA f32 reference with PyTorch ConvTranspose2d/BatchNorm semantics."""
    def convt(x, w, s, p):
        kh, kw = w.shape[2], w.shape[3]
        rhs = jnp.transpose(w[:, :, ::-1, ::-1], (1, 0, 2, 3))   # OIHW
        return jax.lax.conv_general_dilated(
            x, rhs, window_strides=(1, 1),
            padding=[(kh - 1 - p, kh - 1 - p), (kw - 1 - p, kw - 1 - p)],
            lhs_dilation=(s, s),
            dimension_numbers=('NCHW', 'OIHW', 'NCHW'))

    def bn_relu(x, g, b):
        mean = jnp.mean(x, axis=(0, 2, 3), keepdims=True)
        var = jnp.mean((x - mean) ** 2, axis=(0, 2, 3), keepdims=True)
        xn = (x - mean) * jax.lax.rsqrt(var + BN_EPS)
        return jnp.maximum(xn * g.reshape(1, -1, 1, 1) + b.reshape(1, -1, 1, 1), 0.0)

    x = z.reshape(z.shape[0], z.shape[1], 1, 1)
    x = bn_relu(convt(x, params['w1'], 1, 0), params['g1'], params['b1'])
    x = bn_relu(convt(x, params['w2'], 2, 1), params['g2'], params['b2'])
    x = bn_relu(convt(x, params['w3'], 2, 1), params['g3'], params['b3'])
    x = bn_relu(convt(x, params['w4'], 2, 1), params['g4'], params['b4'])
    return jnp.tanh(convt(x, params['w5'], 2, 1))


# ---------------------------------- main ------------------------------------

if __name__ == "__main__":
    key = jax.random.PRNGKey(0)
    kz, kp = jax.random.split(key)
    params = init_params(kp)
    packed = pack_params(params)       # one-time weight packing (not per forward)

    batch = 2
    z = jax.random.normal(kz, (batch, LATENT_DIM), jnp.float32)

    fwd = jax.jit(generator_forward)
    out = fwd(z, packed)
    jax.block_until_ready(out)

    expected = (batch, CHANNELS, 48, 64)
    assert out.shape == expected, (out.shape, expected)
    assert bool(jnp.all(jnp.isfinite(out)))
    assert bool(jnp.all(jnp.abs(out) <= 1.0 + 1e-6))       # tanh range

    # Compare against the f32 XLA reference; bf16 weights/activations on the
    # MXU path give ~1e-2-level deviation at DCGAN init scales.
    ref = jax.jit(reference_forward)(z, params)
    jax.block_until_ready(ref)
    max_err = float(jnp.max(jnp.abs(out - ref)))
    assert max_err < 5e-2, f"max abs err vs f32 reference: {max_err}"

    print("KERNEL_OK")
</pallas_src>

<mosaic_0001>
module attributes {stable_mosaic.version = 11 : i64} {
  func.func @_convt_bn_relu_kernel(%arg0: i32, %arg1: memref<64x192xbf16, #tpu.memory_space<vmem>>, %arg2: memref<192x256xbf16, #tpu.memory_space<vmem>>, %arg3: memref<64x1xf32, #tpu.memory_space<vmem>>, %arg4: memref<64x1xf32, #tpu.memory_space<vmem>>, %arg5: memref<64x256xbf16, #tpu.memory_space<vmem>>) attributes {dimension_semantics = [#tpu.dimension_semantics<arbitrary>], iteration_bounds = array<i64: 1>, scalar_prefetch = 0 : i64, scratch_operands = 0 : i64, tpu.core_type = #tpu.core_type<tc>, window_params = [{pipeline_mode = #tpu.pipeline_mode<synchronous>, transform_indices = @transform_0, window_bounds = array<i64: 64, 192>}, {pipeline_mode = #tpu.pipeline_mode<synchronous>, transform_indices = @transform_1, window_bounds = array<i64: 192, 256>}, {pipeline_mode = #tpu.pipeline_mode<synchronous>, transform_indices = @transform_2, window_bounds = array<i64: 64, 1>}, {pipeline_mode = #tpu.pipeline_mode<synchronous>, transform_indices = @transform_3, window_bounds = array<i64: 64, 1>}, {pipeline_mode = #tpu.pipeline_mode<synchronous>, transform_indices = @transform_4, window_bounds = array<i64: 64, 256>}]} {
    %c0 = arith.constant 0 : index
    %c0_0 = arith.constant 0 : index
    %0 = vector.load %arg1[%c0, %c0_0] : memref<64x192xbf16, #tpu.memory_space<vmem>>, vector<64x192xbf16>
    %c0_1 = arith.constant 0 : index
    %c0_2 = arith.constant 0 : index
    %1 = vector.load %arg2[%c0_1, %c0_2] : memref<192x256xbf16, #tpu.memory_space<vmem>>, vector<192x256xbf16>
    %cst = arith.constant dense<0.000000e+00> : vector<64x256xf32>
    %2 = tpu.matmul %0, %1, %cst {dimension_numbers = #tpu.dot_dimension_numbers<[1], [0], [0], [1], [0, 0, 1, 1], [], []>} : vector<64x192xbf16>, vector<192x256xbf16>, vector<64x256xf32> -> vector<64x256xf32>
    %cst_3 = arith.constant dense<0.000000e+00> : vector<64xf32>
    %3 = vector.multi_reduction <add>, %2, %cst_3 [1] : vector<64x256xf32> to vector<64xf32>
    %4 = vector.shape_cast %3 : vector<64xf32> to vector<64x1xf32>
    %cst_4 = arith.constant 0.0416666679 : f32
    %5 = vector.broadcast %cst_4 : f32 to vector<64x1xf32>
    %6 = arith.mulf %4, %5 : vector<64x1xf32>
    %7 = arith.mulf %2, %2 : vector<64x256xf32>
    %cst_5 = arith.constant dense<0.000000e+00> : vector<64xf32>
    %8 = vector.multi_reduction <add>, %7, %cst_5 [1] : vector<64x256xf32> to vector<64xf32>
    %9 = vector.shape_cast %8 : vector<64xf32> to vector<64x1xf32>
    %cst_6 = arith.constant 0.0416666679 : f32
    %10 = vector.broadcast %cst_6 : f32 to vector<64x1xf32>
    %11 = arith.mulf %9, %10 : vector<64x1xf32>
    %12 = arith.mulf %6, %6 : vector<64x1xf32>
    %13 = arith.subf %11, %12 : vector<64x1xf32>
    %cst_7 = arith.constant 0.000000e+00 : f32
    %14 = vector.broadcast %cst_7 : f32 to vector<64x1xf32>
    %15 = arith.maximumf %13, %14 : vector<64x1xf32>
    %c0_8 = arith.constant 0 : index
    %c0_9 = arith.constant 0 : index
    %16 = vector.load %arg3[%c0_8, %c0_9] : memref<64x1xf32, #tpu.memory_space<vmem>>, vector<64x1xf32>
    %cst_10 = arith.constant 9.99999974E-6 : f32
    %17 = vector.broadcast %cst_10 : f32 to vector<64x1xf32>
    %18 = arith.addf %15, %17 : vector<64x1xf32>
    %19 = math.rsqrt %18 : vector<64x1xf32>
    %20 = arith.mulf %16, %19 : vector<64x1xf32>
    %c0_11 = arith.constant 0 : index
    %c0_12 = arith.constant 0 : index
    %21 = vector.load %arg4[%c0_11, %c0_12] : memref<64x1xf32, #tpu.memory_space<vmem>>, vector<64x1xf32>
    %22 = arith.mulf %6, %20 : vector<64x1xf32>
    %23 = arith.subf %21, %22 : vector<64x1xf32>
    %24 = vector.broadcast %20 : vector<64x1xf32> to vector<64x256xf32>
    %25 = arith.mulf %2, %24 : vector<64x256xf32>
    %26 = vector.broadcast %23 : vector<64x1xf32> to vector<64x256xf32>
    %27 = arith.addf %25, %26 : vector<64x256xf32>
    %cst_13 = arith.constant 0.000000e+00 : f32
    %28 = vector.broadcast %cst_13 : f32 to vector<64x256xf32>
    %29 = arith.maximumf %27, %28 : vector<64x256xf32>
    %30 = arith.truncf %29 : vector<64x256xf32> to vector<64x256xbf16>
    %c0_14 = arith.constant 0 : index
    %c0_15 = arith.constant 0 : index
    %31 = vector.load %arg5[%c0_14, %c0_15] : memref<64x256xbf16, #tpu.memory_space<vmem>>, vector<64x256xbf16>
    tpu.vector_store %arg5[%c0_14, %c0_15], %30 {strides = array<i32>} : memref<64x256xbf16, #tpu.memory_space<vmem>>, vector<64x256xbf16>,
    return
  }
  func.func @transform_0(%arg0: i32) -> (i32, i32) {
    %c0_i32 = arith.constant 0 : i32
    %c0_i32_0 = arith.constant 0 : i32
    %c0_i32_1 = arith.constant 0 : i32
    return %c0_i32, %c0_i32_0 : i32, i32
  }
  func.func @transform_1(%arg0: i32) -> (i32, i32) {
    %c0_i32 = arith.constant 0 : i32
    %c0_i32_0 = arith.constant 0 : i32
    %c0_i32_1 = arith.constant 0 : i32
    return %c0_i32, %c0_i32_0 : i32, i32
  }
  func.func @transform_2(%arg0: i32) -> (i32, i32) {
    %c0_i32 = arith.constant 0 : i32
    %c0_i32_0 = arith.constant 0 : i32
    %c0_i32_1 = arith.constant 0 : i32
    return %c0_i32, %c0_i32_0 : i32, i32
  }
  func.func @transform_3(%arg0: i32) -> (i32, i32) {
    %c0_i32 = arith.constant 0 : i32
    %c0_i32_0 = arith.constant 0 : i32
    %c0_i32_1 = arith.constant 0 : i32
    return %c0_i32, %c0_i32_0 : i32, i32
  }
  func.func @transform_4(%arg0: i32) -> (i32, i32) {
    %c0_i32 = arith.constant 0 : i32
    %c0_i32_0 = arith.constant 0 : i32
    %c0_i32_1 = arith.constant 0 : i32
    return %c0_i32, %c0_i32_0 : i32, i32
  }
}

module attributes {stable_mosaic.version = 11 : i64} {
  func.func @_convt_bn_relu_kernel(%arg0: i32, %arg1: memref<32x1024xbf16, #tpu.memory_space<vmem>>, %arg2: memref<1024x256xbf16, #tpu.memory_space<vmem>>, %arg3: memref<32x1xf32, #tpu.memory_space<vmem>>, %arg4: memref<32x1xf32, #tpu.memory_space<vmem>>, %arg5: memref<32x256xbf16, #tpu.memory_space<vmem>>) attributes {dimension_semantics = [#tpu.dimension_semantics<arbitrary>], iteration_bounds = array<i64: 1>, scalar_prefetch = 0 : i64, scratch_operands = 0 : i64, tpu.core_type = #tpu.core_type<tc>, window_params = [{pipeline_mode = #tpu.pipeline_mode<synchronous>, transform_indices = @transform_0, window_bounds = array<i64: 32, 1024>}, {pipeline_mode = #tpu.pipeline_mode<synchronous>, transform_indices = @transform_1, window_bounds = array<i64: 1024, 256>}, {pipeline_mode = #tpu.pipeline_mode<synchronous>, transform_indices = @transform_2, window_bounds = array<i64: 32, 1>}, {pipeline_mode = #tpu.pipeline_mode<synchronous>, transform_indices = @transform_3, window_bounds = array<i64: 32, 1>}, {pipeline_mode = #tpu.pipeline_mode<synchronous>, transform_indices = @transform_4, window_bounds = array<i64: 32, 256>}]} {
    %c0 = arith.constant 0 : index
    %c0_0 = arith.constant 0 : index
    %0 = vector.load %arg1[%c0, %c0_0] : memref<32x1024xbf16, #tpu.memory_space<vmem>>, vector<32x1024xbf16>
    %c0_1 = arith.constant 0 : index
    %c0_2 = arith.constant 0 : index
    %1 = vector.load %arg2[%c0_1, %c0_2] : memref<1024x256xbf16, #tpu.memory_space<vmem>>, vector<1024x256xbf16>
    %cst = arith.constant dense<0.000000e+00> : vector<32x256xf32>
    %2 = tpu.matmul %0, %1, %cst {dimension_numbers = #tpu.dot_dimension_numbers<[1], [0], [0], [1], [0, 0, 1, 1], [], []>} : vector<32x1024xbf16>, vector<1024x256xbf16>, vector<32x256xf32> -> vector<32x256xf32>
    %cst_3 = arith.constant dense<0.000000e+00> : vector<32xf32>
    %3 = vector.multi_reduction <add>, %2, %cst_3 [1] : vector<32x256xf32> to vector<32xf32>
    %4 = vector.shape_cast %3 : vector<32xf32> to vector<32x1xf32>
    %cst_4 = arith.constant 0.010416667 : f32
    %5 = vector.broadcast %cst_4 : f32 to vector<32x1xf32>
    %6 = arith.mulf %4, %5 : vector<32x1xf32>
    %7 = arith.mulf %2, %2 : vector<32x256xf32>
    %cst_5 = arith.constant dense<0.000000e+00> : vector<32xf32>
    %8 = vector.multi_reduction <add>, %7, %cst_5 [1] : vector<32x256xf32> to vector<32xf32>
    %9 = vector.shape_cast %8 : vector<32xf32> to vector<32x1xf32>
    %cst_6 = arith.constant 0.010416667 : f32
    %10 = vector.broadcast %cst_6 : f32 to vector<32x1xf32>
    %11 = arith.mulf %9, %10 : vector<32x1xf32>
    %12 = arith.mulf %6, %6 : vector<32x1xf32>
    %13 = arith.subf %11, %12 : vector<32x1xf32>
    %cst_7 = arith.constant 0.000000e+00 : f32
    %14 = vector.broadcast %cst_7 : f32 to vector<32x1xf32>
    %15 = arith.maximumf %13, %14 : vector<32x1xf32>
    %c0_8 = arith.constant 0 : index
    %c0_9 = arith.constant 0 : index
    %16 = vector.load %arg3[%c0_8, %c0_9] : memref<32x1xf32, #tpu.memory_space<vmem>>, vector<32x1xf32>
    %cst_10 = arith.constant 9.99999974E-6 : f32
    %17 = vector.broadcast %cst_10 : f32 to vector<32x1xf32>
    %18 = arith.addf %15, %17 : vector<32x1xf32>
    %19 = math.rsqrt %18 : vector<32x1xf32>
    %20 = arith.mulf %16, %19 : vector<32x1xf32>
    %c0_11 = arith.constant 0 : index
    %c0_12 = arith.constant 0 : index
    %21 = vector.load %arg4[%c0_11, %c0_12] : memref<32x1xf32, #tpu.memory_space<vmem>>, vector<32x1xf32>
    %22 = arith.mulf %6, %20 : vector<32x1xf32>
    %23 = arith.subf %21, %22 : vector<32x1xf32>
    %24 = vector.broadcast %20 : vector<32x1xf32> to vector<32x256xf32>
    %25 = arith.mulf %2, %24 : vector<32x256xf32>
    %26 = vector.broadcast %23 : vector<32x1xf32> to vector<32x256xf32>
    %27 = arith.addf %25, %26 : vector<32x256xf32>
    %cst_13 = arith.constant 0.000000e+00 : f32
    %28 = vector.broadcast %cst_13 : f32 to vector<32x256xf32>
    %29 = arith.maximumf %27, %28 : vector<32x256xf32>
    %30 = arith.truncf %29 : vector<32x256xf32> to vector<32x256xbf16>
    %c0_14 = arith.constant 0 : index
    %c0_15 = arith.constant 0 : index
    %31 = vector.load %arg5[%c0_14, %c0_15] : memref<32x256xbf16, #tpu.memory_space<vmem>>, vector<32x256xbf16>
    tpu.vector_store %arg5[%c0_14, %c0_15], %30 {strides = array<i32>} : memref<32x256xbf16, #tpu.memory_space<vmem>>, vector<32x256xbf16>,
    return
  }
  func.func @transform_0(%arg0: i32) -> (i32, i32) {
    %c0_i32 = arith.constant 0 : i32
    %c0_i32_0 = arith.constant 0 : i32
    %c0_i32_1 = arith.constant 0 : i32
    return %c0_i32, %c0_i32_0 : i32, i32
  }
  func.func @transform_1(%arg0: i32) -> (i32, i32) {
    %c0_i32 = arith.constant 0 : i32
    %c0_i32_0 = arith.constant 0 : i32
    %c0_i32_1 = arith.constant 0 : i32
    return %c0_i32, %c0_i32_0 : i32, i32
  }
  func.func @transform_2(%arg0: i32) -> (i32, i32) {
    %c0_i32 = arith.constant 0 : i32
    %c0_i32_0 = arith.constant 0 : i32
    %c0_i32_1 = arith.constant 0 : i32
    return %c0_i32, %c0_i32_0 : i32, i32
  }
  func.func @transform_3(%arg0: i32) -> (i32, i32) {
    %c0_i32 = arith.constant 0 : i32
    %c0_i32_0 = arith.constant 0 : i32
    %c0_i32_1 = arith.constant 0 : i32
    return %c0_i32, %c0_i32_0 : i32, i32
  }
  func.func @transform_4(%arg0: i32) -> (i32, i32) {
    %c0_i32 = arith.constant 0 : i32
    %c0_i32_0 = arith.constant 0 : i32
    %c0_i32_1 = arith.constant 0 : i32
    return %c0_i32, %c0_i32_0 : i32, i32
  }
}

module attributes {stable_mosaic.version = 11 : i64} {
  func.func @_convt_bn_relu_kernel(%arg0: i32, %arg1: memref<16x512xbf16, #tpu.memory_space<vmem>>, %arg2: memref<512x512xbf16, #tpu.memory_space<vmem>>, %arg3: memref<16x1xf32, #tpu.memory_space<vmem>>, %arg4: memref<16x1xf32, #tpu.memory_space<vmem>>, %arg5: memref<16x512xbf16, #tpu.memory_space<vmem>>) attributes {dimension_semantics = [#tpu.dimension_semantics<arbitrary>], iteration_bounds = array<i64: 1>, scalar_prefetch = 0 : i64, scratch_operands = 0 : i64, tpu.core_type = #tpu.core_type<tc>, window_params = [{pipeline_mode = #tpu.pipeline_mode<synchronous>, transform_indices = @transform_0, window_bounds = array<i64: 16, 512>}, {pipeline_mode = #tpu.pipeline_mode<synchronous>, transform_indices = @transform_1, window_bounds = array<i64: 512, 512>}, {pipeline_mode = #tpu.pipeline_mode<synchronous>, transform_indices = @transform_2, window_bounds = array<i64: 16, 1>}, {pipeline_mode = #tpu.pipeline_mode<synchronous>, transform_indices = @transform_3, window_bounds = array<i64: 16, 1>}, {pipeline_mode = #tpu.pipeline_mode<synchronous>, transform_indices = @transform_4, window_bounds = array<i64: 16, 512>}]} {
    %c0 = arith.constant 0 : index
    %c0_0 = arith.constant 0 : index
    %0 = vector.load %arg1[%c0, %c0_0] : memref<16x512xbf16, #tpu.memory_space<vmem>>, vector<16x512xbf16>
    %c0_1 = arith.constant 0 : index
    %c0_2 = arith.constant 0 : index
    %1 = vector.load %arg2[%c0_1, %c0_2] : memref<512x512xbf16, #tpu.memory_space<vmem>>, vector<512x512xbf16>
    %cst = arith.constant dense<0.000000e+00> : vector<16x512xf32>
    %2 = tpu.matmul %0, %1, %cst {dimension_numbers = #tpu.dot_dimension_numbers<[1], [0], [0], [1], [0, 0, 1, 1], [], []>} : vector<16x512xbf16>, vector<512x512xbf16>, vector<16x512xf32> -> vector<16x512xf32>
    %cst_3 = arith.constant dense<0.000000e+00> : vector<16xf32>
    %3 = vector.multi_reduction <add>, %2, %cst_3 [1] : vector<16x512xf32> to vector<16xf32>
    %4 = vector.shape_cast %3 : vector<16xf32> to vector<16x1xf32>
    %cst_4 = arith.constant 0.00260416674 : f32
    %5 = vector.broadcast %cst_4 : f32 to vector<16x1xf32>
    %6 = arith.mulf %4, %5 : vector<16x1xf32>
    %7 = arith.mulf %2, %2 : vector<16x512xf32>
    %cst_5 = arith.constant dense<0.000000e+00> : vector<16xf32>
    %8 = vector.multi_reduction <add>, %7, %cst_5 [1] : vector<16x512xf32> to vector<16xf32>
    %9 = vector.shape_cast %8 : vector<16xf32> to vector<16x1xf32>
    %cst_6 = arith.constant 0.00260416674 : f32
    %10 = vector.broadcast %cst_6 : f32 to vector<16x1xf32>
    %11 = arith.mulf %9, %10 : vector<16x1xf32>
    %12 = arith.mulf %6, %6 : vector<16x1xf32>
    %13 = arith.subf %11, %12 : vector<16x1xf32>
    %cst_7 = arith.constant 0.000000e+00 : f32
    %14 = vector.broadcast %cst_7 : f32 to vector<16x1xf32>
    %15 = arith.maximumf %13, %14 : vector<16x1xf32>
    %c0_8 = arith.constant 0 : index
    %c0_9 = arith.constant 0 : index
    %16 = vector.load %arg3[%c0_8, %c0_9] : memref<16x1xf32, #tpu.memory_space<vmem>>, vector<16x1xf32>
    %cst_10 = arith.constant 9.99999974E-6 : f32
    %17 = vector.broadcast %cst_10 : f32 to vector<16x1xf32>
    %18 = arith.addf %15, %17 : vector<16x1xf32>
    %19 = math.rsqrt %18 : vector<16x1xf32>
    %20 = arith.mulf %16, %19 : vector<16x1xf32>
    %c0_11 = arith.constant 0 : index
    %c0_12 = arith.constant 0 : index
    %21 = vector.load %arg4[%c0_11, %c0_12] : memref<16x1xf32, #tpu.memory_space<vmem>>, vector<16x1xf32>
    %22 = arith.mulf %6, %20 : vector<16x1xf32>
    %23 = arith.subf %21, %22 : vector<16x1xf32>
    %24 = vector.broadcast %20 : vector<16x1xf32> to vector<16x512xf32>
    %25 = arith.mulf %2, %24 : vector<16x512xf32>
    %26 = vector.broadcast %23 : vector<16x1xf32> to vector<16x512xf32>
    %27 = arith.addf %25, %26 : vector<16x512xf32>
    %cst_13 = arith.constant 0.000000e+00 : f32
    %28 = vector.broadcast %cst_13 : f32 to vector<16x512xf32>
    %29 = arith.maximumf %27, %28 : vector<16x512xf32>
    %30 = arith.truncf %29 : vector<16x512xf32> to vector<16x512xbf16>
    %c0_14 = arith.constant 0 : index
    %c0_15 = arith.constant 0 : index
    %31 = vector.load %arg5[%c0_14, %c0_15] : memref<16x512xbf16, #tpu.memory_space<vmem>>, vector<16x512xbf16>
    tpu.vector_store %arg5[%c0_14, %c0_15], %30 {strides = array<i32>} : memref<16x512xbf16, #tpu.memory_space<vmem>>, vector<16x512xbf16>,
    return
  }
  func.func @transform_0(%arg0: i32) -> (i32, i32) {
    %c0_i32 = arith.constant 0 : i32
    %c0_i32_0 = arith.constant 0 : i32
    %c0_i32_1 = arith.constant 0 : i32
    return %c0_i32, %c0_i32_0 : i32, i32
  }
  func.func @transform_1(%arg0: i32) -> (i32, i32) {
    %c0_i32 = arith.constant 0 : i32
    %c0_i32_0 = arith.constant 0 : i32
    %c0_i32_1 = arith.constant 0 : i32
    return %c0_i32, %c0_i32_0 : i32, i32
  }
  func.func @transform_2(%arg0: i32) -> (i32, i32) {
    %c0_i32 = arith.constant 0 : i32
    %c0_i32_0 = arith.constant 0 : i32
    %c0_i32_1 = arith.constant 0 : i32
    return %c0_i32, %c0_i32_0 : i32, i32
  }
  func.func @transform_3(%arg0: i32) -> (i32, i32) {
    %c0_i32 = arith.constant 0 : i32
    %c0_i32_0 = arith.constant 0 : i32
    %c0_i32_1 = arith.constant 0 : i32
    return %c0_i32, %c0_i32_0 : i32, i32
  }
  func.func @transform_4(%arg0: i32) -> (i32, i32) {
    %c0_i32 = arith.constant 0 : i32
    %c0_i32_0 = arith.constant 0 : i32
    %c0_i32_1 = arith.constant 0 : i32
    return %c0_i32, %c0_i32_0 : i32, i32
  }
}

module attributes {stable_mosaic.version = 11 : i64} {
  func.func @_convt_bn_relu_kernel(%arg0: i32, %arg1: memref<8x256xbf16, #tpu.memory_space<vmem>>, %arg2: memref<256x1536xbf16, #tpu.memory_space<vmem>>, %arg3: memref<8x1xf32, #tpu.memory_space<vmem>>, %arg4: memref<8x1xf32, #tpu.memory_space<vmem>>, %arg5: memref<8x1536xbf16, #tpu.memory_space<vmem>>) attributes {dimension_semantics = [#tpu.dimension_semantics<arbitrary>], iteration_bounds = array<i64: 1>, scalar_prefetch = 0 : i64, scratch_operands = 0 : i64, tpu.core_type = #tpu.core_type<tc>, window_params = [{pipeline_mode = #tpu.pipeline_mode<synchronous>, transform_indices = @transform_0, window_bounds = array<i64: 8, 256>}, {pipeline_mode = #tpu.pipeline_mode<synchronous>, transform_indices = @transform_1, window_bounds = array<i64: 256, 1536>}, {pipeline_mode = #tpu.pipeline_mode<synchronous>, transform_indices = @transform_2, window_bounds = array<i64: 8, 1>}, {pipeline_mode = #tpu.pipeline_mode<synchronous>, transform_indices = @transform_3, window_bounds = array<i64: 8, 1>}, {pipeline_mode = #tpu.pipeline_mode<synchronous>, transform_indices = @transform_4, window_bounds = array<i64: 8, 1536>}]} {
    %c0 = arith.constant 0 : index
    %c0_0 = arith.constant 0 : index
    %0 = vector.load %arg1[%c0, %c0_0] : memref<8x256xbf16, #tpu.memory_space<vmem>>, vector<8x256xbf16>
    %c0_1 = arith.constant 0 : index
    %c0_2 = arith.constant 0 : index
    %1 = vector.load %arg2[%c0_1, %c0_2] : memref<256x1536xbf16, #tpu.memory_space<vmem>>, vector<256x1536xbf16>
    %cst = arith.constant dense<0.000000e+00> : vector<8x1536xf32>
    %2 = tpu.matmul %0, %1, %cst {dimension_numbers = #tpu.dot_dimension_numbers<[1], [0], [0], [1], [0, 0, 1, 1], [], []>} : vector<8x256xbf16>, vector<256x1536xbf16>, vector<8x1536xf32> -> vector<8x1536xf32>
    %cst_3 = arith.constant dense<0.000000e+00> : vector<8xf32>
    %3 = vector.multi_reduction <add>, %2, %cst_3 [1] : vector<8x1536xf32> to vector<8xf32>
    %4 = vector.shape_cast %3 : vector<8xf32> to vector<8x1xf32>
    %cst_4 = arith.constant 6.51041686E-4 : f32
    %5 = vector.broadcast %cst_4 : f32 to vector<8x1xf32>
    %6 = arith.mulf %4, %5 : vector<8x1xf32>
    %7 = arith.mulf %2, %2 : vector<8x1536xf32>
    %cst_5 = arith.constant dense<0.000000e+00> : vector<8xf32>
    %8 = vector.multi_reduction <add>, %7, %cst_5 [1] : vector<8x1536xf32> to vector<8xf32>
    %9 = vector.shape_cast %8 : vector<8xf32> to vector<8x1xf32>
    %cst_6 = arith.constant 6.51041686E-4 : f32
    %10 = vector.broadcast %cst_6 : f32 to vector<8x1xf32>
    %11 = arith.mulf %9, %10 : vector<8x1xf32>
    %12 = arith.mulf %6, %6 : vector<8x1xf32>
    %13 = arith.subf %11, %12 : vector<8x1xf32>
    %cst_7 = arith.constant 0.000000e+00 : f32
    %14 = vector.broadcast %cst_7 : f32 to vector<8x1xf32>
    %15 = arith.maximumf %13, %14 : vector<8x1xf32>
    %c0_8 = arith.constant 0 : index
    %c0_9 = arith.constant 0 : index
    %16 = vector.load %arg3[%c0_8, %c0_9] : memref<8x1xf32, #tpu.memory_space<vmem>>, vector<8x1xf32>
    %cst_10 = arith.constant 9.99999974E-6 : f32
    %17 = vector.broadcast %cst_10 : f32 to vector<8x1xf32>
    %18 = arith.addf %15, %17 : vector<8x1xf32>
    %19 = math.rsqrt %18 : vector<8x1xf32>
    %20 = arith.mulf %16, %19 : vector<8x1xf32>
    %c0_11 = arith.constant 0 : index
    %c0_12 = arith.constant 0 : index
    %21 = vector.load %arg4[%c0_11, %c0_12] : memref<8x1xf32, #tpu.memory_space<vmem>>, vector<8x1xf32>
    %22 = arith.mulf %6, %20 : vector<8x1xf32>
    %23 = arith.subf %21, %22 : vector<8x1xf32>
    %24 = vector.broadcast %20 : vector<8x1xf32> to vector<8x1536xf32>
    %25 = arith.mulf %2, %24 : vector<8x1536xf32>
    %26 = vector.broadcast %23 : vector<8x1xf32> to vector<8x1536xf32>
    %27 = arith.addf %25, %26 : vector<8x1536xf32>
    %cst_13 = arith.constant 0.000000e+00 : f32
    %28 = vector.broadcast %cst_13 : f32 to vector<8x1536xf32>
    %29 = arith.maximumf %27, %28 : vector<8x1536xf32>
    %30 = arith.truncf %29 : vector<8x1536xf32> to vector<8x1536xbf16>
    %c0_14 = arith.constant 0 : index
    %c0_15 = arith.constant 0 : index
    %31 = vector.load %arg5[%c0_14, %c0_15] : memref<8x1536xbf16, #tpu.memory_space<vmem>>, vector<8x1536xbf16>
    tpu.vector_store %arg5[%c0_14, %c0_15], %30 {strides = array<i32>} : memref<8x1536xbf16, #tpu.memory_space<vmem>>, vector<8x1536xbf16>,
    return
  }
  func.func @transform_0(%arg0: i32) -> (i32, i32) {
    %c0_i32 = arith.constant 0 : i32
    %c0_i32_0 = arith.constant 0 : i32
    %c0_i32_1 = arith.constant 0 : i32
    return %c0_i32, %c0_i32_0 : i32, i32
  }
  func.func @transform_1(%arg0: i32) -> (i32, i32) {
    %c0_i32 = arith.constant 0 : i32
    %c0_i32_0 = arith.constant 0 : i32
    %c0_i32_1 = arith.constant 0 : i32
    return %c0_i32, %c0_i32_0 : i32, i32
  }
  func.func @transform_2(%arg0: i32) -> (i32, i32) {
    %c0_i32 = arith.constant 0 : i32
    %c0_i32_0 = arith.constant 0 : i32
    %c0_i32_1 = arith.constant 0 : i32
    return %c0_i32, %c0_i32_0 : i32, i32
  }
  func.func @transform_3(%arg0: i32) -> (i32, i32) {
    %c0_i32 = arith.constant 0 : i32
    %c0_i32_0 = arith.constant 0 : i32
    %c0_i32_1 = arith.constant 0 : i32
    return %c0_i32, %c0_i32_0 : i32, i32
  }
  func.func @transform_4(%arg0: i32) -> (i32, i32) {
    %c0_i32 = arith.constant 0 : i32
    %c0_i32_0 = arith.constant 0 : i32
    %c0_i32_1 = arith.constant 0 : i32
    return %c0_i32, %c0_i32_0 : i32, i32
  }
}

module attributes {stable_mosaic.version = 11 : i64} {
  func.func @_convt_tanh_kernel(%arg0: i32, %arg1: memref<8x128xbf16, #tpu.memory_space<vmem>>, %arg2: memref<128x6144xbf16, #tpu.memory_space<vmem>>, %arg3: memref<8x6144xf32, #tpu.memory_space<vmem>>) attributes {dimension_semantics = [#tpu.dimension_semantics<arbitrary>], iteration_bounds = array<i64: 1>, scalar_prefetch = 0 : i64, scratch_operands = 0 : i64, tpu.core_type = #tpu.core_type<tc>, window_params = [{pipeline_mode = #tpu.pipeline_mode<synchronous>, transform_indices = @transform_0, window_bounds = array<i64: 8, 128>}, {pipeline_mode = #tpu.pipeline_mode<synchronous>, transform_indices = @transform_1, window_bounds = array<i64: 128, 6144>}, {pipeline_mode = #tpu.pipeline_mode<synchronous>, transform_indices = @transform_2, window_bounds = array<i64: 8, 6144>}]} {
    %c0 = arith.constant 0 : index
    %c0_0 = arith.constant 0 : index
    %0 = vector.load %arg1[%c0, %c0_0] : memref<8x128xbf16, #tpu.memory_space<vmem>>, vector<8x128xbf16>
    %c0_1 = arith.constant 0 : index
    %c0_2 = arith.constant 0 : index
    %1 = vector.load %arg2[%c0_1, %c0_2] : memref<128x6144xbf16, #tpu.memory_space<vmem>>, vector<128x6144xbf16>
    %cst = arith.constant dense<0.000000e+00> : vector<8x6144xf32>
    %2 = tpu.matmul %0, %1, %cst {dimension_numbers = #tpu.dot_dimension_numbers<[1], [0], [0], [1], [0, 0, 1, 1], [], []>} : vector<8x128xbf16>, vector<128x6144xbf16>, vector<8x6144xf32> -> vector<8x6144xf32>
    %3 = math.tanh %2 : vector<8x6144xf32>
    %c0_3 = arith.constant 0 : index
    %c0_4 = arith.constant 0 : index
    %4 = vector.load %arg3[%c0_3, %c0_4] : memref<8x6144xf32, #tpu.memory_space<vmem>>, vector<8x6144xf32>
    tpu.vector_store %arg3[%c0_3, %c0_4], %3 {strides = array<i32>} : memref<8x6144xf32, #tpu.memory_space<vmem>>, vector<8x6144xf32>,
    return
  }
  func.func @transform_0(%arg0: i32) -> (i32, i32) {
    %c0_i32 = arith.constant 0 : i32
    %c0_i32_0 = arith.constant 0 : i32
    %c0_i32_1 = arith.constant 0 : i32
    return %c0_i32, %c0_i32_0 : i32, i32
  }
  func.func @transform_1(%arg0: i32) -> (i32, i32) {
    %c0_i32 = arith.constant 0 : i32
    %c0_i32_0 = arith.constant 0 : i32
    %c0_i32_1 = arith.constant 0 : i32
    return %c0_i32, %c0_i32_0 : i32, i32
  }
  func.func @transform_2(%arg0: i32) -> (i32, i32) {
    %c0_i32 = arith.constant 0 : i32
    %c0_i32_0 = arith.constant 0 : i32
    %c0_i32_1 = arith.constant 0 : i32
    return %c0_i32, %c0_i32_0 : i32, i32
  }
}

</mosaic_0001>

<llo_original>
// kernel: generator_forward.12
$region0: #{generator_forward.12}
  #allocation0 [shape = 'u32[]', space=smem, size = 0x4, offset = 0x4, fixed_abs, tag = 'smem constant byte address 0x4 - core index']
  #allocation1 [shape = 'u32[144,128]{1,0:T(1,128)}', space=vmem, size = 0x12000, scoped, tag = 'internal scratch']
  #allocation2 [shape = 'u32[2048]{0}', space=vmem, size = 0x2000, scoped, tag = 'scoped memory for generator_forward.12']
  #allocation3 [shape = 'u32[2048]{0}', space=vmem, size = 0x2000, scoped, tag = 'scoped memory for generator_forward.12']
  #allocation4 [shape = 'u32[2048]{0}', space=vmem, size = 0x2000, scoped, tag = 'scoped memory for generator_forward.12']
  #allocation5 [shape = 'u32[2048]{0}', space=vmem, size = 0x2000, scoped, tag = 'scoped memory for generator_forward.12']
  #allocation6 [shape = 'u32[2048]{0}', space=vmem, size = 0x2000, scoped, tag = 'scoped memory for generator_forward.12']
  %s0 = inlined_call_operand.hbm [shape: bf16[64,192], index: 0, kind: input, shape index: {}]
  %s1 = inlined_call_operand.vmem [shape: f32[64,1], index: 1, kind: input, shape index: {}]
  %s2 = inlined_call_operand.vmem [shape: f32[64,1], index: 2, kind: input, shape index: {}]
  %s3 = inlined_call_operand.vmem [shape: bf16[192,24], index: 3, kind: input, shape index: {}]
  %s4 = inlined_call_operand.<no memory space> [shape: bf16[], index: 4, kind: input, shape index: {}]
  %s5 = inlined_call_operand.vmem [shape: bf16[64,256], index: 5, kind: output, shape index: {}]
  %s6 = sld [smem:[#allocation0]]
  $region30: #{generator_forward.12} parent=0
    _
  %s8 = ssub.s32 1, %s6
  %s9 = scalar_select 0, %s8, %s6
  %v10 = vstv %s4
  %v11 = vunpack.i.l.bf16 %v10
  %v13 = vunpack.i.h.bf16 %v10
  $region1: #{generator_forward.12} parent=0
    #allocation7 [shape = 'u8[32768]{0}', space=vmem, size = 0x8000, scoped, tag = 'input window, operand 0, single buffered']
    #allocation8 [shape = 's32[1]{0}', space=sflag, size = 0x4, scoped, tag = 'scoped memory for generator_forward.12']
    #allocation9 [shape = 'u8[98304]{0}', space=vmem, size = 0x18000, dematerialized = true, scoped, tag = 'FusionAdapter Buffer %fusion.21 = bf16[192,256]{1,0:T(8,128)(2,1)} fusion(%param_3.138, %param_4.34), kind=kLoop, calls=%fused_computation.134.clone, metadata={op_name="jit(generator_forward)/jit(_pad)/pad" stack_frame_id=28}']
    %15 = vsyncpa [#allocation8], 0
    // Predicated region
    $region2: #{generator_forward.12} parent=1 // pred_check
      _
    $region3: #{generator_forward.12} parent=1 // pred_check_branch
      %17 = sbr.rel (0) target = $region5
    $region4: #{generator_forward.12} parent=1 // pred_region
      %s19 = ssub.s32 1024, 1024
      %20 = vsyncadd [#allocation8], %s19
      %s21 = sshll.u32 [#allocation7], 4
      %s22 = int_to_ptr.vmem [resolvable:$true] %s21
      %27 = dma.hbm_to_vmem [thread:$0]  %s0, 1024, %s22, [#allocation8], 128, 128, 8
    $region5: #{generator_forward.12} parent=1 // pred_fallthru
      _
    // Predicated region
    $region6: #{generator_forward.12} parent=1 // pred_check
      _
    $region7: #{generator_forward.12} parent=1 // pred_check_branch
      %29 = sbr.rel (0) target = $region9
    $region8: #{generator_forward.12} parent=1 // pred_region
      _
    $region9: #{generator_forward.12} parent=1 // pred_fallthru
      _
    // Predicated region
    $region10: #{generator_forward.12} parent=1 // pred_check
      _
    $region11: #{generator_forward.12} parent=1 // pred_check_branch
      %31 = sbr.rel (0) target = $region13
    $region12: #{generator_forward.12} parent=1 // pred_region
      _
    $region13: #{generator_forward.12} parent=1 // pred_fallthru
      _
    // Predicated region
    $region14: #{generator_forward.12} parent=1 // pred_check
      _
    $region15: #{generator_forward.12} parent=1 // pred_check_branch
      %33 = sbr.rel (0) target = $region17
    $region16: #{generator_forward.12} parent=1 // pred_region
      _
    $region17: #{generator_forward.12} parent=1 // pred_fallthru
      _
    // Predicated region
    $region18: #{generator_forward.12} parent=1 // pred_check
      _
    $region19: #{generator_forward.12} parent=1 // pred_check_branch
      %35 = sbr.rel (0) target = $region21
    $region20: #{generator_forward.12} parent=1 // pred_region
      %36 = dma.done [#allocation8], 1024
    $region21: #{generator_forward.12} parent=1 // pred_fallthru
      _
    %s38 = sor.u32 255, 127
    %s39 = sand.u32 %s38, 85
    %s40 = sshrl.u32 %s39, 1
    %s41 = sor.u32 %s39, %s40
    %s42 = sand.u32 51, %s41
    %s43 = sshrl.u32 %s42, 2
    %s44 = sor.u32 %s42, %s43
    %s45 = sand.u32 15, %s44
    %v46 = vld [vmem:[%s3] sm:%s45]
    %v47 = vunpack.c.l.bf16 %v46
    %v48 = vunpack.c.h.bf16 %v46
    %v49 = vlaneseq
    %v50 = vand.u32 %v49, 127
    %vm52 = vcmp.lt.s32.totalorder %v50, 24
    %v53 = vsel %vm52, %v47, %v11
    %v54 = vpack.c.bf16 0.0, %v53
    %56 = vst [vmem:[#allocation9] sm:$0xf] %v54
    %s57 = scalar_lea.vmem [#allocation9], 4
    %v58 = vpack.c.bf16 0.0, %v11
    %60 = vst [vmem:[%s57] sm:$0xf] %v58
    %s61 = scalar_lea.vmem %s3, 4
    %s63 = sor.u32 255, 127
    %s64 = sand.u32 %s63, 85
    %s65 = sshrl.u32 %s64, 1
    %s66 = sor.u32 %s64, %s65
    %s67 = sand.u32 51, %s66
    %s68 = sshrl.u32 %s67, 2
    %s69 = sor.u32 %s67, %s68
    %s70 = sand.u32 15, %s69
    %v71 = vld [vmem:[%s61] sm:%s70]
    %v72 = vunpack.c.l.bf16 %v71
    %v73 = vunpack.c.h.bf16 %v71
    %v74 = vlaneseq
    %v75 = vand.u32 %v74, 127
    %vm77 = vcmp.lt.s32.totalorder %v75, 24
    %v78 = vsel %vm77, %v72, %v11
    %s79 = scalar_lea.vmem [#allocation9], 8
    %v80 = vpack.c.bf16 0.0, %v78
    %82 = vst [vmem:[%s79] sm:$0xf] %v80
    %s83 = scalar_lea.vmem [#allocation9], 12
    %v84 = vpack.c.bf16 0.0, %v11
    %86 = vst [vmem:[%s83] sm:$0xf] %v84
    %s87 = scalar_lea.vmem %s3, 8
    %s89 = sor.u32 255, 127
    %s90 = sand.u32 %s89, 85
    %s91 = sshrl.u32 %s90, 1
    %s92 = sor.u32 %s90, %s91
    %s93 = sand.u32 51, %s92
    %s94 = sshrl.u32 %s93, 2
    %s95 = sor.u32 %s93, %s94
    %s96 = sand.u32 15, %s95
    %v97 = vld [vmem:[%s87] sm:%s96]
    %v98 = vunpack.c.l.bf16 %v97
    %v99 = vunpack.c.h.bf16 %v97
    %v100 = vlaneseq
    %v101 = vand.u32 %v100, 127
    %vm103 = vcmp.lt.s32.totalorder %v101, 24
    %v104 = vsel %vm103, %v98, %v11
    %s105 = scalar_lea.vmem [#allocation9], 16
    %v106 = vpack.c.bf16 0.0, %v104
    %108 = vst [vmem:[%s105] sm:$0xf] %v106
    %s109 = scalar_lea.vmem [#allocation9], 20
    %v110 = vpack.c.bf16 0.0, %v11
    %112 = vst [vmem:[%s109] sm:$0xf] %v110
    %s113 = scalar_lea.vmem %s3, 12
    %s115 = sor.u32 255, 127
    %s116 = sand.u32 %s115, 85
    %s117 = sshrl.u32 %s116, 1
    %s118 = sor.u32 %s116, %s117
    %s119 = sand.u32 51, %s118
    %s120 = sshrl.u32 %s119, 2
    %s121 = sor.u32 %s119, %s120
    %s122 = sand.u32 15, %s121
    %v123 = vld [vmem:[%s113] sm:%s122]
    %v124 = vunpack.c.l.bf16 %v123
    %v125 = vunpack.c.h.bf16 %v123
    %v126 = vlaneseq
    %v127 = vand.u32 %v126, 127
    %vm129 = vcmp.lt.s32.totalorder %v127, 24
    %v130 = vsel %vm129, %v124, %v11
    %s131 = scalar_lea.vmem [#allocation9], 24
    %v132 = vpack.c.bf16 0.0, %v130
    %134 = vst [vmem:[%s131] sm:$0xf] %v132
    %s135 = scalar_lea.vmem [#allocation9], 28
    %v136 = vpack.c.bf16 0.0, %v11
    %138 = vst [vmem:[%s135] sm:$0xf] %v136
    %s139 = scalar_lea.vmem %s3, 16
    %s141 = sor.u32 255, 127
    %s142 = sand.u32 %s141, 85
    %s143 = sshrl.u32 %s142, 1
    %s144 = sor.u32 %s142, %s143
    %s145 = sand.u32 51, %s144
    %s146 = sshrl.u32 %s145, 2
    %s147 = sor.u32 %s145, %s146
    %s148 = sand.u32 15, %s147
    %v149 = vld [vmem:[%s139] sm:%s148]
    %v150 = vunpack.c.l.bf16 %v149
    %v151 = vunpack.c.h.bf16 %v149
    %v152 = vlaneseq
    %v153 = vand.u32 %v152, 127
    %vm155 = vcmp.lt.s32.totalorder %v153, 24
    %v156 = vsel %vm155, %v150, %v11
    %s157 = scalar_lea.vmem [#allocation9], 32
    %v158 = vpack.c.bf16 0.0, %v156
    %160 = vst [vmem:[%s157] sm:$0xf] %v158
    %s161 = scalar_lea.vmem [#allocation9], 36
    %v162 = vpack.c.bf16 0.0, %v11
    %164 = vst [vmem:[%s161] sm:$0xf] %v162
    %s165 = scalar_lea.vmem %s3, 20
    %s167 = sor.u32 255, 127
    %s168 = sand.u32 %s167, 85
    %s169 = sshrl.u32 %s168, 1
    %s170 = sor.u32 %s168, %s169
    %s171 = sand.u32 51, %s170
    %s172 = sshrl.u32 %s171, 2
    %s173 = sor.u32 %s171, %s172
    %s174 = sand.u32 15, %s173
    %v175 = vld [vmem:[%s165] sm:%s174]
    %v176 = vunpack.c.l.bf16 %v175
    %v177 = vunpack.c.h.bf16 %v175
    %v178 = vlaneseq
    %v179 = vand.u32 %v178, 127
    %vm181 = vcmp.lt.s32.totalorder %v179, 24
    %v182 = vsel %vm181, %v176, %v11
    %s183 = scalar_lea.vmem [#allocation9], 40
    %v184 = vpack.c.bf16 0.0, %v182
    %186 = vst [vmem:[%s183] sm:$0xf] %v184
    %s187 = scalar_lea.vmem [#allocation9], 44
    %v188 = vpack.c.bf16 0.0, %v11
    %190 = vst [vmem:[%s187] sm:$0xf] %v188
    %s191 = scalar_lea.vmem %s3, 24
    %s193 = sor.u32 255, 127
    %s194 = sand.u32 %s193, 85
    %s195 = sshrl.u32 %s194, 1
    %s196 = sor.u32 %s194, %s195
    %s197 = sand.u32 51, %s196
    %s198 = sshrl.u32 %s197, 2
    %s199 = sor.u32 %s197, %s198
    %s200 = sand.u32 15, %s199
    %v201 = vld [vmem:[%s191] sm:%s200]
    %v202 = vunpack.c.l.bf16 %v201
    %v203 = vunpack.c.h.bf16 %v201
    %v204 = vlaneseq
    %v205 = vand.u32 %v204, 127
    %vm207 = vcmp.lt.s32.totalorder %v205, 24
    %v208 = vsel %vm207, %v202, %v11
    %s209 = scalar_lea.vmem [#allocation9], 48
    %v210 = vpack.c.bf16 0.0, %v208
    %212 = vst [vmem:[%s209] sm:$0xf] %v210
    %s213 = scalar_lea.vmem [#allocation9], 52
    %v214 = vpack.c.bf16 0.0, %v11
    %216 = vst [vmem:[%s213] sm:$0xf] %v214
    %s217 = scalar_lea.vmem %s3, 28
    %s219 = sor.u32 255, 127
    %s220 = sand.u32 %s219, 85
    %s221 = sshrl.u32 %s220, 1
    %s222 = sor.u32 %s220, %s221
    %s223 = sand.u32 51, %s222
    %s224 = sshrl.u32 %s223, 2
    %s225 = sor.u32 %s223, %s224
    %s226 = sand.u32 15, %s225
    %v227 = vld [vmem:[%s217] sm:%s226]
    %v228 = vunpack.c.l.bf16 %v227
    %v229 = vunpack.c.h.bf16 %v227
    %v230 = vlaneseq
    %v231 = vand.u32 %v230, 127
    %vm233 = vcmp.lt.s32.totalorder %v231, 24
    %v234 = vsel %vm233, %v228, %v11
    %s235 = scalar_lea.vmem [#allocation9], 56
    %v236 = vpack.c.bf16 0.0, %v234
    %238 = vst [vmem:[%s235] sm:$0xf] %v236
    %s239 = scalar_lea.vmem [#allocation9], 60
    %v240 = vpack.c.bf16 0.0, %v11
    %242 = vst [vmem:[%s239] sm:$0xf] %v240
    %s243 = scalar_lea.vmem %s3, 32
    %s245 = sor.u32 255, 127
    %s246 = sand.u32 %s245, 85
    %s247 = sshrl.u32 %s246, 1
    %s248 = sor.u32 %s246, %s247
    %s249 = sand.u32 51, %s248
    %s250 = sshrl.u32 %s249, 2
    %s251 = sor.u32 %s249, %s250
    %s252 = sand.u32 15, %s251
    %v253 = vld [vmem:[%s243] sm:%s252]
    %v254 = vunpack.c.l.bf16 %v253
    %v255 = vunpack.c.h.bf16 %v253
    %v256 = vlaneseq
    %v257 = vand.u32 %v256, 127
    %vm259 = vcmp.lt.s32.totalorder %v257, 24
    %v260 = vsel %vm259, %v254, %v11
    %s261 = scalar_lea.vmem [#allocation9], 64
    %v262 = vpack.c.bf16 0.0, %v260
    %264 = vst [vmem:[%s261] sm:$0xf] %v262
    %s265 = scalar_lea.vmem [#allocation9], 68
    %v266 = vpack.c.bf16 0.0, %v11
    %268 = vst [vmem:[%s265] sm:$0xf] %v266
    %s269 = scalar_lea.vmem %s3, 36
    %s271 = sor.u32 255, 127
    %s272 = sand.u32 %s271, 85
    %s273 = sshrl.u32 %s272, 1
    %s274 = sor.u32 %s272, %s273
    %s275 = sand.u32 51, %s274
    %s276 = sshrl.u32 %s275, 2
    %s277 = sor.u32 %s275, %s276
    %s278 = sand.u32 15, %s277
    %v279 = vld [vmem:[%s269] sm:%s278]
    %v280 = vunpack.c.l.bf16 %v279
    %v281 = vunpack.c.h.bf16 %v279
    %v282 = vlaneseq
    %v283 = vand.u32 %v282, 127
    %vm285 = vcmp.lt.s32.totalorder %v283, 24
    %v286 = vsel %vm285, %v280, %v11
    %s287 = scalar_lea.vmem [#allocation9], 72
    %v288 = vpack.c.bf16 0.0, %v286
    %290 = vst [vmem:[%s287] sm:$0xf] %v288
    %s291 = scalar_lea.vmem [#allocation9], 76
    %v292 = vpack.c.bf16 0.0, %v11
    %294 = vst [vmem:[%s291] sm:$0xf] %v292
    %s295 = scalar_lea.vmem %s3, 40
    %s297 = sor.u32 255, 127
    %s298 = sand.u32 %s297, 85
    %s299 = sshrl.u32 %s298, 1
    %s300 = sor.u32 %s298, %s299
    %s301 = sand.u32 51, %s300
    %s302 = sshrl.u32 %s301, 2
    %s303 = sor.u32 %s301, %s302
    %s304 = sand.u32 15, %s303
    %v305 = vld [vmem:[%s295] sm:%s304]
    %v306 = vunpack.c.l.bf16 %v305
    %v307 = vunpack.c.h.bf16 %v305
    %v308 = vlaneseq
    %v309 = vand.u32 %v308, 127
    %vm311 = vcmp.lt.s32.totalorder %v309, 24
    %v312 = vsel %vm311, %v306, %v11
    %s313 = scalar_lea.vmem [#allocation9], 80
    %v314 = vpack.c.bf16 0.0, %v312
    %316 = vst [vmem:[%s313] sm:$0xf] %v314
    %s317 = scalar_lea.vmem [#allocation9], 84
    %v318 = vpack.c.bf16 0.0, %v11
    %320 = vst [vmem:[%s317] sm:$0xf] %v318
    %s321 = scalar_lea.vmem %s3, 44
    %s323 = sor.u32 255, 127
    %s324 = sand.u32 %s323, 85
    %s325 = sshrl.u32 %s324, 1
    %s326 = sor.u32 %s324, %s325
    %s327 = sand.u32 51, %s326
    %s328 = sshrl.u32 %s327, 2
    %s329 = sor.u32 %s327, %s328
    %s330 = sand.u32 15, %s329
    %v331 = vld [vmem:[%s321] sm:%s330]
    %v332 = vunpack.c.l.bf16 %v331
    %v333 = vunpack.c.h.bf16 %v331
    %v334 = vlaneseq
    %v335 = vand.u32 %v334, 127
    %vm337 = vcmp.lt.s32.totalorder %v335, 24
    %v338 = vsel %vm337, %v332, %v11
    %s339 = scalar_lea.vmem [#allocation9], 88
    %v340 = vpack.c.bf16 0.0, %v338
    %342 = vst [vmem:[%s339] sm:$0xf] %v340
    %s343 = scalar_lea.vmem [#allocation9], 92
    %v344 = vpack.c.bf16 0.0, %v11
    %346 = vst [vmem:[%s343] sm:$0xf] %v344
    %s347 = scalar_lea.vmem %s3, 48
    %s349 = sor.u32 255, 127
    %s350 = sand.u32 %s349, 85
    %s351 = sshrl.u32 %s350, 1
    %s352 = sor.u32 %s350, %s351
    %s353 = sand.u32 51, %s352
    %s354 = sshrl.u32 %s353, 2
    %s355 = sor.u32 %s353, %s354
    %s356 = sand.u32 15, %s355
    %v357 = vld [vmem:[%s347] sm:%s356]
    %v358 = vunpack.c.l.bf16 %v357
    %v359 = vunpack.c.h.bf16 %v357
    %v360 = vlaneseq
    %v361 = vand.u32 %v360, 127
    %vm363 = vcmp.lt.s32.totalorder %v361, 24
    %v364 = vsel %vm363, %v358, %v11
    %s365 = scalar_lea.vmem [#allocation9], 96
    %v366 = vpack.c.bf16 0.0, %v364
    %368 = vst [vmem:[%s365] sm:$0xf] %v366
    %s369 = scalar_lea.vmem [#allocation9], 100
    %v370 = vpack.c.bf16 0.0, %v11
    %372 = vst [vmem:[%s369] sm:$0xf] %v370
    %s373 = scalar_lea.vmem %s3, 52
    %s375 = sor.u32 255, 127
    %s376 = sand.u32 %s375, 85
    %s377 = sshrl.u32 %s376, 1
    %s378 = sor.u32 %s376, %s377
    %s379 = sand.u32 51, %s378
    %s380 = sshrl.u32 %s379, 2
    %s381 = sor.u32 %s379, %s380
    %s382 = sand.u32 15, %s381
    %v383 = vld [vmem:[%s373] sm:%s382]
    %v384 = vunpack.c.l.bf16 %v383
    %v385 = vunpack.c.h.bf16 %v383
    %v386 = vlaneseq
    %v387 = vand.u32 %v386, 127
    %vm389 = vcmp.lt.s32.totalorder %v387, 24
    %v390 = vsel %vm389, %v384, %v11
    %s391 = scalar_lea.vmem [#allocation9], 104
    %v392 = vpack.c.bf16 0.0, %v390
    %394 = vst [vmem:[%s391] sm:$0xf] %v392
    %s395 = scalar_lea.vmem [#allocation9], 108
    %v396 = vpack.c.bf16 0.0, %v11
    %398 = vst [vmem:[%s395] sm:$0xf] %v396
    %s399 = scalar_lea.vmem %s3, 56
    %s401 = sor.u32 255, 127
    %s402 = sand.u32 %s401, 85
    %s403 = sshrl.u32 %s402, 1
    %s404 = sor.u32 %s402, %s403
    %s405 = sand.u32 51, %s404
    %s406 = sshrl.u32 %s405, 2
    %s407 = sor.u32 %s405, %s406
    %s408 = sand.u32 15, %s407
    %v409 = vld [vmem:[%s399] sm:%s408]
    %v410 = vunpack.c.l.bf16 %v409
    %v411 = vunpack.c.h.bf16 %v409
    %v412 = vlaneseq
    %v413 = vand.u32 %v412, 127
    %vm415 = vcmp.lt.s32.totalorder %v413, 24
    %v416 = vsel %vm415, %v410, %v11
    %s417 = scalar_lea.vmem [#allocation9], 112
    %v418 = vpack.c.bf16 0.0, %v416
    %420 = vst [vmem:[%s417] sm:$0xf] %v418
    %s421 = scalar_lea.vmem [#allocation9], 116
    %v422 = vpack.c.bf16 0.0, %v11
    %424 = vst [vmem:[%s421] sm:$0xf] %v422
    %s425 = scalar_lea.vmem %s3, 60
    %s427 = sor.u32 255, 127
    %s428 = sand.u32 %s427, 85
    %s429 = sshrl.u32 %s428, 1
    %s430 = sor.u32 %s428, %s429
    %s431 = sand.u32 51, %s430
    %s432 = sshrl.u32 %s431, 2
    %s433 = sor.u32 %s431, %s432
    %s434 = sand.u32 15, %s433
    %v435 = vld [vmem:[%s425] sm:%s434]
    %v436 = vunpack.c.l.bf16 %v435
    %v437 = vunpack.c.h.bf16 %v435
    %v438 = vlaneseq
    %v439 = vand.u32 %v438, 127
    %vm441 = vcmp.lt.s32.totalorder %v439, 24
    %v442 = vsel %vm441, %v436, %v11
    %s443 = scalar_lea.vmem [#allocation9], 120
    %v444 = vpack.c.bf16 0.0, %v442
    %446 = vst [vmem:[%s443] sm:$0xf] %v444
    %s447 = scalar_lea.vmem [#allocation9], 124
    %v448 = vpack.c.bf16 0.0, %v11
    %450 = vst [vmem:[%s447] sm:$0xf] %v448
    %s451 = scalar_lea.vmem %s3, 64
    %s453 = sor.u32 255, 127
    %s454 = sand.u32 %s453, 85
    %s455 = sshrl.u32 %s454, 1
    %s456 = sor.u32 %s454, %s455
    %s457 = sand.u32 51, %s456
    %s458 = sshrl.u32 %s457, 2
    %s459 = sor.u32 %s457, %s458
    %s460 = sand.u32 15, %s459
    %v461 = vld [vmem:[%s451] sm:%s460]
    %v462 = vunpack.c.l.bf16 %v461
    %v463 = vunpack.c.h.bf16 %v461
    %v464 = vlaneseq
    %v465 = vand.u32 %v464, 127
    %vm467 = vcmp.lt.s32.totalorder %v465, 24
    %v468 = vsel %vm467, %v462, %v11
    %s469 = scalar_lea.vmem [#allocation9], 128
    %v470 = vpack.c.bf16 0.0, %v468
    %472 = vst [vmem:[%s469] sm:$0xf] %v470
    %s473 = scalar_lea.vmem [#allocation9], 132
    %v474 = vpack.c.bf16 0.0, %v11
    %476 = vst [vmem:[%s473] sm:$0xf] %v474
    %s477 = scalar_lea.vmem %s3, 68
    %s479 = sor.u32 255, 127
    %s480 = sand.u32 %s479, 85
    %s481 = sshrl.u32 %s480, 1
    %s482 = sor.u32 %s480, %s481
    %s483 = sand.u32 51, %s482
    %s484 = sshrl.u32 %s483, 2
    %s485 = sor.u32 %s483, %s484
    %s486 = sand.u32 15, %s485
    %v487 = vld [vmem:[%s477] sm:%s486]
    %v488 = vunpack.c.l.bf16 %v487
    %v489 = vunpack.c.h.bf16 %v487
    %v490 = vlaneseq
    %v491 = vand.u32 %v490, 127
    %vm493 = vcmp.lt.s32.totalorder %v491, 24
    %v494 = vsel %vm493, %v488, %v11
    %s495 = scalar_lea.vmem [#allocation9], 136
    %v496 = vpack.c.bf16 0.0, %v494
    %498 = vst [vmem:[%s495] sm:$0xf] %v496
    %s499 = scalar_lea.vmem [#allocation9], 140
    %v500 = vpack.c.bf16 0.0, %v11
    %502 = vst [vmem:[%s499] sm:$0xf] %v500
    %s503 = scalar_lea.vmem %s3, 72
    %s505 = sor.u32 255, 127
    %s506 = sand.u32 %s505, 85
    %s507 = sshrl.u32 %s506, 1
    %s508 = sor.u32 %s506, %s507
    %s509 = sand.u32 51, %s508
    %s510 = sshrl.u32 %s509, 2
    %s511 = sor.u32 %s509, %s510
    %s512 = sand.u32 15, %s511
    %v513 = vld [vmem:[%s503] sm:%s512]
    %v514 = vunpack.c.l.bf16 %v513
    %v515 = vunpack.c.h.bf16 %v513
    %v516 = vlaneseq
    %v517 = vand.u32 %v516, 127
    %vm519 = vcmp.lt.s32.totalorder %v517, 24
    %v520 = vsel %vm519, %v514, %v11
    %s521 = scalar_lea.vmem [#allocation9], 144
    %v522 = vpack.c.bf16 0.0, %v520
    %524 = vst [vmem:[%s521] sm:$0xf] %v522
    %s525 = scalar_lea.vmem [#allocation9], 148
    %v526 = vpack.c.bf16 0.0, %v11
    %528 = vst [vmem:[%s525] sm:$0xf] %v526
    %s529 = scalar_lea.vmem %s3, 76
    %s531 = sor.u32 255, 127
    %s532 = sand.u32 %s531, 85
    %s533 = sshrl.u32 %s532, 1
    %s534 = sor.u32 %s532, %s533
    %s535 = sand.u32 51, %s534
    %s536 = sshrl.u32 %s535, 2
    %s537 = sor.u32 %s535, %s536
    %s538 = sand.u32 15, %s537
    %v539 = vld [vmem:[%s529] sm:%s538]
    %v540 = vunpack.c.l.bf16 %v539
    %v541 = vunpack.c.h.bf16 %v539
    %v542 = vlaneseq
    %v543 = vand.u32 %v542, 127
    %vm545 = vcmp.lt.s32.totalorder %v543, 24
    %v546 = vsel %vm545, %v540, %v11
    %s547 = scalar_lea.vmem [#allocation9], 152
    %v548 = vpack.c.bf16 0.0, %v546
    %550 = vst [vmem:[%s547] sm:$0xf] %v548
    %s551 = scalar_lea.vmem [#allocation9], 156
    %v552 = vpack.c.bf16 0.0, %v11
    %554 = vst [vmem:[%s551] sm:$0xf] %v552
    %s555 = scalar_lea.vmem %s3, 80
    %s557 = sor.u32 255, 127
    %s558 = sand.u32 %s557, 85
    %s559 = sshrl.u32 %s558, 1
    %s560 = sor.u32 %s558, %s559
    %s561 = sand.u32 51, %s560
    %s562 = sshrl.u32 %s561, 2
    %s563 = sor.u32 %s561, %s562
    %s564 = sand.u32 15, %s563
    %v565 = vld [vmem:[%s555] sm:%s564]
    %v566 = vunpack.c.l.bf16 %v565
    %v567 = vunpack.c.h.bf16 %v565
    %v568 = vlaneseq
    %v569 = vand.u32 %v568, 127
    %vm571 = vcmp.lt.s32.totalorder %v569, 24
    %v572 = vsel %vm571, %v566, %v11
    %s573 = scalar_lea.vmem [#allocation9], 160
    %v574 = vpack.c.bf16 0.0, %v572
    %576 = vst [vmem:[%s573] sm:$0xf] %v574
    %s577 = scalar_lea.vmem [#allocation9], 164
    %v578 = vpack.c.bf16 0.0, %v11
    %580 = vst [vmem:[%s577] sm:$0xf] %v578
    %s581 = scalar_lea.vmem %s3, 84
    %s583 = sor.u32 255, 127
    %s584 = sand.u32 %s583, 85
    %s585 = sshrl.u32 %s584, 1
    %s586 = sor.u32 %s584, %s585
    %s587 = sand.u32 51, %s586
    %s588 = sshrl.u32 %s587, 2
    %s589 = sor.u32 %s587, %s588
    %s590 = sand.u32 15, %s589
    %v591 = vld [vmem:[%s581] sm:%s590]
    %v592 = vunpack.c.l.bf16 %v591
    %v593 = vunpack.c.h.bf16 %v591
    %v594 = vlaneseq
    %v595 = vand.u32 %v594, 127
    %vm597 = vcmp.lt.s32.totalorder %v595, 24
    %v598 = vsel %vm597, %v592, %v11
    %s599 = scalar_lea.vmem [#allocation9], 168
    %v600 = vpack.c.bf16 0.0, %v598
    %602 = vst [vmem:[%s599] sm:$0xf] %v600
    %s603 = scalar_lea.vmem [#allocation9], 172
    %v604 = vpack.c.bf16 0.0, %v11
    %606 = vst [vmem:[%s603] sm:$0xf] %v604
    %s607 = scalar_lea.vmem %s3, 88
    %s609 = sor.u32 255, 127
    %s610 = sand.u32 %s609, 85
    %s611 = sshrl.u32 %s610, 1
    %s612 = sor.u32 %s610, %s611
    %s613 = sand.u32 51, %s612
    %s614 = sshrl.u32 %s613, 2
    %s615 = sor.u32 %s613, %s614
    %s616 = sand.u32 15, %s615
    %v617 = vld [vmem:[%s607] sm:%s616]
    %v618 = vunpack.c.l.bf16 %v617
    %v619 = vunpack.c.h.bf16 %v617
    %v620 = vlaneseq
    %v621 = vand.u32 %v620, 127
    %vm623 = vcmp.lt.s32.totalorder %v621, 24
    %v624 = vsel %vm623, %v618, %v11
    %s625 = scalar_lea.vmem [#allocation9], 176
    %v626 = vpack.c.bf16 0.0, %v624
    %628 = vst [vmem:[%s625] sm:$0xf] %v626
    %s629 = scalar_lea.vmem [#allocation9], 180
    %v630 = vpack.c.bf16 0.0, %v11
    %632 = vst [vmem:[%s629] sm:$0xf] %v630
    %s633 = scalar_lea.vmem %s3, 92
    %s635 = sor.u32 255, 127
    %s636 = sand.u32 %s635, 85
    %s637 = sshrl.u32 %s636, 1
    %s638 = sor.u32 %s636, %s637
    %s639 = sand.u32 51, %s638
    %s640 = sshrl.u32 %s639, 2
    %s641 = sor.u32 %s639, %s640
    %s642 = sand.u32 15, %s641
    %v643 = vld [vmem:[%s633] sm:%s642]
    %v644 = vunpack.c.l.bf16 %v643
    %v645 = vunpack.c.h.bf16 %v643
    %v646 = vlaneseq
    %v647 = vand.u32 %v646, 127
    %vm649 = vcmp.lt.s32.totalorder %v647, 24
    %v650 = vsel %vm649, %v644, %v11
    %s651 = scalar_lea.vmem [#allocation9], 184
    %v652 = vpack.c.bf16 0.0, %v650
    %654 = vst [vmem:[%s651] sm:$0xf] %v652
    %s655 = scalar_lea.vmem [#allocation9], 188
    %v656 = vpack.c.bf16 0.0, %v11
    %658 = vst [vmem:[%s655] sm:$0xf] %v656
    %v660 = vld [vmem:[#allocation7] sm:$0xff]
    %v661 = vld [vmem:[#allocation7 + $0x8] sm:$0xff]
    %v662 = vld [vmem:[#allocation7 + $0x10] sm:$0xff]
    %v663 = vld [vmem:[#allocation7 + $0x18] sm:$0xff]
    %v664 = vld [vmem:[#allocation7 + $0x20] sm:$0xff]
    %v665 = vld [vmem:[#allocation7 + $0x28] sm:$0xff]
    %v666 = vld [vmem:[#allocation7 + $0x30] sm:$0xff]
    %v667 = vld [vmem:[#allocation7 + $0x38] sm:$0xff]
    %v668 = vld [vmem:[#allocation9] sm:$0xff]
    %v669 = vld [vmem:[#allocation9 + $0x8] sm:$0xff]
    %v670 = vld [vmem:[#allocation9 + $0x10] sm:$0xff]
    %v671 = vld [vmem:[#allocation9 + $0x18] sm:$0xff]
    %v672 = vld [vmem:[#allocation9 + $0x20] sm:$0xff]
    %v673 = vld [vmem:[#allocation9 + $0x28] sm:$0xff]
    %v674 = vld [vmem:[#allocation9 + $0x30] sm:$0xff]
    %v675 = vld [vmem:[#allocation9 + $0x38] sm:$0xff]
    %v676 = vld [vmem:[#allocation9 + $0x40] sm:$0xff]
    %v677 = vld [vmem:[#allocation9 + $0x48] sm:$0xff]
    %v678 = vld [vmem:[#allocation9 + $0x50] sm:$0xff]
    %v679 = vld [vmem:[#allocation9 + $0x58] sm:$0xff]
    %v680 = vld [vmem:[#allocation9 + $0x60] sm:$0xff]
    %v681 = vld [vmem:[#allocation9 + $0x68] sm:$0xff]
    %v682 = vld [vmem:[#allocation9 + $0x70] sm:$0xff]
    %v683 = vld [vmem:[#allocation9 + $0x78] sm:$0xff]
    %v684 = vld [vmem:[#allocation9 + $0x80] sm:$0xff]
    %v685 = vld [vmem:[#allocation9 + $0x88] sm:$0xff]
    %v686 = vld [vmem:[#allocation9 + $0x90] sm:$0xff]
    %v687 = vld [vmem:[#allocation9 + $0x98] sm:$0xff]
    %v688 = vld [vmem:[#allocation9 + $0xa0] sm:$0xff]
    %v689 = vld [vmem:[#allocation9 + $0xa8] sm:$0xff]
    %v690 = vld [vmem:[#allocation9 + $0xb0] sm:$0xff]
    %v691 = vld [vmem:[#allocation9 + $0xb8] sm:$0xff]
    %v700 = vunpack.c.l.b16 %v660
    %v701 = vunpack.c.h.b16 %v660
    %v702 = vunpack.c.l.b16 %v661
    %v703 = vunpack.c.h.b16 %v661
    %v704 = vunpack.c.l.b16 %v662
    %v705 = vunpack.c.h.b16 %v662
    %v706 = vunpack.c.l.b16 %v663
    %v707 = vunpack.c.h.b16 %v663
    %v708 = vunpack.c.l.b16 %v664
    %v709 = vunpack.c.h.b16 %v664
    %v710 = vunpack.c.l.b16 %v665
    %v711 = vunpack.c.h.b16 %v665
    %v712 = vunpack.c.l.b16 %v666
    %v713 = vunpack.c.h.b16 %v666
    %v714 = vunpack.c.l.b16 %v667
    %v715 = vunpack.c.h.b16 %v667
    %v716 = vpack.c.b16 %v702, %v700
    %v717 = vpack.c.b16 %v703, %v701
    %v718 = vpack.c.b16 %v706, %v704
    %v719 = vpack.c.b16 %v707, %v705
    %v720 = vpack.c.b16 %v710, %v708
    %v721 = vpack.c.b16 %v711, %v709
    %v722 = vpack.c.b16 %v714, %v712
    %v723 = vpack.c.b16 %v715, %v713
    %v752 = vunpack.c.l.b16 %v668
    %v753 = vunpack.c.h.b16 %v668
    %v754 = vunpack.c.l.b16 %v669
    %v755 = vunpack.c.h.b16 %v669
    %v756 = vunpack.c.l.b16 %v670
    %v757 = vunpack.c.h.b16 %v670
    %v758 = vunpack.c.l.b16 %v671
    %v759 = vunpack.c.h.b16 %v671
    %v760 = vunpack.c.l.b16 %v672
    %v761 = vunpack.c.h.b16 %v672
    %v762 = vunpack.c.l.b16 %v673
    %v763 = vunpack.c.h.b16 %v673
    %v764 = vunpack.c.l.b16 %v674
    %v765 = vunpack.c.h.b16 %v674
    %v766 = vunpack.c.l.b16 %v675
    %v767 = vunpack.c.h.b16 %v675
    %v768 = vunpack.c.l.b16 %v676
    %v769 = vunpack.c.h.b16 %v676
    %v770 = vunpack.c.l.b16 %v677
    %v771 = vunpack.c.h.b16 %v677
    %v772 = vunpack.c.l.b16 %v678
    %v773 = vunpack.c.h.b16 %v678
    %v774 = vunpack.c.l.b16 %v679
    %v775 = vunpack.c.h.b16 %v679
    %v776 = vunpack.c.l.b16 %v680
    %v777 = vunpack.c.h.b16 %v680
    %v778 = vunpack.c.l.b16 %v681
    %v779 = vunpack.c.h.b16 %v681
    %v780 = vunpack.c.l.b16 %v682
    %v781 = vunpack.c.h.b16 %v682
    %v782 = vunpack.c.l.b16 %v683
    %v783 = vunpack.c.h.b16 %v683
    %v784 = vunpack.c.l.b16 %v684
    %v785 = vunpack.c.h.b16 %v684
    %v786 = vunpack.c.l.b16 %v685
    %v787 = vunpack.c.h.b16 %v685
    %v788 = vunpack.c.l.b16 %v686
    %v789 = vunpack.c.h.b16 %v686
    %v790 = vunpack.c.l.b16 %v687
    %v791 = vunpack.c.h.b16 %v687
    %v792 = vunpack.c.l.b16 %v688
    %v793 = vunpack.c.h.b16 %v688
    %v794 = vunpack.c.l.b16 %v689
    %v795 = vunpack.c.h.b16 %v689
    %v796 = vunpack.c.l.b16 %v690
    %v797 = vunpack.c.h.b16 %v690
    %v798 = vunpack.c.l.b16 %v691
    %v799 = vunpack.c.h.b16 %v691
    %v800 = vpack.c.b16 %v754, %v752
    %v801 = vpack.c.b16 %v755, %v753
    %v802 = vpack.c.b16 %v758, %v756
    %v803 = vpack.c.b16 %v759, %v757
    %v804 = vpack.c.b16 %v762, %v760
    %v805 = vpack.c.b16 %v763, %v761
    %v806 = vpack.c.b16 %v766, %v764
    %v807 = vpack.c.b16 %v767, %v765
    %v808 = vpack.c.b16 %v770, %v768
    %v809 = vpack.c.b16 %v771, %v769
    %v810 = vpack.c.b16 %v774, %v772
    %v811 = vpack.c.b16 %v775, %v773
    %v812 = vpack.c.b16 %v778, %v776
    %v813 = vpack.c.b16 %v779, %v777
    %v814 = vpack.c.b16 %v782, %v780
    %v815 = vpack.c.b16 %v783, %v781
    %v816 = vpack.c.b16 %v786, %v784
    %v817 = vpack.c.b16 %v787, %v785
    %v818 = vpack.c.b16 %v790, %v788
    %v819 = vpack.c.b16 %v791, %v789
    %v820 = vpack.c.b16 %v794, %v792
    %v821 = vpack.c.b16 %v795, %v793
    %v822 = vpack.c.b16 %v798, %v796
    %v823 = vpack.c.b16 %v799, %v797
    %vm848 = vcmask 523264
    %v850 = vsel %vm848, %v717, 0
    %v853 = vsel %vm848, %v719, 0
    %v856 = vsel %vm848, %v721, 0
    %v859 = vsel %vm848, %v723, 0
    %861 = vmatprep.subr.bf16.mxu0 %v801
    %862 = vmatpush1.bf16.msra.mxu0 %v800
    %863 = vmatprep.subr.bf16.mxu0 %v803
    %864 = vmatpush1.bf16.msra.mxu0 %v802
    %865 = vmatprep.subr.bf16.mxu0 %v805
    %866 = vmatpush1.bf16.msra.mxu0 %v804
    %867 = vmatprep.subr.bf16.mxu0 %v807
    %868 = vmatpush1.bf16.msra.mxu0 %v806
    %869 = vmatprep.subr.bf16.mxu0 %v809
    %870 = vmatpush1.bf16.msra.mxu0 %v808
    %871 = vmatprep.subr.bf16.mxu0 %v811
    %872 = vmatpush1.bf16.msra.mxu0 %v810
    %873 = vmatprep.subr.bf16.mxu0 %v813
    %874 = vmatpush1.bf16.msra.mxu0 %v812
    %875 = vmatprep.subr.bf16.mxu0 %v815
    %876 = vmatpush1.bf16.msra.mxu0 %v814
    %877 = vmatprep.subr.bf16.mxu0 %v817
    %878 = vmatpush1.bf16.msra.mxu0 %v816
    %879 = vmatprep.subr.bf16.mxu0 %v819
    %880 = vmatpush1.bf16.msra.mxu0 %v818
    %881 = vmatprep.subr.bf16.mxu0 %v821
    %882 = vmatpush1.bf16.msra.mxu0 %v820
    %883 = vmatprep.subr.bf16.mxu0 %v823
    %884 = vmatpush1.bf16.msra.mxu0 %v822
    %885 = vmatprep.subr.bf16.mxu0 0
    %886 = vmatpush1.bf16.msra.mxu0 0
    %887 = vmatprep.subr.bf16.mxu0 0
    %888 = vmatpush1.bf16.msra.mxu0 0
    %889 = vmatprep.subr.bf16.mxu0 0
    %890 = vmatpush1.bf16.msra.mxu0 0
    %891 = vmatprep.subr.bf16.mxu0 0
    %892 = vmatpush1.bf16.msra.mxu0 0
    %893 = vmatprep.mubr.bf16.mxu0 %v850
    %894 = vmatmul.mubr.bf16.gmra.mrb[0].mxu0 %v716
    %v895 = vpop.f32.mrb[0].mxu0
    %v896 = vadd.f32 0.0, %v895
    %v897 = vpop.f32.mrb[0].mxu0
    %v898 = vadd.f32 0.0, %v897
    %v899 = vpop.f32.mrb[0].mxu0
    %v900 = vadd.f32 0.0, %v899
    %v901 = vpop.f32.mrb[0].mxu0
    %v902 = vadd.f32 0.0, %v901
    %903 = vmatprep.mubr.bf16.mxu0 %v853
    %904 = vmatmul.mubr.bf16.gmra.mrb[0].mxu0 %v718
    %v905 = vpop.f32.mrb[0].mxu0
    %v906 = vadd.f32 0.0, %v905
    %v907 = vpop.f32.mrb[0].mxu0
    %v908 = vadd.f32 0.0, %v907
    %v909 = vpop.f32.mrb[0].mxu0
    %v910 = vadd.f32 0.0, %v909
    %v911 = vpop.f32.mrb[0].mxu0
    %v912 = vadd.f32 0.0, %v911
    %913 = vmatprep.mubr.bf16.mxu0 %v856
    %914 = vmatmul.mubr.bf16.gmra.mrb[0].mxu0 %v720
    %v915 = vpop.f32.mrb[0].mxu0
    %v916 = vadd.f32 0.0, %v915
    %v917 = vpop.f32.mrb[0].mxu0
    %v918 = vadd.f32 0.0, %v917
    %v919 = vpop.f32.mrb[0].mxu0
    %v920 = vadd.f32 0.0, %v919
    %v921 = vpop.f32.mrb[0].mxu0
    %v922 = vadd.f32 0.0, %v921
    %923 = vmatprep.mubr.bf16.mxu0 %v859
    %924 = vmatmul.mubr.bf16.gmra.mrb[0].mxu0 %v722
    %v925 = vpop.f32.mrb[0].mxu0
    %v926 = vadd.f32 0.0, %v925
    %v927 = vpop.f32.mrb[0].mxu0
    %v928 = vadd.f32 0.0, %v927
    %v929 = vpop.f32.mrb[0].mxu0
    %v930 = vadd.f32 0.0, %v929
    %v931 = vpop.f32.mrb[0].mxu0
    %v932 = vadd.f32 0.0, %v931
    %933 = vdwg.mxu0
    %v934 = vadd.f32 %v896, %v898
    %935 = vadd.xlane.f32.xlu0 %v934
    %v936 = vpop.xlane.xlu0 %935
    %v937 = vadd.f32 %v900, %v902
    %938 = vadd.xlane.f32.xlu0 %v937
    %v939 = vpop.xlane.xlu0 %938
    %v940 = vadd.f32 %v906, %v908
    %941 = vadd.xlane.f32.xlu0 %v940
    %v942 = vpop.xlane.xlu0 %941
    %v943 = vadd.f32 %v910, %v912
    %944 = vadd.xlane.f32.xlu0 %v943
    %v945 = vpop.xlane.xlu0 %944
    %v946 = vadd.f32 %v916, %v918
    %947 = vadd.xlane.f32.xlu0 %v946
    %v948 = vpop.xlane.xlu0 %947
    %v949 = vadd.f32 %v920, %v922
    %950 = vadd.xlane.f32.xlu0 %v949
    %v951 = vpop.xlane.xlu0 %950
    %v952 = vadd.f32 %v926, %v928
    %953 = vadd.xlane.f32.xlu0 %v952
    %v954 = vpop.xlane.xlu0 %953
    %v955 = vadd.f32 %v930, %v932
    %956 = vadd.xlane.f32.xlu0 %v955
    %v957 = vpop.xlane.xlu0 %956
    %v958 = vmul.f32 %v936, 0.041666668
    %v959 = vmul.f32 %v939, 0.041666668
    %v960 = vmul.f32 %v942, 0.041666668
    %v961 = vmul.f32 %v945, 0.041666668
    %v962 = vmul.f32 %v948, 0.041666668
    %v963 = vmul.f32 %v951, 0.041666668
    %v964 = vmul.f32 %v954, 0.041666668
    %v965 = vmul.f32 %v957, 0.041666668
    %v966 = vmul.f32 %v896, %v896
    %v967 = vmul.f32 %v898, %v898
    %v968 = vmul.f32 %v900, %v900
    %v969 = vmul.f32 %v902, %v902
    %v970 = vmul.f32 %v906, %v906
    %v971 = vmul.f32 %v908, %v908
    %v972 = vmul.f32 %v910, %v910
    %v973 = vmul.f32 %v912, %v912
    %v974 = vmul.f32 %v916, %v916
    %v975 = vmul.f32 %v918, %v918
    %v976 = vmul.f32 %v920, %v920
    %v977 = vmul.f32 %v922, %v922
    %v978 = vmul.f32 %v926, %v926
    %v979 = vmul.f32 %v928, %v928
    %v980 = vmul.f32 %v930, %v930
    %v981 = vmul.f32 %v932, %v932
    %v982 = vadd.f32 %v966, %v967
    %983 = vadd.xlane.f32.xlu0 %v982
    %v984 = vpop.xlane.xlu0 %983
    %v985 = vadd.f32 %v968, %v969
    %986 = vadd.xlane.f32.xlu0 %v985
    %v987 = vpop.xlane.xlu0 %986
    %v988 = vadd.f32 %v970, %v971
    %989 = vadd.xlane.f32.xlu0 %v988
    %v990 = vpop.xlane.xlu0 %989
    %v991 = vadd.f32 %v972, %v973
    %992 = vadd.xlane.f32.xlu0 %v991
    %v993 = vpop.xlane.xlu0 %992
    %v994 = vadd.f32 %v974, %v975
    %995 = vadd.xlane.f32.xlu0 %v994
    %v996 = vpop.xlane.xlu0 %995
    %v997 = vadd.f32 %v976, %v977
    %998 = vadd.xlane.f32.xlu0 %v997
    %v999 = vpop.xlane.xlu0 %998
    %v1000 = vadd.f32 %v978, %v979
    %1001 = vadd.xlane.f32.xlu0 %v1000
    %v1002 = vpop.xlane.xlu0 %1001
    %v1003 = vadd.f32 %v980, %v981
    %1004 = vadd.xlane.f32.xlu0 %v1003
    %v1005 = vpop.xlane.xlu0 %1004
    %v1006 = vmul.f32 %v984, 0.041666668
    %v1007 = vmul.f32 %v987, 0.041666668
    %v1008 = vmul.f32 %v990, 0.041666668
    %v1009 = vmul.f32 %v993, 0.041666668
    %v1010 = vmul.f32 %v996, 0.041666668
    %v1011 = vmul.f32 %v999, 0.041666668
    %v1012 = vmul.f32 %v1002, 0.041666668
    %v1013 = vmul.f32 %v1005, 0.041666668
    %v1014 = vmul.f32 %v958, %v958
    %v1015 = vmul.f32 %v959, %v959
    %v1016 = vmul.f32 %v960, %v960
    %v1017 = vmul.f32 %v961, %v961
    %v1018 = vmul.f32 %v962, %v962
    %v1019 = vmul.f32 %v963, %v963
    %v1020 = vmul.f32 %v964, %v964
    %v1021 = vmul.f32 %v965, %v965
    %v1022 = vsub.f32 %v1006, %v1014
    %v1023 = vsub.f32 %v1007, %v1015
    %v1024 = vsub.f32 %v1008, %v1016
    %v1025 = vsub.f32 %v1009, %v1017
    %v1026 = vsub.f32 %v1010, %v1018
    %v1027 = vsub.f32 %v1011, %v1019
    %v1028 = vsub.f32 %v1012, %v1020
    %v1029 = vsub.f32 %v1013, %v1021
    %v1030 = vmax.f32 %v1022, 0.0
    %v1031 = vmax.f32 %v1023, 0.0
    %v1032 = vmax.f32 %v1024, 0.0
    %v1033 = vmax.f32 %v1025, 0.0
    %v1034 = vmax.f32 %v1026, 0.0
    %v1035 = vmax.f32 %v1027, 0.0
    %v1036 = vmax.f32 %v1028, 0.0
    %v1037 = vmax.f32 %v1029, 0.0
    %v1038 = vld [vmem:[%s1] sm:$0xff]
    %v1039 = vld [vmem:[%s1 + $0x8] sm:$0xff]
    %v1040 = vld [vmem:[%s1 + $0x10] sm:$0xff]
    %v1041 = vld [vmem:[%s1 + $0x18] sm:$0xff]
    %v1042 = vld [vmem:[%s1 + $0x20] sm:$0xff]
    %v1043 = vld [vmem:[%s1 + $0x28] sm:$0xff]
    %v1044 = vld [vmem:[%s1 + $0x30] sm:$0xff]
    %v1045 = vld [vmem:[%s1 + $0x38] sm:$0xff]
    %v1046 = vadd.f32 %v1030, 1e-05
    %v1047 = vadd.f32 %v1031, 1e-05
    %v1048 = vadd.f32 %v1032, 1e-05
    %v1049 = vadd.f32 %v1033, 1e-05
    %v1050 = vadd.f32 %v1034, 1e-05
    %v1051 = vadd.f32 %v1035, 1e-05
    %v1052 = vadd.f32 %v1036, 1e-05
    %v1053 = vadd.f32 %v1037, 1e-05
    %v1054 = vrsqrt.pop %v1046
    %v1055 = vrsqrt.pop %v1047
    %v1056 = vrsqrt.pop %v1048
    %v1057 = vrsqrt.pop %v1049
    %v1058 = vrsqrt.pop %v1050
    %v1059 = vrsqrt.pop %v1051
    %v1060 = vrsqrt.pop %v1052
    %v1061 = vrsqrt.pop %v1053
    %v1062 = vmul.f32 %v1038, %v1054
    %v1063 = vmul.f32 %v1039, %v1055
    %v1064 = vmul.f32 %v1040, %v1056
    %v1065 = vmul.f32 %v1041, %v1057
    %v1066 = vmul.f32 %v1042, %v1058
    %v1067 = vmul.f32 %v1043, %v1059
    %v1068 = vmul.f32 %v1044, %v1060
    %v1069 = vmul.f32 %v1045, %v1061
    %v1070 = vld [vmem:[%s2] sm:$0xff]
    %v1071 = vld [vmem:[%s2 + $0x8] sm:$0xff]
    %v1072 = vld [vmem:[%s2 + $0x10] sm:$0xff]
    %v1073 = vld [vmem:[%s2 + $0x18] sm:$0xff]
    %v1074 = vld [vmem:[%s2 + $0x20] sm:$0xff]
    %v1075 = vld [vmem:[%s2 + $0x28] sm:$0xff]
    %v1076 = vld [vmem:[%s2 + $0x30] sm:$0xff]
    %v1077 = vld [vmem:[%s2 + $0x38] sm:$0xff]
    %v1078 = vmul.f32 %v958, %v1062
    %v1079 = vmul.f32 %v959, %v1063
    %v1080 = vmul.f32 %v960, %v1064
    %v1081 = vmul.f32 %v961, %v1065
    %v1082 = vmul.f32 %v962, %v1066
    %v1083 = vmul.f32 %v963, %v1067
    %v1084 = vmul.f32 %v964, %v1068
    %v1085 = vmul.f32 %v965, %v1069
    %v1086 = vsub.f32 %v1070, %v1078
    %v1087 = vsub.f32 %v1071, %v1079
    %v1088 = vsub.f32 %v1072, %v1080
    %v1089 = vsub.f32 %v1073, %v1081
    %v1090 = vsub.f32 %v1074, %v1082
    %v1091 = vsub.f32 %v1075, %v1083
    %v1092 = vsub.f32 %v1076, %v1084
    %v1093 = vsub.f32 %v1077, %v1085
    %1095 = vset.pattern.permute.xlu0 0
    %1096 = vperm.xlu0 %1095, %v1062
    %v1097 = vpop.permute.xlu0 %1096
    %1100 = vset.pattern.permute.xlu0 0
    %1101 = vperm.xlu0 %1100, %v1063
    %v1102 = vpop.permute.xlu0 %1101
    %1105 = vset.pattern.permute.xlu0 0
    %1106 = vperm.xlu0 %1105, %v1064
    %v1107 = vpop.permute.xlu0 %1106
    %1110 = vset.pattern.permute.xlu0 0
    %1111 = vperm.xlu0 %1110, %v1065
    %v1112 = vpop.permute.xlu0 %1111
    %1115 = vset.pattern.permute.xlu0 0
    %1116 = vperm.xlu0 %1115, %v1066
    %v1117 = vpop.permute.xlu0 %1116
    %1120 = vset.pattern.permute.xlu0 0
    %1121 = vperm.xlu0 %1120, %v1067
    %v1122 = vpop.permute.xlu0 %1121
    %1125 = vset.pattern.permute.xlu0 0
    %1126 = vperm.xlu0 %1125, %v1068
    %v1127 = vpop.permute.xlu0 %1126
    %1130 = vset.pattern.permute.xlu0 0
    %1131 = vperm.xlu0 %1130, %v1069
    %v1132 = vpop.permute.xlu0 %1131
    %v1134 = vmul.f32 %v896, %v1097
    %v1135 = vmul.f32 %v898, %v1097
    %v1136 = vmul.f32 %v900, %v1102
    %v1137 = vmul.f32 %v902, %v1102
    %v1138 = vmul.f32 %v906, %v1107
    %v1139 = vmul.f32 %v908, %v1107
    %v1140 = vmul.f32 %v910, %v1112
    %v1141 = vmul.f32 %v912, %v1112
    %v1142 = vmul.f32 %v916, %v1117
    %v1143 = vmul.f32 %v918, %v1117
    %v1144 = vmul.f32 %v920, %v1122
    %v1145 = vmul.f32 %v922, %v1122
    %v1146 = vmul.f32 %v926, %v1127
    %v1147 = vmul.f32 %v928, %v1127
    %v1148 = vmul.f32 %v930, %v1132
    %v1149 = vmul.f32 %v932, %v1132
    %1151 = vset.pattern.permute.xlu0 0
    %1152 = vperm.xlu0 %1151, %v1086
    %v1153 = vpop.permute.xlu0 %1152
    %1156 = vset.pattern.permute.xlu0 0
    %1157 = vperm.xlu0 %1156, %v1087
    %v1158 = vpop.permute.xlu0 %1157
    %1161 = vset.pattern.permute.xlu0 0
    %1162 = vperm.xlu0 %1161, %v1088
    %v1163 = vpop.permute.xlu0 %1162
    %1166 = vset.pattern.permute.xlu0 0
    %1167 = vperm.xlu0 %1166, %v1089
    %v1168 = vpop.permute.xlu0 %1167
    %1171 = vset.pattern.permute.xlu0 0
    %1172 = vperm.xlu0 %1171, %v1090
    %v1173 = vpop.permute.xlu0 %1172
    %1176 = vset.pattern.permute.xlu0 0
    %1177 = vperm.xlu0 %1176, %v1091
    %v1178 = vpop.permute.xlu0 %1177
    %1181 = vset.pattern.permute.xlu0 0
    %1182 = vperm.xlu0 %1181, %v1092
    %v1183 = vpop.permute.xlu0 %1182
    %1186 = vset.pattern.permute.xlu0 0
    %1187 = vperm.xlu0 %1186, %v1093
    %v1188 = vpop.permute.xlu0 %1187
    %v1190 = vadd.f32 %v1134, %v1153
    %v1191 = vadd.f32 %v1135, %v1153
    %v1192 = vadd.f32 %v1136, %v1158
    %v1193 = vadd.f32 %v1137, %v1158
    %v1194 = vadd.f32 %v1138, %v1163
    %v1195 = vadd.f32 %v1139, %v1163
    %v1196 = vadd.f32 %v1140, %v1168
    %v1197 = vadd.f32 %v1141, %v1168
    %v1198 = vadd.f32 %v1142, %v1173
    %v1199 = vadd.f32 %v1143, %v1173
    %v1200 = vadd.f32 %v1144, %v1178
    %v1201 = vadd.f32 %v1145, %v1178
    %v1202 = vadd.f32 %v1146, %v1183
    %v1203 = vadd.f32 %v1147, %v1183
    %v1204 = vadd.f32 %v1148, %v1188
    %v1205 = vadd.f32 %v1149, %v1188
    %v1206 = vmax.f32 %v1190, 0.0
    %v1207 = vmax.f32 %v1191, 0.0
    %v1208 = vmax.f32 %v1192, 0.0
    %v1209 = vmax.f32 %v1193, 0.0
    %v1210 = vmax.f32 %v1194, 0.0
    %v1211 = vmax.f32 %v1195, 0.0
    %v1212 = vmax.f32 %v1196, 0.0
    %v1213 = vmax.f32 %v1197, 0.0
    %v1214 = vmax.f32 %v1198, 0.0
    %v1215 = vmax.f32 %v1199, 0.0
    %v1216 = vmax.f32 %v1200, 0.0
    %v1217 = vmax.f32 %v1201, 0.0
    %v1218 = vmax.f32 %v1202, 0.0
    %v1219 = vmax.f32 %v1203, 0.0
    %v1220 = vmax.f32 %v1204, 0.0
    %v1221 = vmax.f32 %v1205, 0.0
    %v1222 = vpack.c.bf16 %v1208, %v1206
    %v1223 = vpack.c.bf16 %v1209, %v1207
    %v1224 = vpack.c.bf16 %v1212, %v1210
    %v1225 = vpack.c.bf16 %v1213, %v1211
    %v1226 = vpack.c.bf16 %v1216, %v1214
    %v1227 = vpack.c.bf16 %v1217, %v1215
    %v1228 = vpack.c.bf16 %v1220, %v1218
    %v1229 = vpack.c.bf16 %v1221, %v1219
    %v1238 = vunpack.c.l.b16 %v1222
    %v1239 = vunpack.c.l.b16 %v1223
    %v1240 = vunpack.c.h.b16 %v1222
    %v1241 = vunpack.c.h.b16 %v1223
    %v1242 = vunpack.c.l.b16 %v1224
    %v1243 = vunpack.c.l.b16 %v1225
    %v1244 = vunpack.c.h.b16 %v1224
    %v1245 = vunpack.c.h.b16 %v1225
    %v1246 = vunpack.c.l.b16 %v1226
    %v1247 = vunpack.c.l.b16 %v1227
    %v1248 = vunpack.c.h.b16 %v1226
    %v1249 = vunpack.c.h.b16 %v1227
    %v1250 = vunpack.c.l.b16 %v1228
    %v1251 = vunpack.c.l.b16 %v1229
    %v1252 = vunpack.c.h.b16 %v1228
    %v1253 = vunpack.c.h.b16 %v1229
    %v1254 = vpack.c.b16 %v1239, %v1238
    %v1255 = vpack.c.b16 %v1241, %v1240
    %v1256 = vpack.c.b16 %v1243, %v1242
    %v1257 = vpack.c.b16 %v1245, %v1244
    %v1258 = vpack.c.b16 %v1247, %v1246
    %v1259 = vpack.c.b16 %v1249, %v1248
    %v1260 = vpack.c.b16 %v1251, %v1250
    %v1261 = vpack.c.b16 %v1253, %v1252
    %1270 = vst [vmem:[%s5] sm:$0xff] %v1254
    %1271 = vst [vmem:[%s5 + $0x8] sm:$0xff] %v1255
    %1272 = vst [vmem:[%s5 + $0x10] sm:$0xff] %v1256
    %1273 = vst [vmem:[%s5 + $0x18] sm:$0xff] %v1257
    %1274 = vst [vmem:[%s5 + $0x20] sm:$0xff] %v1258
    %1275 = vst [vmem:[%s5 + $0x28] sm:$0xff] %v1259
    %1276 = vst [vmem:[%s5 + $0x30] sm:$0xff] %v1260
    %1277 = vst [vmem:[%s5 + $0x38] sm:$0xff] %v1261
    // Predicated region
    $region22: #{generator_forward.12} parent=1 // pred_check
      _
    $region23: #{generator_forward.12} parent=1 // pred_check_branch
      %1279 = sbr.rel (0) target = $region25
    $region24: #{generator_forward.12} parent=1 // pred_region
      _
    $region25: #{generator_forward.12} parent=1 // pred_fallthru
      _
    // Predicated region
    $region26: #{generator_forward.12} parent=1 // pred_check
      _
    $region27: #{generator_forward.12} parent=1 // pred_check_branch
      %1281 = sbr.rel (0) target = $region29
    $region28: #{generator_forward.12} parent=1 // pred_region
      _
    $region29: #{generator_forward.12} parent=1 // pred_fallthru
      _
    %1282 = vsyncpa [#allocation8], 1

// kernel: generator_forward.11
$region0: #{generator_forward.11}
  #allocation0 [shape = 'u32[]', space=smem, size = 0x4, offset = 0x4, fixed_abs, tag = 'smem constant byte address 0x4 - core index']
  #allocation1 [shape = 'u32[144,128]{1,0:T(1,128)}', space=vmem, size = 0x12000, scoped, tag = 'internal scratch']
  #allocation2 [shape = 'u32[2048]{0}', space=vmem, size = 0x2000, scoped, tag = 'scoped memory for generator_forward.11']
  #allocation3 [shape = 'u32[2048]{0}', space=vmem, size = 0x2000, scoped, tag = 'scoped memory for generator_forward.11']
  #allocation4 [shape = 'u32[2048]{0}', space=vmem, size = 0x2000, scoped, tag = 'scoped memory for generator_forward.11']
  #allocation5 [shape = 'u32[2048]{0}', space=vmem, size = 0x2000, scoped, tag = 'scoped memory for generator_forward.11']
  #allocation6 [shape = 'u32[2048]{0}', space=vmem, size = 0x2000, scoped, tag = 'scoped memory for generator_forward.11']
  %s0 = inlined_call_operand.vmem [shape: bf16[32,1024], index: 0, kind: input, shape index: {}]
  %s1 = inlined_call_operand.vmem [shape: f32[32,1], index: 1, kind: input, shape index: {}]
  %s2 = inlined_call_operand.vmem [shape: f32[32,1], index: 2, kind: input, shape index: {}]
  %s3 = inlined_call_operand.vmem [shape: bf16[1024,96], index: 3, kind: input, shape index: {}]
  %s4 = inlined_call_operand.<no memory space> [shape: bf16[], index: 4, kind: input, shape index: {}]
  %s5 = inlined_call_operand.vmem [shape: bf16[32,256], index: 5, kind: output, shape index: {}]
  %s6 = sld [smem:[#allocation0]]
  $region26: #{generator_forward.11} parent=0
    _
  %s8 = ssub.s32 1, %s6
  %s9 = scalar_select 0, %s8, %s6
  %v10 = vstv %s4
  %v11 = vunpack.i.l.bf16 %v10
  %v13 = vunpack.i.h.bf16 %v10
  $region1: #{generator_forward.11} parent=0
    #allocation7 [shape = 'u8[524288]{0}', space=vmem, size = 0x80000, dematerialized = true, scoped, tag = 'FusionAdapter Buffer %fusion.3 = bf16[1024,256]{1,0:T(8,128)(2,1)} fusion(%param_3.35, %param_4.33), kind=kLoop, calls=%fused_computation.23.clone, metadata={op_name="jit(generator_forward)/jit(_pad)/pad" stack_frame_id=38}']
    // Predicated region
    $region2: #{generator_forward.11} parent=1 // pred_check
      _
    $region3: #{generator_forward.11} parent=1 // pred_check_branch
      %16 = sbr.rel (0) target = $region5
    $region4: #{generator_forward.11} parent=1 // pred_region
      _
    $region5: #{generator_forward.11} parent=1 // pred_fallthru
      _
    // Predicated region
    $region6: #{generator_forward.11} parent=1 // pred_check
      _
    $region7: #{generator_forward.11} parent=1 // pred_check_branch
      %18 = sbr.rel (0) target = $region9
    $region8: #{generator_forward.11} parent=1 // pred_region
      _
    $region9: #{generator_forward.11} parent=1 // pred_fallthru
      _
    // Predicated region
    $region10: #{generator_forward.11} parent=1 // pred_check
      _
    $region11: #{generator_forward.11} parent=1 // pred_check_branch
      %20 = sbr.rel (0) target = $region13
    $region12: #{generator_forward.11} parent=1 // pred_region
      _
    $region13: #{generator_forward.11} parent=1 // pred_fallthru
      _
    // Predicated region
    $region14: #{generator_forward.11} parent=1 // pred_check
      _
    $region15: #{generator_forward.11} parent=1 // pred_check_branch
      %22 = sbr.rel (0) target = $region17
    $region16: #{generator_forward.11} parent=1 // pred_region
      _
    $region17: #{generator_forward.11} parent=1 // pred_fallthru
      _
    %s24 = sor.u32 255, 127
    %s25 = sand.u32 %s24, 85
    %s26 = sshrl.u32 %s25, 1
    %s27 = sor.u32 %s25, %s26
    %s28 = sand.u32 51, %s27
    %s29 = sshrl.u32 %s28, 2
    %s30 = sor.u32 %s28, %s29
    %s31 = sand.u32 15, %s30
    %v32 = vld [vmem:[%s3] sm:%s31]
    %v33 = vunpack.c.l.bf16 %v32
    %v34 = vunpack.c.h.bf16 %v32
    %v35 = vlaneseq
    %v36 = vand.u32 %v35, 127
    %vm38 = vcmp.lt.s32.totalorder %v36, 96
    %v39 = vsel %vm38, %v33, %v11
    %v40 = vpack.c.bf16 0.0, %v39
    %42 = vst [vmem:[#allocation7] sm:$0xf] %v40
    %s43 = scalar_lea.vmem [#allocation7], 4
    %v44 = vpack.c.bf16 0.0, %v11
    %46 = vst [vmem:[%s43] sm:$0xf] %v44
    %s47 = scalar_lea.vmem %s3, 4
    %s49 = sor.u32 255, 127
    %s50 = sand.u32 %s49, 85
    %s51 = sshrl.u32 %s50, 1
    %s52 = sor.u32 %s50, %s51
    %s53 = sand.u32 51, %s52
    %s54 = sshrl.u32 %s53, 2
    %s55 = sor.u32 %s53, %s54
    %s56 = sand.u32 15, %s55
    %v57 = vld [vmem:[%s47] sm:%s56]
    %v58 = vunpack.c.l.bf16 %v57
    %v59 = vunpack.c.h.bf16 %v57
    %v60 = vlaneseq
    %v61 = vand.u32 %v60, 127
    %vm63 = vcmp.lt.s32.totalorder %v61, 96
    %v64 = vsel %vm63, %v58, %v11
    %s65 = scalar_lea.vmem [#allocation7], 8
    %v66 = vpack.c.bf16 0.0, %v64
    %68 = vst [vmem:[%s65] sm:$0xf] %v66
    %s69 = scalar_lea.vmem [#allocation7], 12
    %v70 = vpack.c.bf16 0.0, %v11
    %72 = vst [vmem:[%s69] sm:$0xf] %v70
    %s73 = scalar_lea.vmem %s3, 8
    %s75 = sor.u32 255, 127
    %s76 = sand.u32 %s75, 85
    %s77 = sshrl.u32 %s76, 1
    %s78 = sor.u32 %s76, %s77
    %s79 = sand.u32 51, %s78
    %s80 = sshrl.u32 %s79, 2
    %s81 = sor.u32 %s79, %s80
    %s82 = sand.u32 15, %s81
    %v83 = vld [vmem:[%s73] sm:%s82]
    %v84 = vunpack.c.l.bf16 %v83
    %v85 = vunpack.c.h.bf16 %v83
    %v86 = vlaneseq
    %v87 = vand.u32 %v86, 127
    %vm89 = vcmp.lt.s32.totalorder %v87, 96
    %v90 = vsel %vm89, %v84, %v11
    %s91 = scalar_lea.vmem [#allocation7], 16
    %v92 = vpack.c.bf16 0.0, %v90
    %94 = vst [vmem:[%s91] sm:$0xf] %v92
    %s95 = scalar_lea.vmem [#allocation7], 20
    %v96 = vpack.c.bf16 0.0, %v11
    %98 = vst [vmem:[%s95] sm:$0xf] %v96
    %s99 = scalar_lea.vmem %s3, 12
    %s101 = sor.u32 255, 127
    %s102 = sand.u32 %s101, 85
    %s103 = sshrl.u32 %s102, 1
    %s104 = sor.u32 %s102, %s103
    %s105 = sand.u32 51, %s104
    %s106 = sshrl.u32 %s105, 2
    %s107 = sor.u32 %s105, %s106
    %s108 = sand.u32 15, %s107
    %v109 = vld [vmem:[%s99] sm:%s108]
    %v110 = vunpack.c.l.bf16 %v109
    %v111 = vunpack.c.h.bf16 %v109
    %v112 = vlaneseq
    %v113 = vand.u32 %v112, 127
    %vm115 = vcmp.lt.s32.totalorder %v113, 96
    %v116 = vsel %vm115, %v110, %v11
    %s117 = scalar_lea.vmem [#allocation7], 24
    %v118 = vpack.c.bf16 0.0, %v116
    %120 = vst [vmem:[%s117] sm:$0xf] %v118
    %s121 = scalar_lea.vmem [#allocation7], 28
    %v122 = vpack.c.bf16 0.0, %v11
    %124 = vst [vmem:[%s121] sm:$0xf] %v122
    %s125 = scalar_lea.vmem %s3, 16
    %s127 = sor.u32 255, 127
    %s128 = sand.u32 %s127, 85
    %s129 = sshrl.u32 %s128, 1
    %s130 = sor.u32 %s128, %s129
    %s131 = sand.u32 51, %s130
    %s132 = sshrl.u32 %s131, 2
    %s133 = sor.u32 %s131, %s132
    %s134 = sand.u32 15, %s133
    %v135 = vld [vmem:[%s125] sm:%s134]
    %v136 = vunpack.c.l.bf16 %v135
    %v137 = vunpack.c.h.bf16 %v135
    %v138 = vlaneseq
    %v139 = vand.u32 %v138, 127
    %vm141 = vcmp.lt.s32.totalorder %v139, 96
    %v142 = vsel %vm141, %v136, %v11
    %s143 = scalar_lea.vmem [#allocation7], 32
    %v144 = vpack.c.bf16 0.0, %v142
    %146 = vst [vmem:[%s143] sm:$0xf] %v144
    %s147 = scalar_lea.vmem [#allocation7], 36
    %v148 = vpack.c.bf16 0.0, %v11
    %150 = vst [vmem:[%s147] sm:$0xf] %v148
    %s151 = scalar_lea.vmem %s3, 20
    %s153 = sor.u32 255, 127
    %s154 = sand.u32 %s153, 85
    %s155 = sshrl.u32 %s154, 1
    %s156 = sor.u32 %s154, %s155
    %s157 = sand.u32 51, %s156
    %s158 = sshrl.u32 %s157, 2
    %s159 = sor.u32 %s157, %s158
    %s160 = sand.u32 15, %s159
    %v161 = vld [vmem:[%s151] sm:%s160]
    %v162 = vunpack.c.l.bf16 %v161
    %v163 = vunpack.c.h.bf16 %v161
    %v164 = vlaneseq
    %v165 = vand.u32 %v164, 127
    %vm167 = vcmp.lt.s32.totalorder %v165, 96
    %v168 = vsel %vm167, %v162, %v11
    %s169 = scalar_lea.vmem [#allocation7], 40
    %v170 = vpack.c.bf16 0.0, %v168
    %172 = vst [vmem:[%s169] sm:$0xf] %v170
    %s173 = scalar_lea.vmem [#allocation7], 44
    %v174 = vpack.c.bf16 0.0, %v11
    %176 = vst [vmem:[%s173] sm:$0xf] %v174
    %s177 = scalar_lea.vmem %s3, 24
    %s179 = sor.u32 255, 127
    %s180 = sand.u32 %s179, 85
    %s181 = sshrl.u32 %s180, 1
    %s182 = sor.u32 %s180, %s181
    %s183 = sand.u32 51, %s182
    %s184 = sshrl.u32 %s183, 2
    %s185 = sor.u32 %s183, %s184
    %s186 = sand.u32 15, %s185
    %v187 = vld [vmem:[%s177] sm:%s186]
    %v188 = vunpack.c.l.bf16 %v187
    %v189 = vunpack.c.h.bf16 %v187
    %v190 = vlaneseq
    %v191 = vand.u32 %v190, 127
    %vm193 = vcmp.lt.s32.totalorder %v191, 96
    %v194 = vsel %vm193, %v188, %v11
    %s195 = scalar_lea.vmem [#allocation7], 48
    %v196 = vpack.c.bf16 0.0, %v194
    %198 = vst [vmem:[%s195] sm:$0xf] %v196
    %s199 = scalar_lea.vmem [#allocation7], 52
    %v200 = vpack.c.bf16 0.0, %v11
    %202 = vst [vmem:[%s199] sm:$0xf] %v200
    %s203 = scalar_lea.vmem %s3, 28
    %s205 = sor.u32 255, 127
    %s206 = sand.u32 %s205, 85
    %s207 = sshrl.u32 %s206, 1
    %s208 = sor.u32 %s206, %s207
    %s209 = sand.u32 51, %s208
    %s210 = sshrl.u32 %s209, 2
    %s211 = sor.u32 %s209, %s210
    %s212 = sand.u32 15, %s211
    %v213 = vld [vmem:[%s203] sm:%s212]
    %v214 = vunpack.c.l.bf16 %v213
    %v215 = vunpack.c.h.bf16 %v213
    %v216 = vlaneseq
    %v217 = vand.u32 %v216, 127
    %vm219 = vcmp.lt.s32.totalorder %v217, 96
    %v220 = vsel %vm219, %v214, %v11
    %s221 = scalar_lea.vmem [#allocation7], 56
    %v222 = vpack.c.bf16 0.0, %v220
    %224 = vst [vmem:[%s221] sm:$0xf] %v222
    %s225 = scalar_lea.vmem [#allocation7], 60
    %v226 = vpack.c.bf16 0.0, %v11
    %228 = vst [vmem:[%s225] sm:$0xf] %v226
    %s229 = scalar_lea.vmem %s3, 32
    %s231 = sor.u32 255, 127
    %s232 = sand.u32 %s231, 85
    %s233 = sshrl.u32 %s232, 1
    %s234 = sor.u32 %s232, %s233
    %s235 = sand.u32 51, %s234
    %s236 = sshrl.u32 %s235, 2
    %s237 = sor.u32 %s235, %s236
    %s238 = sand.u32 15, %s237
    %v239 = vld [vmem:[%s229] sm:%s238]
    %v240 = vunpack.c.l.bf16 %v239
    %v241 = vunpack.c.h.bf16 %v239
    %v242 = vlaneseq
    %v243 = vand.u32 %v242, 127
    %vm245 = vcmp.lt.s32.totalorder %v243, 96
    %v246 = vsel %vm245, %v240, %v11
    %s247 = scalar_lea.vmem [#allocation7], 64
    %v248 = vpack.c.bf16 0.0, %v246
    %250 = vst [vmem:[%s247] sm:$0xf] %v248
    %s251 = scalar_lea.vmem [#allocation7], 68
    %v252 = vpack.c.bf16 0.0, %v11
    %254 = vst [vmem:[%s251] sm:$0xf] %v252
    %s255 = scalar_lea.vmem %s3, 36
    %s257 = sor.u32 255, 127
    %s258 = sand.u32 %s257, 85
    %s259 = sshrl.u32 %s258, 1
    %s260 = sor.u32 %s258, %s259
    %s261 = sand.u32 51, %s260
    %s262 = sshrl.u32 %s261, 2
    %s263 = sor.u32 %s261, %s262
    %s264 = sand.u32 15, %s263
    %v265 = vld [vmem:[%s255] sm:%s264]
    %v266 = vunpack.c.l.bf16 %v265
    %v267 = vunpack.c.h.bf16 %v265
    %v268 = vlaneseq
    %v269 = vand.u32 %v268, 127
    %vm271 = vcmp.lt.s32.totalorder %v269, 96
    %v272 = vsel %vm271, %v266, %v11
    %s273 = scalar_lea.vmem [#allocation7], 72
    %v274 = vpack.c.bf16 0.0, %v272
    %276 = vst [vmem:[%s273] sm:$0xf] %v274
    %s277 = scalar_lea.vmem [#allocation7], 76
    %v278 = vpack.c.bf16 0.0, %v11
    %280 = vst [vmem:[%s277] sm:$0xf] %v278
    %s281 = scalar_lea.vmem %s3, 40
    %s283 = sor.u32 255, 127
    %s284 = sand.u32 %s283, 85
    %s285 = sshrl.u32 %s284, 1
    %s286 = sor.u32 %s284, %s285
    %s287 = sand.u32 51, %s286
    %s288 = sshrl.u32 %s287, 2
    %s289 = sor.u32 %s287, %s288
    %s290 = sand.u32 15, %s289
    %v291 = vld [vmem:[%s281] sm:%s290]
    %v292 = vunpack.c.l.bf16 %v291
    %v293 = vunpack.c.h.bf16 %v291
    %v294 = vlaneseq
    %v295 = vand.u32 %v294, 127
    %vm297 = vcmp.lt.s32.totalorder %v295, 96
    %v298 = vsel %vm297, %v292, %v11
    %s299 = scalar_lea.vmem [#allocation7], 80
    %v300 = vpack.c.bf16 0.0, %v298
    %302 = vst [vmem:[%s299] sm:$0xf] %v300
    %s303 = scalar_lea.vmem [#allocation7], 84
    %v304 = vpack.c.bf16 0.0, %v11
    %306 = vst [vmem:[%s303] sm:$0xf] %v304
    %s307 = scalar_lea.vmem %s3, 44
    %s309 = sor.u32 255, 127
    %s310 = sand.u32 %s309, 85
    %s311 = sshrl.u32 %s310, 1
    %s312 = sor.u32 %s310, %s311
    %s313 = sand.u32 51, %s312
    %s314 = sshrl.u32 %s313, 2
    %s315 = sor.u32 %s313, %s314
    %s316 = sand.u32 15, %s315
    %v317 = vld [vmem:[%s307] sm:%s316]
    %v318 = vunpack.c.l.bf16 %v317
    %v319 = vunpack.c.h.bf16 %v317
    %v320 = vlaneseq
    %v321 = vand.u32 %v320, 127
    %vm323 = vcmp.lt.s32.totalorder %v321, 96
    %v324 = vsel %vm323, %v318, %v11
    %s325 = scalar_lea.vmem [#allocation7], 88
    %v326 = vpack.c.bf16 0.0, %v324
    %328 = vst [vmem:[%s325] sm:$0xf] %v326
    %s329 = scalar_lea.vmem [#allocation7], 92
    %v330 = vpack.c.bf16 0.0, %v11
    %332 = vst [vmem:[%s329] sm:$0xf] %v330
    %s333 = scalar_lea.vmem %s3, 48
    %s335 = sor.u32 255, 127
    %s336 = sand.u32 %s335, 85
    %s337 = sshrl.u32 %s336, 1
    %s338 = sor.u32 %s336, %s337
    %s339 = sand.u32 51, %s338
    %s340 = sshrl.u32 %s339, 2
    %s341 = sor.u32 %s339, %s340
    %s342 = sand.u32 15, %s341
    %v343 = vld [vmem:[%s333] sm:%s342]
    %v344 = vunpack.c.l.bf16 %v343
    %v345 = vunpack.c.h.bf16 %v343
    %v346 = vlaneseq
    %v347 = vand.u32 %v346, 127
    %vm349 = vcmp.lt.s32.totalorder %v347, 96
    %v350 = vsel %vm349, %v344, %v11
    %s351 = scalar_lea.vmem [#allocation7], 96
    %v352 = vpack.c.bf16 0.0, %v350
    %354 = vst [vmem:[%s351] sm:$0xf] %v352
    %s355 = scalar_lea.vmem [#allocation7], 100
    %v356 = vpack.c.bf16 0.0, %v11
    %358 = vst [vmem:[%s355] sm:$0xf] %v356
    %s359 = scalar_lea.vmem %s3, 52
    %s361 = sor.u32 255, 127
    %s362 = sand.u32 %s361, 85
    %s363 = sshrl.u32 %s362, 1
    %s364 = sor.u32 %s362, %s363
    %s365 = sand.u32 51, %s364
    %s366 = sshrl.u32 %s365, 2
    %s367 = sor.u32 %s365, %s366
    %s368 = sand.u32 15, %s367
    %v369 = vld [vmem:[%s359] sm:%s368]
    %v370 = vunpack.c.l.bf16 %v369
    %v371 = vunpack.c.h.bf16 %v369
    %v372 = vlaneseq
    %v373 = vand.u32 %v372, 127
    %vm375 = vcmp.lt.s32.totalorder %v373, 96
    %v376 = vsel %vm375, %v370, %v11
    %s377 = scalar_lea.vmem [#allocation7], 104
    %v378 = vpack.c.bf16 0.0, %v376
    %380 = vst [vmem:[%s377] sm:$0xf] %v378
    %s381 = scalar_lea.vmem [#allocation7], 108
    %v382 = vpack.c.bf16 0.0, %v11
    %384 = vst [vmem:[%s381] sm:$0xf] %v382
    %s385 = scalar_lea.vmem %s3, 56
    %s387 = sor.u32 255, 127
    %s388 = sand.u32 %s387, 85
    %s389 = sshrl.u32 %s388, 1
    %s390 = sor.u32 %s388, %s389
    %s391 = sand.u32 51, %s390
    %s392 = sshrl.u32 %s391, 2
    %s393 = sor.u32 %s391, %s392
    %s394 = sand.u32 15, %s393
    %v395 = vld [vmem:[%s385] sm:%s394]
    %v396 = vunpack.c.l.bf16 %v395
    %v397 = vunpack.c.h.bf16 %v395
    %v398 = vlaneseq
    %v399 = vand.u32 %v398, 127
    %vm401 = vcmp.lt.s32.totalorder %v399, 96
    %v402 = vsel %vm401, %v396, %v11
    %s403 = scalar_lea.vmem [#allocation7], 112
    %v404 = vpack.c.bf16 0.0, %v402
    %406 = vst [vmem:[%s403] sm:$0xf] %v404
    %s407 = scalar_lea.vmem [#allocation7], 116
    %v408 = vpack.c.bf16 0.0, %v11
    %410 = vst [vmem:[%s407] sm:$0xf] %v408
    %s411 = scalar_lea.vmem %s3, 60
    %s413 = sor.u32 255, 127
    %s414 = sand.u32 %s413, 85
    %s415 = sshrl.u32 %s414, 1
    %s416 = sor.u32 %s414, %s415
    %s417 = sand.u32 51, %s416
    %s418 = sshrl.u32 %s417, 2
    %s419 = sor.u32 %s417, %s418
    %s420 = sand.u32 15, %s419
    %v421 = vld [vmem:[%s411] sm:%s420]
    %v422 = vunpack.c.l.bf16 %v421
    %v423 = vunpack.c.h.bf16 %v421
    %v424 = vlaneseq
    %v425 = vand.u32 %v424, 127
    %vm427 = vcmp.lt.s32.totalorder %v425, 96
    %v428 = vsel %vm427, %v422, %v11
    %s429 = scalar_lea.vmem [#allocation7], 120
    %v430 = vpack.c.bf16 0.0, %v428
    %432 = vst [vmem:[%s429] sm:$0xf] %v430
    %s433 = scalar_lea.vmem [#allocation7], 124
    %v434 = vpack.c.bf16 0.0, %v11
    %436 = vst [vmem:[%s433] sm:$0xf] %v434
    %s437 = scalar_lea.vmem %s3, 64
    %s439 = sor.u32 255, 127
    %s440 = sand.u32 %s439, 85
    %s441 = sshrl.u32 %s440, 1
    %s442 = sor.u32 %s440, %s441
    %s443 = sand.u32 51, %s442
    %s444 = sshrl.u32 %s443, 2
    %s445 = sor.u32 %s443, %s444
    %s446 = sand.u32 15, %s445
    %v447 = vld [vmem:[%s437] sm:%s446]
    %v448 = vunpack.c.l.bf16 %v447
    %v449 = vunpack.c.h.bf16 %v447
    %v450 = vlaneseq
    %v451 = vand.u32 %v450, 127
    %vm453 = vcmp.lt.s32.totalorder %v451, 96
    %v454 = vsel %vm453, %v448, %v11
    %s455 = scalar_lea.vmem [#allocation7], 128
    %v456 = vpack.c.bf16 0.0, %v454
    %458 = vst [vmem:[%s455] sm:$0xf] %v456
    %s459 = scalar_lea.vmem [#allocation7], 132
    %v460 = vpack.c.bf16 0.0, %v11
    %462 = vst [vmem:[%s459] sm:$0xf] %v460
    %s463 = scalar_lea.vmem %s3, 68
    %s465 = sor.u32 255, 127
    %s466 = sand.u32 %s465, 85
    %s467 = sshrl.u32 %s466, 1
    %s468 = sor.u32 %s466, %s467
    %s469 = sand.u32 51, %s468
    %s470 = sshrl.u32 %s469, 2
    %s471 = sor.u32 %s469, %s470
    %s472 = sand.u32 15, %s471
    %v473 = vld [vmem:[%s463] sm:%s472]
    %v474 = vunpack.c.l.bf16 %v473
    %v475 = vunpack.c.h.bf16 %v473
    %v476 = vlaneseq
    %v477 = vand.u32 %v476, 127
    %vm479 = vcmp.lt.s32.totalorder %v477, 96
    %v480 = vsel %vm479, %v474, %v11
    %s481 = scalar_lea.vmem [#allocation7], 136
    %v482 = vpack.c.bf16 0.0, %v480
    %484 = vst [vmem:[%s481] sm:$0xf] %v482
    %s485 = scalar_lea.vmem [#allocation7], 140
    %v486 = vpack.c.bf16 0.0, %v11
    %488 = vst [vmem:[%s485] sm:$0xf] %v486
    %s489 = scalar_lea.vmem %s3, 72
    %s491 = sor.u32 255, 127
    %s492 = sand.u32 %s491, 85
    %s493 = sshrl.u32 %s492, 1
    %s494 = sor.u32 %s492, %s493
    %s495 = sand.u32 51, %s494
    %s496 = sshrl.u32 %s495, 2
    %s497 = sor.u32 %s495, %s496
    %s498 = sand.u32 15, %s497
    %v499 = vld [vmem:[%s489] sm:%s498]
    %v500 = vunpack.c.l.bf16 %v499
    %v501 = vunpack.c.h.bf16 %v499
    %v502 = vlaneseq
    %v503 = vand.u32 %v502, 127
    %vm505 = vcmp.lt.s32.totalorder %v503, 96
    %v506 = vsel %vm505, %v500, %v11
    %s507 = scalar_lea.vmem [#allocation7], 144
    %v508 = vpack.c.bf16 0.0, %v506
    %510 = vst [vmem:[%s507] sm:$0xf] %v508
    %s511 = scalar_lea.vmem [#allocation7], 148
    %v512 = vpack.c.bf16 0.0, %v11
    %514 = vst [vmem:[%s511] sm:$0xf] %v512
    %s515 = scalar_lea.vmem %s3, 76
    %s517 = sor.u32 255, 127
    %s518 = sand.u32 %s517, 85
    %s519 = sshrl.u32 %s518, 1
    %s520 = sor.u32 %s518, %s519
    %s521 = sand.u32 51, %s520
    %s522 = sshrl.u32 %s521, 2
    %s523 = sor.u32 %s521, %s522
    %s524 = sand.u32 15, %s523
    %v525 = vld [vmem:[%s515] sm:%s524]
    %v526 = vunpack.c.l.bf16 %v525
    %v527 = vunpack.c.h.bf16 %v525
    %v528 = vlaneseq
    %v529 = vand.u32 %v528, 127
    %vm531 = vcmp.lt.s32.totalorder %v529, 96
    %v532 = vsel %vm531, %v526, %v11
    %s533 = scalar_lea.vmem [#allocation7], 152
    %v534 = vpack.c.bf16 0.0, %v532
    %536 = vst [vmem:[%s533] sm:$0xf] %v534
    %s537 = scalar_lea.vmem [#allocation7], 156
    %v538 = vpack.c.bf16 0.0, %v11
    %540 = vst [vmem:[%s537] sm:$0xf] %v538
    %s541 = scalar_lea.vmem %s3, 80
    %s543 = sor.u32 255, 127
    %s544 = sand.u32 %s543, 85
    %s545 = sshrl.u32 %s544, 1
    %s546 = sor.u32 %s544, %s545
    %s547 = sand.u32 51, %s546
    %s548 = sshrl.u32 %s547, 2
    %s549 = sor.u32 %s547, %s548
    %s550 = sand.u32 15, %s549
    %v551 = vld [vmem:[%s541] sm:%s550]
    %v552 = vunpack.c.l.bf16 %v551
    %v553 = vunpack.c.h.bf16 %v551
    %v554 = vlaneseq
    %v555 = vand.u32 %v554, 127
    %vm557 = vcmp.lt.s32.totalorder %v555, 96
    %v558 = vsel %vm557, %v552, %v11
    %s559 = scalar_lea.vmem [#allocation7], 160
    %v560 = vpack.c.bf16 0.0, %v558
    %562 = vst [vmem:[%s559] sm:$0xf] %v560
    %s563 = scalar_lea.vmem [#allocation7], 164
    %v564 = vpack.c.bf16 0.0, %v11
    %566 = vst [vmem:[%s563] sm:$0xf] %v564
    %s567 = scalar_lea.vmem %s3, 84
    %s569 = sor.u32 255, 127
    %s570 = sand.u32 %s569, 85
    %s571 = sshrl.u32 %s570, 1
    %s572 = sor.u32 %s570, %s571
    %s573 = sand.u32 51, %s572
    %s574 = sshrl.u32 %s573, 2
    %s575 = sor.u32 %s573, %s574
    %s576 = sand.u32 15, %s575
    %v577 = vld [vmem:[%s567] sm:%s576]
    %v578 = vunpack.c.l.bf16 %v577
    %v579 = vunpack.c.h.bf16 %v577
    %v580 = vlaneseq
    %v581 = vand.u32 %v580, 127
    %vm583 = vcmp.lt.s32.totalorder %v581, 96
    %v584 = vsel %vm583, %v578, %v11
    %s585 = scalar_lea.vmem [#allocation7], 168
    %v586 = vpack.c.bf16 0.0, %v584
    %588 = vst [vmem:[%s585] sm:$0xf] %v586
    %s589 = scalar_lea.vmem [#allocation7], 172
    %v590 = vpack.c.bf16 0.0, %v11
    %592 = vst [vmem:[%s589] sm:$0xf] %v590
    %s593 = scalar_lea.vmem %s3, 88
    %s595 = sor.u32 255, 127
    %s596 = sand.u32 %s595, 85
    %s597 = sshrl.u32 %s596, 1
    %s598 = sor.u32 %s596, %s597
    %s599 = sand.u32 51, %s598
    %s600 = sshrl.u32 %s599, 2
    %s601 = sor.u32 %s599, %s600
    %s602 = sand.u32 15, %s601
    %v603 = vld [vmem:[%s593] sm:%s602]
    %v604 = vunpack.c.l.bf16 %v603
    %v605 = vunpack.c.h.bf16 %v603
    %v606 = vlaneseq
    %v607 = vand.u32 %v606, 127
    %vm609 = vcmp.lt.s32.totalorder %v607, 96
    %v610 = vsel %vm609, %v604, %v11
    %s611 = scalar_lea.vmem [#allocation7], 176
    %v612 = vpack.c.bf16 0.0, %v610
    %614 = vst [vmem:[%s611] sm:$0xf] %v612
    %s615 = scalar_lea.vmem [#allocation7], 180
    %v616 = vpack.c.bf16 0.0, %v11
    %618 = vst [vmem:[%s615] sm:$0xf] %v616
    %s619 = scalar_lea.vmem %s3, 92
    %s621 = sor.u32 255, 127
    %s622 = sand.u32 %s621, 85
    %s623 = sshrl.u32 %s622, 1
    %s624 = sor.u32 %s622, %s623
    %s625 = sand.u32 51, %s624
    %s626 = sshrl.u32 %s625, 2
    %s627 = sor.u32 %s625, %s626
    %s628 = sand.u32 15, %s627
    %v629 = vld [vmem:[%s619] sm:%s628]
    %v630 = vunpack.c.l.bf16 %v629
    %v631 = vunpack.c.h.bf16 %v629
    %v632 = vlaneseq
    %v633 = vand.u32 %v632, 127
    %vm635 = vcmp.lt.s32.totalorder %v633, 96
    %v636 = vsel %vm635, %v630, %v11
    %s637 = scalar_lea.vmem [#allocation7], 184
    %v638 = vpack.c.bf16 0.0, %v636
    %640 = vst [vmem:[%s637] sm:$0xf] %v638
    %s641 = scalar_lea.vmem [#allocation7], 188
    %v642 = vpack.c.bf16 0.0, %v11
    %644 = vst [vmem:[%s641] sm:$0xf] %v642
    %s645 = scalar_lea.vmem %s3, 96
    %s647 = sor.u32 255, 127
    %s648 = sand.u32 %s647, 85
    %s649 = sshrl.u32 %s648, 1
    %s650 = sor.u32 %s648, %s649
    %s651 = sand.u32 51, %s650
    %s652 = sshrl.u32 %s651, 2
    %s653 = sor.u32 %s651, %s652
    %s654 = sand.u32 15, %s653
    %v655 = vld [vmem:[%s645] sm:%s654]
    %v656 = vunpack.c.l.bf16 %v655
    %v657 = vunpack.c.h.bf16 %v655
    %v658 = vlaneseq
    %v659 = vand.u32 %v658, 127
    %vm661 = vcmp.lt.s32.totalorder %v659, 96
    %v662 = vsel %vm661, %v656, %v11
    %s663 = scalar_lea.vmem [#allocation7], 192
    %v664 = vpack.c.bf16 0.0, %v662
    %666 = vst [vmem:[%s663] sm:$0xf] %v664
    %s667 = scalar_lea.vmem [#allocation7], 196
    %v668 = vpack.c.bf16 0.0, %v11
    %670 = vst [vmem:[%s667] sm:$0xf] %v668
    %s671 = scalar_lea.vmem %s3, 100
    %s673 = sor.u32 255, 127
    %s674 = sand.u32 %s673, 85
    %s675 = sshrl.u32 %s674, 1
    %s676 = sor.u32 %s674, %s675
    %s677 = sand.u32 51, %s676
    %s678 = sshrl.u32 %s677, 2
    %s679 = sor.u32 %s677, %s678
    %s680 = sand.u32 15, %s679
    %v681 = vld [vmem:[%s671] sm:%s680]
    %v682 = vunpack.c.l.bf16 %v681
    %v683 = vunpack.c.h.bf16 %v681
    %v684 = vlaneseq
    %v685 = vand.u32 %v684, 127
    %vm687 = vcmp.lt.s32.totalorder %v685, 96
    %v688 = vsel %vm687, %v682, %v11
    %s689 = scalar_lea.vmem [#allocation7], 200
    %v690 = vpack.c.bf16 0.0, %v688
    %692 = vst [vmem:[%s689] sm:$0xf] %v690
    %s693 = scalar_lea.vmem [#allocation7], 204
    %v694 = vpack.c.bf16 0.0, %v11
    %696 = vst [vmem:[%s693] sm:$0xf] %v694
    %s697 = scalar_lea.vmem %s3, 104
    %s699 = sor.u32 255, 127
    %s700 = sand.u32 %s699, 85
    %s701 = sshrl.u32 %s700, 1
    %s702 = sor.u32 %s700, %s701
    %s703 = sand.u32 51, %s702
    %s704 = sshrl.u32 %s703, 2
    %s705 = sor.u32 %s703, %s704
    %s706 = sand.u32 15, %s705
    %v707 = vld [vmem:[%s697] sm:%s706]
    %v708 = vunpack.c.l.bf16 %v707
    %v709 = vunpack.c.h.bf16 %v707
    %v710 = vlaneseq
    %v711 = vand.u32 %v710, 127
    %vm713 = vcmp.lt.s32.totalorder %v711, 96
    %v714 = vsel %vm713, %v708, %v11
    %s715 = scalar_lea.vmem [#allocation7], 208
    %v716 = vpack.c.bf16 0.0, %v714
    %718 = vst [vmem:[%s715] sm:$0xf] %v716
    %s719 = scalar_lea.vmem [#allocation7], 212
    %v720 = vpack.c.bf16 0.0, %v11
    %722 = vst [vmem:[%s719] sm:$0xf] %v720
    %s723 = scalar_lea.vmem %s3, 108
    %s725 = sor.u32 255, 127
    %s726 = sand.u32 %s725, 85
    %s727 = sshrl.u32 %s726, 1
    %s728 = sor.u32 %s726, %s727
    %s729 = sand.u32 51, %s728
    %s730 = sshrl.u32 %s729, 2
    %s731 = sor.u32 %s729, %s730
    %s732 = sand.u32 15, %s731
    %v733 = vld [vmem:[%s723] sm:%s732]
    %v734 = vunpack.c.l.bf16 %v733
    %v735 = vunpack.c.h.bf16 %v733
    %v736 = vlaneseq
    %v737 = vand.u32 %v736, 127
    %vm739 = vcmp.lt.s32.totalorder %v737, 96
    %v740 = vsel %vm739, %v734, %v11
    %s741 = scalar_lea.vmem [#allocation7], 216
    %v742 = vpack.c.bf16 0.0, %v740
    %744 = vst [vmem:[%s741] sm:$0xf] %v742
    %s745 = scalar_lea.vmem [#allocation7], 220
    %v746 = vpack.c.bf16 0.0, %v11
    %748 = vst [vmem:[%s745] sm:$0xf] %v746
    %s749 = scalar_lea.vmem %s3, 112
    %s751 = sor.u32 255, 127
    %s752 = sand.u32 %s751, 85
    %s753 = sshrl.u32 %s752, 1
    %s754 = sor.u32 %s752, %s753
    %s755 = sand.u32 51, %s754
    %s756 = sshrl.u32 %s755, 2
    %s757 = sor.u32 %s755, %s756
    %s758 = sand.u32 15, %s757
    %v759 = vld [vmem:[%s749] sm:%s758]
    %v760 = vunpack.c.l.bf16 %v759
    %v761 = vunpack.c.h.bf16 %v759
    %v762 = vlaneseq
    %v763 = vand.u32 %v762, 127
    %vm765 = vcmp.lt.s32.totalorder %v763, 96
    %v766 = vsel %vm765, %v760, %v11
    %s767 = scalar_lea.vmem [#allocation7], 224
    %v768 = vpack.c.bf16 0.0, %v766
    %770 = vst [vmem:[%s767] sm:$0xf] %v768
    %s771 = scalar_lea.vmem [#allocation7], 228
    %v772 = vpack.c.bf16 0.0, %v11
    %774 = vst [vmem:[%s771] sm:$0xf] %v772
    %s775 = scalar_lea.vmem %s3, 116
    %s777 = sor.u32 255, 127
    %s778 = sand.u32 %s777, 85
    %s779 = sshrl.u32 %s778, 1
    %s780 = sor.u32 %s778, %s779
    %s781 = sand.u32 51, %s780
    %s782 = sshrl.u32 %s781, 2
    %s783 = sor.u32 %s781, %s782
    %s784 = sand.u32 15, %s783
    %v785 = vld [vmem:[%s775] sm:%s784]
    %v786 = vunpack.c.l.bf16 %v785
    %v787 = vunpack.c.h.bf16 %v785
    %v788 = vlaneseq
    %v789 = vand.u32 %v788, 127
    %vm791 = vcmp.lt.s32.totalorder %v789, 96
    %v792 = vsel %vm791, %v786, %v11
    %s793 = scalar_lea.vmem [#allocation7], 232
    %v794 = vpack.c.bf16 0.0, %v792
    %796 = vst [vmem:[%s793] sm:$0xf] %v794
    %s797 = scalar_lea.vmem [#allocation7], 236
    %v798 = vpack.c.bf16 0.0, %v11
    %800 = vst [vmem:[%s797] sm:$0xf] %v798
    %s801 = scalar_lea.vmem %s3, 120
    %s803 = sor.u32 255, 127
    %s804 = sand.u32 %s803, 85
    %s805 = sshrl.u32 %s804, 1
    %s806 = sor.u32 %s804, %s805
    %s807 = sand.u32 51, %s806
    %s808 = sshrl.u32 %s807, 2
    %s809 = sor.u32 %s807, %s808
    %s810 = sand.u32 15, %s809
    %v811 = vld [vmem:[%s801] sm:%s810]
    %v812 = vunpack.c.l.bf16 %v811
    %v813 = vunpack.c.h.bf16 %v811
    %v814 = vlaneseq
    %v815 = vand.u32 %v814, 127
    %vm817 = vcmp.lt.s32.totalorder %v815, 96
    %v818 = vsel %vm817, %v812, %v11
    %s819 = scalar_lea.vmem [#allocation7], 240
    %v820 = vpack.c.bf16 0.0, %v818
    %822 = vst [vmem:[%s819] sm:$0xf] %v820
    %s823 = scalar_lea.vmem [#allocation7], 244
    %v824 = vpack.c.bf16 0.0, %v11
    %826 = vst [vmem:[%s823] sm:$0xf] %v824
    %s827 = scalar_lea.vmem %s3, 124
    %s829 = sor.u32 255, 127
    %s830 = sand.u32 %s829, 85
    %s831 = sshrl.u32 %s830, 1
    %s832 = sor.u32 %s830, %s831
    %s833 = sand.u32 51, %s832
    %s834 = sshrl.u32 %s833, 2
    %s835 = sor.u32 %s833, %s834
    %s836 = sand.u32 15, %s835
    %v837 = vld [vmem:[%s827] sm:%s836]
    %v838 = vunpack.c.l.bf16 %v837
    %v839 = vunpack.c.h.bf16 %v837
    %v840 = vlaneseq
    %v841 = vand.u32 %v840, 127
    %vm843 = vcmp.lt.s32.totalorder %v841, 96
    %v844 = vsel %vm843, %v838, %v11
    %s845 = scalar_lea.vmem [#allocation7], 248
    %v846 = vpack.c.bf16 0.0, %v844
    %848 = vst [vmem:[%s845] sm:$0xf] %v846
    %s849 = scalar_lea.vmem [#allocation7], 252
    %v850 = vpack.c.bf16 0.0, %v11
    %852 = vst [vmem:[%s849] sm:$0xf] %v850
    %s853 = scalar_lea.vmem %s3, 128
    %s855 = sor.u32 255, 127
    %s856 = sand.u32 %s855, 85
    %s857 = sshrl.u32 %s856, 1
    %s858 = sor.u32 %s856, %s857
    %s859 = sand.u32 51, %s858
    %s860 = sshrl.u32 %s859, 2
    %s861 = sor.u32 %s859, %s860
    %s862 = sand.u32 15, %s861
    %v863 = vld [vmem:[%s853] sm:%s862]
    %v864 = vunpack.c.l.bf16 %v863
    %v865 = vunpack.c.h.bf16 %v863
    %v866 = vlaneseq
    %v867 = vand.u32 %v866, 127
    %vm869 = vcmp.lt.s32.totalorder %v867, 96
    %v870 = vsel %vm869, %v864, %v11
    %s871 = scalar_lea.vmem [#allocation7], 256
    %v872 = vpack.c.bf16 0.0, %v870
    %874 = vst [vmem:[%s871] sm:$0xf] %v872
    %s875 = scalar_lea.vmem [#allocation7], 260
    %v876 = vpack.c.bf16 0.0, %v11
    %878 = vst [vmem:[%s875] sm:$0xf] %v876
    %s879 = scalar_lea.vmem %s3, 132
    %s881 = sor.u32 255, 127
    %s882 = sand.u32 %s881, 85
    %s883 = sshrl.u32 %s882, 1
    %s884 = sor.u32 %s882, %s883
    %s885 = sand.u32 51, %s884
    %s886 = sshrl.u32 %s885, 2
    %s887 = sor.u32 %s885, %s886
    %s888 = sand.u32 15, %s887
    %v889 = vld [vmem:[%s879] sm:%s888]
    %v890 = vunpack.c.l.bf16 %v889
    %v891 = vunpack.c.h.bf16 %v889
    %v892 = vlaneseq
    %v893 = vand.u32 %v892, 127
    %vm895 = vcmp.lt.s32.totalorder %v893, 96
    %v896 = vsel %vm895, %v890, %v11
    %s897 = scalar_lea.vmem [#allocation7], 264
    %v898 = vpack.c.bf16 0.0, %v896
    %900 = vst [vmem:[%s897] sm:$0xf] %v898
    %s901 = scalar_lea.vmem [#allocation7], 268
    %v902 = vpack.c.bf16 0.0, %v11
    %904 = vst [vmem:[%s901] sm:$0xf] %v902
    %s905 = scalar_lea.vmem %s3, 136
    %s907 = sor.u32 255, 127
    %s908 = sand.u32 %s907, 85
    %s909 = sshrl.u32 %s908, 1
    %s910 = sor.u32 %s908, %s909
    %s911 = sand.u32 51, %s910
    %s912 = sshrl.u32 %s911, 2
    %s913 = sor.u32 %s911, %s912
    %s914 = sand.u32 15, %s913
    %v915 = vld [vmem:[%s905] sm:%s914]
    %v916 = vunpack.c.l.bf16 %v915
    %v917 = vunpack.c.h.bf16 %v915
    %v918 = vlaneseq
    %v919 = vand.u32 %v918, 127
    %vm921 = vcmp.lt.s32.totalorder %v919, 96
    %v922 = vsel %vm921, %v916, %v11
    %s923 = scalar_lea.vmem [#allocation7], 272
    %v924 = vpack.c.bf16 0.0, %v922
    %926 = vst [vmem:[%s923] sm:$0xf] %v924
    %s927 = scalar_lea.vmem [#allocation7], 276
    %v928 = vpack.c.bf16 0.0, %v11
    %930 = vst [vmem:[%s927] sm:$0xf] %v928
    %s931 = scalar_lea.vmem %s3, 140
    %s933 = sor.u32 255, 127
    %s934 = sand.u32 %s933, 85
    %s935 = sshrl.u32 %s934, 1
    %s936 = sor.u32 %s934, %s935
    %s937 = sand.u32 51, %s936
    %s938 = sshrl.u32 %s937, 2
    %s939 = sor.u32 %s937, %s938
    %s940 = sand.u32 15, %s939
    %v941 = vld [vmem:[%s931] sm:%s940]
    %v942 = vunpack.c.l.bf16 %v941
    %v943 = vunpack.c.h.bf16 %v941
    %v944 = vlaneseq
    %v945 = vand.u32 %v944, 127
    %vm947 = vcmp.lt.s32.totalorder %v945, 96
    %v948 = vsel %vm947, %v942, %v11
    %s949 = scalar_lea.vmem [#allocation7], 280
    %v950 = vpack.c.bf16 0.0, %v948
    %952 = vst [vmem:[%s949] sm:$0xf] %v950
    %s953 = scalar_lea.vmem [#allocation7], 284
    %v954 = vpack.c.bf16 0.0, %v11
    %956 = vst [vmem:[%s953] sm:$0xf] %v954
    %s957 = scalar_lea.vmem %s3, 144
    %s959 = sor.u32 255, 127
    %s960 = sand.u32 %s959, 85
    %s961 = sshrl.u32 %s960, 1
    %s962 = sor.u32 %s960, %s961
    %s963 = sand.u32 51, %s962
    %s964 = sshrl.u32 %s963, 2
    %s965 = sor.u32 %s963, %s964
    %s966 = sand.u32 15, %s965
    %v967 = vld [vmem:[%s957] sm:%s966]
    %v968 = vunpack.c.l.bf16 %v967
    %v969 = vunpack.c.h.bf16 %v967
    %v970 = vlaneseq
    %v971 = vand.u32 %v970, 127
    %vm973 = vcmp.lt.s32.totalorder %v971, 96
    %v974 = vsel %vm973, %v968, %v11
    %s975 = scalar_lea.vmem [#allocation7], 288
    %v976 = vpack.c.bf16 0.0, %v974
    %978 = vst [vmem:[%s975] sm:$0xf] %v976
    %s979 = scalar_lea.vmem [#allocation7], 292
    %v980 = vpack.c.bf16 0.0, %v11
    %982 = vst [vmem:[%s979] sm:$0xf] %v980
    %s983 = scalar_lea.vmem %s3, 148
    %s985 = sor.u32 255, 127
    %s986 = sand.u32 %s985, 85
    %s987 = sshrl.u32 %s986, 1
    %s988 = sor.u32 %s986, %s987
    %s989 = sand.u32 51, %s988
    %s990 = sshrl.u32 %s989, 2
    %s991 = sor.u32 %s989, %s990
    %s992 = sand.u32 15, %s991
    %v993 = vld [vmem:[%s983] sm:%s992]
    %v994 = vunpack.c.l.bf16 %v993
    %v995 = vunpack.c.h.bf16 %v993
    %v996 = vlaneseq
    %v997 = vand.u32 %v996, 127
    %vm999 = vcmp.lt.s32.totalorder %v997, 96
    %v1000 = vsel %vm999, %v994, %v11
    %s1001 = scalar_lea.vmem [#allocation7], 296
    %v1002 = vpack.c.bf16 0.0, %v1000
    %1004 = vst [vmem:[%s1001] sm:$0xf] %v1002
    %s1005 = scalar_lea.vmem [#allocation7], 300
    %v1006 = vpack.c.bf16 0.0, %v11
    %1008 = vst [vmem:[%s1005] sm:$0xf] %v1006
    %s1009 = scalar_lea.vmem %s3, 152
    %s1011 = sor.u32 255, 127
    %s1012 = sand.u32 %s1011, 85
    %s1013 = sshrl.u32 %s1012, 1
    %s1014 = sor.u32 %s1012, %s1013
    %s1015 = sand.u32 51, %s1014
    %s1016 = sshrl.u32 %s1015, 2
    %s1017 = sor.u32 %s1015, %s1016
    %s1018 = sand.u32 15, %s1017
    %v1019 = vld [vmem:[%s1009] sm:%s1018]
    %v1020 = vunpack.c.l.bf16 %v1019
    %v1021 = vunpack.c.h.bf16 %v1019
    %v1022 = vlaneseq
    %v1023 = vand.u32 %v1022, 127
    %vm1025 = vcmp.lt.s32.totalorder %v1023, 96
    %v1026 = vsel %vm1025, %v1020, %v11
    %s1027 = scalar_lea.vmem [#allocation7], 304
    %v1028 = vpack.c.bf16 0.0, %v1026
    %1030 = vst [vmem:[%s1027] sm:$0xf] %v1028
    %s1031 = scalar_lea.vmem [#allocation7], 308
    %v1032 = vpack.c.bf16 0.0, %v11
    %1034 = vst [vmem:[%s1031] sm:$0xf] %v1032
    %s1035 = scalar_lea.vmem %s3, 156
    %s1037 = sor.u32 255, 127
    %s1038 = sand.u32 %s1037, 85
    %s1039 = sshrl.u32 %s1038, 1
    %s1040 = sor.u32 %s1038, %s1039
    %s1041 = sand.u32 51, %s1040
    %s1042 = sshrl.u32 %s1041, 2
    %s1043 = sor.u32 %s1041, %s1042
    %s1044 = sand.u32 15, %s1043
    %v1045 = vld [vmem:[%s1035] sm:%s1044]
    %v1046 = vunpack.c.l.bf16 %v1045
    %v1047 = vunpack.c.h.bf16 %v1045
    %v1048 = vlaneseq
    %v1049 = vand.u32 %v1048, 127
    %vm1051 = vcmp.lt.s32.totalorder %v1049, 96
    %v1052 = vsel %vm1051, %v1046, %v11
    %s1053 = scalar_lea.vmem [#allocation7], 312
    %v1054 = vpack.c.bf16 0.0, %v1052
    %1056 = vst [vmem:[%s1053] sm:$0xf] %v1054
    %s1057 = scalar_lea.vmem [#allocation7], 316
    %v1058 = vpack.c.bf16 0.0, %v11
    %1060 = vst [vmem:[%s1057] sm:$0xf] %v1058
    %s1061 = scalar_lea.vmem %s3, 160
    %s1063 = sor.u32 255, 127
    %s1064 = sand.u32 %s1063, 85
    %s1065 = sshrl.u32 %s1064, 1
    %s1066 = sor.u32 %s1064, %s1065
    %s1067 = sand.u32 51, %s1066
    %s1068 = sshrl.u32 %s1067, 2
    %s1069 = sor.u32 %s1067, %s1068
    %s1070 = sand.u32 15, %s1069
    %v1071 = vld [vmem:[%s1061] sm:%s1070]
    %v1072 = vunpack.c.l.bf16 %v1071
    %v1073 = vunpack.c.h.bf16 %v1071
    %v1074 = vlaneseq
    %v1075 = vand.u32 %v1074, 127
    %vm1077 = vcmp.lt.s32.totalorder %v1075, 96
    %v1078 = vsel %vm1077, %v1072, %v11
    %s1079 = scalar_lea.vmem [#allocation7], 320
    %v1080 = vpack.c.bf16 0.0, %v1078
    %1082 = vst [vmem:[%s1079] sm:$0xf] %v1080
    %s1083 = scalar_lea.vmem [#allocation7], 324
    %v1084 = vpack.c.bf16 0.0, %v11
    %1086 = vst [vmem:[%s1083] sm:$0xf] %v1084
    %s1087 = scalar_lea.vmem %s3, 164
    %s1089 = sor.u32 255, 127
    %s1090 = sand.u32 %s1089, 85
    %s1091 = sshrl.u32 %s1090, 1
    %s1092 = sor.u32 %s1090, %s1091
    %s1093 = sand.u32 51, %s1092
    %s1094 = sshrl.u32 %s1093, 2
    %s1095 = sor.u32 %s1093, %s1094
    %s1096 = sand.u32 15, %s1095
    %v1097 = vld [vmem:[%s1087] sm:%s1096]
    %v1098 = vunpack.c.l.bf16 %v1097
    %v1099 = vunpack.c.h.bf16 %v1097
    %v1100 = vlaneseq
    %v1101 = vand.u32 %v1100, 127
    %vm1103 = vcmp.lt.s32.totalorder %v1101, 96
    %v1104 = vsel %vm1103, %v1098, %v11
    %s1105 = scalar_lea.vmem [#allocation7], 328
    %v1106 = vpack.c.bf16 0.0, %v1104
    %1108 = vst [vmem:[%s1105] sm:$0xf] %v1106
    %s1109 = scalar_lea.vmem [#allocation7], 332
    %v1110 = vpack.c.bf16 0.0, %v11
    %1112 = vst [vmem:[%s1109] sm:$0xf] %v1110
    %s1113 = scalar_lea.vmem %s3, 168
    %s1115 = sor.u32 255, 127
    %s1116 = sand.u32 %s1115, 85
    %s1117 = sshrl.u32 %s1116, 1
    %s1118 = sor.u32 %s1116, %s1117
    %s1119 = sand.u32 51, %s1118
    %s1120 = sshrl.u32 %s1119, 2
    %s1121 = sor.u32 %s1119, %s1120
    %s1122 = sand.u32 15, %s1121
    %v1123 = vld [vmem:[%s1113] sm:%s1122]
    %v1124 = vunpack.c.l.bf16 %v1123
    %v1125 = vunpack.c.h.bf16 %v1123
    %v1126 = vlaneseq
    %v1127 = vand.u32 %v1126, 127
    %vm1129 = vcmp.lt.s32.totalorder %v1127, 96
    %v1130 = vsel %vm1129, %v1124, %v11
    %s1131 = scalar_lea.vmem [#allocation7], 336
    %v1132 = vpack.c.bf16 0.0, %v1130
    %1134 = vst [vmem:[%s1131] sm:$0xf] %v1132
    %s1135 = scalar_lea.vmem [#allocation7], 340
    %v1136 = vpack.c.bf16 0.0, %v11
    %1138 = vst [vmem:[%s1135] sm:$0xf] %v1136
    %s1139 = scalar_lea.vmem %s3, 172
    %s1141 = sor.u32 255, 127
    %s1142 = sand.u32 %s1141, 85
    %s1143 = sshrl.u32 %s1142, 1
    %s1144 = sor.u32 %s1142, %s1143
    %s1145 = sand.u32 51, %s1144
    %s1146 = sshrl.u32 %s1145, 2
    %s1147 = sor.u32 %s1145, %s1146
    %s1148 = sand.u32 15, %s1147
    %v1149 = vld [vmem:[%s1139] sm:%s1148]
    %v1150 = vunpack.c.l.bf16 %v1149
    %v1151 = vunpack.c.h.bf16 %v1149
    %v1152 = vlaneseq
    %v1153 = vand.u32 %v1152, 127
    %vm1155 = vcmp.lt.s32.totalorder %v1153, 96
    %v1156 = vsel %vm1155, %v1150, %v11
    %s1157 = scalar_lea.vmem [#allocation7], 344
    %v1158 = vpack.c.bf16 0.0, %v1156
    %1160 = vst [vmem:[%s1157] sm:$0xf] %v1158
    %s1161 = scalar_lea.vmem [#allocation7], 348
    %v1162 = vpack.c.bf16 0.0, %v11
    %1164 = vst [vmem:[%s1161] sm:$0xf] %v1162
    %s1165 = scalar_lea.vmem %s3, 176
    %s1167 = sor.u32 255, 127
    %s1168 = sand.u32 %s1167, 85
    %s1169 = sshrl.u32 %s1168, 1
    %s1170 = sor.u32 %s1168, %s1169
    %s1171 = sand.u32 51, %s1170
    %s1172 = sshrl.u32 %s1171, 2
    %s1173 = sor.u32 %s1171, %s1172
    %s1174 = sand.u32 15, %s1173
    %v1175 = vld [vmem:[%s1165] sm:%s1174]
    %v1176 = vunpack.c.l.bf16 %v1175
    %v1177 = vunpack.c.h.bf16 %v1175
    %v1178 = vlaneseq
    %v1179 = vand.u32 %v1178, 127
    %vm1181 = vcmp.lt.s32.totalorder %v1179, 96
    %v1182 = vsel %vm1181, %v1176, %v11
    %s1183 = scalar_lea.vmem [#allocation7], 352
    %v1184 = vpack.c.bf16 0.0, %v1182
    %1186 = vst [vmem:[%s1183] sm:$0xf] %v1184
    %s1187 = scalar_lea.vmem [#allocation7], 356
    %v1188 = vpack.c.bf16 0.0, %v11
    %1190 = vst [vmem:[%s1187] sm:$0xf] %v1188
    %s1191 = scalar_lea.vmem %s3, 180
    %s1193 = sor.u32 255, 127
    %s1194 = sand.u32 %s1193, 85
    %s1195 = sshrl.u32 %s1194, 1
    %s1196 = sor.u32 %s1194, %s1195
    %s1197 = sand.u32 51, %s1196
    %s1198 = sshrl.u32 %s1197, 2
    %s1199 = sor.u32 %s1197, %s1198
    %s1200 = sand.u32 15, %s1199
    %v1201 = vld [vmem:[%s1191] sm:%s1200]
    %v1202 = vunpack.c.l.bf16 %v1201
    %v1203 = vunpack.c.h.bf16 %v1201
    %v1204 = vlaneseq
    %v1205 = vand.u32 %v1204, 127
    %vm1207 = vcmp.lt.s32.totalorder %v1205, 96
    %v1208 = vsel %vm1207, %v1202, %v11
    %s1209 = scalar_lea.vmem [#allocation7], 360
    %v1210 = vpack.c.bf16 0.0, %v1208
    %1212 = vst [vmem:[%s1209] sm:$0xf] %v1210
    %s1213 = scalar_lea.vmem [#allocation7], 364
    %v1214 = vpack.c.bf16 0.0, %v11
    %1216 = vst [vmem:[%s1213] sm:$0xf] %v1214
    %s1217 = scalar_lea.vmem %s3, 184
    %s1219 = sor.u32 255, 127
    %s1220 = sand.u32 %s1219, 85
    %s1221 = sshrl.u32 %s1220, 1
    %s1222 = sor.u32 %s1220, %s1221
    %s1223 = sand.u32 51, %s1222
    %s1224 = sshrl.u32 %s1223, 2
    %s1225 = sor.u32 %s1223, %s1224
    %s1226 = sand.u32 15, %s1225
    %v1227 = vld [vmem:[%s1217] sm:%s1226]
    %v1228 = vunpack.c.l.bf16 %v1227
    %v1229 = vunpack.c.h.bf16 %v1227
    %v1230 = vlaneseq
    %v1231 = vand.u32 %v1230, 127
    %vm1233 = vcmp.lt.s32.totalorder %v1231, 96
    %v1234 = vsel %vm1233, %v1228, %v11
    %s1235 = scalar_lea.vmem [#allocation7], 368
    %v1236 = vpack.c.bf16 0.0, %v1234
    %1238 = vst [vmem:[%s1235] sm:$0xf] %v1236
    %s1239 = scalar_lea.vmem [#allocation7], 372
    %v1240 = vpack.c.bf16 0.0, %v11
    %1242 = vst [vmem:[%s1239] sm:$0xf] %v1240
    %s1243 = scalar_lea.vmem %s3, 188
    %s1245 = sor.u32 255, 127
    %s1246 = sand.u32 %s1245, 85
    %s1247 = sshrl.u32 %s1246, 1
    %s1248 = sor.u32 %s1246, %s1247
    %s1249 = sand.u32 51, %s1248
    %s1250 = sshrl.u32 %s1249, 2
    %s1251 = sor.u32 %s1249, %s1250
    %s1252 = sand.u32 15, %s1251
    %v1253 = vld [vmem:[%s1243] sm:%s1252]
    %v1254 = vunpack.c.l.bf16 %v1253
    %v1255 = vunpack.c.h.bf16 %v1253
    %v1256 = vlaneseq
    %v1257 = vand.u32 %v1256, 127
    %vm1259 = vcmp.lt.s32.totalorder %v1257, 96
    %v1260 = vsel %vm1259, %v1254, %v11
    %s1261 = scalar_lea.vmem [#allocation7], 376
    %v1262 = vpack.c.bf16 0.0, %v1260
    %1264 = vst [vmem:[%s1261] sm:$0xf] %v1262
    %s1265 = scalar_lea.vmem [#allocation7], 380
    %v1266 = vpack.c.bf16 0.0, %v11
    %1268 = vst [vmem:[%s1265] sm:$0xf] %v1266
    %s1269 = scalar_lea.vmem %s3, 192
    %s1271 = sor.u32 255, 127
    %s1272 = sand.u32 %s1271, 85
    %s1273 = sshrl.u32 %s1272, 1
    %s1274 = sor.u32 %s1272, %s1273
    %s1275 = sand.u32 51, %s1274
    %s1276 = sshrl.u32 %s1275, 2
    %s1277 = sor.u32 %s1275, %s1276
    %s1278 = sand.u32 15, %s1277
    %v1279 = vld [vmem:[%s1269] sm:%s1278]
    %v1280 = vunpack.c.l.bf16 %v1279
    %v1281 = vunpack.c.h.bf16 %v1279
    %v1282 = vlaneseq
    %v1283 = vand.u32 %v1282, 127
    %vm1285 = vcmp.lt.s32.totalorder %v1283, 96
    %v1286 = vsel %vm1285, %v1280, %v11
    %s1287 = scalar_lea.vmem [#allocation7], 384
    %v1288 = vpack.c.bf16 0.0, %v1286
    %1290 = vst [vmem:[%s1287] sm:$0xf] %v1288
    %s1291 = scalar_lea.vmem [#allocation7], 388
    %v1292 = vpack.c.bf16 0.0, %v11
    %1294 = vst [vmem:[%s1291] sm:$0xf] %v1292
    %s1295 = scalar_lea.vmem %s3, 196
    %s1297 = sor.u32 255, 127
    %s1298 = sand.u32 %s1297, 85
    %s1299 = sshrl.u32 %s1298, 1
    %s1300 = sor.u32 %s1298, %s1299
    %s1301 = sand.u32 51, %s1300
    %s1302 = sshrl.u32 %s1301, 2
    %s1303 = sor.u32 %s1301, %s1302
    %s1304 = sand.u32 15, %s1303
    %v1305 = vld [vmem:[%s1295] sm:%s1304]
    %v1306 = vunpack.c.l.bf16 %v1305
    %v1307 = vunpack.c.h.bf16 %v1305
    %v1308 = vlaneseq
    %v1309 = vand.u32 %v1308, 127
    %vm1311 = vcmp.lt.s32.totalorder %v1309, 96
    %v1312 = vsel %vm1311, %v1306, %v11
    %s1313 = scalar_lea.vmem [#allocation7], 392
    %v1314 = vpack.c.bf16 0.0, %v1312
    %1316 = vst [vmem:[%s1313] sm:$0xf] %v1314
    %s1317 = scalar_lea.vmem [#allocation7], 396
    %v1318 = vpack.c.bf16 0.0, %v11
    %1320 = vst [vmem:[%s1317] sm:$0xf] %v1318
    %s1321 = scalar_lea.vmem %s3, 200
    %s1323 = sor.u32 255, 127
    %s1324 = sand.u32 %s1323, 85
    %s1325 = sshrl.u32 %s1324, 1
    %s1326 = sor.u32 %s1324, %s1325
    %s1327 = sand.u32 51, %s1326
    %s1328 = sshrl.u32 %s1327, 2
    %s1329 = sor.u32 %s1327, %s1328
    %s1330 = sand.u32 15, %s1329
    %v1331 = vld [vmem:[%s1321] sm:%s1330]
    %v1332 = vunpack.c.l.bf16 %v1331
    %v1333 = vunpack.c.h.bf16 %v1331
    %v1334 = vlaneseq
    %v1335 = vand.u32 %v1334, 127
    %vm1337 = vcmp.lt.s32.totalorder %v1335, 96
    %v1338 = vsel %vm1337, %v1332, %v11
    %s1339 = scalar_lea.vmem [#allocation7], 400
    %v1340 = vpack.c.bf16 0.0, %v1338
    %1342 = vst [vmem:[%s1339] sm:$0xf] %v1340
    %s1343 = scalar_lea.vmem [#allocation7], 404
    %v1344 = vpack.c.bf16 0.0, %v11
    %1346 = vst [vmem:[%s1343] sm:$0xf] %v1344
    %s1347 = scalar_lea.vmem %s3, 204
    %s1349 = sor.u32 255, 127
    %s1350 = sand.u32 %s1349, 85
    %s1351 = sshrl.u32 %s1350, 1
    %s1352 = sor.u32 %s1350, %s1351
    %s1353 = sand.u32 51, %s1352
    %s1354 = sshrl.u32 %s1353, 2
    %s1355 = sor.u32 %s1353, %s1354
    %s1356 = sand.u32 15, %s1355
    %v1357 = vld [vmem:[%s1347] sm:%s1356]
    %v1358 = vunpack.c.l.bf16 %v1357
    %v1359 = vunpack.c.h.bf16 %v1357
    %v1360 = vlaneseq
    %v1361 = vand.u32 %v1360, 127
    %vm1363 = vcmp.lt.s32.totalorder %v1361, 96
    %v1364 = vsel %vm1363, %v1358, %v11
    %s1365 = scalar_lea.vmem [#allocation7], 408
    %v1366 = vpack.c.bf16 0.0, %v1364
    %1368 = vst [vmem:[%s1365] sm:$0xf] %v1366
    %s1369 = scalar_lea.vmem [#allocation7], 412
    %v1370 = vpack.c.bf16 0.0, %v11
    %1372 = vst [vmem:[%s1369] sm:$0xf] %v1370
    %s1373 = scalar_lea.vmem %s3, 208
    %s1375 = sor.u32 255, 127
    %s1376 = sand.u32 %s1375, 85
    %s1377 = sshrl.u32 %s1376, 1
    %s1378 = sor.u32 %s1376, %s1377
    %s1379 = sand.u32 51, %s1378
    %s1380 = sshrl.u32 %s1379, 2
    %s1381 = sor.u32 %s1379, %s1380
    %s1382 = sand.u32 15, %s1381
    %v1383 = vld [vmem:[%s1373] sm:%s1382]
    %v1384 = vunpack.c.l.bf16 %v1383
    %v1385 = vunpack.c.h.bf16 %v1383
    %v1386 = vlaneseq
    %v1387 = vand.u32 %v1386, 127
    %vm1389 = vcmp.lt.s32.totalorder %v1387, 96
    %v1390 = vsel %vm1389, %v1384, %v11
    %s1391 = scalar_lea.vmem [#allocation7], 416
    %v1392 = vpack.c.bf16 0.0, %v1390
    %1394 = vst [vmem:[%s1391] sm:$0xf] %v1392
    %s1395 = scalar_lea.vmem [#allocation7], 420
    %v1396 = vpack.c.bf16 0.0, %v11
    %1398 = vst [vmem:[%s1395] sm:$0xf] %v1396
    %s1399 = scalar_lea.vmem %s3, 212
    %s1401 = sor.u32 255, 127
    %s1402 = sand.u32 %s1401, 85
    %s1403 = sshrl.u32 %s1402, 1
    %s1404 = sor.u32 %s1402, %s1403
    %s1405 = sand.u32 51, %s1404
    %s1406 = sshrl.u32 %s1405, 2
    %s1407 = sor.u32 %s1405, %s1406
    %s1408 = sand.u32 15, %s1407
    %v1409 = vld [vmem:[%s1399] sm:%s1408]
    %v1410 = vunpack.c.l.bf16 %v1409
    %v1411 = vunpack.c.h.bf16 %v1409
    %v1412 = vlaneseq
    %v1413 = vand.u32 %v1412, 127
    %vm1415 = vcmp.lt.s32.totalorder %v1413, 96
    %v1416 = vsel %vm1415, %v1410, %v11
    %s1417 = scalar_lea.vmem [#allocation7], 424
    %v1418 = vpack.c.bf16 0.0, %v1416
    %1420 = vst [vmem:[%s1417] sm:$0xf] %v1418
    %s1421 = scalar_lea.vmem [#allocation7], 428
    %v1422 = vpack.c.bf16 0.0, %v11
    %1424 = vst [vmem:[%s1421] sm:$0xf] %v1422
    %s1425 = scalar_lea.vmem %s3, 216
    %s1427 = sor.u32 255, 127
    %s1428 = sand.u32 %s1427, 85
    %s1429 = sshrl.u32 %s1428, 1
    %s1430 = sor.u32 %s1428, %s1429
    %s1431 = sand.u32 51, %s1430
    %s1432 = sshrl.u32 %s1431, 2
    %s1433 = sor.u32 %s1431, %s1432
    %s1434 = sand.u32 15, %s1433
    %v1435 = vld [vmem:[%s1425] sm:%s1434]
    %v1436 = vunpack.c.l.bf16 %v1435
    %v1437 = vunpack.c.h.bf16 %v1435
    %v1438 = vlaneseq
    %v1439 = vand.u32 %v1438, 127
    %vm1441 = vcmp.lt.s32.totalorder %v1439, 96
    %v1442 = vsel %vm1441, %v1436, %v11
    %s1443 = scalar_lea.vmem [#allocation7], 432
    %v1444 = vpack.c.bf16 0.0, %v1442
    %1446 = vst [vmem:[%s1443] sm:$0xf] %v1444
    %s1447 = scalar_lea.vmem [#allocation7], 436
    %v1448 = vpack.c.bf16 0.0, %v11
    %1450 = vst [vmem:[%s1447] sm:$0xf] %v1448
    %s1451 = scalar_lea.vmem %s3, 220
    %s1453 = sor.u32 255, 127
    %s1454 = sand.u32 %s1453, 85
    %s1455 = sshrl.u32 %s1454, 1
    %s1456 = sor.u32 %s1454, %s1455
    %s1457 = sand.u32 51, %s1456
    %s1458 = sshrl.u32 %s1457, 2
    %s1459 = sor.u32 %s1457, %s1458
    %s1460 = sand.u32 15, %s1459
    %v1461 = vld [vmem:[%s1451] sm:%s1460]
    %v1462 = vunpack.c.l.bf16 %v1461
    %v1463 = vunpack.c.h.bf16 %v1461
    %v1464 = vlaneseq
    %v1465 = vand.u32 %v1464, 127
    %vm1467 = vcmp.lt.s32.totalorder %v1465, 96
    %v1468 = vsel %vm1467, %v1462, %v11
    %s1469 = scalar_lea.vmem [#allocation7], 440
    %v1470 = vpack.c.bf16 0.0, %v1468
    %1472 = vst [vmem:[%s1469] sm:$0xf] %v1470
    %s1473 = scalar_lea.vmem [#allocation7], 444
    %v1474 = vpack.c.bf16 0.0, %v11
    %1476 = vst [vmem:[%s1473] sm:$0xf] %v1474
    %s1477 = scalar_lea.vmem %s3, 224
    %s1479 = sor.u32 255, 127
    %s1480 = sand.u32 %s1479, 85
    %s1481 = sshrl.u32 %s1480, 1
    %s1482 = sor.u32 %s1480, %s1481
    %s1483 = sand.u32 51, %s1482
    %s1484 = sshrl.u32 %s1483, 2
    %s1485 = sor.u32 %s1483, %s1484
    %s1486 = sand.u32 15, %s1485
    %v1487 = vld [vmem:[%s1477] sm:%s1486]
    %v1488 = vunpack.c.l.bf16 %v1487
    %v1489 = vunpack.c.h.bf16 %v1487
    %v1490 = vlaneseq
    %v1491 = vand.u32 %v1490, 127
    %vm1493 = vcmp.lt.s32.totalorder %v1491, 96
    %v1494 = vsel %vm1493, %v1488, %v11
    %s1495 = scalar_lea.vmem [#allocation7], 448
    %v1496 = vpack.c.bf16 0.0, %v1494
    %1498 = vst [vmem:[%s1495] sm:$0xf] %v1496
    %s1499 = scalar_lea.vmem [#allocation7], 452
    %v1500 = vpack.c.bf16 0.0, %v11
    %1502 = vst [vmem:[%s1499] sm:$0xf] %v1500
    %s1503 = scalar_lea.vmem %s3, 228
    %s1505 = sor.u32 255, 127
    %s1506 = sand.u32 %s1505, 85
    %s1507 = sshrl.u32 %s1506, 1
    %s1508 = sor.u32 %s1506, %s1507
    %s1509 = sand.u32 51, %s1508
    %s1510 = sshrl.u32 %s1509, 2
    %s1511 = sor.u32 %s1509, %s1510
    %s1512 = sand.u32 15, %s1511
    %v1513 = vld [vmem:[%s1503] sm:%s1512]
    %v1514 = vunpack.c.l.bf16 %v1513
    %v1515 = vunpack.c.h.bf16 %v1513
    %v1516 = vlaneseq
    %v1517 = vand.u32 %v1516, 127
    %vm1519 = vcmp.lt.s32.totalorder %v1517, 96
    %v1520 = vsel %vm1519, %v1514, %v11
    %s1521 = scalar_lea.vmem [#allocation7], 456
    %v1522 = vpack.c.bf16 0.0, %v1520
    %1524 = vst [vmem:[%s1521] sm:$0xf] %v1522
    %s1525 = scalar_lea.vmem [#allocation7], 460
    %v1526 = vpack.c.bf16 0.0, %v11
    %1528 = vst [vmem:[%s1525] sm:$0xf] %v1526
    %s1529 = scalar_lea.vmem %s3, 232
    %s1531 = sor.u32 255, 127
    %s1532 = sand.u32 %s1531, 85
    %s1533 = sshrl.u32 %s1532, 1
    %s1534 = sor.u32 %s1532, %s1533
    %s1535 = sand.u32 51, %s1534
    %s1536 = sshrl.u32 %s1535, 2
    %s1537 = sor.u32 %s1535, %s1536
    %s1538 = sand.u32 15, %s1537
    %v1539 = vld [vmem:[%s1529] sm:%s1538]
    %v1540 = vunpack.c.l.bf16 %v1539
    %v1541 = vunpack.c.h.bf16 %v1539
    %v1542 = vlaneseq
    %v1543 = vand.u32 %v1542, 127
    %vm1545 = vcmp.lt.s32.totalorder %v1543, 96
    %v1546 = vsel %vm1545, %v1540, %v11
    %s1547 = scalar_lea.vmem [#allocation7], 464
    %v1548 = vpack.c.bf16 0.0, %v1546
    %1550 = vst [vmem:[%s1547] sm:$0xf] %v1548
    %s1551 = scalar_lea.vmem [#allocation7], 468
    %v1552 = vpack.c.bf16 0.0, %v11
    %1554 = vst [vmem:[%s1551] sm:$0xf] %v1552
    %s1555 = scalar_lea.vmem %s3, 236
    %s1557 = sor.u32 255, 127
    %s1558 = sand.u32 %s1557, 85
    %s1559 = sshrl.u32 %s1558, 1
    %s1560 = sor.u32 %s1558, %s1559
    %s1561 = sand.u32 51, %s1560
    %s1562 = sshrl.u32 %s1561, 2
    %s1563 = sor.u32 %s1561, %s1562
    %s1564 = sand.u32 15, %s1563
    %v1565 = vld [vmem:[%s1555] sm:%s1564]
    %v1566 = vunpack.c.l.bf16 %v1565
    %v1567 = vunpack.c.h.bf16 %v1565
    %v1568 = vlaneseq
    %v1569 = vand.u32 %v1568, 127
    %vm1571 = vcmp.lt.s32.totalorder %v1569, 96
    %v1572 = vsel %vm1571, %v1566, %v11
    %s1573 = scalar_lea.vmem [#allocation7], 472
    %v1574 = vpack.c.bf16 0.0, %v1572
    %1576 = vst [vmem:[%s1573] sm:$0xf] %v1574
    %s1577 = scalar_lea.vmem [#allocation7], 476
    %v1578 = vpack.c.bf16 0.0, %v11
    %1580 = vst [vmem:[%s1577] sm:$0xf] %v1578
    %s1581 = scalar_lea.vmem %s3, 240
    %s1583 = sor.u32 255, 127
    %s1584 = sand.u32 %s1583, 85
    %s1585 = sshrl.u32 %s1584, 1
    %s1586 = sor.u32 %s1584, %s1585
    %s1587 = sand.u32 51, %s1586
    %s1588 = sshrl.u32 %s1587, 2
    %s1589 = sor.u32 %s1587, %s1588
    %s1590 = sand.u32 15, %s1589
    %v1591 = vld [vmem:[%s1581] sm:%s1590]
    %v1592 = vunpack.c.l.bf16 %v1591
    %v1593 = vunpack.c.h.bf16 %v1591
    %v1594 = vlaneseq
    %v1595 = vand.u32 %v1594, 127
    %vm1597 = vcmp.lt.s32.totalorder %v1595, 96
    %v1598 = vsel %vm1597, %v1592, %v11
    %s1599 = scalar_lea.vmem [#allocation7], 480
    %v1600 = vpack.c.bf16 0.0, %v1598
    %1602 = vst [vmem:[%s1599] sm:$0xf] %v1600
    %s1603 = scalar_lea.vmem [#allocation7], 484
    %v1604 = vpack.c.bf16 0.0, %v11
    %1606 = vst [vmem:[%s1603] sm:$0xf] %v1604
    %s1607 = scalar_lea.vmem %s3, 244
    %s1609 = sor.u32 255, 127
    %s1610 = sand.u32 %s1609, 85
    %s1611 = sshrl.u32 %s1610, 1
    %s1612 = sor.u32 %s1610, %s1611
    %s1613 = sand.u32 51, %s1612
    %s1614 = sshrl.u32 %s1613, 2
    %s1615 = sor.u32 %s1613, %s1614
    %s1616 = sand.u32 15, %s1615
    %v1617 = vld [vmem:[%s1607] sm:%s1616]
    %v1618 = vunpack.c.l.bf16 %v1617
    %v1619 = vunpack.c.h.bf16 %v1617
    %v1620 = vlaneseq
    %v1621 = vand.u32 %v1620, 127
    %vm1623 = vcmp.lt.s32.totalorder %v1621, 96
    %v1624 = vsel %vm1623, %v1618, %v11
    %s1625 = scalar_lea.vmem [#allocation7], 488
    %v1626 = vpack.c.bf16 0.0, %v1624
    %1628 = vst [vmem:[%s1625] sm:$0xf] %v1626
    %s1629 = scalar_lea.vmem [#allocation7], 492
    %v1630 = vpack.c.bf16 0.0, %v11
    %1632 = vst [vmem:[%s1629] sm:$0xf] %v1630
    %s1633 = scalar_lea.vmem %s3, 248
    %s1635 = sor.u32 255, 127
    %s1636 = sand.u32 %s1635, 85
    %s1637 = sshrl.u32 %s1636, 1
    %s1638 = sor.u32 %s1636, %s1637
    %s1639 = sand.u32 51, %s1638
    %s1640 = sshrl.u32 %s1639, 2
    %s1641 = sor.u32 %s1639, %s1640
    %s1642 = sand.u32 15, %s1641
    %v1643 = vld [vmem:[%s1633] sm:%s1642]
    %v1644 = vunpack.c.l.bf16 %v1643
    %v1645 = vunpack.c.h.bf16 %v1643
    %v1646 = vlaneseq
    %v1647 = vand.u32 %v1646, 127
    %vm1649 = vcmp.lt.s32.totalorder %v1647, 96
    %v1650 = vsel %vm1649, %v1644, %v11
    %s1651 = scalar_lea.vmem [#allocation7], 496
    %v1652 = vpack.c.bf16 0.0, %v1650
    %1654 = vst [vmem:[%s1651] sm:$0xf] %v1652
    %s1655 = scalar_lea.vmem [#allocation7], 500
    %v1656 = vpack.c.bf16 0.0, %v11
    %1658 = vst [vmem:[%s1655] sm:$0xf] %v1656
    %s1659 = scalar_lea.vmem %s3, 252
    %s1661 = sor.u32 255, 127
    %s1662 = sand.u32 %s1661, 85
    %s1663 = sshrl.u32 %s1662, 1
    %s1664 = sor.u32 %s1662, %s1663
    %s1665 = sand.u32 51, %s1664
    %s1666 = sshrl.u32 %s1665, 2
    %s1667 = sor.u32 %s1665, %s1666
    %s1668 = sand.u32 15, %s1667
    %v1669 = vld [vmem:[%s1659] sm:%s1668]
    %v1670 = vunpack.c.l.bf16 %v1669
    %v1671 = vunpack.c.h.bf16 %v1669
    %v1672 = vlaneseq
    %v1673 = vand.u32 %v1672, 127
    %vm1675 = vcmp.lt.s32.totalorder %v1673, 96
    %v1676 = vsel %vm1675, %v1670, %v11
    %s1677 = scalar_lea.vmem [#allocation7], 504
    %v1678 = vpack.c.bf16 0.0, %v1676
    %1680 = vst [vmem:[%s1677] sm:$0xf] %v1678
    %s1681 = scalar_lea.vmem [#allocation7], 508
    %v1682 = vpack.c.bf16 0.0, %v11
    %1684 = vst [vmem:[%s1681] sm:$0xf] %v1682
    %s1685 = scalar_lea.vmem %s3, 256
    %s1687 = sor.u32 255, 127
    %s1688 = sand.u32 %s1687, 85
    %s1689 = sshrl.u32 %s1688, 1
    %s1690 = sor.u32 %s1688, %s1689
    %s1691 = sand.u32 51, %s1690
    %s1692 = sshrl.u32 %s1691, 2
    %s1693 = sor.u32 %s1691, %s1692
    %s1694 = sand.u32 15, %s1693
    %v1695 = vld [vmem:[%s1685] sm:%s1694]
    %v1696 = vunpack.c.l.bf16 %v1695
    %v1697 = vunpack.c.h.bf16 %v1695
    %v1698 = vlaneseq
    %v1699 = vand.u32 %v1698, 127
    %vm1701 = vcmp.lt.s32.totalorder %v1699, 96
    %v1702 = vsel %vm1701, %v1696, %v11
    %s1703 = scalar_lea.vmem [#allocation7], 512
    %v1704 = vpack.c.bf16 0.0, %v1702
    %1706 = vst [vmem:[%s1703] sm:$0xf] %v1704
    %s1707 = scalar_lea.vmem [#allocation7], 516
    %v1708 = vpack.c.bf16 0.0, %v11
    %1710 = vst [vmem:[%s1707] sm:$0xf] %v1708
    %s1711 = scalar_lea.vmem %s3, 260
    %s1713 = sor.u32 255, 127
    %s1714 = sand.u32 %s1713, 85
    %s1715 = sshrl.u32 %s1714, 1
    %s1716 = sor.u32 %s1714, %s1715
    %s1717 = sand.u32 51, %s1716
    %s1718 = sshrl.u32 %s1717, 2
    %s1719 = sor.u32 %s1717, %s1718
    %s1720 = sand.u32 15, %s1719
    %v1721 = vld [vmem:[%s1711] sm:%s1720]
    %v1722 = vunpack.c.l.bf16 %v1721
    %v1723 = vunpack.c.h.bf16 %v1721
    %v1724 = vlaneseq
    %v1725 = vand.u32 %v1724, 127
    %vm1727 = vcmp.lt.s32.totalorder %v1725, 96
    %v1728 = vsel %vm1727, %v1722, %v11
    %s1729 = scalar_lea.vmem [#allocation7], 520
    %v1730 = vpack.c.bf16 0.0, %v1728
    %1732 = vst [vmem:[%s1729] sm:$0xf] %v1730
    %s1733 = scalar_lea.vmem [#allocation7], 524
    %v1734 = vpack.c.bf16 0.0, %v11
    %1736 = vst [vmem:[%s1733] sm:$0xf] %v1734
    %s1737 = scalar_lea.vmem %s3, 264
    %s1739 = sor.u32 255, 127
    %s1740 = sand.u32 %s1739, 85
    %s1741 = sshrl.u32 %s1740, 1
    %s1742 = sor.u32 %s1740, %s1741
    %s1743 = sand.u32 51, %s1742
    %s1744 = sshrl.u32 %s1743, 2
    %s1745 = sor.u32 %s1743, %s1744
    %s1746 = sand.u32 15, %s1745
    %v1747 = vld [vmem:[%s1737] sm:%s1746]
    %v1748 = vunpack.c.l.bf16 %v1747
    %v1749 = vunpack.c.h.bf16 %v1747
    %v1750 = vlaneseq
    %v1751 = vand.u32 %v1750, 127
    %vm1753 = vcmp.lt.s32.totalorder %v1751, 96
    %v1754 = vsel %vm1753, %v1748, %v11
    %s1755 = scalar_lea.vmem [#allocation7], 528
    %v1756 = vpack.c.bf16 0.0, %v1754
    %1758 = vst [vmem:[%s1755] sm:$0xf] %v1756
    %s1759 = scalar_lea.vmem [#allocation7], 532
    %v1760 = vpack.c.bf16 0.0, %v11
    %1762 = vst [vmem:[%s1759] sm:$0xf] %v1760
    %s1763 = scalar_lea.vmem %s3, 268
    %s1765 = sor.u32 255, 127
    %s1766 = sand.u32 %s1765, 85
    %s1767 = sshrl.u32 %s1766, 1
    %s1768 = sor.u32 %s1766, %s1767
    %s1769 = sand.u32 51, %s1768
    %s1770 = sshrl.u32 %s1769, 2
    %s1771 = sor.u32 %s1769, %s1770
    %s1772 = sand.u32 15, %s1771
    %v1773 = vld [vmem:[%s1763] sm:%s1772]
    %v1774 = vunpack.c.l.bf16 %v1773
    %v1775 = vunpack.c.h.bf16 %v1773
    %v1776 = vlaneseq
    %v1777 = vand.u32 %v1776, 127
    %vm1779 = vcmp.lt.s32.totalorder %v1777, 96
    %v1780 = vsel %vm1779, %v1774, %v11
    %s1781 = scalar_lea.vmem [#allocation7], 536
    %v1782 = vpack.c.bf16 0.0, %v1780
    %1784 = vst [vmem:[%s1781] sm:$0xf] %v1782
    %s1785 = scalar_lea.vmem [#allocation7], 540
    %v1786 = vpack.c.bf16 0.0, %v11
    %1788 = vst [vmem:[%s1785] sm:$0xf] %v1786
    %s1789 = scalar_lea.vmem %s3, 272
    %s1791 = sor.u32 255, 127
    %s1792 = sand.u32 %s1791, 85
    %s1793 = sshrl.u32 %s1792, 1
    %s1794 = sor.u32 %s1792, %s1793
    %s1795 = sand.u32 51, %s1794
    %s1796 = sshrl.u32 %s1795, 2
    %s1797 = sor.u32 %s1795, %s1796
    %s1798 = sand.u32 15, %s1797
    %v1799 = vld [vmem:[%s1789] sm:%s1798]
    %v1800 = vunpack.c.l.bf16 %v1799
    %v1801 = vunpack.c.h.bf16 %v1799
    %v1802 = vlaneseq
    %v1803 = vand.u32 %v1802, 127
    %vm1805 = vcmp.lt.s32.totalorder %v1803, 96
    %v1806 = vsel %vm1805, %v1800, %v11
    %s1807 = scalar_lea.vmem [#allocation7], 544
    %v1808 = vpack.c.bf16 0.0, %v1806
    %1810 = vst [vmem:[%s1807] sm:$0xf] %v1808
    %s1811 = scalar_lea.vmem [#allocation7], 548
    %v1812 = vpack.c.bf16 0.0, %v11
    %1814 = vst [vmem:[%s1811] sm:$0xf] %v1812
    %s1815 = scalar_lea.vmem %s3, 276
    %s1817 = sor.u32 255, 127
    %s1818 = sand.u32 %s1817, 85
    %s1819 = sshrl.u32 %s1818, 1
    %s1820 = sor.u32 %s1818, %s1819
    %s1821 = sand.u32 51, %s1820
    %s1822 = sshrl.u32 %s1821, 2
    %s1823 = sor.u32 %s1821, %s1822
    %s1824 = sand.u32 15, %s1823
    %v1825 = vld [vmem:[%s1815] sm:%s1824]
    %v1826 = vunpack.c.l.bf16 %v1825
    %v1827 = vunpack.c.h.bf16 %v1825
    %v1828 = vlaneseq
    %v1829 = vand.u32 %v1828, 127
    %vm1831 = vcmp.lt.s32.totalorder %v1829, 96
    %v1832 = vsel %vm1831, %v1826, %v11
    %s1833 = scalar_lea.vmem [#allocation7], 552
    %v1834 = vpack.c.bf16 0.0, %v1832
    %1836 = vst [vmem:[%s1833] sm:$0xf] %v1834
    %s1837 = scalar_lea.vmem [#allocation7], 556
    %v1838 = vpack.c.bf16 0.0, %v11
    %1840 = vst [vmem:[%s1837] sm:$0xf] %v1838
    %s1841 = scalar_lea.vmem %s3, 280
    %s1843 = sor.u32 255, 127
    %s1844 = sand.u32 %s1843, 85
    %s1845 = sshrl.u32 %s1844, 1
    %s1846 = sor.u32 %s1844, %s1845
    %s1847 = sand.u32 51, %s1846
    %s1848 = sshrl.u32 %s1847, 2
    %s1849 = sor.u32 %s1847, %s1848
    %s1850 = sand.u32 15, %s1849
    %v1851 = vld [vmem:[%s1841] sm:%s1850]
    %v1852 = vunpack.c.l.bf16 %v1851
    %v1853 = vunpack.c.h.bf16 %v1851
    %v1854 = vlaneseq
    %v1855 = vand.u32 %v1854, 127
    %vm1857 = vcmp.lt.s32.totalorder %v1855, 96
    %v1858 = vsel %vm1857, %v1852, %v11
    %s1859 = scalar_lea.vmem [#allocation7], 560
    %v1860 = vpack.c.bf16 0.0, %v1858
    %1862 = vst [vmem:[%s1859] sm:$0xf] %v1860
    %s1863 = scalar_lea.vmem [#allocation7], 564
    %v1864 = vpack.c.bf16 0.0, %v11
    %1866 = vst [vmem:[%s1863] sm:$0xf] %v1864
    %s1867 = scalar_lea.vmem %s3, 284
    %s1869 = sor.u32 255, 127
    %s1870 = sand.u32 %s1869, 85
    %s1871 = sshrl.u32 %s1870, 1
    %s1872 = sor.u32 %s1870, %s1871
    %s1873 = sand.u32 51, %s1872
    %s1874 = sshrl.u32 %s1873, 2
    %s1875 = sor.u32 %s1873, %s1874
    %s1876 = sand.u32 15, %s1875
    %v1877 = vld [vmem:[%s1867] sm:%s1876]
    %v1878 = vunpack.c.l.bf16 %v1877
    %v1879 = vunpack.c.h.bf16 %v1877
    %v1880 = vlaneseq
    %v1881 = vand.u32 %v1880, 127
    %vm1883 = vcmp.lt.s32.totalorder %v1881, 96
    %v1884 = vsel %vm1883, %v1878, %v11
    %s1885 = scalar_lea.vmem [#allocation7], 568
    %v1886 = vpack.c.bf16 0.0, %v1884
    %1888 = vst [vmem:[%s1885] sm:$0xf] %v1886
    %s1889 = scalar_lea.vmem [#allocation7], 572
    %v1890 = vpack.c.bf16 0.0, %v11
    %1892 = vst [vmem:[%s1889] sm:$0xf] %v1890
    %s1893 = scalar_lea.vmem %s3, 288
    %s1895 = sor.u32 255, 127
    %s1896 = sand.u32 %s1895, 85
    %s1897 = sshrl.u32 %s1896, 1
    %s1898 = sor.u32 %s1896, %s1897
    %s1899 = sand.u32 51, %s1898
    %s1900 = sshrl.u32 %s1899, 2
    %s1901 = sor.u32 %s1899, %s1900
    %s1902 = sand.u32 15, %s1901
    %v1903 = vld [vmem:[%s1893] sm:%s1902]
    %v1904 = vunpack.c.l.bf16 %v1903
    %v1905 = vunpack.c.h.bf16 %v1903
    %v1906 = vlaneseq
    %v1907 = vand.u32 %v1906, 127
    %vm1909 = vcmp.lt.s32.totalorder %v1907, 96
    %v1910 = vsel %vm1909, %v1904, %v11
    %s1911 = scalar_lea.vmem [#allocation7], 576
    %v1912 = vpack.c.bf16 0.0, %v1910
    %1914 = vst [vmem:[%s1911] sm:$0xf] %v1912
    %s1915 = scalar_lea.vmem [#allocation7], 580
    %v1916 = vpack.c.bf16 0.0, %v11
    %1918 = vst [vmem:[%s1915] sm:$0xf] %v1916
    %s1919 = scalar_lea.vmem %s3, 292
    %s1921 = sor.u32 255, 127
    %s1922 = sand.u32 %s1921, 85
    %s1923 = sshrl.u32 %s1922, 1
    %s1924 = sor.u32 %s1922, %s1923
    %s1925 = sand.u32 51, %s1924
    %s1926 = sshrl.u32 %s1925, 2
    %s1927 = sor.u32 %s1925, %s1926
    %s1928 = sand.u32 15, %s1927
    %v1929 = vld [vmem:[%s1919] sm:%s1928]
    %v1930 = vunpack.c.l.bf16 %v1929
    %v1931 = vunpack.c.h.bf16 %v1929
    %v1932 = vlaneseq
    %v1933 = vand.u32 %v1932, 127
    %vm1935 = vcmp.lt.s32.totalorder %v1933, 96
    %v1936 = vsel %vm1935, %v1930, %v11
    %s1937 = scalar_lea.vmem [#allocation7], 584
    %v1938 = vpack.c.bf16 0.0, %v1936
    %1940 = vst [vmem:[%s1937] sm:$0xf] %v1938
    %s1941 = scalar_lea.vmem [#allocation7], 588
    %v1942 = vpack.c.bf16 0.0, %v11
    %1944 = vst [vmem:[%s1941] sm:$0xf] %v1942
    %s1945 = scalar_lea.vmem %s3, 296
    %s1947 = sor.u32 255, 127
    %s1948 = sand.u32 %s1947, 85
    %s1949 = sshrl.u32 %s1948, 1
    %s1950 = sor.u32 %s1948, %s1949
    %s1951 = sand.u32 51, %s1950
    %s1952 = sshrl.u32 %s1951, 2
    %s1953 = sor.u32 %s1951, %s1952
    %s1954 = sand.u32 15, %s1953
    %v1955 = vld [vmem:[%s1945] sm:%s1954]
    %v1956 = vunpack.c.l.bf16 %v1955
    %v1957 = vunpack.c.h.bf16 %v1955
    %v1958 = vlaneseq
    %v1959 = vand.u32 %v1958, 127
    %vm1961 = vcmp.lt.s32.totalorder %v1959, 96
    %v1962 = vsel %vm1961, %v1956, %v11
    %s1963 = scalar_lea.vmem [#allocation7], 592
    %v1964 = vpack.c.bf16 0.0, %v1962
    %1966 = vst [vmem:[%s1963] sm:$0xf] %v1964
    %s1967 = scalar_lea.vmem [#allocation7], 596
    %v1968 = vpack.c.bf16 0.0, %v11
    %1970 = vst [vmem:[%s1967] sm:$0xf] %v1968
    %s1971 = scalar_lea.vmem %s3, 300
    %s1973 = sor.u32 255, 127
    %s1974 = sand.u32 %s1973, 85
    %s1975 = sshrl.u32 %s1974, 1
    %s1976 = sor.u32 %s1974, %s1975
    %s1977 = sand.u32 51, %s1976
    %s1978 = sshrl.u32 %s1977, 2
    %s1979 = sor.u32 %s1977, %s1978
    %s1980 = sand.u32 15, %s1979
    %v1981 = vld [vmem:[%s1971] sm:%s1980]
    %v1982 = vunpack.c.l.bf16 %v1981
    %v1983 = vunpack.c.h.bf16 %v1981
    %v1984 = vlaneseq
    %v1985 = vand.u32 %v1984, 127
    %vm1987 = vcmp.lt.s32.totalorder %v1985, 96
    %v1988 = vsel %vm1987, %v1982, %v11
    %s1989 = scalar_lea.vmem [#allocation7], 600
    %v1990 = vpack.c.bf16 0.0, %v1988
    %1992 = vst [vmem:[%s1989] sm:$0xf] %v1990
    %s1993 = scalar_lea.vmem [#allocation7], 604
    %v1994 = vpack.c.bf16 0.0, %v11
    %1996 = vst [vmem:[%s1993] sm:$0xf] %v1994
    %s1997 = scalar_lea.vmem %s3, 304
    %s1999 = sor.u32 255, 127
    %s2000 = sand.u32 %s1999, 85
    %s2001 = sshrl.u32 %s2000, 1
    %s2002 = sor.u32 %s2000, %s2001
    %s2003 = sand.u32 51, %s2002
    %s2004 = sshrl.u32 %s2003, 2
    %s2005 = sor.u32 %s2003, %s2004
    %s2006 = sand.u32 15, %s2005
    %v2007 = vld [vmem:[%s1997] sm:%s2006]
    %v2008 = vunpack.c.l.bf16 %v2007
    %v2009 = vunpack.c.h.bf16 %v2007
    %v2010 = vlaneseq
    %v2011 = vand.u32 %v2010, 127
    %vm2013 = vcmp.lt.s32.totalorder %v2011, 96
    %v2014 = vsel %vm2013, %v2008, %v11
    %s2015 = scalar_lea.vmem [#allocation7], 608
    %v2016 = vpack.c.bf16 0.0, %v2014
    %2018 = vst [vmem:[%s2015] sm:$0xf] %v2016
    %s2019 = scalar_lea.vmem [#allocation7], 612
    %v2020 = vpack.c.bf16 0.0, %v11
    %2022 = vst [vmem:[%s2019] sm:$0xf] %v2020
    %s2023 = scalar_lea.vmem %s3, 308
    %s2025 = sor.u32 255, 127
    %s2026 = sand.u32 %s2025, 85
    %s2027 = sshrl.u32 %s2026, 1
    %s2028 = sor.u32 %s2026, %s2027
    %s2029 = sand.u32 51, %s2028
    %s2030 = sshrl.u32 %s2029, 2
    %s2031 = sor.u32 %s2029, %s2030
    %s2032 = sand.u32 15, %s2031
    %v2033 = vld [vmem:[%s2023] sm:%s2032]
    %v2034 = vunpack.c.l.bf16 %v2033
    %v2035 = vunpack.c.h.bf16 %v2033
    %v2036 = vlaneseq
    %v2037 = vand.u32 %v2036, 127
    %vm2039 = vcmp.lt.s32.totalorder %v2037, 96
    %v2040 = vsel %vm2039, %v2034, %v11
    %s2041 = scalar_lea.vmem [#allocation7], 616
    %v2042 = vpack.c.bf16 0.0, %v2040
    %2044 = vst [vmem:[%s2041] sm:$0xf] %v2042
    %s2045 = scalar_lea.vmem [#allocation7], 620
    %v2046 = vpack.c.bf16 0.0, %v11
    %2048 = vst [vmem:[%s2045] sm:$0xf] %v2046
    %s2049 = scalar_lea.vmem %s3, 312
    %s2051 = sor.u32 255, 127
    %s2052 = sand.u32 %s2051, 85
    %s2053 = sshrl.u32 %s2052, 1
    %s2054 = sor.u32 %s2052, %s2053
    %s2055 = sand.u32 51, %s2054
    %s2056 = sshrl.u32 %s2055, 2
    %s2057 = sor.u32 %s2055, %s2056
    %s2058 = sand.u32 15, %s2057
    %v2059 = vld [vmem:[%s2049] sm:%s2058]
    %v2060 = vunpack.c.l.bf16 %v2059
    %v2061 = vunpack.c.h.bf16 %v2059
    %v2062 = vlaneseq
    %v2063 = vand.u32 %v2062, 127
    %vm2065 = vcmp.lt.s32.totalorder %v2063, 96
    %v2066 = vsel %vm2065, %v2060, %v11
    %s2067 = scalar_lea.vmem [#allocation7], 624
    %v2068 = vpack.c.bf16 0.0, %v2066
    %2070 = vst [vmem:[%s2067] sm:$0xf] %v2068
    %s2071 = scalar_lea.vmem [#allocation7], 628
    %v2072 = vpack.c.bf16 0.0, %v11
    %2074 = vst [vmem:[%s2071] sm:$0xf] %v2072
    %s2075 = scalar_lea.vmem %s3, 316
    %s2077 = sor.u32 255, 127
    %s2078 = sand.u32 %s2077, 85
    %s2079 = sshrl.u32 %s2078, 1
    %s2080 = sor.u32 %s2078, %s2079
    %s2081 = sand.u32 51, %s2080
    %s2082 = sshrl.u32 %s2081, 2
    %s2083 = sor.u32 %s2081, %s2082
    %s2084 = sand.u32 15, %s2083
    %v2085 = vld [vmem:[%s2075] sm:%s2084]
    %v2086 = vunpack.c.l.bf16 %v2085
    %v2087 = vunpack.c.h.bf16 %v2085
    %v2088 = vlaneseq
    %v2089 = vand.u32 %v2088, 127
    %vm2091 = vcmp.lt.s32.totalorder %v2089, 96
    %v2092 = vsel %vm2091, %v2086, %v11
    %s2093 = scalar_lea.vmem [#allocation7], 632
    %v2094 = vpack.c.bf16 0.0, %v2092
    %2096 = vst [vmem:[%s2093] sm:$0xf] %v2094
    %s2097 = scalar_lea.vmem [#allocation7], 636
    %v2098 = vpack.c.bf16 0.0, %v11
    %2100 = vst [vmem:[%s2097] sm:$0xf] %v2098
    %s2101 = scalar_lea.vmem %s3, 320
    %s2103 = sor.u32 255, 127
    %s2104 = sand.u32 %s2103, 85
    %s2105 = sshrl.u32 %s2104, 1
    %s2106 = sor.u32 %s2104, %s2105
    %s2107 = sand.u32 51, %s2106
    %s2108 = sshrl.u32 %s2107, 2
    %s2109 = sor.u32 %s2107, %s2108
    %s2110 = sand.u32 15, %s2109
    %v2111 = vld [vmem:[%s2101] sm:%s2110]
    %v2112 = vunpack.c.l.bf16 %v2111
    %v2113 = vunpack.c.h.bf16 %v2111
    %v2114 = vlaneseq
    %v2115 = vand.u32 %v2114, 127
    %vm2117 = vcmp.lt.s32.totalorder %v2115, 96
    %v2118 = vsel %vm2117, %v2112, %v11
    %s2119 = scalar_lea.vmem [#allocation7], 640
    %v2120 = vpack.c.bf16 0.0, %v2118
    %2122 = vst [vmem:[%s2119] sm:$0xf] %v2120
    %s2123 = scalar_lea.vmem [#allocation7], 644
    %v2124 = vpack.c.bf16 0.0, %v11
    %2126 = vst [vmem:[%s2123] sm:$0xf] %v2124
    %s2127 = scalar_lea.vmem %s3, 324
    %s2129 = sor.u32 255, 127
    %s2130 = sand.u32 %s2129, 85
    %s2131 = sshrl.u32 %s2130, 1
    %s2132 = sor.u32 %s2130, %s2131
    %s2133 = sand.u32 51, %s2132
    %s2134 = sshrl.u32 %s2133, 2
    %s2135 = sor.u32 %s2133, %s2134
    %s2136 = sand.u32 15, %s2135
    %v2137 = vld [vmem:[%s2127] sm:%s2136]
    %v2138 = vunpack.c.l.bf16 %v2137
    %v2139 = vunpack.c.h.bf16 %v2137
    %v2140 = vlaneseq
    %v2141 = vand.u32 %v2140, 127
    %vm2143 = vcmp.lt.s32.totalorder %v2141, 96
    %v2144 = vsel %vm2143, %v2138, %v11
    %s2145 = scalar_lea.vmem [#allocation7], 648
    %v2146 = vpack.c.bf16 0.0, %v2144
    %2148 = vst [vmem:[%s2145] sm:$0xf] %v2146
    %s2149 = scalar_lea.vmem [#allocation7], 652
    %v2150 = vpack.c.bf16 0.0, %v11
    %2152 = vst [vmem:[%s2149] sm:$0xf] %v2150
    %s2153 = scalar_lea.vmem %s3, 328
    %s2155 = sor.u32 255, 127
    %s2156 = sand.u32 %s2155, 85
    %s2157 = sshrl.u32 %s2156, 1
    %s2158 = sor.u32 %s2156, %s2157
    %s2159 = sand.u32 51, %s2158
    %s2160 = sshrl.u32 %s2159, 2
    %s2161 = sor.u32 %s2159, %s2160
    %s2162 = sand.u32 15, %s2161
    %v2163 = vld [vmem:[%s2153] sm:%s2162]
    %v2164 = vunpack.c.l.bf16 %v2163
    %v2165 = vunpack.c.h.bf16 %v2163
    %v2166 = vlaneseq
    %v2167 = vand.u32 %v2166, 127
    %vm2169 = vcmp.lt.s32.totalorder %v2167, 96
    %v2170 = vsel %vm2169, %v2164, %v11
    %s2171 = scalar_lea.vmem [#allocation7], 656
    %v2172 = vpack.c.bf16 0.0, %v2170
    %2174 = vst [vmem:[%s2171] sm:$0xf] %v2172
    %s2175 = scalar_lea.vmem [#allocation7], 660
    %v2176 = vpack.c.bf16 0.0, %v11
    %2178 = vst [vmem:[%s2175] sm:$0xf] %v2176
    %s2179 = scalar_lea.vmem %s3, 332
    %s2181 = sor.u32 255, 127
    %s2182 = sand.u32 %s2181, 85
    %s2183 = sshrl.u32 %s2182, 1
    %s2184 = sor.u32 %s2182, %s2183
    %s2185 = sand.u32 51, %s2184
    %s2186 = sshrl.u32 %s2185, 2
    %s2187 = sor.u32 %s2185, %s2186
    %s2188 = sand.u32 15, %s2187
    %v2189 = vld [vmem:[%s2179] sm:%s2188]
    %v2190 = vunpack.c.l.bf16 %v2189
    %v2191 = vunpack.c.h.bf16 %v2189
    %v2192 = vlaneseq
    %v2193 = vand.u32 %v2192, 127
    %vm2195 = vcmp.lt.s32.totalorder %v2193, 96
    %v2196 = vsel %vm2195, %v2190, %v11
    %s2197 = scalar_lea.vmem [#allocation7], 664
    %v2198 = vpack.c.bf16 0.0, %v2196
    %2200 = vst [vmem:[%s2197] sm:$0xf] %v2198
    %s2201 = scalar_lea.vmem [#allocation7], 668
    %v2202 = vpack.c.bf16 0.0, %v11
    %2204 = vst [vmem:[%s2201] sm:$0xf] %v2202
    %s2205 = scalar_lea.vmem %s3, 336
    %s2207 = sor.u32 255, 127
    %s2208 = sand.u32 %s2207, 85
    %s2209 = sshrl.u32 %s2208, 1
    %s2210 = sor.u32 %s2208, %s2209
    %s2211 = sand.u32 51, %s2210
    %s2212 = sshrl.u32 %s2211, 2
    %s2213 = sor.u32 %s2211, %s2212
    %s2214 = sand.u32 15, %s2213
    %v2215 = vld [vmem:[%s2205] sm:%s2214]
    %v2216 = vunpack.c.l.bf16 %v2215
    %v2217 = vunpack.c.h.bf16 %v2215
    %v2218 = vlaneseq
    %v2219 = vand.u32 %v2218, 127
    %vm2221 = vcmp.lt.s32.totalorder %v2219, 96
    %v2222 = vsel %vm2221, %v2216, %v11
    %s2223 = scalar_lea.vmem [#allocation7], 672
    %v2224 = vpack.c.bf16 0.0, %v2222
    %2226 = vst [vmem:[%s2223] sm:$0xf] %v2224
    %s2227 = scalar_lea.vmem [#allocation7], 676
    %v2228 = vpack.c.bf16 0.0, %v11
    %2230 = vst [vmem:[%s2227] sm:$0xf] %v2228
    %s2231 = scalar_lea.vmem %s3, 340
    %s2233 = sor.u32 255, 127
    %s2234 = sand.u32 %s2233, 85
    %s2235 = sshrl.u32 %s2234, 1
    %s2236 = sor.u32 %s2234, %s2235
    %s2237 = sand.u32 51, %s2236
    %s2238 = sshrl.u32 %s2237, 2
    %s2239 = sor.u32 %s2237, %s2238
    %s2240 = sand.u32 15, %s2239
    %v2241 = vld [vmem:[%s2231] sm:%s2240]
    %v2242 = vunpack.c.l.bf16 %v2241
    %v2243 = vunpack.c.h.bf16 %v2241
    %v2244 = vlaneseq
    %v2245 = vand.u32 %v2244, 127
    %vm2247 = vcmp.lt.s32.totalorder %v2245, 96
    %v2248 = vsel %vm2247, %v2242, %v11
    %s2249 = scalar_lea.vmem [#allocation7], 680
    %v2250 = vpack.c.bf16 0.0, %v2248
    %2252 = vst [vmem:[%s2249] sm:$0xf] %v2250
    %s2253 = scalar_lea.vmem [#allocation7], 684
    %v2254 = vpack.c.bf16 0.0, %v11
    %2256 = vst [vmem:[%s2253] sm:$0xf] %v2254
    %s2257 = scalar_lea.vmem %s3, 344
    %s2259 = sor.u32 255, 127
    %s2260 = sand.u32 %s2259, 85
    %s2261 = sshrl.u32 %s2260, 1
    %s2262 = sor.u32 %s2260, %s2261
    %s2263 = sand.u32 51, %s2262
    %s2264 = sshrl.u32 %s2263, 2
    %s2265 = sor.u32 %s2263, %s2264
    %s2266 = sand.u32 15, %s2265
    %v2267 = vld [vmem:[%s2257] sm:%s2266]
    %v2268 = vunpack.c.l.bf16 %v2267
    %v2269 = vunpack.c.h.bf16 %v2267
    %v2270 = vlaneseq
    %v2271 = vand.u32 %v2270, 127
    %vm2273 = vcmp.lt.s32.totalorder %v2271, 96
    %v2274 = vsel %vm2273, %v2268, %v11
    %s2275 = scalar_lea.vmem [#allocation7], 688
    %v2276 = vpack.c.bf16 0.0, %v2274
    %2278 = vst [vmem:[%s2275] sm:$0xf] %v2276
    %s2279 = scalar_lea.vmem [#allocation7], 692
    %v2280 = vpack.c.bf16 0.0, %v11
    %2282 = vst [vmem:[%s2279] sm:$0xf] %v2280
    %s2283 = scalar_lea.vmem %s3, 348
    %s2285 = sor.u32 255, 127
    %s2286 = sand.u32 %s2285, 85
    %s2287 = sshrl.u32 %s2286, 1
    %s2288 = sor.u32 %s2286, %s2287
    %s2289 = sand.u32 51, %s2288
    %s2290 = sshrl.u32 %s2289, 2
    %s2291 = sor.u32 %s2289, %s2290
    %s2292 = sand.u32 15, %s2291
    %v2293 = vld [vmem:[%s2283] sm:%s2292]
    %v2294 = vunpack.c.l.bf16 %v2293
    %v2295 = vunpack.c.h.bf16 %v2293
    %v2296 = vlaneseq
    %v2297 = vand.u32 %v2296, 127
    %vm2299 = vcmp.lt.s32.totalorder %v2297, 96
    %v2300 = vsel %vm2299, %v2294, %v11
    %s2301 = scalar_lea.vmem [#allocation7], 696
    %v2302 = vpack.c.bf16 0.0, %v2300
    %2304 = vst [vmem:[%s2301] sm:$0xf] %v2302
    %s2305 = scalar_lea.vmem [#allocation7], 700
    %v2306 = vpack.c.bf16 0.0, %v11
    %2308 = vst [vmem:[%s2305] sm:$0xf] %v2306
    %s2309 = scalar_lea.vmem %s3, 352
    %s2311 = sor.u32 255, 127
    %s2312 = sand.u32 %s2311, 85
    %s2313 = sshrl.u32 %s2312, 1
    %s2314 = sor.u32 %s2312, %s2313
    %s2315 = sand.u32 51, %s2314
    %s2316 = sshrl.u32 %s2315, 2
    %s2317 = sor.u32 %s2315, %s2316
    %s2318 = sand.u32 15, %s2317
    %v2319 = vld [vmem:[%s2309] sm:%s2318]
    %v2320 = vunpack.c.l.bf16 %v2319
    %v2321 = vunpack.c.h.bf16 %v2319
    %v2322 = vlaneseq
    %v2323 = vand.u32 %v2322, 127
    %vm2325 = vcmp.lt.s32.totalorder %v2323, 96
    %v2326 = vsel %vm2325, %v2320, %v11
    %s2327 = scalar_lea.vmem [#allocation7], 704
    %v2328 = vpack.c.bf16 0.0, %v2326
    %2330 = vst [vmem:[%s2327] sm:$0xf] %v2328
    %s2331 = scalar_lea.vmem [#allocation7], 708
    %v2332 = vpack.c.bf16 0.0, %v11
    %2334 = vst [vmem:[%s2331] sm:$0xf] %v2332
    %s2335 = scalar_lea.vmem %s3, 356
    %s2337 = sor.u32 255, 127
    %s2338 = sand.u32 %s2337, 85
    %s2339 = sshrl.u32 %s2338, 1
    %s2340 = sor.u32 %s2338, %s2339
    %s2341 = sand.u32 51, %s2340
    %s2342 = sshrl.u32 %s2341, 2
    %s2343 = sor.u32 %s2341, %s2342
    %s2344 = sand.u32 15, %s2343
    %v2345 = vld [vmem:[%s2335] sm:%s2344]
    %v2346 = vunpack.c.l.bf16 %v2345
    %v2347 = vunpack.c.h.bf16 %v2345
    %v2348 = vlaneseq
    %v2349 = vand.u32 %v2348, 127
    %vm2351 = vcmp.lt.s32.totalorder %v2349, 96
    %v2352 = vsel %vm2351, %v2346, %v11
    %s2353 = scalar_lea.vmem [#allocation7], 712
    %v2354 = vpack.c.bf16 0.0, %v2352
    %2356 = vst [vmem:[%s2353] sm:$0xf] %v2354
    %s2357 = scalar_lea.vmem [#allocation7], 716
    %v2358 = vpack.c.bf16 0.0, %v11
    %2360 = vst [vmem:[%s2357] sm:$0xf] %v2358
    %s2361 = scalar_lea.vmem %s3, 360
    %s2363 = sor.u32 255, 127
    %s2364 = sand.u32 %s2363, 85
    %s2365 = sshrl.u32 %s2364, 1
    %s2366 = sor.u32 %s2364, %s2365
    %s2367 = sand.u32 51, %s2366
    %s2368 = sshrl.u32 %s2367, 2
    %s2369 = sor.u32 %s2367, %s2368
    %s2370 = sand.u32 15, %s2369
    %v2371 = vld [vmem:[%s2361] sm:%s2370]
    %v2372 = vunpack.c.l.bf16 %v2371
    %v2373 = vunpack.c.h.bf16 %v2371
    %v2374 = vlaneseq
    %v2375 = vand.u32 %v2374, 127
    %vm2377 = vcmp.lt.s32.totalorder %v2375, 96
    %v2378 = vsel %vm2377, %v2372, %v11
    %s2379 = scalar_lea.vmem [#allocation7], 720
    %v2380 = vpack.c.bf16 0.0, %v2378
    %2382 = vst [vmem:[%s2379] sm:$0xf] %v2380
    %s2383 = scalar_lea.vmem [#allocation7], 724
    %v2384 = vpack.c.bf16 0.0, %v11
    %2386 = vst [vmem:[%s2383] sm:$0xf] %v2384
    %s2387 = scalar_lea.vmem %s3, 364
    %s2389 = sor.u32 255, 127
    %s2390 = sand.u32 %s2389, 85
    %s2391 = sshrl.u32 %s2390, 1
    %s2392 = sor.u32 %s2390, %s2391
    %s2393 = sand.u32 51, %s2392
    %s2394 = sshrl.u32 %s2393, 2
    %s2395 = sor.u32 %s2393, %s2394
    %s2396 = sand.u32 15, %s2395
    %v2397 = vld [vmem:[%s2387] sm:%s2396]
    %v2398 = vunpack.c.l.bf16 %v2397
    %v2399 = vunpack.c.h.bf16 %v2397
    %v2400 = vlaneseq
    %v2401 = vand.u32 %v2400, 127
    %vm2403 = vcmp.lt.s32.totalorder %v2401, 96
    %v2404 = vsel %vm2403, %v2398, %v11
    %s2405 = scalar_lea.vmem [#allocation7], 728
    %v2406 = vpack.c.bf16 0.0, %v2404
    %2408 = vst [vmem:[%s2405] sm:$0xf] %v2406
    %s2409 = scalar_lea.vmem [#allocation7], 732
    %v2410 = vpack.c.bf16 0.0, %v11
    %2412 = vst [vmem:[%s2409] sm:$0xf] %v2410
    %s2413 = scalar_lea.vmem %s3, 368
    %s2415 = sor.u32 255, 127
    %s2416 = sand.u32 %s2415, 85
    %s2417 = sshrl.u32 %s2416, 1
    %s2418 = sor.u32 %s2416, %s2417
    %s2419 = sand.u32 51, %s2418
    %s2420 = sshrl.u32 %s2419, 2
    %s2421 = sor.u32 %s2419, %s2420
    %s2422 = sand.u32 15, %s2421
    %v2423 = vld [vmem:[%s2413] sm:%s2422]
    %v2424 = vunpack.c.l.bf16 %v2423
    %v2425 = vunpack.c.h.bf16 %v2423
    %v2426 = vlaneseq
    %v2427 = vand.u32 %v2426, 127
    %vm2429 = vcmp.lt.s32.totalorder %v2427, 96
    %v2430 = vsel %vm2429, %v2424, %v11
    %s2431 = scalar_lea.vmem [#allocation7], 736
    %v2432 = vpack.c.bf16 0.0, %v2430
    %2434 = vst [vmem:[%s2431] sm:$0xf] %v2432
    %s2435 = scalar_lea.vmem [#allocation7], 740
    %v2436 = vpack.c.bf16 0.0, %v11
    %2438 = vst [vmem:[%s2435] sm:$0xf] %v2436
    %s2439 = scalar_lea.vmem %s3, 372
    %s2441 = sor.u32 255, 127
    %s2442 = sand.u32 %s2441, 85
    %s2443 = sshrl.u32 %s2442, 1
    %s2444 = sor.u32 %s2442, %s2443
    %s2445 = sand.u32 51, %s2444
    %s2446 = sshrl.u32 %s2445, 2
    %s2447 = sor.u32 %s2445, %s2446
    %s2448 = sand.u32 15, %s2447
    %v2449 = vld [vmem:[%s2439] sm:%s2448]
    %v2450 = vunpack.c.l.bf16 %v2449
    %v2451 = vunpack.c.h.bf16 %v2449
    %v2452 = vlaneseq
    %v2453 = vand.u32 %v2452, 127
    %vm2455 = vcmp.lt.s32.totalorder %v2453, 96
    %v2456 = vsel %vm2455, %v2450, %v11
    %s2457 = scalar_lea.vmem [#allocation7], 744
    %v2458 = vpack.c.bf16 0.0, %v2456
    %2460 = vst [vmem:[%s2457] sm:$0xf] %v2458
    %s2461 = scalar_lea.vmem [#allocation7], 748
    %v2462 = vpack.c.bf16 0.0, %v11
    %2464 = vst [vmem:[%s2461] sm:$0xf] %v2462
    %s2465 = scalar_lea.vmem %s3, 376
    %s2467 = sor.u32 255, 127
    %s2468 = sand.u32 %s2467, 85
    %s2469 = sshrl.u32 %s2468, 1
    %s2470 = sor.u32 %s2468, %s2469
    %s2471 = sand.u32 51, %s2470
    %s2472 = sshrl.u32 %s2471, 2
    %s2473 = sor.u32 %s2471, %s2472
    %s2474 = sand.u32 15, %s2473
    %v2475 = vld [vmem:[%s2465] sm:%s2474]
    %v2476 = vunpack.c.l.bf16 %v2475
    %v2477 = vunpack.c.h.bf16 %v2475
    %v2478 = vlaneseq
    %v2479 = vand.u32 %v2478, 127
    %vm2481 = vcmp.lt.s32.totalorder %v2479, 96
    %v2482 = vsel %vm2481, %v2476, %v11
    %s2483 = scalar_lea.vmem [#allocation7], 752
    %v2484 = vpack.c.bf16 0.0, %v2482
    %2486 = vst [vmem:[%s2483] sm:$0xf] %v2484
    %s2487 = scalar_lea.vmem [#allocation7], 756
    %v2488 = vpack.c.bf16 0.0, %v11
    %2490 = vst [vmem:[%s2487] sm:$0xf] %v2488
    %s2491 = scalar_lea.vmem %s3, 380
    %s2493 = sor.u32 255, 127
    %s2494 = sand.u32 %s2493, 85
    %s2495 = sshrl.u32 %s2494, 1
    %s2496 = sor.u32 %s2494, %s2495
    %s2497 = sand.u32 51, %s2496
    %s2498 = sshrl.u32 %s2497, 2
    %s2499 = sor.u32 %s2497, %s2498
    %s2500 = sand.u32 15, %s2499
    %v2501 = vld [vmem:[%s2491] sm:%s2500]
    %v2502 = vunpack.c.l.bf16 %v2501
    %v2503 = vunpack.c.h.bf16 %v2501
    %v2504 = vlaneseq
    %v2505 = vand.u32 %v2504, 127
    %vm2507 = vcmp.lt.s32.totalorder %v2505, 96
    %v2508 = vsel %vm2507, %v2502, %v11
    %s2509 = scalar_lea.vmem [#allocation7], 760
    %v2510 = vpack.c.bf16 0.0, %v2508
    %2512 = vst [vmem:[%s2509] sm:$0xf] %v2510
    %s2513 = scalar_lea.vmem [#allocation7], 764
    %v2514 = vpack.c.bf16 0.0, %v11
    %2516 = vst [vmem:[%s2513] sm:$0xf] %v2514
    %s2517 = scalar_lea.vmem %s3, 384
    %s2519 = sor.u32 255, 127
    %s2520 = sand.u32 %s2519, 85
    %s2521 = sshrl.u32 %s2520, 1
    %s2522 = sor.u32 %s2520, %s2521
    %s2523 = sand.u32 51, %s2522
    %s2524 = sshrl.u32 %s2523, 2
    %s2525 = sor.u32 %s2523, %s2524
    %s2526 = sand.u32 15, %s2525
    %v2527 = vld [vmem:[%s2517] sm:%s2526]
    %v2528 = vunpack.c.l.bf16 %v2527
    %v2529 = vunpack.c.h.bf16 %v2527
    %v2530 = vlaneseq
    %v2531 = vand.u32 %v2530, 127
    %vm2533 = vcmp.lt.s32.totalorder %v2531, 96
    %v2534 = vsel %vm2533, %v2528, %v11
    %s2535 = scalar_lea.vmem [#allocation7], 768
    %v2536 = vpack.c.bf16 0.0, %v2534
    %2538 = vst [vmem:[%s2535] sm:$0xf] %v2536
    %s2539 = scalar_lea.vmem [#allocation7], 772
    %v2540 = vpack.c.bf16 0.0, %v11
    %2542 = vst [vmem:[%s2539] sm:$0xf] %v2540
    %s2543 = scalar_lea.vmem %s3, 388
    %s2545 = sor.u32 255, 127
    %s2546 = sand.u32 %s2545, 85
    %s2547 = sshrl.u32 %s2546, 1
    %s2548 = sor.u32 %s2546, %s2547
    %s2549 = sand.u32 51, %s2548
    %s2550 = sshrl.u32 %s2549, 2
    %s2551 = sor.u32 %s2549, %s2550
    %s2552 = sand.u32 15, %s2551
    %v2553 = vld [vmem:[%s2543] sm:%s2552]
    %v2554 = vunpack.c.l.bf16 %v2553
    %v2555 = vunpack.c.h.bf16 %v2553
    %v2556 = vlaneseq
    %v2557 = vand.u32 %v2556, 127
    %vm2559 = vcmp.lt.s32.totalorder %v2557, 96
    %v2560 = vsel %vm2559, %v2554, %v11
    %s2561 = scalar_lea.vmem [#allocation7], 776
    %v2562 = vpack.c.bf16 0.0, %v2560
    %2564 = vst [vmem:[%s2561] sm:$0xf] %v2562
    %s2565 = scalar_lea.vmem [#allocation7], 780
    %v2566 = vpack.c.bf16 0.0, %v11
    %2568 = vst [vmem:[%s2565] sm:$0xf] %v2566
    %s2569 = scalar_lea.vmem %s3, 392
    %s2571 = sor.u32 255, 127
    %s2572 = sand.u32 %s2571, 85
    %s2573 = sshrl.u32 %s2572, 1
    %s2574 = sor.u32 %s2572, %s2573
    %s2575 = sand.u32 51, %s2574
    %s2576 = sshrl.u32 %s2575, 2
    %s2577 = sor.u32 %s2575, %s2576
    %s2578 = sand.u32 15, %s2577
    %v2579 = vld [vmem:[%s2569] sm:%s2578]
    %v2580 = vunpack.c.l.bf16 %v2579
    %v2581 = vunpack.c.h.bf16 %v2579
    %v2582 = vlaneseq
    %v2583 = vand.u32 %v2582, 127
    %vm2585 = vcmp.lt.s32.totalorder %v2583, 96
    %v2586 = vsel %vm2585, %v2580, %v11
    %s2587 = scalar_lea.vmem [#allocation7], 784
    %v2588 = vpack.c.bf16 0.0, %v2586
    %2590 = vst [vmem:[%s2587] sm:$0xf] %v2588
    %s2591 = scalar_lea.vmem [#allocation7], 788
    %v2592 = vpack.c.bf16 0.0, %v11
    %2594 = vst [vmem:[%s2591] sm:$0xf] %v2592
    %s2595 = scalar_lea.vmem %s3, 396
    %s2597 = sor.u32 255, 127
    %s2598 = sand.u32 %s2597, 85
    %s2599 = sshrl.u32 %s2598, 1
    %s2600 = sor.u32 %s2598, %s2599
    %s2601 = sand.u32 51, %s2600
    %s2602 = sshrl.u32 %s2601, 2
    %s2603 = sor.u32 %s2601, %s2602
    %s2604 = sand.u32 15, %s2603
    %v2605 = vld [vmem:[%s2595] sm:%s2604]
    %v2606 = vunpack.c.l.bf16 %v2605
    %v2607 = vunpack.c.h.bf16 %v2605
    %v2608 = vlaneseq
    %v2609 = vand.u32 %v2608, 127
    %vm2611 = vcmp.lt.s32.totalorder %v2609, 96
    %v2612 = vsel %vm2611, %v2606, %v11
    %s2613 = scalar_lea.vmem [#allocation7], 792
    %v2614 = vpack.c.bf16 0.0, %v2612
    %2616 = vst [vmem:[%s2613] sm:$0xf] %v2614
    %s2617 = scalar_lea.vmem [#allocation7], 796
    %v2618 = vpack.c.bf16 0.0, %v11
    %2620 = vst [vmem:[%s2617] sm:$0xf] %v2618
    %s2621 = scalar_lea.vmem %s3, 400
    %s2623 = sor.u32 255, 127
    %s2624 = sand.u32 %s2623, 85
    %s2625 = sshrl.u32 %s2624, 1
    %s2626 = sor.u32 %s2624, %s2625
    %s2627 = sand.u32 51, %s2626
    %s2628 = sshrl.u32 %s2627, 2
    %s2629 = sor.u32 %s2627, %s2628
    %s2630 = sand.u32 15, %s2629
    %v2631 = vld [vmem:[%s2621] sm:%s2630]
    %v2632 = vunpack.c.l.bf16 %v2631
    %v2633 = vunpack.c.h.bf16 %v2631
    %v2634 = vlaneseq
    %v2635 = vand.u32 %v2634, 127
    %vm2637 = vcmp.lt.s32.totalorder %v2635, 96
    %v2638 = vsel %vm2637, %v2632, %v11
    %s2639 = scalar_lea.vmem [#allocation7], 800
    %v2640 = vpack.c.bf16 0.0, %v2638
    %2642 = vst [vmem:[%s2639] sm:$0xf] %v2640
    %s2643 = scalar_lea.vmem [#allocation7], 804
    %v2644 = vpack.c.bf16 0.0, %v11
    %2646 = vst [vmem:[%s2643] sm:$0xf] %v2644
    %s2647 = scalar_lea.vmem %s3, 404
    %s2649 = sor.u32 255, 127
    %s2650 = sand.u32 %s2649, 85
    %s2651 = sshrl.u32 %s2650, 1
    %s2652 = sor.u32 %s2650, %s2651
    %s2653 = sand.u32 51, %s2652
    %s2654 = sshrl.u32 %s2653, 2
    %s2655 = sor.u32 %s2653, %s2654
    %s2656 = sand.u32 15, %s2655
    %v2657 = vld [vmem:[%s2647] sm:%s2656]
    %v2658 = vunpack.c.l.bf16 %v2657
    %v2659 = vunpack.c.h.bf16 %v2657
    %v2660 = vlaneseq
    %v2661 = vand.u32 %v2660, 127
    %vm2663 = vcmp.lt.s32.totalorder %v2661, 96
    %v2664 = vsel %vm2663, %v2658, %v11
    %s2665 = scalar_lea.vmem [#allocation7], 808
    %v2666 = vpack.c.bf16 0.0, %v2664
    %2668 = vst [vmem:[%s2665] sm:$0xf] %v2666
    %s2669 = scalar_lea.vmem [#allocation7], 812
    %v2670 = vpack.c.bf16 0.0, %v11
    %2672 = vst [vmem:[%s2669] sm:$0xf] %v2670
    %s2673 = scalar_lea.vmem %s3, 408
    %s2675 = sor.u32 255, 127
    %s2676 = sand.u32 %s2675, 85
    %s2677 = sshrl.u32 %s2676, 1
    %s2678 = sor.u32 %s2676, %s2677
    %s2679 = sand.u32 51, %s2678
    %s2680 = sshrl.u32 %s2679, 2
    %s2681 = sor.u32 %s2679, %s2680
    %s2682 = sand.u32 15, %s2681
    %v2683 = vld [vmem:[%s2673] sm:%s2682]
    %v2684 = vunpack.c.l.bf16 %v2683
    %v2685 = vunpack.c.h.bf16 %v2683
    %v2686 = vlaneseq
    %v2687 = vand.u32 %v2686, 127
    %vm2689 = vcmp.lt.s32.totalorder %v2687, 96
    %v2690 = vsel %vm2689, %v2684, %v11
    %s2691 = scalar_lea.vmem [#allocation7], 816
    %v2692 = vpack.c.bf16 0.0, %v2690
    %2694 = vst [vmem:[%s2691] sm:$0xf] %v2692
    %s2695 = scalar_lea.vmem [#allocation7], 820
    %v2696 = vpack.c.bf16 0.0, %v11
    %2698 = vst [vmem:[%s2695] sm:$0xf] %v2696
    %s2699 = scalar_lea.vmem %s3, 412
    %s2701 = sor.u32 255, 127
    %s2702 = sand.u32 %s2701, 85
    %s2703 = sshrl.u32 %s2702, 1
    %s2704 = sor.u32 %s2702, %s2703
    %s2705 = sand.u32 51, %s2704
    %s2706 = sshrl.u32 %s2705, 2
    %s2707 = sor.u32 %s2705, %s2706
    %s2708 = sand.u32 15, %s2707
    %v2709 = vld [vmem:[%s2699] sm:%s2708]
    %v2710 = vunpack.c.l.bf16 %v2709
    %v2711 = vunpack.c.h.bf16 %v2709
    %v2712 = vlaneseq
    %v2713 = vand.u32 %v2712, 127
    %vm2715 = vcmp.lt.s32.totalorder %v2713, 96
    %v2716 = vsel %vm2715, %v2710, %v11
    %s2717 = scalar_lea.vmem [#allocation7], 824
    %v2718 = vpack.c.bf16 0.0, %v2716
    %2720 = vst [vmem:[%s2717] sm:$0xf] %v2718
    %s2721 = scalar_lea.vmem [#allocation7], 828
    %v2722 = vpack.c.bf16 0.0, %v11
    %2724 = vst [vmem:[%s2721] sm:$0xf] %v2722
    %s2725 = scalar_lea.vmem %s3, 416
    %s2727 = sor.u32 255, 127
    %s2728 = sand.u32 %s2727, 85
    %s2729 = sshrl.u32 %s2728, 1
    %s2730 = sor.u32 %s2728, %s2729
    %s2731 = sand.u32 51, %s2730
    %s2732 = sshrl.u32 %s2731, 2
    %s2733 = sor.u32 %s2731, %s2732
    %s2734 = sand.u32 15, %s2733
    %v2735 = vld [vmem:[%s2725] sm:%s2734]
    %v2736 = vunpack.c.l.bf16 %v2735
    %v2737 = vunpack.c.h.bf16 %v2735
    %v2738 = vlaneseq
    %v2739 = vand.u32 %v2738, 127
    %vm2741 = vcmp.lt.s32.totalorder %v2739, 96
    %v2742 = vsel %vm2741, %v2736, %v11
    %s2743 = scalar_lea.vmem [#allocation7], 832
    %v2744 = vpack.c.bf16 0.0, %v2742
    %2746 = vst [vmem:[%s2743] sm:$0xf] %v2744
    %s2747 = scalar_lea.vmem [#allocation7], 836
    %v2748 = vpack.c.bf16 0.0, %v11
    %2750 = vst [vmem:[%s2747] sm:$0xf] %v2748
    %s2751 = scalar_lea.vmem %s3, 420
    %s2753 = sor.u32 255, 127
    %s2754 = sand.u32 %s2753, 85
    %s2755 = sshrl.u32 %s2754, 1
    %s2756 = sor.u32 %s2754, %s2755
    %s2757 = sand.u32 51, %s2756
    %s2758 = sshrl.u32 %s2757, 2
    %s2759 = sor.u32 %s2757, %s2758
    %s2760 = sand.u32 15, %s2759
    %v2761 = vld [vmem:[%s2751] sm:%s2760]
    %v2762 = vunpack.c.l.bf16 %v2761
    %v2763 = vunpack.c.h.bf16 %v2761
    %v2764 = vlaneseq
    %v2765 = vand.u32 %v2764, 127
    %vm2767 = vcmp.lt.s32.totalorder %v2765, 96
    %v2768 = vsel %vm2767, %v2762, %v11
    %s2769 = scalar_lea.vmem [#allocation7], 840
    %v2770 = vpack.c.bf16 0.0, %v2768
    %2772 = vst [vmem:[%s2769] sm:$0xf] %v2770
    %s2773 = scalar_lea.vmem [#allocation7], 844
    %v2774 = vpack.c.bf16 0.0, %v11
    %2776 = vst [vmem:[%s2773] sm:$0xf] %v2774
    %s2777 = scalar_lea.vmem %s3, 424
    %s2779 = sor.u32 255, 127
    %s2780 = sand.u32 %s2779, 85
    %s2781 = sshrl.u32 %s2780, 1
    %s2782 = sor.u32 %s2780, %s2781
    %s2783 = sand.u32 51, %s2782
    %s2784 = sshrl.u32 %s2783, 2
    %s2785 = sor.u32 %s2783, %s2784
    %s2786 = sand.u32 15, %s2785
    %v2787 = vld [vmem:[%s2777] sm:%s2786]
    %v2788 = vunpack.c.l.bf16 %v2787
    %v2789 = vunpack.c.h.bf16 %v2787
    %v2790 = vlaneseq
    %v2791 = vand.u32 %v2790, 127
    %vm2793 = vcmp.lt.s32.totalorder %v2791, 96
    %v2794 = vsel %vm2793, %v2788, %v11
    %s2795 = scalar_lea.vmem [#allocation7], 848
    %v2796 = vpack.c.bf16 0.0, %v2794
    %2798 = vst [vmem:[%s2795] sm:$0xf] %v2796
    %s2799 = scalar_lea.vmem [#allocation7], 852
    %v2800 = vpack.c.bf16 0.0, %v11
    %2802 = vst [vmem:[%s2799] sm:$0xf] %v2800
    %s2803 = scalar_lea.vmem %s3, 428
    %s2805 = sor.u32 255, 127
    %s2806 = sand.u32 %s2805, 85
    %s2807 = sshrl.u32 %s2806, 1
    %s2808 = sor.u32 %s2806, %s2807
    %s2809 = sand.u32 51, %s2808
    %s2810 = sshrl.u32 %s2809, 2
    %s2811 = sor.u32 %s2809, %s2810
    %s2812 = sand.u32 15, %s2811
    %v2813 = vld [vmem:[%s2803] sm:%s2812]
    %v2814 = vunpack.c.l.bf16 %v2813
    %v2815 = vunpack.c.h.bf16 %v2813
    %v2816 = vlaneseq
    %v2817 = vand.u32 %v2816, 127
    %vm2819 = vcmp.lt.s32.totalorder %v2817, 96
    %v2820 = vsel %vm2819, %v2814, %v11
    %s2821 = scalar_lea.vmem [#allocation7], 856
    %v2822 = vpack.c.bf16 0.0, %v2820
    %2824 = vst [vmem:[%s2821] sm:$0xf] %v2822
    %s2825 = scalar_lea.vmem [#allocation7], 860
    %v2826 = vpack.c.bf16 0.0, %v11
    %2828 = vst [vmem:[%s2825] sm:$0xf] %v2826
    %s2829 = scalar_lea.vmem %s3, 432
    %s2831 = sor.u32 255, 127
    %s2832 = sand.u32 %s2831, 85
    %s2833 = sshrl.u32 %s2832, 1
    %s2834 = sor.u32 %s2832, %s2833
    %s2835 = sand.u32 51, %s2834
    %s2836 = sshrl.u32 %s2835, 2
    %s2837 = sor.u32 %s2835, %s2836
    %s2838 = sand.u32 15, %s2837
    %v2839 = vld [vmem:[%s2829] sm:%s2838]
    %v2840 = vunpack.c.l.bf16 %v2839
    %v2841 = vunpack.c.h.bf16 %v2839
    %v2842 = vlaneseq
    %v2843 = vand.u32 %v2842, 127
    %vm2845 = vcmp.lt.s32.totalorder %v2843, 96
    %v2846 = vsel %vm2845, %v2840, %v11
    %s2847 = scalar_lea.vmem [#allocation7], 864
    %v2848 = vpack.c.bf16 0.0, %v2846
    %2850 = vst [vmem:[%s2847] sm:$0xf] %v2848
    %s2851 = scalar_lea.vmem [#allocation7], 868
    %v2852 = vpack.c.bf16 0.0, %v11
    %2854 = vst [vmem:[%s2851] sm:$0xf] %v2852
    %s2855 = scalar_lea.vmem %s3, 436
    %s2857 = sor.u32 255, 127
    %s2858 = sand.u32 %s2857, 85
    %s2859 = sshrl.u32 %s2858, 1
    %s2860 = sor.u32 %s2858, %s2859
    %s2861 = sand.u32 51, %s2860
    %s2862 = sshrl.u32 %s2861, 2
    %s2863 = sor.u32 %s2861, %s2862
    %s2864 = sand.u32 15, %s2863
    %v2865 = vld [vmem:[%s2855] sm:%s2864]
    %v2866 = vunpack.c.l.bf16 %v2865
    %v2867 = vunpack.c.h.bf16 %v2865
    %v2868 = vlaneseq
    %v2869 = vand.u32 %v2868, 127
    %vm2871 = vcmp.lt.s32.totalorder %v2869, 96
    %v2872 = vsel %vm2871, %v2866, %v11
    %s2873 = scalar_lea.vmem [#allocation7], 872
    %v2874 = vpack.c.bf16 0.0, %v2872
    %2876 = vst [vmem:[%s2873] sm:$0xf] %v2874
    %s2877 = scalar_lea.vmem [#allocation7], 876
    %v2878 = vpack.c.bf16 0.0, %v11
    %2880 = vst [vmem:[%s2877] sm:$0xf] %v2878
    %s2881 = scalar_lea.vmem %s3, 440
    %s2883 = sor.u32 255, 127
    %s2884 = sand.u32 %s2883, 85
    %s2885 = sshrl.u32 %s2884, 1
    %s2886 = sor.u32 %s2884, %s2885
    %s2887 = sand.u32 51, %s2886
    %s2888 = sshrl.u32 %s2887, 2
    %s2889 = sor.u32 %s2887, %s2888
    %s2890 = sand.u32 15, %s2889
    %v2891 = vld [vmem:[%s2881] sm:%s2890]
    %v2892 = vunpack.c.l.bf16 %v2891
    %v2893 = vunpack.c.h.bf16 %v2891
    %v2894 = vlaneseq
    %v2895 = vand.u32 %v2894, 127
    %vm2897 = vcmp.lt.s32.totalorder %v2895, 96
    %v2898 = vsel %vm2897, %v2892, %v11
    %s2899 = scalar_lea.vmem [#allocation7], 880
    %v2900 = vpack.c.bf16 0.0, %v2898
    %2902 = vst [vmem:[%s2899] sm:$0xf] %v2900
    %s2903 = scalar_lea.vmem [#allocation7], 884
    %v2904 = vpack.c.bf16 0.0, %v11
    %2906 = vst [vmem:[%s2903] sm:$0xf] %v2904
    %s2907 = scalar_lea.vmem %s3, 444
    %s2909 = sor.u32 255, 127
    %s2910 = sand.u32 %s2909, 85
    %s2911 = sshrl.u32 %s2910, 1
    %s2912 = sor.u32 %s2910, %s2911
    %s2913 = sand.u32 51, %s2912
    %s2914 = sshrl.u32 %s2913, 2
    %s2915 = sor.u32 %s2913, %s2914
    %s2916 = sand.u32 15, %s2915
    %v2917 = vld [vmem:[%s2907] sm:%s2916]
    %v2918 = vunpack.c.l.bf16 %v2917
    %v2919 = vunpack.c.h.bf16 %v2917
    %v2920 = vlaneseq
    %v2921 = vand.u32 %v2920, 127
    %vm2923 = vcmp.lt.s32.totalorder %v2921, 96
    %v2924 = vsel %vm2923, %v2918, %v11
    %s2925 = scalar_lea.vmem [#allocation7], 888
    %v2926 = vpack.c.bf16 0.0, %v2924
    %2928 = vst [vmem:[%s2925] sm:$0xf] %v2926
    %s2929 = scalar_lea.vmem [#allocation7], 892
    %v2930 = vpack.c.bf16 0.0, %v11
    %2932 = vst [vmem:[%s2929] sm:$0xf] %v2930
    %s2933 = scalar_lea.vmem %s3, 448
    %s2935 = sor.u32 255, 127
    %s2936 = sand.u32 %s2935, 85
    %s2937 = sshrl.u32 %s2936, 1
    %s2938 = sor.u32 %s2936, %s2937
    %s2939 = sand.u32 51, %s2938
    %s2940 = sshrl.u32 %s2939, 2
    %s2941 = sor.u32 %s2939, %s2940
    %s2942 = sand.u32 15, %s2941
    %v2943 = vld [vmem:[%s2933] sm:%s2942]
    %v2944 = vunpack.c.l.bf16 %v2943
    %v2945 = vunpack.c.h.bf16 %v2943
    %v2946 = vlaneseq
    %v2947 = vand.u32 %v2946, 127
    %vm2949 = vcmp.lt.s32.totalorder %v2947, 96
    %v2950 = vsel %vm2949, %v2944, %v11
    %s2951 = scalar_lea.vmem [#allocation7], 896
    %v2952 = vpack.c.bf16 0.0, %v2950
    %2954 = vst [vmem:[%s2951] sm:$0xf] %v2952
    %s2955 = scalar_lea.vmem [#allocation7], 900
    %v2956 = vpack.c.bf16 0.0, %v11
    %2958 = vst [vmem:[%s2955] sm:$0xf] %v2956
    %s2959 = scalar_lea.vmem %s3, 452
    %s2961 = sor.u32 255, 127
    %s2962 = sand.u32 %s2961, 85
    %s2963 = sshrl.u32 %s2962, 1
    %s2964 = sor.u32 %s2962, %s2963
    %s2965 = sand.u32 51, %s2964
    %s2966 = sshrl.u32 %s2965, 2
    %s2967 = sor.u32 %s2965, %s2966
    %s2968 = sand.u32 15, %s2967
    %v2969 = vld [vmem:[%s2959] sm:%s2968]
    %v2970 = vunpack.c.l.bf16 %v2969
    %v2971 = vunpack.c.h.bf16 %v2969
    %v2972 = vlaneseq
    %v2973 = vand.u32 %v2972, 127
    %vm2975 = vcmp.lt.s32.totalorder %v2973, 96
    %v2976 = vsel %vm2975, %v2970, %v11
    %s2977 = scalar_lea.vmem [#allocation7], 904
    %v2978 = vpack.c.bf16 0.0, %v2976
    %2980 = vst [vmem:[%s2977] sm:$0xf] %v2978
    %s2981 = scalar_lea.vmem [#allocation7], 908
    %v2982 = vpack.c.bf16 0.0, %v11
    %2984 = vst [vmem:[%s2981] sm:$0xf] %v2982
    %s2985 = scalar_lea.vmem %s3, 456
    %s2987 = sor.u32 255, 127
    %s2988 = sand.u32 %s2987, 85
    %s2989 = sshrl.u32 %s2988, 1
    %s2990 = sor.u32 %s2988, %s2989
    %s2991 = sand.u32 51, %s2990
    %s2992 = sshrl.u32 %s2991, 2
    %s2993 = sor.u32 %s2991, %s2992
    %s2994 = sand.u32 15, %s2993
    %v2995 = vld [vmem:[%s2985] sm:%s2994]
    %v2996 = vunpack.c.l.bf16 %v2995
    %v2997 = vunpack.c.h.bf16 %v2995
    %v2998 = vlaneseq
    %v2999 = vand.u32 %v2998, 127
    %vm3001 = vcmp.lt.s32.totalorder %v2999, 96
    %v3002 = vsel %vm3001, %v2996, %v11
    %s3003 = scalar_lea.vmem [#allocation7], 912
    %v3004 = vpack.c.bf16 0.0, %v3002
    %3006 = vst [vmem:[%s3003] sm:$0xf] %v3004
    %s3007 = scalar_lea.vmem [#allocation7], 916
    %v3008 = vpack.c.bf16 0.0, %v11
    %3010 = vst [vmem:[%s3007] sm:$0xf] %v3008
    %s3011 = scalar_lea.vmem %s3, 460
    %s3013 = sor.u32 255, 127
    %s3014 = sand.u32 %s3013, 85
    %s3015 = sshrl.u32 %s3014, 1
    %s3016 = sor.u32 %s3014, %s3015
    %s3017 = sand.u32 51, %s3016
    %s3018 = sshrl.u32 %s3017, 2
    %s3019 = sor.u32 %s3017, %s3018
    %s3020 = sand.u32 15, %s3019
    %v3021 = vld [vmem:[%s3011] sm:%s3020]
    %v3022 = vunpack.c.l.bf16 %v3021
    %v3023 = vunpack.c.h.bf16 %v3021
    %v3024 = vlaneseq
    %v3025 = vand.u32 %v3024, 127
    %vm3027 = vcmp.lt.s32.totalorder %v3025, 96
    %v3028 = vsel %vm3027, %v3022, %v11
    %s3029 = scalar_lea.vmem [#allocation7], 920
    %v3030 = vpack.c.bf16 0.0, %v3028
    %3032 = vst [vmem:[%s3029] sm:$0xf] %v3030
    %s3033 = scalar_lea.vmem [#allocation7], 924
    %v3034 = vpack.c.bf16 0.0, %v11
    %3036 = vst [vmem:[%s3033] sm:$0xf] %v3034
    %s3037 = scalar_lea.vmem %s3, 464
    %s3039 = sor.u32 255, 127
    %s3040 = sand.u32 %s3039, 85
    %s3041 = sshrl.u32 %s3040, 1
    %s3042 = sor.u32 %s3040, %s3041
    %s3043 = sand.u32 51, %s3042
    %s3044 = sshrl.u32 %s3043, 2
    %s3045 = sor.u32 %s3043, %s3044
    %s3046 = sand.u32 15, %s3045
    %v3047 = vld [vmem:[%s3037] sm:%s3046]
    %v3048 = vunpack.c.l.bf16 %v3047
    %v3049 = vunpack.c.h.bf16 %v3047
    %v3050 = vlaneseq
    %v3051 = vand.u32 %v3050, 127
    %vm3053 = vcmp.lt.s32.totalorder %v3051, 96
    %v3054 = vsel %vm3053, %v3048, %v11
    %s3055 = scalar_lea.vmem [#allocation7], 928
    %v3056 = vpack.c.bf16 0.0, %v3054
    %3058 = vst [vmem:[%s3055] sm:$0xf] %v3056
    %s3059 = scalar_lea.vmem [#allocation7], 932
    %v3060 = vpack.c.bf16 0.0, %v11
    %3062 = vst [vmem:[%s3059] sm:$0xf] %v3060
    %s3063 = scalar_lea.vmem %s3, 468
    %s3065 = sor.u32 255, 127
    %s3066 = sand.u32 %s3065, 85
    %s3067 = sshrl.u32 %s3066, 1
    %s3068 = sor.u32 %s3066, %s3067
    %s3069 = sand.u32 51, %s3068
    %s3070 = sshrl.u32 %s3069, 2
    %s3071 = sor.u32 %s3069, %s3070
    %s3072 = sand.u32 15, %s3071
    %v3073 = vld [vmem:[%s3063] sm:%s3072]
    %v3074 = vunpack.c.l.bf16 %v3073
    %v3075 = vunpack.c.h.bf16 %v3073
    %v3076 = vlaneseq
    %v3077 = vand.u32 %v3076, 127
    %vm3079 = vcmp.lt.s32.totalorder %v3077, 96
    %v3080 = vsel %vm3079, %v3074, %v11
    %s3081 = scalar_lea.vmem [#allocation7], 936
    %v3082 = vpack.c.bf16 0.0, %v3080
    %3084 = vst [vmem:[%s3081] sm:$0xf] %v3082
    %s3085 = scalar_lea.vmem [#allocation7], 940
    %v3086 = vpack.c.bf16 0.0, %v11
    %3088 = vst [vmem:[%s3085] sm:$0xf] %v3086
    %s3089 = scalar_lea.vmem %s3, 472
    %s3091 = sor.u32 255, 127
    %s3092 = sand.u32 %s3091, 85
    %s3093 = sshrl.u32 %s3092, 1
    %s3094 = sor.u32 %s3092, %s3093
    %s3095 = sand.u32 51, %s3094
    %s3096 = sshrl.u32 %s3095, 2
    %s3097 = sor.u32 %s3095, %s3096
    %s3098 = sand.u32 15, %s3097
    %v3099 = vld [vmem:[%s3089] sm:%s3098]
    %v3100 = vunpack.c.l.bf16 %v3099
    %v3101 = vunpack.c.h.bf16 %v3099
    %v3102 = vlaneseq
    %v3103 = vand.u32 %v3102, 127
    %vm3105 = vcmp.lt.s32.totalorder %v3103, 96
    %v3106 = vsel %vm3105, %v3100, %v11
    %s3107 = scalar_lea.vmem [#allocation7], 944
    %v3108 = vpack.c.bf16 0.0, %v3106
    %3110 = vst [vmem:[%s3107] sm:$0xf] %v3108
    %s3111 = scalar_lea.vmem [#allocation7], 948
    %v3112 = vpack.c.bf16 0.0, %v11
    %3114 = vst [vmem:[%s3111] sm:$0xf] %v3112
    %s3115 = scalar_lea.vmem %s3, 476
    %s3117 = sor.u32 255, 127
    %s3118 = sand.u32 %s3117, 85
    %s3119 = sshrl.u32 %s3118, 1
    %s3120 = sor.u32 %s3118, %s3119
    %s3121 = sand.u32 51, %s3120
    %s3122 = sshrl.u32 %s3121, 2
    %s3123 = sor.u32 %s3121, %s3122
    %s3124 = sand.u32 15, %s3123
    %v3125 = vld [vmem:[%s3115] sm:%s3124]
    %v3126 = vunpack.c.l.bf16 %v3125
    %v3127 = vunpack.c.h.bf16 %v3125
    %v3128 = vlaneseq
    %v3129 = vand.u32 %v3128, 127
    %vm3131 = vcmp.lt.s32.totalorder %v3129, 96
    %v3132 = vsel %vm3131, %v3126, %v11
    %s3133 = scalar_lea.vmem [#allocation7], 952
    %v3134 = vpack.c.bf16 0.0, %v3132
    %3136 = vst [vmem:[%s3133] sm:$0xf] %v3134
    %s3137 = scalar_lea.vmem [#allocation7], 956
    %v3138 = vpack.c.bf16 0.0, %v11
    %3140 = vst [vmem:[%s3137] sm:$0xf] %v3138
    %s3141 = scalar_lea.vmem %s3, 480
    %s3143 = sor.u32 255, 127
    %s3144 = sand.u32 %s3143, 85
    %s3145 = sshrl.u32 %s3144, 1
    %s3146 = sor.u32 %s3144, %s3145
    %s3147 = sand.u32 51, %s3146
    %s3148 = sshrl.u32 %s3147, 2
    %s3149 = sor.u32 %s3147, %s3148
    %s3150 = sand.u32 15, %s3149
    %v3151 = vld [vmem:[%s3141] sm:%s3150]
    %v3152 = vunpack.c.l.bf16 %v3151
    %v3153 = vunpack.c.h.bf16 %v3151
    %v3154 = vlaneseq
    %v3155 = vand.u32 %v3154, 127
    %vm3157 = vcmp.lt.s32.totalorder %v3155, 96
    %v3158 = vsel %vm3157, %v3152, %v11
    %s3159 = scalar_lea.vmem [#allocation7], 960
    %v3160 = vpack.c.bf16 0.0, %v3158
    %3162 = vst [vmem:[%s3159] sm:$0xf] %v3160
    %s3163 = scalar_lea.vmem [#allocation7], 964
    %v3164 = vpack.c.bf16 0.0, %v11
    %3166 = vst [vmem:[%s3163] sm:$0xf] %v3164
    %s3167 = scalar_lea.vmem %s3, 484
    %s3169 = sor.u32 255, 127
    %s3170 = sand.u32 %s3169, 85
    %s3171 = sshrl.u32 %s3170, 1
    %s3172 = sor.u32 %s3170, %s3171
    %s3173 = sand.u32 51, %s3172
    %s3174 = sshrl.u32 %s3173, 2
    %s3175 = sor.u32 %s3173, %s3174
    %s3176 = sand.u32 15, %s3175
    %v3177 = vld [vmem:[%s3167] sm:%s3176]
    %v3178 = vunpack.c.l.bf16 %v3177
    %v3179 = vunpack.c.h.bf16 %v3177
    %v3180 = vlaneseq
    %v3181 = vand.u32 %v3180, 127
    %vm3183 = vcmp.lt.s32.totalorder %v3181, 96
    %v3184 = vsel %vm3183, %v3178, %v11
    %s3185 = scalar_lea.vmem [#allocation7], 968
    %v3186 = vpack.c.bf16 0.0, %v3184
    %3188 = vst [vmem:[%s3185] sm:$0xf] %v3186
    %s3189 = scalar_lea.vmem [#allocation7], 972
    %v3190 = vpack.c.bf16 0.0, %v11
    %3192 = vst [vmem:[%s3189] sm:$0xf] %v3190
    %s3193 = scalar_lea.vmem %s3, 488
    %s3195 = sor.u32 255, 127
    %s3196 = sand.u32 %s3195, 85
    %s3197 = sshrl.u32 %s3196, 1
    %s3198 = sor.u32 %s3196, %s3197
    %s3199 = sand.u32 51, %s3198
    %s3200 = sshrl.u32 %s3199, 2
    %s3201 = sor.u32 %s3199, %s3200
    %s3202 = sand.u32 15, %s3201
    %v3203 = vld [vmem:[%s3193] sm:%s3202]
    %v3204 = vunpack.c.l.bf16 %v3203
    %v3205 = vunpack.c.h.bf16 %v3203
    %v3206 = vlaneseq
    %v3207 = vand.u32 %v3206, 127
    %vm3209 = vcmp.lt.s32.totalorder %v3207, 96
    %v3210 = vsel %vm3209, %v3204, %v11
    %s3211 = scalar_lea.vmem [#allocation7], 976
    %v3212 = vpack.c.bf16 0.0, %v3210
    %3214 = vst [vmem:[%s3211] sm:$0xf] %v3212
    %s3215 = scalar_lea.vmem [#allocation7], 980
    %v3216 = vpack.c.bf16 0.0, %v11
    %3218 = vst [vmem:[%s3215] sm:$0xf] %v3216
    %s3219 = scalar_lea.vmem %s3, 492
    %s3221 = sor.u32 255, 127
    %s3222 = sand.u32 %s3221, 85
    %s3223 = sshrl.u32 %s3222, 1
    %s3224 = sor.u32 %s3222, %s3223
    %s3225 = sand.u32 51, %s3224
    %s3226 = sshrl.u32 %s3225, 2
    %s3227 = sor.u32 %s3225, %s3226
    %s3228 = sand.u32 15, %s3227
    %v3229 = vld [vmem:[%s3219] sm:%s3228]
    %v3230 = vunpack.c.l.bf16 %v3229
    %v3231 = vunpack.c.h.bf16 %v3229
    %v3232 = vlaneseq
    %v3233 = vand.u32 %v3232, 127
    %vm3235 = vcmp.lt.s32.totalorder %v3233, 96
    %v3236 = vsel %vm3235, %v3230, %v11
    %s3237 = scalar_lea.vmem [#allocation7], 984
    %v3238 = vpack.c.bf16 0.0, %v3236
    %3240 = vst [vmem:[%s3237] sm:$0xf] %v3238
    %s3241 = scalar_lea.vmem [#allocation7], 988
    %v3242 = vpack.c.bf16 0.0, %v11
    %3244 = vst [vmem:[%s3241] sm:$0xf] %v3242
    %s3245 = scalar_lea.vmem %s3, 496
    %s3247 = sor.u32 255, 127
    %s3248 = sand.u32 %s3247, 85
    %s3249 = sshrl.u32 %s3248, 1
    %s3250 = sor.u32 %s3248, %s3249
    %s3251 = sand.u32 51, %s3250
    %s3252 = sshrl.u32 %s3251, 2
    %s3253 = sor.u32 %s3251, %s3252
    %s3254 = sand.u32 15, %s3253
    %v3255 = vld [vmem:[%s3245] sm:%s3254]
    %v3256 = vunpack.c.l.bf16 %v3255
    %v3257 = vunpack.c.h.bf16 %v3255
    %v3258 = vlaneseq
    %v3259 = vand.u32 %v3258, 127
    %vm3261 = vcmp.lt.s32.totalorder %v3259, 96
    %v3262 = vsel %vm3261, %v3256, %v11
    %s3263 = scalar_lea.vmem [#allocation7], 992
    %v3264 = vpack.c.bf16 0.0, %v3262
    %3266 = vst [vmem:[%s3263] sm:$0xf] %v3264
    %s3267 = scalar_lea.vmem [#allocation7], 996
    %v3268 = vpack.c.bf16 0.0, %v11
    %3270 = vst [vmem:[%s3267] sm:$0xf] %v3268
    %s3271 = scalar_lea.vmem %s3, 500
    %s3273 = sor.u32 255, 127
    %s3274 = sand.u32 %s3273, 85
    %s3275 = sshrl.u32 %s3274, 1
    %s3276 = sor.u32 %s3274, %s3275
    %s3277 = sand.u32 51, %s3276
    %s3278 = sshrl.u32 %s3277, 2
    %s3279 = sor.u32 %s3277, %s3278
    %s3280 = sand.u32 15, %s3279
    %v3281 = vld [vmem:[%s3271] sm:%s3280]
    %v3282 = vunpack.c.l.bf16 %v3281
    %v3283 = vunpack.c.h.bf16 %v3281
    %v3284 = vlaneseq
    %v3285 = vand.u32 %v3284, 127
    %vm3287 = vcmp.lt.s32.totalorder %v3285, 96
    %v3288 = vsel %vm3287, %v3282, %v11
    %s3289 = scalar_lea.vmem [#allocation7], 1000
    %v3290 = vpack.c.bf16 0.0, %v3288
    %3292 = vst [vmem:[%s3289] sm:$0xf] %v3290
    %s3293 = scalar_lea.vmem [#allocation7], 1004
    %v3294 = vpack.c.bf16 0.0, %v11
    %3296 = vst [vmem:[%s3293] sm:$0xf] %v3294
    %s3297 = scalar_lea.vmem %s3, 504
    %s3299 = sor.u32 255, 127
    %s3300 = sand.u32 %s3299, 85
    %s3301 = sshrl.u32 %s3300, 1
    %s3302 = sor.u32 %s3300, %s3301
    %s3303 = sand.u32 51, %s3302
    %s3304 = sshrl.u32 %s3303, 2
    %s3305 = sor.u32 %s3303, %s3304
    %s3306 = sand.u32 15, %s3305
    %v3307 = vld [vmem:[%s3297] sm:%s3306]
    %v3308 = vunpack.c.l.bf16 %v3307
    %v3309 = vunpack.c.h.bf16 %v3307
    %v3310 = vlaneseq
    %v3311 = vand.u32 %v3310, 127
    %vm3313 = vcmp.lt.s32.totalorder %v3311, 96
    %v3314 = vsel %vm3313, %v3308, %v11
    %s3315 = scalar_lea.vmem [#allocation7], 1008
    %v3316 = vpack.c.bf16 0.0, %v3314
    %3318 = vst [vmem:[%s3315] sm:$0xf] %v3316
    %s3319 = scalar_lea.vmem [#allocation7], 1012
    %v3320 = vpack.c.bf16 0.0, %v11
    %3322 = vst [vmem:[%s3319] sm:$0xf] %v3320
    %s3323 = scalar_lea.vmem %s3, 508
    %s3325 = sor.u32 255, 127
    %s3326 = sand.u32 %s3325, 85
    %s3327 = sshrl.u32 %s3326, 1
    %s3328 = sor.u32 %s3326, %s3327
    %s3329 = sand.u32 51, %s3328
    %s3330 = sshrl.u32 %s3329, 2
    %s3331 = sor.u32 %s3329, %s3330
    %s3332 = sand.u32 15, %s3331
    %v3333 = vld [vmem:[%s3323] sm:%s3332]
    %v3334 = vunpack.c.l.bf16 %v3333
    %v3335 = vunpack.c.h.bf16 %v3333
    %v3336 = vlaneseq
    %v3337 = vand.u32 %v3336, 127
    %vm3339 = vcmp.lt.s32.totalorder %v3337, 96
    %v3340 = vsel %vm3339, %v3334, %v11
    %s3341 = scalar_lea.vmem [#allocation7], 1016
    %v3342 = vpack.c.bf16 0.0, %v3340
    %3344 = vst [vmem:[%s3341] sm:$0xf] %v3342
    %s3345 = scalar_lea.vmem [#allocation7], 1020
    %v3346 = vpack.c.bf16 0.0, %v11
    %3348 = vst [vmem:[%s3345] sm:$0xf] %v3346
    %v3349 = vld [vmem:[%s0] sm:$0xff]
    %v3350 = vld [vmem:[%s0 + $0x8] sm:$0xff]
    %v3351 = vld [vmem:[%s0 + $0x10] sm:$0xff]
    %v3352 = vld [vmem:[%s0 + $0x18] sm:$0xff]
    %v3353 = vld [vmem:[%s0 + $0x20] sm:$0xff]
    %v3354 = vld [vmem:[%s0 + $0x28] sm:$0xff]
    %v3355 = vld [vmem:[%s0 + $0x30] sm:$0xff]
    %v3356 = vld [vmem:[%s0 + $0x38] sm:$0xff]
    %v3357 = vld [vmem:[%s0 + $0x40] sm:$0xff]
    %v3358 = vld [vmem:[%s0 + $0x48] sm:$0xff]
    %v3359 = vld [vmem:[%s0 + $0x50] sm:$0xff]
    %v3360 = vld [vmem:[%s0 + $0x58] sm:$0xff]
    %v3361 = vld [vmem:[%s0 + $0x60] sm:$0xff]
    %v3362 = vld [vmem:[%s0 + $0x68] sm:$0xff]
    %v3363 = vld [vmem:[%s0 + $0x70] sm:$0xff]
    %v3364 = vld [vmem:[%s0 + $0x78] sm:$0xff]
    %v3365 = vld [vmem:[#allocation7] sm:$0xff]
    %v3366 = vld [vmem:[#allocation7 + $0x8] sm:$0xff]
    %v3367 = vld [vmem:[#allocation7 + $0x10] sm:$0xff]
    %v3368 = vld [vmem:[#allocation7 + $0x18] sm:$0xff]
    %v3369 = vld [vmem:[#allocation7 + $0x20] sm:$0xff]
    %v3370 = vld [vmem:[#allocation7 + $0x28] sm:$0xff]
    %v3371 = vld [vmem:[#allocation7 + $0x30] sm:$0xff]
    %v3372 = vld [vmem:[#allocation7 + $0x38] sm:$0xff]
    %v3373 = vld [vmem:[#allocation7 + $0x40] sm:$0xff]
    %v3374 = vld [vmem:[#allocation7 + $0x48] sm:$0xff]
    %v3375 = vld [vmem:[#allocation7 + $0x50] sm:$0xff]
    %v3376 = vld [vmem:[#allocation7 + $0x58] sm:$0xff]
    %v3377 = vld [vmem:[#allocation7 + $0x60] sm:$0xff]
    %v3378 = vld [vmem:[#allocation7 + $0x68] sm:$0xff]
    %v3379 = vld [vmem:[#allocation7 + $0x70] sm:$0xff]
    %v3380 = vld [vmem:[#allocation7 + $0x78] sm:$0xff]
    %v3381 = vld [vmem:[#allocation7 + $0x80] sm:$0xff]
    %v3382 = vld [vmem:[#allocation7 + $0x88] sm:$0xff]
    %v3383 = vld [vmem:[#allocation7 + $0x90] sm:$0xff]
    %v3384 = vld [vmem:[#allocation7 + $0x98] sm:$0xff]
    %v3385 = vld [vmem:[#allocation7 + $0xa0] sm:$0xff]
    %v3386 = vld [vmem:[#allocation7 + $0xa8] sm:$0xff]
    %v3387 = vld [vmem:[#allocation7 + $0xb0] sm:$0xff]
    %v3388 = vld [vmem:[#allocation7 + $0xb8] sm:$0xff]
    %v3389 = vld [vmem:[#allocation7 + $0xc0] sm:$0xff]
    %v3390 = vld [vmem:[#allocation7 + $0xc8] sm:$0xff]
    %v3391 = vld [vmem:[#allocation7 + $0xd0] sm:$0xff]
    %v3392 = vld [vmem:[#allocation7 + $0xd8] sm:$0xff]
    %v3393 = vld [vmem:[#allocation7 + $0xe0] sm:$0xff]
    %v3394 = vld [vmem:[#allocation7 + $0xe8] sm:$0xff]
    %v3395 = vld [vmem:[#allocation7 + $0xf0] sm:$0xff]
    %v3396 = vld [vmem:[#allocation7 + $0xf8] sm:$0xff]
    %v3397 = vld [vmem:[#allocation7 + $0x100] sm:$0xff]
    %v3398 = vld [vmem:[#allocation7 + $0x108] sm:$0xff]
    %v3399 = vld [vmem:[#allocation7 + $0x110] sm:$0xff]
    %v3400 = vld [vmem:[#allocation7 + $0x118] sm:$0xff]
    %v3401 = vld [vmem:[#allocation7 + $0x120] sm:$0xff]
    %v3402 = vld [vmem:[#allocation7 + $0x128] sm:$0xff]
    %v3403 = vld [vmem:[#allocation7 + $0x130] sm:$0xff]
    %v3404 = vld [vmem:[#allocation7 + $0x138] sm:$0xff]
    %v3405 = vld [vmem:[#allocation7 + $0x140] sm:$0xff]
    %v3406 = vld [vmem:[#allocation7 + $0x148] sm:$0xff]
    %v3407 = vld [vmem:[#allocation7 + $0x150] sm:$0xff]
    %v3408 = vld [vmem:[#allocation7 + $0x158] sm:$0xff]
    %v3409 = vld [vmem:[#allocation7 + $0x160] sm:$0xff]
    %v3410 = vld [vmem:[#allocation7 + $0x168] sm:$0xff]
    %v3411 = vld [vmem:[#allocation7 + $0x170] sm:$0xff]
    %v3412 = vld [vmem:[#allocation7 + $0x178] sm:$0xff]
    %v3413 = vld [vmem:[#allocation7 + $0x180] sm:$0xff]
    %v3414 = vld [vmem:[#allocation7 + $0x188] sm:$0xff]
    %v3415 = vld [vmem:[#allocation7 + $0x190] sm:$0xff]
    %v3416 = vld [vmem:[#allocation7 + $0x198] sm:$0xff]
    %v3417 = vld [vmem:[#allocation7 + $0x1a0] sm:$0xff]
    %v3418 = vld [vmem:[#allocation7 + $0x1a8] sm:$0xff]
    %v3419 = vld [vmem:[#allocation7 + $0x1b0] sm:$0xff]
    %v3420 = vld [vmem:[#allocation7 + $0x1b8] sm:$0xff]
    %v3421 = vld [vmem:[#allocation7 + $0x1c0] sm:$0xff]
    %v3422 = vld [vmem:[#allocation7 + $0x1c8] sm:$0xff]
    %v3423 = vld [vmem:[#allocation7 + $0x1d0] sm:$0xff]
    %v3424 = vld [vmem:[#allocation7 + $0x1d8] sm:$0xff]
    %v3425 = vld [vmem:[#allocation7 + $0x1e0] sm:$0xff]
    %v3426 = vld [vmem:[#allocation7 + $0x1e8] sm:$0xff]
    %v3427 = vld [vmem:[#allocation7 + $0x1f0] sm:$0xff]
    %v3428 = vld [vmem:[#allocation7 + $0x1f8] sm:$0xff]
    %v3429 = vld [vmem:[#allocation7 + $0x200] sm:$0xff]
    %v3430 = vld [vmem:[#allocation7 + $0x208] sm:$0xff]
    %v3431 = vld [vmem:[#allocation7 + $0x210] sm:$0xff]
    %v3432 = vld [vmem:[#allocation7 + $0x218] sm:$0xff]
    %v3433 = vld [vmem:[#allocation7 + $0x220] sm:$0xff]
    %v3434 = vld [vmem:[#allocation7 + $0x228] sm:$0xff]
    %v3435 = vld [vmem:[#allocation7 + $0x230] sm:$0xff]
    %v3436 = vld [vmem:[#allocation7 + $0x238] sm:$0xff]
    %v3437 = vld [vmem:[#allocation7 + $0x240] sm:$0xff]
    %v3438 = vld [vmem:[#allocation7 + $0x248] sm:$0xff]
    %v3439 = vld [vmem:[#allocation7 + $0x250] sm:$0xff]
    %v3440 = vld [vmem:[#allocation7 + $0x258] sm:$0xff]
    %v3441 = vld [vmem:[#allocation7 + $0x260] sm:$0xff]
    %v3442 = vld [vmem:[#allocation7 + $0x268] sm:$0xff]
    %v3443 = vld [vmem:[#allocation7 + $0x270] sm:$0xff]
    %v3444 = vld [vmem:[#allocation7 + $0x278] sm:$0xff]
    %v3445 = vld [vmem:[#allocation7 + $0x280] sm:$0xff]
    %v3446 = vld [vmem:[#allocation7 + $0x288] sm:$0xff]
    %v3447 = vld [vmem:[#allocation7 + $0x290] sm:$0xff]
    %v3448 = vld [vmem:[#allocation7 + $0x298] sm:$0xff]
    %v3449 = vld [vmem:[#allocation7 + $0x2a0] sm:$0xff]
    %v3450 = vld [vmem:[#allocation7 + $0x2a8] sm:$0xff]
    %v3451 = vld [vmem:[#allocation7 + $0x2b0] sm:$0xff]
    %v3452 = vld [vmem:[#allocation7 + $0x2b8] sm:$0xff]
    %v3453 = vld [vmem:[#allocation7 + $0x2c0] sm:$0xff]
    %v3454 = vld [vmem:[#allocation7 + $0x2c8] sm:$0xff]
    %v3455 = vld [vmem:[#allocation7 + $0x2d0] sm:$0xff]
    %v3456 = vld [vmem:[#allocation7 + $0x2d8] sm:$0xff]
    %v3457 = vld [vmem:[#allocation7 + $0x2e0] sm:$0xff]
    %v3458 = vld [vmem:[#allocation7 + $0x2e8] sm:$0xff]
    %v3459 = vld [vmem:[#allocation7 + $0x2f0] sm:$0xff]
    %v3460 = vld [vmem:[#allocation7 + $0x2f8] sm:$0xff]
    %v3461 = vld [vmem:[#allocation7 + $0x300] sm:$0xff]
    %v3462 = vld [vmem:[#allocation7 + $0x308] sm:$0xff]
    %v3463 = vld [vmem:[#allocation7 + $0x310] sm:$0xff]
    %v3464 = vld [vmem:[#allocation7 + $0x318] sm:$0xff]
    %v3465 = vld [vmem:[#allocation7 + $0x320] sm:$0xff]
    %v3466 = vld [vmem:[#allocation7 + $0x328] sm:$0xff]
    %v3467 = vld [vmem:[#allocation7 + $0x330] sm:$0xff]
    %v3468 = vld [vmem:[#allocation7 + $0x338] sm:$0xff]
    %v3469 = vld [vmem:[#allocation7 + $0x340] sm:$0xff]
    %v3470 = vld [vmem:[#allocation7 + $0x348] sm:$0xff]
    %v3471 = vld [vmem:[#allocation7 + $0x350] sm:$0xff]
    %v3472 = vld [vmem:[#allocation7 + $0x358] sm:$0xff]
    %v3473 = vld [vmem:[#allocation7 + $0x360] sm:$0xff]
    %v3474 = vld [vmem:[#allocation7 + $0x368] sm:$0xff]
    %v3475 = vld [vmem:[#allocation7 + $0x370] sm:$0xff]
    %v3476 = vld [vmem:[#allocation7 + $0x378] sm:$0xff]
    %v3477 = vld [vmem:[#allocation7 + $0x380] sm:$0xff]
    %v3478 = vld [vmem:[#allocation7 + $0x388] sm:$0xff]
    %v3479 = vld [vmem:[#allocation7 + $0x390] sm:$0xff]
    %v3480 = vld [vmem:[#allocation7 + $0x398] sm:$0xff]
    %v3481 = vld [vmem:[#allocation7 + $0x3a0] sm:$0xff]
    %v3482 = vld [vmem:[#allocation7 + $0x3a8] sm:$0xff]
    %v3483 = vld [vmem:[#allocation7 + $0x3b0] sm:$0xff]
    %v3484 = vld [vmem:[#allocation7 + $0x3b8] sm:$0xff]
    %v3485 = vld [vmem:[#allocation7 + $0x3c0] sm:$0xff]
    %v3486 = vld [vmem:[#allocation7 + $0x3c8] sm:$0xff]
    %v3487 = vld [vmem:[#allocation7 + $0x3d0] sm:$0xff]
    %v3488 = vld [vmem:[#allocation7 + $0x3d8] sm:$0xff]
    %v3489 = vld [vmem:[#allocation7 + $0x3e0] sm:$0xff]
    %v3490 = vld [vmem:[#allocation7 + $0x3e8] sm:$0xff]
    %v3491 = vld [vmem:[#allocation7 + $0x3f0] sm:$0xff]
    %v3492 = vld [vmem:[#allocation7 + $0x3f8] sm:$0xff]
    %v3509 = vunpack.c.l.b16 %v3349
    %v3510 = vunpack.c.h.b16 %v3349
    %v3511 = vunpack.c.l.b16 %v3350
    %v3512 = vunpack.c.h.b16 %v3350
    %v3513 = vunpack.c.l.b16 %v3351
    %v3514 = vunpack.c.h.b16 %v3351
    %v3515 = vunpack.c.l.b16 %v3352
    %v3516 = vunpack.c.h.b16 %v3352
    %v3517 = vunpack.c.l.b16 %v3353
    %v3518 = vunpack.c.h.b16 %v3353
    %v3519 = vunpack.c.l.b16 %v3354
    %v3520 = vunpack.c.h.b16 %v3354
    %v3521 = vunpack.c.l.b16 %v3355
    %v3522 = vunpack.c.h.b16 %v3355
    %v3523 = vunpack.c.l.b16 %v3356
    %v3524 = vunpack.c.h.b16 %v3356
    %v3525 = vunpack.c.l.b16 %v3357
    %v3526 = vunpack.c.h.b16 %v3357
    %v3527 = vunpack.c.l.b16 %v3358
    %v3528 = vunpack.c.h.b16 %v3358
    %v3529 = vunpack.c.l.b16 %v3359
    %v3530 = vunpack.c.h.b16 %v3359
    %v3531 = vunpack.c.l.b16 %v3360
    %v3532 = vunpack.c.h.b16 %v3360
    %v3533 = vunpack.c.l.b16 %v3361
    %v3534 = vunpack.c.h.b16 %v3361
    %v3535 = vunpack.c.l.b16 %v3362
    %v3536 = vunpack.c.h.b16 %v3362
    %v3537 = vunpack.c.l.b16 %v3363
    %v3538 = vunpack.c.h.b16 %v3363
    %v3539 = vunpack.c.l.b16 %v3364
    %v3540 = vunpack.c.h.b16 %v3364
    %v3541 = vpack.c.b16 %v3517, %v3509
    %v3542 = vpack.c.b16 %v3518, %v3510
    %v3543 = vpack.c.b16 %v3519, %v3511
    %v3544 = vpack.c.b16 %v3520, %v3512
    %v3545 = vpack.c.b16 %v3521, %v3513
    %v3546 = vpack.c.b16 %v3522, %v3514
    %v3547 = vpack.c.b16 %v3523, %v3515
    %v3548 = vpack.c.b16 %v3524, %v3516
    %v3549 = vpack.c.b16 %v3533, %v3525
    %v3550 = vpack.c.b16 %v3534, %v3526
    %v3551 = vpack.c.b16 %v3535, %v3527
    %v3552 = vpack.c.b16 %v3536, %v3528
    %v3553 = vpack.c.b16 %v3537, %v3529
    %v3554 = vpack.c.b16 %v3538, %v3530
    %v3555 = vpack.c.b16 %v3539, %v3531
    %v3556 = vpack.c.b16 %v3540, %v3532
    %v3701 = vunpack.c.l.b16 %v3365
    %v3702 = vunpack.c.h.b16 %v3365
    %v3703 = vunpack.c.l.b16 %v3366
    %v3704 = vunpack.c.h.b16 %v3366
    %v3705 = vunpack.c.l.b16 %v3367
    %v3706 = vunpack.c.h.b16 %v3367
    %v3707 = vunpack.c.l.b16 %v3368
    %v3708 = vunpack.c.h.b16 %v3368
    %v3709 = vunpack.c.l.b16 %v3369
    %v3710 = vunpack.c.h.b16 %v3369
    %v3711 = vunpack.c.l.b16 %v3370
    %v3712 = vunpack.c.h.b16 %v3370
    %v3713 = vunpack.c.l.b16 %v3371
    %v3714 = vunpack.c.h.b16 %v3371
    %v3715 = vunpack.c.l.b16 %v3372
    %v3716 = vunpack.c.h.b16 %v3372
    %v3717 = vunpack.c.l.b16 %v3373
    %v3718 = vunpack.c.h.b16 %v3373
    %v3719 = vunpack.c.l.b16 %v3374
    %v3720 = vunpack.c.h.b16 %v3374
    %v3721 = vunpack.c.l.b16 %v3375
    %v3722 = vunpack.c.h.b16 %v3375
    %v3723 = vunpack.c.l.b16 %v3376
    %v3724 = vunpack.c.h.b16 %v3376
    %v3725 = vunpack.c.l.b16 %v3377
    %v3726 = vunpack.c.h.b16 %v3377
    %v3727 = vunpack.c.l.b16 %v3378
    %v3728 = vunpack.c.h.b16 %v3378
    %v3729 = vunpack.c.l.b16 %v3379
    %v3730 = vunpack.c.h.b16 %v3379
    %v3731 = vunpack.c.l.b16 %v3380
    %v3732 = vunpack.c.h.b16 %v3380
    %v3733 = vunpack.c.l.b16 %v3381
    %v3734 = vunpack.c.h.b16 %v3381
    %v3735 = vunpack.c.l.b16 %v3382
    %v3736 = vunpack.c.h.b16 %v3382
    %v3737 = vunpack.c.l.b16 %v3383
    %v3738 = vunpack.c.h.b16 %v3383
    %v3739 = vunpack.c.l.b16 %v3384
    %v3740 = vunpack.c.h.b16 %v3384
    %v3741 = vunpack.c.l.b16 %v3385
    %v3742 = vunpack.c.h.b16 %v3385
    %v3743 = vunpack.c.l.b16 %v3386
    %v3744 = vunpack.c.h.b16 %v3386
    %v3745 = vunpack.c.l.b16 %v3387
    %v3746 = vunpack.c.h.b16 %v3387
    %v3747 = vunpack.c.l.b16 %v3388
    %v3748 = vunpack.c.h.b16 %v3388
    %v3749 = vunpack.c.l.b16 %v3389
    %v3750 = vunpack.c.h.b16 %v3389
    %v3751 = vunpack.c.l.b16 %v3390
    %v3752 = vunpack.c.h.b16 %v3390
    %v3753 = vunpack.c.l.b16 %v3391
    %v3754 = vunpack.c.h.b16 %v3391
    %v3755 = vunpack.c.l.b16 %v3392
    %v3756 = vunpack.c.h.b16 %v3392
    %v3757 = vunpack.c.l.b16 %v3393
    %v3758 = vunpack.c.h.b16 %v3393
    %v3759 = vunpack.c.l.b16 %v3394
    %v3760 = vunpack.c.h.b16 %v3394
    %v3761 = vunpack.c.l.b16 %v3395
    %v3762 = vunpack.c.h.b16 %v3395
    %v3763 = vunpack.c.l.b16 %v3396
    %v3764 = vunpack.c.h.b16 %v3396
    %v3765 = vunpack.c.l.b16 %v3397
    %v3766 = vunpack.c.h.b16 %v3397
    %v3767 = vunpack.c.l.b16 %v3398
    %v3768 = vunpack.c.h.b16 %v3398
    %v3769 = vunpack.c.l.b16 %v3399
    %v3770 = vunpack.c.h.b16 %v3399
    %v3771 = vunpack.c.l.b16 %v3400
    %v3772 = vunpack.c.h.b16 %v3400
    %v3773 = vunpack.c.l.b16 %v3401
    %v3774 = vunpack.c.h.b16 %v3401
    %v3775 = vunpack.c.l.b16 %v3402
    %v3776 = vunpack.c.h.b16 %v3402
    %v3777 = vunpack.c.l.b16 %v3403
    %v3778 = vunpack.c.h.b16 %v3403
    %v3779 = vunpack.c.l.b16 %v3404
    %v3780 = vunpack.c.h.b16 %v3404
    %v3781 = vunpack.c.l.b16 %v3405
    %v3782 = vunpack.c.h.b16 %v3405
    %v3783 = vunpack.c.l.b16 %v3406
    %v3784 = vunpack.c.h.b16 %v3406
    %v3785 = vunpack.c.l.b16 %v3407
    %v3786 = vunpack.c.h.b16 %v3407
    %v3787 = vunpack.c.l.b16 %v3408
    %v3788 = vunpack.c.h.b16 %v3408
    %v3789 = vunpack.c.l.b16 %v3409
    %v3790 = vunpack.c.h.b16 %v3409
    %v3791 = vunpack.c.l.b16 %v3410
    %v3792 = vunpack.c.h.b16 %v3410
    %v3793 = vunpack.c.l.b16 %v3411
    %v3794 = vunpack.c.h.b16 %v3411
    %v3795 = vunpack.c.l.b16 %v3412
    %v3796 = vunpack.c.h.b16 %v3412
    %v3797 = vunpack.c.l.b16 %v3413
    %v3798 = vunpack.c.h.b16 %v3413
    %v3799 = vunpack.c.l.b16 %v3414
    %v3800 = vunpack.c.h.b16 %v3414
    %v3801 = vunpack.c.l.b16 %v3415
    %v3802 = vunpack.c.h.b16 %v3415
    %v3803 = vunpack.c.l.b16 %v3416
    %v3804 = vunpack.c.h.b16 %v3416
    %v3805 = vunpack.c.l.b16 %v3417
    %v3806 = vunpack.c.h.b16 %v3417
    %v3807 = vunpack.c.l.b16 %v3418
    %v3808 = vunpack.c.h.b16 %v3418
    %v3809 = vunpack.c.l.b16 %v3419
    %v3810 = vunpack.c.h.b16 %v3419
    %v3811 = vunpack.c.l.b16 %v3420
    %v3812 = vunpack.c.h.b16 %v3420
    %v3813 = vunpack.c.l.b16 %v3421
    %v3814 = vunpack.c.h.b16 %v3421
    %v3815 = vunpack.c.l.b16 %v3422
    %v3816 = vunpack.c.h.b16 %v3422
    %v3817 = vunpack.c.l.b16 %v3423
    %v3818 = vunpack.c.h.b16 %v3423
    %v3819 = vunpack.c.l.b16 %v3424
    %v3820 = vunpack.c.h.b16 %v3424
    %v3821 = vunpack.c.l.b16 %v3425
    %v3822 = vunpack.c.h.b16 %v3425
    %v3823 = vunpack.c.l.b16 %v3426
    %v3824 = vunpack.c.h.b16 %v3426
    %v3825 = vunpack.c.l.b16 %v3427
    %v3826 = vunpack.c.h.b16 %v3427
    %v3827 = vunpack.c.l.b16 %v3428
    %v3828 = vunpack.c.h.b16 %v3428
    %v3829 = vunpack.c.l.b16 %v3429
    %v3830 = vunpack.c.h.b16 %v3429
    %v3831 = vunpack.c.l.b16 %v3430
    %v3832 = vunpack.c.h.b16 %v3430
    %v3833 = vunpack.c.l.b16 %v3431
    %v3834 = vunpack.c.h.b16 %v3431
    %v3835 = vunpack.c.l.b16 %v3432
    %v3836 = vunpack.c.h.b16 %v3432
    %v3837 = vunpack.c.l.b16 %v3433
    %v3838 = vunpack.c.h.b16 %v3433
    %v3839 = vunpack.c.l.b16 %v3434
    %v3840 = vunpack.c.h.b16 %v3434
    %v3841 = vunpack.c.l.b16 %v3435
    %v3842 = vunpack.c.h.b16 %v3435
    %v3843 = vunpack.c.l.b16 %v3436
    %v3844 = vunpack.c.h.b16 %v3436
    %v3845 = vunpack.c.l.b16 %v3437
    %v3846 = vunpack.c.h.b16 %v3437
    %v3847 = vunpack.c.l.b16 %v3438
    %v3848 = vunpack.c.h.b16 %v3438
    %v3849 = vunpack.c.l.b16 %v3439
    %v3850 = vunpack.c.h.b16 %v3439
    %v3851 = vunpack.c.l.b16 %v3440
    %v3852 = vunpack.c.h.b16 %v3440
    %v3853 = vunpack.c.l.b16 %v3441
    %v3854 = vunpack.c.h.b16 %v3441
    %v3855 = vunpack.c.l.b16 %v3442
    %v3856 = vunpack.c.h.b16 %v3442
    %v3857 = vunpack.c.l.b16 %v3443
    %v3858 = vunpack.c.h.b16 %v3443
    %v3859 = vunpack.c.l.b16 %v3444
    %v3860 = vunpack.c.h.b16 %v3444
    %v3861 = vunpack.c.l.b16 %v3445
    %v3862 = vunpack.c.h.b16 %v3445
    %v3863 = vunpack.c.l.b16 %v3446
    %v3864 = vunpack.c.h.b16 %v3446
    %v3865 = vunpack.c.l.b16 %v3447
    %v3866 = vunpack.c.h.b16 %v3447
    %v3867 = vunpack.c.l.b16 %v3448
    %v3868 = vunpack.c.h.b16 %v3448
    %v3869 = vunpack.c.l.b16 %v3449
    %v3870 = vunpack.c.h.b16 %v3449
    %v3871 = vunpack.c.l.b16 %v3450
    %v3872 = vunpack.c.h.b16 %v3450
    %v3873 = vunpack.c.l.b16 %v3451
    %v3874 = vunpack.c.h.b16 %v3451
    %v3875 = vunpack.c.l.b16 %v3452
    %v3876 = vunpack.c.h.b16 %v3452
    %v3877 = vunpack.c.l.b16 %v3453
    %v3878 = vunpack.c.h.b16 %v3453
    %v3879 = vunpack.c.l.b16 %v3454
    %v3880 = vunpack.c.h.b16 %v3454
    %v3881 = vunpack.c.l.b16 %v3455
    %v3882 = vunpack.c.h.b16 %v3455
    %v3883 = vunpack.c.l.b16 %v3456
    %v3884 = vunpack.c.h.b16 %v3456
    %v3885 = vunpack.c.l.b16 %v3457
    %v3886 = vunpack.c.h.b16 %v3457
    %v3887 = vunpack.c.l.b16 %v3458
    %v3888 = vunpack.c.h.b16 %v3458
    %v3889 = vunpack.c.l.b16 %v3459
    %v3890 = vunpack.c.h.b16 %v3459
    %v3891 = vunpack.c.l.b16 %v3460
    %v3892 = vunpack.c.h.b16 %v3460
    %v3893 = vunpack.c.l.b16 %v3461
    %v3894 = vunpack.c.h.b16 %v3461
    %v3895 = vunpack.c.l.b16 %v3462
    %v3896 = vunpack.c.h.b16 %v3462
    %v3897 = vunpack.c.l.b16 %v3463
    %v3898 = vunpack.c.h.b16 %v3463
    %v3899 = vunpack.c.l.b16 %v3464
    %v3900 = vunpack.c.h.b16 %v3464
    %v3901 = vunpack.c.l.b16 %v3465
    %v3902 = vunpack.c.h.b16 %v3465
    %v3903 = vunpack.c.l.b16 %v3466
    %v3904 = vunpack.c.h.b16 %v3466
    %v3905 = vunpack.c.l.b16 %v3467
    %v3906 = vunpack.c.h.b16 %v3467
    %v3907 = vunpack.c.l.b16 %v3468
    %v3908 = vunpack.c.h.b16 %v3468
    %v3909 = vunpack.c.l.b16 %v3469
    %v3910 = vunpack.c.h.b16 %v3469
    %v3911 = vunpack.c.l.b16 %v3470
    %v3912 = vunpack.c.h.b16 %v3470
    %v3913 = vunpack.c.l.b16 %v3471
    %v3914 = vunpack.c.h.b16 %v3471
    %v3915 = vunpack.c.l.b16 %v3472
    %v3916 = vunpack.c.h.b16 %v3472
    %v3917 = vunpack.c.l.b16 %v3473
    %v3918 = vunpack.c.h.b16 %v3473
    %v3919 = vunpack.c.l.b16 %v3474
    %v3920 = vunpack.c.h.b16 %v3474
    %v3921 = vunpack.c.l.b16 %v3475
    %v3922 = vunpack.c.h.b16 %v3475
    %v3923 = vunpack.c.l.b16 %v3476
    %v3924 = vunpack.c.h.b16 %v3476
    %v3925 = vunpack.c.l.b16 %v3477
    %v3926 = vunpack.c.h.b16 %v3477
    %v3927 = vunpack.c.l.b16 %v3478
    %v3928 = vunpack.c.h.b16 %v3478
    %v3929 = vunpack.c.l.b16 %v3479
    %v3930 = vunpack.c.h.b16 %v3479
    %v3931 = vunpack.c.l.b16 %v3480
    %v3932 = vunpack.c.h.b16 %v3480
    %v3933 = vunpack.c.l.b16 %v3481
    %v3934 = vunpack.c.h.b16 %v3481
    %v3935 = vunpack.c.l.b16 %v3482
    %v3936 = vunpack.c.h.b16 %v3482
    %v3937 = vunpack.c.l.b16 %v3483
    %v3938 = vunpack.c.h.b16 %v3483
    %v3939 = vunpack.c.l.b16 %v3484
    %v3940 = vunpack.c.h.b16 %v3484
    %v3941 = vunpack.c.l.b16 %v3485
    %v3942 = vunpack.c.h.b16 %v3485
    %v3943 = vunpack.c.l.b16 %v3486
    %v3944 = vunpack.c.h.b16 %v3486
    %v3945 = vunpack.c.l.b16 %v3487
    %v3946 = vunpack.c.h.b16 %v3487
    %v3947 = vunpack.c.l.b16 %v3488
    %v3948 = vunpack.c.h.b16 %v3488
    %v3949 = vunpack.c.l.b16 %v3489
    %v3950 = vunpack.c.h.b16 %v3489
    %v3951 = vunpack.c.l.b16 %v3490
    %v3952 = vunpack.c.h.b16 %v3490
    %v3953 = vunpack.c.l.b16 %v3491
    %v3954 = vunpack.c.h.b16 %v3491
    %v3955 = vunpack.c.l.b16 %v3492
    %v3956 = vunpack.c.h.b16 %v3492
    %v3957 = vpack.c.b16 %v3703, %v3701
    %v3958 = vpack.c.b16 %v3704, %v3702
    %v3959 = vpack.c.b16 %v3707, %v3705
    %v3960 = vpack.c.b16 %v3708, %v3706
    %v3961 = vpack.c.b16 %v3711, %v3709
    %v3962 = vpack.c.b16 %v3712, %v3710
    %v3963 = vpack.c.b16 %v3715, %v3713
    %v3964 = vpack.c.b16 %v3716, %v3714
    %v3965 = vpack.c.b16 %v3719, %v3717
    %v3966 = vpack.c.b16 %v3720, %v3718
    %v3967 = vpack.c.b16 %v3723, %v3721
    %v3968 = vpack.c.b16 %v3724, %v3722
    %v3969 = vpack.c.b16 %v3727, %v3725
    %v3970 = vpack.c.b16 %v3728, %v3726
    %v3971 = vpack.c.b16 %v3731, %v3729
    %v3972 = vpack.c.b16 %v3732, %v3730
    %v3973 = vpack.c.b16 %v3735, %v3733
    %v3974 = vpack.c.b16 %v3736, %v3734
    %v3975 = vpack.c.b16 %v3739, %v3737
    %v3976 = vpack.c.b16 %v3740, %v3738
    %v3977 = vpack.c.b16 %v3743, %v3741
    %v3978 = vpack.c.b16 %v3744, %v3742
    %v3979 = vpack.c.b16 %v3747, %v3745
    %v3980 = vpack.c.b16 %v3748, %v3746
    %v3981 = vpack.c.b16 %v3751, %v3749
    %v3982 = vpack.c.b16 %v3752, %v3750
    %v3983 = vpack.c.b16 %v3755, %v3753
    %v3984 = vpack.c.b16 %v3756, %v3754
    %v3985 = vpack.c.b16 %v3759, %v3757
    %v3986 = vpack.c.b16 %v3760, %v3758
    %v3987 = vpack.c.b16 %v3763, %v3761
    %v3988 = vpack.c.b16 %v3764, %v3762
    %v3989 = vpack.c.b16 %v3767, %v3765
    %v3990 = vpack.c.b16 %v3768, %v3766
    %v3991 = vpack.c.b16 %v3771, %v3769
    %v3992 = vpack.c.b16 %v3772, %v3770
    %v3993 = vpack.c.b16 %v3775, %v3773
    %v3994 = vpack.c.b16 %v3776, %v3774
    %v3995 = vpack.c.b16 %v3779, %v3777
    %v3996 = vpack.c.b16 %v3780, %v3778
    %v3997 = vpack.c.b16 %v3783, %v3781
    %v3998 = vpack.c.b16 %v3784, %v3782
    %v3999 = vpack.c.b16 %v3787, %v3785
    %v4000 = vpack.c.b16 %v3788, %v3786
    %v4001 = vpack.c.b16 %v3791, %v3789
    %v4002 = vpack.c.b16 %v3792, %v3790
    %v4003 = vpack.c.b16 %v3795, %v3793
    %v4004 = vpack.c.b16 %v3796, %v3794
    %v4005 = vpack.c.b16 %v3799, %v3797
    %v4006 = vpack.c.b16 %v3800, %v3798
    %v4007 = vpack.c.b16 %v3803, %v3801
    %v4008 = vpack.c.b16 %v3804, %v3802
    %v4009 = vpack.c.b16 %v3807, %v3805
    %v4010 = vpack.c.b16 %v3808, %v3806
    %v4011 = vpack.c.b16 %v3811, %v3809
    %v4012 = vpack.c.b16 %v3812, %v3810
    %v4013 = vpack.c.b16 %v3815, %v3813
    %v4014 = vpack.c.b16 %v3816, %v3814
    %v4015 = vpack.c.b16 %v3819, %v3817
    %v4016 = vpack.c.b16 %v3820, %v3818
    %v4017 = vpack.c.b16 %v3823, %v3821
    %v4018 = vpack.c.b16 %v3824, %v3822
    %v4019 = vpack.c.b16 %v3827, %v3825
    %v4020 = vpack.c.b16 %v3828, %v3826
    %v4021 = vpack.c.b16 %v3831, %v3829
    %v4022 = vpack.c.b16 %v3832, %v3830
    %v4023 = vpack.c.b16 %v3835, %v3833
    %v4024 = vpack.c.b16 %v3836, %v3834
    %v4025 = vpack.c.b16 %v3839, %v3837
    %v4026 = vpack.c.b16 %v3840, %v3838
    %v4027 = vpack.c.b16 %v3843, %v3841
    %v4028 = vpack.c.b16 %v3844, %v3842
    %v4029 = vpack.c.b16 %v3847, %v3845
    %v4030 = vpack.c.b16 %v3848, %v3846
    %v4031 = vpack.c.b16 %v3851, %v3849
    %v4032 = vpack.c.b16 %v3852, %v3850
    %v4033 = vpack.c.b16 %v3855, %v3853
    %v4034 = vpack.c.b16 %v3856, %v3854
    %v4035 = vpack.c.b16 %v3859, %v3857
    %v4036 = vpack.c.b16 %v3860, %v3858
    %v4037 = vpack.c.b16 %v3863, %v3861
    %v4038 = vpack.c.b16 %v3864, %v3862
    %v4039 = vpack.c.b16 %v3867, %v3865
    %v4040 = vpack.c.b16 %v3868, %v3866
    %v4041 = vpack.c.b16 %v3871, %v3869
    %v4042 = vpack.c.b16 %v3872, %v3870
    %v4043 = vpack.c.b16 %v3875, %v3873
    %v4044 = vpack.c.b16 %v3876, %v3874
    %v4045 = vpack.c.b16 %v3879, %v3877
    %v4046 = vpack.c.b16 %v3880, %v3878
    %v4047 = vpack.c.b16 %v3883, %v3881
    %v4048 = vpack.c.b16 %v3884, %v3882
    %v4049 = vpack.c.b16 %v3887, %v3885
    %v4050 = vpack.c.b16 %v3888, %v3886
    %v4051 = vpack.c.b16 %v3891, %v3889
    %v4052 = vpack.c.b16 %v3892, %v3890
    %v4053 = vpack.c.b16 %v3895, %v3893
    %v4054 = vpack.c.b16 %v3896, %v3894
    %v4055 = vpack.c.b16 %v3899, %v3897
    %v4056 = vpack.c.b16 %v3900, %v3898
    %v4057 = vpack.c.b16 %v3903, %v3901
    %v4058 = vpack.c.b16 %v3904, %v3902
    %v4059 = vpack.c.b16 %v3907, %v3905
    %v4060 = vpack.c.b16 %v3908, %v3906
    %v4061 = vpack.c.b16 %v3911, %v3909
    %v4062 = vpack.c.b16 %v3912, %v3910
    %v4063 = vpack.c.b16 %v3915, %v3913
    %v4064 = vpack.c.b16 %v3916, %v3914
    %v4065 = vpack.c.b16 %v3919, %v3917
    %v4066 = vpack.c.b16 %v3920, %v3918
    %v4067 = vpack.c.b16 %v3923, %v3921
    %v4068 = vpack.c.b16 %v3924, %v3922
    %v4069 = vpack.c.b16 %v3927, %v3925
    %v4070 = vpack.c.b16 %v3928, %v3926
    %v4071 = vpack.c.b16 %v3931, %v3929
    %v4072 = vpack.c.b16 %v3932, %v3930
    %v4073 = vpack.c.b16 %v3935, %v3933
    %v4074 = vpack.c.b16 %v3936, %v3934
    %v4075 = vpack.c.b16 %v3939, %v3937
    %v4076 = vpack.c.b16 %v3940, %v3938
    %v4077 = vpack.c.b16 %v3943, %v3941
    %v4078 = vpack.c.b16 %v3944, %v3942
    %v4079 = vpack.c.b16 %v3947, %v3945
    %v4080 = vpack.c.b16 %v3948, %v3946
    %v4081 = vpack.c.b16 %v3951, %v3949
    %v4082 = vpack.c.b16 %v3952, %v3950
    %v4083 = vpack.c.b16 %v3955, %v3953
    %v4084 = vpack.c.b16 %v3956, %v3954
    %4213 = vmatprep.subr.bf16.mxu0 %v3958
    %4214 = vmatpush1.bf16.msra.mxu0 %v3957
    %4215 = vmatprep.subr.bf16.mxu0 %v3960
    %4216 = vmatpush1.bf16.msra.mxu0 %v3959
    %4217 = vmatprep.subr.bf16.mxu0 %v3962
    %4218 = vmatpush1.bf16.msra.mxu0 %v3961
    %4219 = vmatprep.subr.bf16.mxu0 %v3964
    %4220 = vmatpush1.bf16.msra.mxu0 %v3963
    %4221 = vmatprep.subr.bf16.mxu0 %v3966
    %4222 = vmatpush1.bf16.msra.mxu0 %v3965
    %4223 = vmatprep.subr.bf16.mxu0 %v3968
    %4224 = vmatpush1.bf16.msra.mxu0 %v3967
    %4225 = vmatprep.subr.bf16.mxu0 %v3970
    %4226 = vmatpush1.bf16.msra.mxu0 %v3969
    %4227 = vmatprep.subr.bf16.mxu0 %v3972
    %4228 = vmatpush1.bf16.msra.mxu0 %v3971
    %4229 = vmatprep.subr.bf16.mxu0 %v3974
    %4230 = vmatpush1.bf16.msra.mxu0 %v3973
    %4231 = vmatprep.subr.bf16.mxu0 %v3976
    %4232 = vmatpush1.bf16.msra.mxu0 %v3975
    %4233 = vmatprep.subr.bf16.mxu0 %v3978
    %4234 = vmatpush1.bf16.msra.mxu0 %v3977
    %4235 = vmatprep.subr.bf16.mxu0 %v3980
    %4236 = vmatpush1.bf16.msra.mxu0 %v3979
    %4237 = vmatprep.subr.bf16.mxu0 %v3982
    %4238 = vmatpush1.bf16.msra.mxu0 %v3981
    %4239 = vmatprep.subr.bf16.mxu0 %v3984
    %4240 = vmatpush1.bf16.msra.mxu0 %v3983
    %4241 = vmatprep.subr.bf16.mxu0 %v3986
    %4242 = vmatpush1.bf16.msra.mxu0 %v3985
    %4243 = vmatprep.subr.bf16.mxu0 %v3988
    %4244 = vmatpush1.bf16.msra.mxu0 %v3987
    %4245 = vmatprep.mubr.bf16.mxu0 %v3542
    %4246 = vmatmul.mubr.bf16.gmra.mrb[0].mxu0 %v3541
    %v4247 = vpop.f32.mrb[0].mxu0
    %v4248 = vadd.f32 0.0, %v4247
    %v4249 = vpop.f32.mrb[0].mxu0
    %v4250 = vadd.f32 0.0, %v4249
    %v4251 = vpop.f32.mrb[0].mxu0
    %v4252 = vadd.f32 0.0, %v4251
    %v4253 = vpop.f32.mrb[0].mxu0
    %v4254 = vadd.f32 0.0, %v4253
    %4255 = vmatprep.mubr.bf16.mxu0 %v3550
    %4256 = vmatmul.mubr.bf16.gmra.mrb[0].mxu0 %v3549
    %v4257 = vpop.f32.mrb[0].mxu0
    %v4258 = vadd.f32 0.0, %v4257
    %v4259 = vpop.f32.mrb[0].mxu0
    %v4260 = vadd.f32 0.0, %v4259
    %v4261 = vpop.f32.mrb[0].mxu0
    %v4262 = vadd.f32 0.0, %v4261
    %v4263 = vpop.f32.mrb[0].mxu0
    %v4264 = vadd.f32 0.0, %v4263
    %4265 = vdwg.mxu0
    %4266 = vmatprep.subr.bf16.mxu0 %v3990
    %4267 = vmatpush1.bf16.msra.mxu0 %v3989
    %4268 = vmatprep.subr.bf16.mxu0 %v3992
    %4269 = vmatpush1.bf16.msra.mxu0 %v3991
    %4270 = vmatprep.subr.bf16.mxu0 %v3994
    %4271 = vmatpush1.bf16.msra.mxu0 %v3993
    %4272 = vmatprep.subr.bf16.mxu0 %v3996
    %4273 = vmatpush1.bf16.msra.mxu0 %v3995
    %4274 = vmatprep.subr.bf16.mxu0 %v3998
    %4275 = vmatpush1.bf16.msra.mxu0 %v3997
    %4276 = vmatprep.subr.bf16.mxu0 %v4000
    %4277 = vmatpush1.bf16.msra.mxu0 %v3999
    %4278 = vmatprep.subr.bf16.mxu0 %v4002
    %4279 = vmatpush1.bf16.msra.mxu0 %v4001
    %4280 = vmatprep.subr.bf16.mxu0 %v4004
    %4281 = vmatpush1.bf16.msra.mxu0 %v4003
    %4282 = vmatprep.subr.bf16.mxu0 %v4006
    %4283 = vmatpush1.bf16.msra.mxu0 %v4005
    %4284 = vmatprep.subr.bf16.mxu0 %v4008
    %4285 = vmatpush1.bf16.msra.mxu0 %v4007
    %4286 = vmatprep.subr.bf16.mxu0 %v4010
    %4287 = vmatpush1.bf16.msra.mxu0 %v4009
    %4288 = vmatprep.subr.bf16.mxu0 %v4012
    %4289 = vmatpush1.bf16.msra.mxu0 %v4011
    %4290 = vmatprep.subr.bf16.mxu0 %v4014
    %4291 = vmatpush1.bf16.msra.mxu0 %v4013
    %4292 = vmatprep.subr.bf16.mxu0 %v4016
    %4293 = vmatpush1.bf16.msra.mxu0 %v4015
    %4294 = vmatprep.subr.bf16.mxu0 %v4018
    %4295 = vmatpush1.bf16.msra.mxu0 %v4017
    %4296 = vmatprep.subr.bf16.mxu0 %v4020
    %4297 = vmatpush1.bf16.msra.mxu0 %v4019
    %4298 = vmatprep.mubr.bf16.mxu0 %v3544
    %4299 = vmatmul.mubr.bf16.gmra.mrb[0].mxu0 %v3543
    %v4300 = vpop.f32.mrb[0].mxu0
    %v4301 = vadd.f32 %v4248, %v4300
    %v4302 = vpop.f32.mrb[0].mxu0
    %v4303 = vadd.f32 %v4250, %v4302
    %v4304 = vpop.f32.mrb[0].mxu0
    %v4305 = vadd.f32 %v4252, %v4304
    %v4306 = vpop.f32.mrb[0].mxu0
    %v4307 = vadd.f32 %v4254, %v4306
    %4308 = vmatprep.mubr.bf16.mxu0 %v3552
    %4309 = vmatmul.mubr.bf16.gmra.mrb[0].mxu0 %v3551
    %v4310 = vpop.f32.mrb[0].mxu0
    %v4311 = vadd.f32 %v4258, %v4310
    %v4312 = vpop.f32.mrb[0].mxu0
    %v4313 = vadd.f32 %v4260, %v4312
    %v4314 = vpop.f32.mrb[0].mxu0
    %v4315 = vadd.f32 %v4262, %v4314
    %v4316 = vpop.f32.mrb[0].mxu0
    %v4317 = vadd.f32 %v4264, %v4316
    %4318 = vdwg.mxu0
    %4319 = vmatprep.subr.bf16.mxu0 %v4022
    %4320 = vmatpush1.bf16.msra.mxu0 %v4021
    %4321 = vmatprep.subr.bf16.mxu0 %v4024
    %4322 = vmatpush1.bf16.msra.mxu0 %v4023
    %4323 = vmatprep.subr.bf16.mxu0 %v4026
    %4324 = vmatpush1.bf16.msra.mxu0 %v4025
    %4325 = vmatprep.subr.bf16.mxu0 %v4028
    %4326 = vmatpush1.bf16.msra.mxu0 %v4027
    %4327 = vmatprep.subr.bf16.mxu0 %v4030
    %4328 = vmatpush1.bf16.msra.mxu0 %v4029
    %4329 = vmatprep.subr.bf16.mxu0 %v4032
    %4330 = vmatpush1.bf16.msra.mxu0 %v4031
    %4331 = vmatprep.subr.bf16.mxu0 %v4034
    %4332 = vmatpush1.bf16.msra.mxu0 %v4033
    %4333 = vmatprep.subr.bf16.mxu0 %v4036
    %4334 = vmatpush1.bf16.msra.mxu0 %v4035
    %4335 = vmatprep.subr.bf16.mxu0 %v4038
    %4336 = vmatpush1.bf16.msra.mxu0 %v4037
    %4337 = vmatprep.subr.bf16.mxu0 %v4040
    %4338 = vmatpush1.bf16.msra.mxu0 %v4039
    %4339 = vmatprep.subr.bf16.mxu0 %v4042
    %4340 = vmatpush1.bf16.msra.mxu0 %v4041
    %4341 = vmatprep.subr.bf16.mxu0 %v4044
    %4342 = vmatpush1.bf16.msra.mxu0 %v4043
    %4343 = vmatprep.subr.bf16.mxu0 %v4046
    %4344 = vmatpush1.bf16.msra.mxu0 %v4045
    %4345 = vmatprep.subr.bf16.mxu0 %v4048
    %4346 = vmatpush1.bf16.msra.mxu0 %v4047
    %4347 = vmatprep.subr.bf16.mxu0 %v4050
    %4348 = vmatpush1.bf16.msra.mxu0 %v4049
    %4349 = vmatprep.subr.bf16.mxu0 %v4052
    %4350 = vmatpush1.bf16.msra.mxu0 %v4051
    %4351 = vmatprep.mubr.bf16.mxu0 %v3546
    %4352 = vmatmul.mubr.bf16.gmra.mrb[0].mxu0 %v3545
    %v4353 = vpop.f32.mrb[0].mxu0
    %v4354 = vadd.f32 %v4301, %v4353
    %v4355 = vpop.f32.mrb[0].mxu0
    %v4356 = vadd.f32 %v4303, %v4355
    %v4357 = vpop.f32.mrb[0].mxu0
    %v4358 = vadd.f32 %v4305, %v4357
    %v4359 = vpop.f32.mrb[0].mxu0
    %v4360 = vadd.f32 %v4307, %v4359
    %4361 = vmatprep.mubr.bf16.mxu0 %v3554
    %4362 = vmatmul.mubr.bf16.gmra.mrb[0].mxu0 %v3553
    %v4363 = vpop.f32.mrb[0].mxu0
    %v4364 = vadd.f32 %v4311, %v4363
    %v4365 = vpop.f32.mrb[0].mxu0
    %v4366 = vadd.f32 %v4313, %v4365
    %v4367 = vpop.f32.mrb[0].mxu0
    %v4368 = vadd.f32 %v4315, %v4367
    %v4369 = vpop.f32.mrb[0].mxu0
    %v4370 = vadd.f32 %v4317, %v4369
    %4371 = vdwg.mxu0
    %4372 = vmatprep.subr.bf16.mxu0 %v4054
    %4373 = vmatpush1.bf16.msra.mxu0 %v4053
    %4374 = vmatprep.subr.bf16.mxu0 %v4056
    %4375 = vmatpush1.bf16.msra.mxu0 %v4055
    %4376 = vmatprep.subr.bf16.mxu0 %v4058
    %4377 = vmatpush1.bf16.msra.mxu0 %v4057
    %4378 = vmatprep.subr.bf16.mxu0 %v4060
    %4379 = vmatpush1.bf16.msra.mxu0 %v4059
    %4380 = vmatprep.subr.bf16.mxu0 %v4062
    %4381 = vmatpush1.bf16.msra.mxu0 %v4061
    %4382 = vmatprep.subr.bf16.mxu0 %v4064
    %4383 = vmatpush1.bf16.msra.mxu0 %v4063
    %4384 = vmatprep.subr.bf16.mxu0 %v4066
    %4385 = vmatpush1.bf16.msra.mxu0 %v4065
    %4386 = vmatprep.subr.bf16.mxu0 %v4068
    %4387 = vmatpush1.bf16.msra.mxu0 %v4067
    %4388 = vmatprep.subr.bf16.mxu0 %v4070
    %4389 = vmatpush1.bf16.msra.mxu0 %v4069
    %4390 = vmatprep.subr.bf16.mxu0 %v4072
    %4391 = vmatpush1.bf16.msra.mxu0 %v4071
    %4392 = vmatprep.subr.bf16.mxu0 %v4074
    %4393 = vmatpush1.bf16.msra.mxu0 %v4073
    %4394 = vmatprep.subr.bf16.mxu0 %v4076
    %4395 = vmatpush1.bf16.msra.mxu0 %v4075
    %4396 = vmatprep.subr.bf16.mxu0 %v4078
    %4397 = vmatpush1.bf16.msra.mxu0 %v4077
    %4398 = vmatprep.subr.bf16.mxu0 %v4080
    %4399 = vmatpush1.bf16.msra.mxu0 %v4079
    %4400 = vmatprep.subr.bf16.mxu0 %v4082
    %4401 = vmatpush1.bf16.msra.mxu0 %v4081
    %4402 = vmatprep.subr.bf16.mxu0 %v4084
    %4403 = vmatpush1.bf16.msra.mxu0 %v4083
    %4404 = vmatprep.mubr.bf16.mxu0 %v3548
    %4405 = vmatmul.mubr.bf16.gmra.mrb[0].mxu0 %v3547
    %v4406 = vpop.f32.mrb[0].mxu0
    %v4407 = vadd.f32 %v4354, %v4406
    %v4408 = vpop.f32.mrb[0].mxu0
    %v4409 = vadd.f32 %v4356, %v4408
    %v4410 = vpop.f32.mrb[0].mxu0
    %v4411 = vadd.f32 %v4358, %v4410
    %v4412 = vpop.f32.mrb[0].mxu0
    %v4413 = vadd.f32 %v4360, %v4412
    %4414 = vmatprep.mubr.bf16.mxu0 %v3556
    %4415 = vmatmul.mubr.bf16.gmra.mrb[0].mxu0 %v3555
    %v4416 = vpop.f32.mrb[0].mxu0
    %v4417 = vadd.f32 %v4364, %v4416
    %v4418 = vpop.f32.mrb[0].mxu0
    %v4419 = vadd.f32 %v4366, %v4418
    %v4420 = vpop.f32.mrb[0].mxu0
    %v4421 = vadd.f32 %v4368, %v4420
    %v4422 = vpop.f32.mrb[0].mxu0
    %v4423 = vadd.f32 %v4370, %v4422
    %4424 = vdwg.mxu0
    %v4425 = vadd.f32 %v4407, %v4409
    %4426 = vadd.xlane.f32.xlu0 %v4425
    %v4427 = vpop.xlane.xlu0 %4426
    %v4428 = vadd.f32 %v4411, %v4413
    %4429 = vadd.xlane.f32.xlu0 %v4428
    %v4430 = vpop.xlane.xlu0 %4429
    %v4431 = vadd.f32 %v4417, %v4419
    %4432 = vadd.xlane.f32.xlu0 %v4431
    %v4433 = vpop.xlane.xlu0 %4432
    %v4434 = vadd.f32 %v4421, %v4423
    %4435 = vadd.xlane.f32.xlu0 %v4434
    %v4436 = vpop.xlane.xlu0 %4435
    %v4437 = vmul.f32 %v4427, 0.010416667
    %v4438 = vmul.f32 %v4430, 0.010416667
    %v4439 = vmul.f32 %v4433, 0.010416667
    %v4440 = vmul.f32 %v4436, 0.010416667
    %v4441 = vmul.f32 %v4407, %v4407
    %v4442 = vmul.f32 %v4409, %v4409
    %v4443 = vmul.f32 %v4411, %v4411
    %v4444 = vmul.f32 %v4413, %v4413
    %v4445 = vmul.f32 %v4417, %v4417
    %v4446 = vmul.f32 %v4419, %v4419
    %v4447 = vmul.f32 %v4421, %v4421
    %v4448 = vmul.f32 %v4423, %v4423
    %v4449 = vadd.f32 %v4441, %v4442
    %4450 = vadd.xlane.f32.xlu0 %v4449
    %v4451 = vpop.xlane.xlu0 %4450
    %v4452 = vadd.f32 %v4443, %v4444
    %4453 = vadd.xlane.f32.xlu0 %v4452
    %v4454 = vpop.xlane.xlu0 %4453
    %v4455 = vadd.f32 %v4445, %v4446
    %4456 = vadd.xlane.f32.xlu0 %v4455
    %v4457 = vpop.xlane.xlu0 %4456
    %v4458 = vadd.f32 %v4447, %v4448
    %4459 = vadd.xlane.f32.xlu0 %v4458
    %v4460 = vpop.xlane.xlu0 %4459
    %v4461 = vmul.f32 %v4451, 0.010416667
    %v4462 = vmul.f32 %v4454, 0.010416667
    %v4463 = vmul.f32 %v4457, 0.010416667
    %v4464 = vmul.f32 %v4460, 0.010416667
    %v4465 = vmul.f32 %v4437, %v4437
    %v4466 = vmul.f32 %v4438, %v4438
    %v4467 = vmul.f32 %v4439, %v4439
    %v4468 = vmul.f32 %v4440, %v4440
    %v4469 = vsub.f32 %v4461, %v4465
    %v4470 = vsub.f32 %v4462, %v4466
    %v4471 = vsub.f32 %v4463, %v4467
    %v4472 = vsub.f32 %v4464, %v4468
    %v4473 = vmax.f32 %v4469, 0.0
    %v4474 = vmax.f32 %v4470, 0.0
    %v4475 = vmax.f32 %v4471, 0.0
    %v4476 = vmax.f32 %v4472, 0.0
    %v4477 = vld [vmem:[%s1] sm:$0xff]
    %v4478 = vld [vmem:[%s1 + $0x8] sm:$0xff]
    %v4479 = vld [vmem:[%s1 + $0x10] sm:$0xff]
    %v4480 = vld [vmem:[%s1 + $0x18] sm:$0xff]
    %v4481 = vadd.f32 %v4473, 1e-05
    %v4482 = vadd.f32 %v4474, 1e-05
    %v4483 = vadd.f32 %v4475, 1e-05
    %v4484 = vadd.f32 %v4476, 1e-05
    %v4485 = vrsqrt.pop %v4481
    %v4486 = vrsqrt.pop %v4482
    %v4487 = vrsqrt.pop %v4483
    %v4488 = vrsqrt.pop %v4484
    %v4489 = vmul.f32 %v4477, %v4485
    %v4490 = vmul.f32 %v4478, %v4486
    %v4491 = vmul.f32 %v4479, %v4487
    %v4492 = vmul.f32 %v4480, %v4488
    %v4493 = vld [vmem:[%s2] sm:$0xff]
    %v4494 = vld [vmem:[%s2 + $0x8] sm:$0xff]
    %v4495 = vld [vmem:[%s2 + $0x10] sm:$0xff]
    %v4496 = vld [vmem:[%s2 + $0x18] sm:$0xff]
    %v4497 = vmul.f32 %v4437, %v4489
    %v4498 = vmul.f32 %v4438, %v4490
    %v4499 = vmul.f32 %v4439, %v4491
    %v4500 = vmul.f32 %v4440, %v4492
    %v4501 = vsub.f32 %v4493, %v4497
    %v4502 = vsub.f32 %v4494, %v4498
    %v4503 = vsub.f32 %v4495, %v4499
    %v4504 = vsub.f32 %v4496, %v4500
    %4506 = vset.pattern.permute.xlu0 0
    %4507 = vperm.xlu0 %4506, %v4489
    %v4508 = vpop.permute.xlu0 %4507
    %4511 = vset.pattern.permute.xlu0 0
    %4512 = vperm.xlu0 %4511, %v4490
    %v4513 = vpop.permute.xlu0 %4512
    %4516 = vset.pattern.permute.xlu0 0
    %4517 = vperm.xlu0 %4516, %v4491
    %v4518 = vpop.permute.xlu0 %4517
    %4521 = vset.pattern.permute.xlu0 0
    %4522 = vperm.xlu0 %4521, %v4492
    %v4523 = vpop.permute.xlu0 %4522
    %v4525 = vmul.f32 %v4407, %v4508
    %v4526 = vmul.f32 %v4409, %v4508
    %v4527 = vmul.f32 %v4411, %v4513
    %v4528 = vmul.f32 %v4413, %v4513
    %v4529 = vmul.f32 %v4417, %v4518
    %v4530 = vmul.f32 %v4419, %v4518
    %v4531 = vmul.f32 %v4421, %v4523
    %v4532 = vmul.f32 %v4423, %v4523
    %4534 = vset.pattern.permute.xlu0 0
    %4535 = vperm.xlu0 %4534, %v4501
    %v4536 = vpop.permute.xlu0 %4535
    %4539 = vset.pattern.permute.xlu0 0
    %4540 = vperm.xlu0 %4539, %v4502
    %v4541 = vpop.permute.xlu0 %4540
    %4544 = vset.pattern.permute.xlu0 0
    %4545 = vperm.xlu0 %4544, %v4503
    %v4546 = vpop.permute.xlu0 %4545
    %4549 = vset.pattern.permute.xlu0 0
    %4550 = vperm.xlu0 %4549, %v4504
    %v4551 = vpop.permute.xlu0 %4550
    %v4553 = vadd.f32 %v4525, %v4536
    %v4554 = vadd.f32 %v4526, %v4536
    %v4555 = vadd.f32 %v4527, %v4541
    %v4556 = vadd.f32 %v4528, %v4541
    %v4557 = vadd.f32 %v4529, %v4546
    %v4558 = vadd.f32 %v4530, %v4546
    %v4559 = vadd.f32 %v4531, %v4551
    %v4560 = vadd.f32 %v4532, %v4551
    %v4561 = vmax.f32 %v4553, 0.0
    %v4562 = vmax.f32 %v4554, 0.0
    %v4563 = vmax.f32 %v4555, 0.0
    %v4564 = vmax.f32 %v4556, 0.0
    %v4565 = vmax.f32 %v4557, 0.0
    %v4566 = vmax.f32 %v4558, 0.0
    %v4567 = vmax.f32 %v4559, 0.0
    %v4568 = vmax.f32 %v4560, 0.0
    %v4569 = vpack.c.bf16 %v4563, %v4561
    %v4570 = vpack.c.bf16 %v4564, %v4562
    %v4571 = vpack.c.bf16 %v4567, %v4565
    %v4572 = vpack.c.bf16 %v4568, %v4566
    %v4577 = vunpack.c.l.b16 %v4569
    %v4578 = vunpack.c.l.b16 %v4570
    %v4579 = vunpack.c.h.b16 %v4569
    %v4580 = vunpack.c.h.b16 %v4570
    %v4581 = vunpack.c.l.b16 %v4571
    %v4582 = vunpack.c.l.b16 %v4572
    %v4583 = vunpack.c.h.b16 %v4571
    %v4584 = vunpack.c.h.b16 %v4572
    %v4585 = vpack.c.b16 %v4578, %v4577
    %v4586 = vpack.c.b16 %v4580, %v4579
    %v4587 = vpack.c.b16 %v4582, %v4581
    %v4588 = vpack.c.b16 %v4584, %v4583
    %4593 = vst [vmem:[%s5] sm:$0xff] %v4585
    %4594 = vst [vmem:[%s5 + $0x8] sm:$0xff] %v4586
    %4595 = vst [vmem:[%s5 + $0x10] sm:$0xff] %v4587
    %4596 = vst [vmem:[%s5 + $0x18] sm:$0xff] %v4588
    // Predicated region
    $region18: #{generator_forward.11} parent=1 // pred_check
      _
    $region19: #{generator_forward.11} parent=1 // pred_check_branch
      %4598 = sbr.rel (0) target = $region21
    $region20: #{generator_forward.11} parent=1 // pred_region
      _
    $region21: #{generator_forward.11} parent=1 // pred_fallthru
      _
    // Predicated region
    $region22: #{generator_forward.11} parent=1 // pred_check
      _
    $region23: #{generator_forward.11} parent=1 // pred_check_branch
      %4600 = sbr.rel (0) target = $region25
    $region24: #{generator_forward.11} parent=1 // pred_region
      _
    $region25: #{generator_forward.11} parent=1 // pred_fallthru
      _

// kernel: generator_forward.10
$region0: #{generator_forward.10}
  #allocation0 [shape = 'u32[]', space=smem, size = 0x4, offset = 0x4, fixed_abs, tag = 'smem constant byte address 0x4 - core index']
  #allocation1 [shape = 'u32[144,128]{1,0:T(1,128)}', space=vmem, size = 0x12000, scoped, tag = 'internal scratch']
  #allocation2 [shape = 'u32[2048]{0}', space=vmem, size = 0x2000, scoped, tag = 'scoped memory for generator_forward.10']
  #allocation3 [shape = 'u32[2048]{0}', space=vmem, size = 0x2000, scoped, tag = 'scoped memory for generator_forward.10']
  #allocation4 [shape = 'u32[2048]{0}', space=vmem, size = 0x2000, scoped, tag = 'scoped memory for generator_forward.10']
  #allocation5 [shape = 'u32[2048]{0}', space=vmem, size = 0x2000, scoped, tag = 'scoped memory for generator_forward.10']
  #allocation6 [shape = 'u32[2048]{0}', space=vmem, size = 0x2000, scoped, tag = 'scoped memory for generator_forward.10']
  %s0 = inlined_call_operand.vmem [shape: bf16[16,512], index: 0, kind: input, shape index: {}]
  %s1 = inlined_call_operand.vmem [shape: f32[16,1], index: 1, kind: input, shape index: {}]
  %s2 = inlined_call_operand.vmem [shape: f32[16,1], index: 2, kind: input, shape index: {}]
  %s3 = inlined_call_operand.vmem [shape: bf16[512,384], index: 3, kind: input, shape index: {}]
  %s4 = inlined_call_operand.<no memory space> [shape: bf16[], index: 4, kind: input, shape index: {}]
  %s5 = inlined_call_operand.vmem [shape: bf16[16,512], index: 5, kind: output, shape index: {}]
  %s6 = sld [smem:[#allocation0]]
  $region26: #{generator_forward.10} parent=0
    _
  %s8 = ssub.s32 1, %s6
  %s9 = scalar_select 0, %s8, %s6
  %v10 = vstv %s4
  %v11 = vunpack.i.l.bf16 %v10
  %v13 = vunpack.i.h.bf16 %v10
  $region1: #{generator_forward.10} parent=0
    #allocation7 [shape = 'u8[524288]{0}', space=vmem, size = 0x80000, dematerialized = true, scoped, tag = 'FusionAdapter Buffer %fusion.1 = bf16[512,512]{1,0:T(8,128)(2,1)} fusion(%param_3.33, %param_4.32), kind=kLoop, calls=%fused_computation.21.clone, metadata={op_name="jit(generator_forward)/jit(_pad)/pad" stack_frame_id=48}']
    // Predicated region
    $region2: #{generator_forward.10} parent=1 // pred_check
      _
    $region3: #{generator_forward.10} parent=1 // pred_check_branch
      %16 = sbr.rel (0) target = $region5
    $region4: #{generator_forward.10} parent=1 // pred_region
      _
    $region5: #{generator_forward.10} parent=1 // pred_fallthru
      _
    // Predicated region
    $region6: #{generator_forward.10} parent=1 // pred_check
      _
    $region7: #{generator_forward.10} parent=1 // pred_check_branch
      %18 = sbr.rel (0) target = $region9
    $region8: #{generator_forward.10} parent=1 // pred_region
      _
    $region9: #{generator_forward.10} parent=1 // pred_fallthru
      _
    // Predicated region
    $region10: #{generator_forward.10} parent=1 // pred_check
      _
    $region11: #{generator_forward.10} parent=1 // pred_check_branch
      %20 = sbr.rel (0) target = $region13
    $region12: #{generator_forward.10} parent=1 // pred_region
      _
    $region13: #{generator_forward.10} parent=1 // pred_fallthru
      _
    // Predicated region
    $region14: #{generator_forward.10} parent=1 // pred_check
      _
    $region15: #{generator_forward.10} parent=1 // pred_check_branch
      %22 = sbr.rel (0) target = $region17
    $region16: #{generator_forward.10} parent=1 // pred_region
      _
    $region17: #{generator_forward.10} parent=1 // pred_fallthru
      _
    %v23 = vld [vmem:[%s3] sm:$0xf]
    %v24 = vunpack.c.l.bf16 %v23
    %v25 = vunpack.c.h.bf16 %v23
    %v26 = vpack.c.bf16 0.0, %v24
    %28 = vst [vmem:[#allocation7] sm:$0xf] %v26
    %s29 = scalar_lea.vmem %s3, 4
    %v30 = vld [vmem:[%s29] sm:$0xf]
    %v31 = vunpack.c.l.bf16 %v30
    %v32 = vunpack.c.h.bf16 %v30
    %s33 = scalar_lea.vmem [#allocation7], 4
    %v34 = vpack.c.bf16 0.0, %v31
    %36 = vst [vmem:[%s33] sm:$0xf] %v34
    %s37 = scalar_lea.vmem %s3, 8
    %s39 = sor.u32 255, 127
    %s40 = sand.u32 %s39, 85
    %s41 = sshrl.u32 %s40, 1
    %s42 = sor.u32 %s40, %s41
    %s43 = sand.u32 51, %s42
    %s44 = sshrl.u32 %s43, 2
    %s45 = sor.u32 %s43, %s44
    %s46 = sand.u32 15, %s45
    %v47 = vld [vmem:[%s37] sm:%s46]
    %v48 = vunpack.c.l.bf16 %v47
    %v49 = vunpack.c.h.bf16 %v47
    %s50 = scalar_lea.vmem [#allocation7], 8
    %v51 = vpack.c.bf16 0.0, %v48
    %53 = vst [vmem:[%s50] sm:$0xf] %v51
    %s54 = scalar_lea.vmem [#allocation7], 12
    %v55 = vpack.c.bf16 0.0, %v11
    %57 = vst [vmem:[%s54] sm:$0xf] %v55
    %s58 = scalar_lea.vmem %s3, 12
    %v59 = vld [vmem:[%s58] sm:$0xf]
    %v60 = vunpack.c.l.bf16 %v59
    %v61 = vunpack.c.h.bf16 %v59
    %s62 = scalar_lea.vmem [#allocation7], 16
    %v63 = vpack.c.bf16 0.0, %v60
    %65 = vst [vmem:[%s62] sm:$0xf] %v63
    %s66 = scalar_lea.vmem %s3, 16
    %v67 = vld [vmem:[%s66] sm:$0xf]
    %v68 = vunpack.c.l.bf16 %v67
    %v69 = vunpack.c.h.bf16 %v67
    %s70 = scalar_lea.vmem [#allocation7], 20
    %v71 = vpack.c.bf16 0.0, %v68
    %73 = vst [vmem:[%s70] sm:$0xf] %v71
    %s74 = scalar_lea.vmem %s3, 20
    %s76 = sor.u32 255, 127
    %s77 = sand.u32 %s76, 85
    %s78 = sshrl.u32 %s77, 1
    %s79 = sor.u32 %s77, %s78
    %s80 = sand.u32 51, %s79
    %s81 = sshrl.u32 %s80, 2
    %s82 = sor.u32 %s80, %s81
    %s83 = sand.u32 15, %s82
    %v84 = vld [vmem:[%s74] sm:%s83]
    %v85 = vunpack.c.l.bf16 %v84
    %v86 = vunpack.c.h.bf16 %v84
    %s87 = scalar_lea.vmem [#allocation7], 24
    %v88 = vpack.c.bf16 0.0, %v85
    %90 = vst [vmem:[%s87] sm:$0xf] %v88
    %s91 = scalar_lea.vmem [#allocation7], 28
    %v92 = vpack.c.bf16 0.0, %v11
    %94 = vst [vmem:[%s91] sm:$0xf] %v92
    %s95 = scalar_lea.vmem %s3, 24
    %v96 = vld [vmem:[%s95] sm:$0xf]
    %v97 = vunpack.c.l.bf16 %v96
    %v98 = vunpack.c.h.bf16 %v96
    %s99 = scalar_lea.vmem [#allocation7], 32
    %v100 = vpack.c.bf16 0.0, %v97
    %102 = vst [vmem:[%s99] sm:$0xf] %v100
    %s103 = scalar_lea.vmem %s3, 28
    %v104 = vld [vmem:[%s103] sm:$0xf]
    %v105 = vunpack.c.l.bf16 %v104
    %v106 = vunpack.c.h.bf16 %v104
    %s107 = scalar_lea.vmem [#allocation7], 36
    %v108 = vpack.c.bf16 0.0, %v105
    %110 = vst [vmem:[%s107] sm:$0xf] %v108
    %s111 = scalar_lea.vmem %s3, 32
    %s113 = sor.u32 255, 127
    %s114 = sand.u32 %s113, 85
    %s115 = sshrl.u32 %s114, 1
    %s116 = sor.u32 %s114, %s115
    %s117 = sand.u32 51, %s116
    %s118 = sshrl.u32 %s117, 2
    %s119 = sor.u32 %s117, %s118
    %s120 = sand.u32 15, %s119
    %v121 = vld [vmem:[%s111] sm:%s120]
    %v122 = vunpack.c.l.bf16 %v121
    %v123 = vunpack.c.h.bf16 %v121
    %s124 = scalar_lea.vmem [#allocation7], 40
    %v125 = vpack.c.bf16 0.0, %v122
    %127 = vst [vmem:[%s124] sm:$0xf] %v125
    %s128 = scalar_lea.vmem [#allocation7], 44
    %v129 = vpack.c.bf16 0.0, %v11
    %131 = vst [vmem:[%s128] sm:$0xf] %v129
    %s132 = scalar_lea.vmem %s3, 36
    %v133 = vld [vmem:[%s132] sm:$0xf]
    %v134 = vunpack.c.l.bf16 %v133
    %v135 = vunpack.c.h.bf16 %v133
    %s136 = scalar_lea.vmem [#allocation7], 48
    %v137 = vpack.c.bf16 0.0, %v134
    %139 = vst [vmem:[%s136] sm:$0xf] %v137
    %s140 = scalar_lea.vmem %s3, 40
    %v141 = vld [vmem:[%s140] sm:$0xf]
    %v142 = vunpack.c.l.bf16 %v141
    %v143 = vunpack.c.h.bf16 %v141
    %s144 = scalar_lea.vmem [#allocation7], 52
    %v145 = vpack.c.bf16 0.0, %v142
    %147 = vst [vmem:[%s144] sm:$0xf] %v145
    %s148 = scalar_lea.vmem %s3, 44
    %s150 = sor.u32 255, 127
    %s151 = sand.u32 %s150, 85
    %s152 = sshrl.u32 %s151, 1
    %s153 = sor.u32 %s151, %s152
    %s154 = sand.u32 51, %s153
    %s155 = sshrl.u32 %s154, 2
    %s156 = sor.u32 %s154, %s155
    %s157 = sand.u32 15, %s156
    %v158 = vld [vmem:[%s148] sm:%s157]
    %v159 = vunpack.c.l.bf16 %v158
    %v160 = vunpack.c.h.bf16 %v158
    %s161 = scalar_lea.vmem [#allocation7], 56
    %v162 = vpack.c.bf16 0.0, %v159
    %164 = vst [vmem:[%s161] sm:$0xf] %v162
    %s165 = scalar_lea.vmem [#allocation7], 60
    %v166 = vpack.c.bf16 0.0, %v11
    %168 = vst [vmem:[%s165] sm:$0xf] %v166
    %s169 = scalar_lea.vmem %s3, 48
    %v170 = vld [vmem:[%s169] sm:$0xf]
    %v171 = vunpack.c.l.bf16 %v170
    %v172 = vunpack.c.h.bf16 %v170
    %s173 = scalar_lea.vmem [#allocation7], 64
    %v174 = vpack.c.bf16 0.0, %v171
    %176 = vst [vmem:[%s173] sm:$0xf] %v174
    %s177 = scalar_lea.vmem %s3, 52
    %v178 = vld [vmem:[%s177] sm:$0xf]
    %v179 = vunpack.c.l.bf16 %v178
    %v180 = vunpack.c.h.bf16 %v178
    %s181 = scalar_lea.vmem [#allocation7], 68
    %v182 = vpack.c.bf16 0.0, %v179
    %184 = vst [vmem:[%s181] sm:$0xf] %v182
    %s185 = scalar_lea.vmem %s3, 56
    %s187 = sor.u32 255, 127
    %s188 = sand.u32 %s187, 85
    %s189 = sshrl.u32 %s188, 1
    %s190 = sor.u32 %s188, %s189
    %s191 = sand.u32 51, %s190
    %s192 = sshrl.u32 %s191, 2
    %s193 = sor.u32 %s191, %s192
    %s194 = sand.u32 15, %s193
    %v195 = vld [vmem:[%s185] sm:%s194]
    %v196 = vunpack.c.l.bf16 %v195
    %v197 = vunpack.c.h.bf16 %v195
    %s198 = scalar_lea.vmem [#allocation7], 72
    %v199 = vpack.c.bf16 0.0, %v196
    %201 = vst [vmem:[%s198] sm:$0xf] %v199
    %s202 = scalar_lea.vmem [#allocation7], 76
    %v203 = vpack.c.bf16 0.0, %v11
    %205 = vst [vmem:[%s202] sm:$0xf] %v203
    %s206 = scalar_lea.vmem %s3, 60
    %v207 = vld [vmem:[%s206] sm:$0xf]
    %v208 = vunpack.c.l.bf16 %v207
    %v209 = vunpack.c.h.bf16 %v207
    %s210 = scalar_lea.vmem [#allocation7], 80
    %v211 = vpack.c.bf16 0.0, %v208
    %213 = vst [vmem:[%s210] sm:$0xf] %v211
    %s214 = scalar_lea.vmem %s3, 64
    %v215 = vld [vmem:[%s214] sm:$0xf]
    %v216 = vunpack.c.l.bf16 %v215
    %v217 = vunpack.c.h.bf16 %v215
    %s218 = scalar_lea.vmem [#allocation7], 84
    %v219 = vpack.c.bf16 0.0, %v216
    %221 = vst [vmem:[%s218] sm:$0xf] %v219
    %s222 = scalar_lea.vmem %s3, 68
    %s224 = sor.u32 255, 127
    %s225 = sand.u32 %s224, 85
    %s226 = sshrl.u32 %s225, 1
    %s227 = sor.u32 %s225, %s226
    %s228 = sand.u32 51, %s227
    %s229 = sshrl.u32 %s228, 2
    %s230 = sor.u32 %s228, %s229
    %s231 = sand.u32 15, %s230
    %v232 = vld [vmem:[%s222] sm:%s231]
    %v233 = vunpack.c.l.bf16 %v232
    %v234 = vunpack.c.h.bf16 %v232
    %s235 = scalar_lea.vmem [#allocation7], 88
    %v236 = vpack.c.bf16 0.0, %v233
    %238 = vst [vmem:[%s235] sm:$0xf] %v236
    %s239 = scalar_lea.vmem [#allocation7], 92
    %v240 = vpack.c.bf16 0.0, %v11
    %242 = vst [vmem:[%s239] sm:$0xf] %v240
    %s243 = scalar_lea.vmem %s3, 72
    %v244 = vld [vmem:[%s243] sm:$0xf]
    %v245 = vunpack.c.l.bf16 %v244
    %v246 = vunpack.c.h.bf16 %v244
    %s247 = scalar_lea.vmem [#allocation7], 96
    %v248 = vpack.c.bf16 0.0, %v245
    %250 = vst [vmem:[%s247] sm:$0xf] %v248
    %s251 = scalar_lea.vmem %s3, 76
    %v252 = vld [vmem:[%s251] sm:$0xf]
    %v253 = vunpack.c.l.bf16 %v252
    %v254 = vunpack.c.h.bf16 %v252
    %s255 = scalar_lea.vmem [#allocation7], 100
    %v256 = vpack.c.bf16 0.0, %v253
    %258 = vst [vmem:[%s255] sm:$0xf] %v256
    %s259 = scalar_lea.vmem %s3, 80
    %s261 = sor.u32 255, 127
    %s262 = sand.u32 %s261, 85
    %s263 = sshrl.u32 %s262, 1
    %s264 = sor.u32 %s262, %s263
    %s265 = sand.u32 51, %s264
    %s266 = sshrl.u32 %s265, 2
    %s267 = sor.u32 %s265, %s266
    %s268 = sand.u32 15, %s267
    %v269 = vld [vmem:[%s259] sm:%s268]
    %v270 = vunpack.c.l.bf16 %v269
    %v271 = vunpack.c.h.bf16 %v269
    %s272 = scalar_lea.vmem [#allocation7], 104
    %v273 = vpack.c.bf16 0.0, %v270
    %275 = vst [vmem:[%s272] sm:$0xf] %v273
    %s276 = scalar_lea.vmem [#allocation7], 108
    %v277 = vpack.c.bf16 0.0, %v11
    %279 = vst [vmem:[%s276] sm:$0xf] %v277
    %s280 = scalar_lea.vmem %s3, 84
    %v281 = vld [vmem:[%s280] sm:$0xf]
    %v282 = vunpack.c.l.bf16 %v281
    %v283 = vunpack.c.h.bf16 %v281
    %s284 = scalar_lea.vmem [#allocation7], 112
    %v285 = vpack.c.bf16 0.0, %v282
    %287 = vst [vmem:[%s284] sm:$0xf] %v285
    %s288 = scalar_lea.vmem %s3, 88
    %v289 = vld [vmem:[%s288] sm:$0xf]
    %v290 = vunpack.c.l.bf16 %v289
    %v291 = vunpack.c.h.bf16 %v289
    %s292 = scalar_lea.vmem [#allocation7], 116
    %v293 = vpack.c.bf16 0.0, %v290
    %295 = vst [vmem:[%s292] sm:$0xf] %v293
    %s296 = scalar_lea.vmem %s3, 92
    %s298 = sor.u32 255, 127
    %s299 = sand.u32 %s298, 85
    %s300 = sshrl.u32 %s299, 1
    %s301 = sor.u32 %s299, %s300
    %s302 = sand.u32 51, %s301
    %s303 = sshrl.u32 %s302, 2
    %s304 = sor.u32 %s302, %s303
    %s305 = sand.u32 15, %s304
    %v306 = vld [vmem:[%s296] sm:%s305]
    %v307 = vunpack.c.l.bf16 %v306
    %v308 = vunpack.c.h.bf16 %v306
    %s309 = scalar_lea.vmem [#allocation7], 120
    %v310 = vpack.c.bf16 0.0, %v307
    %312 = vst [vmem:[%s309] sm:$0xf] %v310
    %s313 = scalar_lea.vmem [#allocation7], 124
    %v314 = vpack.c.bf16 0.0, %v11
    %316 = vst [vmem:[%s313] sm:$0xf] %v314
    %s317 = scalar_lea.vmem %s3, 96
    %v318 = vld [vmem:[%s317] sm:$0xf]
    %v319 = vunpack.c.l.bf16 %v318
    %v320 = vunpack.c.h.bf16 %v318
    %s321 = scalar_lea.vmem [#allocation7], 128
    %v322 = vpack.c.bf16 0.0, %v319
    %324 = vst [vmem:[%s321] sm:$0xf] %v322
    %s325 = scalar_lea.vmem %s3, 100
    %v326 = vld [vmem:[%s325] sm:$0xf]
    %v327 = vunpack.c.l.bf16 %v326
    %v328 = vunpack.c.h.bf16 %v326
    %s329 = scalar_lea.vmem [#allocation7], 132
    %v330 = vpack.c.bf16 0.0, %v327
    %332 = vst [vmem:[%s329] sm:$0xf] %v330
    %s333 = scalar_lea.vmem %s3, 104
    %s335 = sor.u32 255, 127
    %s336 = sand.u32 %s335, 85
    %s337 = sshrl.u32 %s336, 1
    %s338 = sor.u32 %s336, %s337
    %s339 = sand.u32 51, %s338
    %s340 = sshrl.u32 %s339, 2
    %s341 = sor.u32 %s339, %s340
    %s342 = sand.u32 15, %s341
    %v343 = vld [vmem:[%s333] sm:%s342]
    %v344 = vunpack.c.l.bf16 %v343
    %v345 = vunpack.c.h.bf16 %v343
    %s346 = scalar_lea.vmem [#allocation7], 136
    %v347 = vpack.c.bf16 0.0, %v344
    %349 = vst [vmem:[%s346] sm:$0xf] %v347
    %s350 = scalar_lea.vmem [#allocation7], 140
    %v351 = vpack.c.bf16 0.0, %v11
    %353 = vst [vmem:[%s350] sm:$0xf] %v351
    %s354 = scalar_lea.vmem %s3, 108
    %v355 = vld [vmem:[%s354] sm:$0xf]
    %v356 = vunpack.c.l.bf16 %v355
    %v357 = vunpack.c.h.bf16 %v355
    %s358 = scalar_lea.vmem [#allocation7], 144
    %v359 = vpack.c.bf16 0.0, %v356
    %361 = vst [vmem:[%s358] sm:$0xf] %v359
    %s362 = scalar_lea.vmem %s3, 112
    %v363 = vld [vmem:[%s362] sm:$0xf]
    %v364 = vunpack.c.l.bf16 %v363
    %v365 = vunpack.c.h.bf16 %v363
    %s366 = scalar_lea.vmem [#allocation7], 148
    %v367 = vpack.c.bf16 0.0, %v364
    %369 = vst [vmem:[%s366] sm:$0xf] %v367
    %s370 = scalar_lea.vmem %s3, 116
    %s372 = sor.u32 255, 127
    %s373 = sand.u32 %s372, 85
    %s374 = sshrl.u32 %s373, 1
    %s375 = sor.u32 %s373, %s374
    %s376 = sand.u32 51, %s375
    %s377 = sshrl.u32 %s376, 2
    %s378 = sor.u32 %s376, %s377
    %s379 = sand.u32 15, %s378
    %v380 = vld [vmem:[%s370] sm:%s379]
    %v381 = vunpack.c.l.bf16 %v380
    %v382 = vunpack.c.h.bf16 %v380
    %s383 = scalar_lea.vmem [#allocation7], 152
    %v384 = vpack.c.bf16 0.0, %v381
    %386 = vst [vmem:[%s383] sm:$0xf] %v384
    %s387 = scalar_lea.vmem [#allocation7], 156
    %v388 = vpack.c.bf16 0.0, %v11
    %390 = vst [vmem:[%s387] sm:$0xf] %v388
    %s391 = scalar_lea.vmem %s3, 120
    %v392 = vld [vmem:[%s391] sm:$0xf]
    %v393 = vunpack.c.l.bf16 %v392
    %v394 = vunpack.c.h.bf16 %v392
    %s395 = scalar_lea.vmem [#allocation7], 160
    %v396 = vpack.c.bf16 0.0, %v393
    %398 = vst [vmem:[%s395] sm:$0xf] %v396
    %s399 = scalar_lea.vmem %s3, 124
    %v400 = vld [vmem:[%s399] sm:$0xf]
    %v401 = vunpack.c.l.bf16 %v400
    %v402 = vunpack.c.h.bf16 %v400
    %s403 = scalar_lea.vmem [#allocation7], 164
    %v404 = vpack.c.bf16 0.0, %v401
    %406 = vst [vmem:[%s403] sm:$0xf] %v404
    %s407 = scalar_lea.vmem %s3, 128
    %s409 = sor.u32 255, 127
    %s410 = sand.u32 %s409, 85
    %s411 = sshrl.u32 %s410, 1
    %s412 = sor.u32 %s410, %s411
    %s413 = sand.u32 51, %s412
    %s414 = sshrl.u32 %s413, 2
    %s415 = sor.u32 %s413, %s414
    %s416 = sand.u32 15, %s415
    %v417 = vld [vmem:[%s407] sm:%s416]
    %v418 = vunpack.c.l.bf16 %v417
    %v419 = vunpack.c.h.bf16 %v417
    %s420 = scalar_lea.vmem [#allocation7], 168
    %v421 = vpack.c.bf16 0.0, %v418
    %423 = vst [vmem:[%s420] sm:$0xf] %v421
    %s424 = scalar_lea.vmem [#allocation7], 172
    %v425 = vpack.c.bf16 0.0, %v11
    %427 = vst [vmem:[%s424] sm:$0xf] %v425
    %s428 = scalar_lea.vmem %s3, 132
    %v429 = vld [vmem:[%s428] sm:$0xf]
    %v430 = vunpack.c.l.bf16 %v429
    %v431 = vunpack.c.h.bf16 %v429
    %s432 = scalar_lea.vmem [#allocation7], 176
    %v433 = vpack.c.bf16 0.0, %v430
    %435 = vst [vmem:[%s432] sm:$0xf] %v433
    %s436 = scalar_lea.vmem %s3, 136
    %v437 = vld [vmem:[%s436] sm:$0xf]
    %v438 = vunpack.c.l.bf16 %v437
    %v439 = vunpack.c.h.bf16 %v437
    %s440 = scalar_lea.vmem [#allocation7], 180
    %v441 = vpack.c.bf16 0.0, %v438
    %443 = vst [vmem:[%s440] sm:$0xf] %v441
    %s444 = scalar_lea.vmem %s3, 140
    %s446 = sor.u32 255, 127
    %s447 = sand.u32 %s446, 85
    %s448 = sshrl.u32 %s447, 1
    %s449 = sor.u32 %s447, %s448
    %s450 = sand.u32 51, %s449
    %s451 = sshrl.u32 %s450, 2
    %s452 = sor.u32 %s450, %s451
    %s453 = sand.u32 15, %s452
    %v454 = vld [vmem:[%s444] sm:%s453]
    %v455 = vunpack.c.l.bf16 %v454
    %v456 = vunpack.c.h.bf16 %v454
    %s457 = scalar_lea.vmem [#allocation7], 184
    %v458 = vpack.c.bf16 0.0, %v455
    %460 = vst [vmem:[%s457] sm:$0xf] %v458
    %s461 = scalar_lea.vmem [#allocation7], 188
    %v462 = vpack.c.bf16 0.0, %v11
    %464 = vst [vmem:[%s461] sm:$0xf] %v462
    %s465 = scalar_lea.vmem %s3, 144
    %v466 = vld [vmem:[%s465] sm:$0xf]
    %v467 = vunpack.c.l.bf16 %v466
    %v468 = vunpack.c.h.bf16 %v466
    %s469 = scalar_lea.vmem [#allocation7], 192
    %v470 = vpack.c.bf16 0.0, %v467
    %472 = vst [vmem:[%s469] sm:$0xf] %v470
    %s473 = scalar_lea.vmem %s3, 148
    %v474 = vld [vmem:[%s473] sm:$0xf]
    %v475 = vunpack.c.l.bf16 %v474
    %v476 = vunpack.c.h.bf16 %v474
    %s477 = scalar_lea.vmem [#allocation7], 196
    %v478 = vpack.c.bf16 0.0, %v475
    %480 = vst [vmem:[%s477] sm:$0xf] %v478
    %s481 = scalar_lea.vmem %s3, 152
    %s483 = sor.u32 255, 127
    %s484 = sand.u32 %s483, 85
    %s485 = sshrl.u32 %s484, 1
    %s486 = sor.u32 %s484, %s485
    %s487 = sand.u32 51, %s486
    %s488 = sshrl.u32 %s487, 2
    %s489 = sor.u32 %s487, %s488
    %s490 = sand.u32 15, %s489
    %v491 = vld [vmem:[%s481] sm:%s490]
    %v492 = vunpack.c.l.bf16 %v491
    %v493 = vunpack.c.h.bf16 %v491
    %s494 = scalar_lea.vmem [#allocation7], 200
    %v495 = vpack.c.bf16 0.0, %v492
    %497 = vst [vmem:[%s494] sm:$0xf] %v495
    %s498 = scalar_lea.vmem [#allocation7], 204
    %v499 = vpack.c.bf16 0.0, %v11
    %501 = vst [vmem:[%s498] sm:$0xf] %v499
    %s502 = scalar_lea.vmem %s3, 156
    %v503 = vld [vmem:[%s502] sm:$0xf]
    %v504 = vunpack.c.l.bf16 %v503
    %v505 = vunpack.c.h.bf16 %v503
    %s506 = scalar_lea.vmem [#allocation7], 208
    %v507 = vpack.c.bf16 0.0, %v504
    %509 = vst [vmem:[%s506] sm:$0xf] %v507
    %s510 = scalar_lea.vmem %s3, 160
    %v511 = vld [vmem:[%s510] sm:$0xf]
    %v512 = vunpack.c.l.bf16 %v511
    %v513 = vunpack.c.h.bf16 %v511
    %s514 = scalar_lea.vmem [#allocation7], 212
    %v515 = vpack.c.bf16 0.0, %v512
    %517 = vst [vmem:[%s514] sm:$0xf] %v515
    %s518 = scalar_lea.vmem %s3, 164
    %s520 = sor.u32 255, 127
    %s521 = sand.u32 %s520, 85
    %s522 = sshrl.u32 %s521, 1
    %s523 = sor.u32 %s521, %s522
    %s524 = sand.u32 51, %s523
    %s525 = sshrl.u32 %s524, 2
    %s526 = sor.u32 %s524, %s525
    %s527 = sand.u32 15, %s526
    %v528 = vld [vmem:[%s518] sm:%s527]
    %v529 = vunpack.c.l.bf16 %v528
    %v530 = vunpack.c.h.bf16 %v528
    %s531 = scalar_lea.vmem [#allocation7], 216
    %v532 = vpack.c.bf16 0.0, %v529
    %534 = vst [vmem:[%s531] sm:$0xf] %v532
    %s535 = scalar_lea.vmem [#allocation7], 220
    %v536 = vpack.c.bf16 0.0, %v11
    %538 = vst [vmem:[%s535] sm:$0xf] %v536
    %s539 = scalar_lea.vmem %s3, 168
    %v540 = vld [vmem:[%s539] sm:$0xf]
    %v541 = vunpack.c.l.bf16 %v540
    %v542 = vunpack.c.h.bf16 %v540
    %s543 = scalar_lea.vmem [#allocation7], 224
    %v544 = vpack.c.bf16 0.0, %v541
    %546 = vst [vmem:[%s543] sm:$0xf] %v544
    %s547 = scalar_lea.vmem %s3, 172
    %v548 = vld [vmem:[%s547] sm:$0xf]
    %v549 = vunpack.c.l.bf16 %v548
    %v550 = vunpack.c.h.bf16 %v548
    %s551 = scalar_lea.vmem [#allocation7], 228
    %v552 = vpack.c.bf16 0.0, %v549
    %554 = vst [vmem:[%s551] sm:$0xf] %v552
    %s555 = scalar_lea.vmem %s3, 176
    %s557 = sor.u32 255, 127
    %s558 = sand.u32 %s557, 85
    %s559 = sshrl.u32 %s558, 1
    %s560 = sor.u32 %s558, %s559
    %s561 = sand.u32 51, %s560
    %s562 = sshrl.u32 %s561, 2
    %s563 = sor.u32 %s561, %s562
    %s564 = sand.u32 15, %s563
    %v565 = vld [vmem:[%s555] sm:%s564]
    %v566 = vunpack.c.l.bf16 %v565
    %v567 = vunpack.c.h.bf16 %v565
    %s568 = scalar_lea.vmem [#allocation7], 232
    %v569 = vpack.c.bf16 0.0, %v566
    %571 = vst [vmem:[%s568] sm:$0xf] %v569
    %s572 = scalar_lea.vmem [#allocation7], 236
    %v573 = vpack.c.bf16 0.0, %v11
    %575 = vst [vmem:[%s572] sm:$0xf] %v573
    %s576 = scalar_lea.vmem %s3, 180
    %v577 = vld [vmem:[%s576] sm:$0xf]
    %v578 = vunpack.c.l.bf16 %v577
    %v579 = vunpack.c.h.bf16 %v577
    %s580 = scalar_lea.vmem [#allocation7], 240
    %v581 = vpack.c.bf16 0.0, %v578
    %583 = vst [vmem:[%s580] sm:$0xf] %v581
    %s584 = scalar_lea.vmem %s3, 184
    %v585 = vld [vmem:[%s584] sm:$0xf]
    %v586 = vunpack.c.l.bf16 %v585
    %v587 = vunpack.c.h.bf16 %v585
    %s588 = scalar_lea.vmem [#allocation7], 244
    %v589 = vpack.c.bf16 0.0, %v586
    %591 = vst [vmem:[%s588] sm:$0xf] %v589
    %s592 = scalar_lea.vmem %s3, 188
    %s594 = sor.u32 255, 127
    %s595 = sand.u32 %s594, 85
    %s596 = sshrl.u32 %s595, 1
    %s597 = sor.u32 %s595, %s596
    %s598 = sand.u32 51, %s597
    %s599 = sshrl.u32 %s598, 2
    %s600 = sor.u32 %s598, %s599
    %s601 = sand.u32 15, %s600
    %v602 = vld [vmem:[%s592] sm:%s601]
    %v603 = vunpack.c.l.bf16 %v602
    %v604 = vunpack.c.h.bf16 %v602
    %s605 = scalar_lea.vmem [#allocation7], 248
    %v606 = vpack.c.bf16 0.0, %v603
    %608 = vst [vmem:[%s605] sm:$0xf] %v606
    %s609 = scalar_lea.vmem [#allocation7], 252
    %v610 = vpack.c.bf16 0.0, %v11
    %612 = vst [vmem:[%s609] sm:$0xf] %v610
    %s613 = scalar_lea.vmem %s3, 192
    %v614 = vld [vmem:[%s613] sm:$0xf]
    %v615 = vunpack.c.l.bf16 %v614
    %v616 = vunpack.c.h.bf16 %v614
    %s617 = scalar_lea.vmem [#allocation7], 256
    %v618 = vpack.c.bf16 0.0, %v615
    %620 = vst [vmem:[%s617] sm:$0xf] %v618
    %s621 = scalar_lea.vmem %s3, 196
    %v622 = vld [vmem:[%s621] sm:$0xf]
    %v623 = vunpack.c.l.bf16 %v622
    %v624 = vunpack.c.h.bf16 %v622
    %s625 = scalar_lea.vmem [#allocation7], 260
    %v626 = vpack.c.bf16 0.0, %v623
    %628 = vst [vmem:[%s625] sm:$0xf] %v626
    %s629 = scalar_lea.vmem %s3, 200
    %s631 = sor.u32 255, 127
    %s632 = sand.u32 %s631, 85
    %s633 = sshrl.u32 %s632, 1
    %s634 = sor.u32 %s632, %s633
    %s635 = sand.u32 51, %s634
    %s636 = sshrl.u32 %s635, 2
    %s637 = sor.u32 %s635, %s636
    %s638 = sand.u32 15, %s637
    %v639 = vld [vmem:[%s629] sm:%s638]
    %v640 = vunpack.c.l.bf16 %v639
    %v641 = vunpack.c.h.bf16 %v639
    %s642 = scalar_lea.vmem [#allocation7], 264
    %v643 = vpack.c.bf16 0.0, %v640
    %645 = vst [vmem:[%s642] sm:$0xf] %v643
    %s646 = scalar_lea.vmem [#allocation7], 268
    %v647 = vpack.c.bf16 0.0, %v11
    %649 = vst [vmem:[%s646] sm:$0xf] %v647
    %s650 = scalar_lea.vmem %s3, 204
    %v651 = vld [vmem:[%s650] sm:$0xf]
    %v652 = vunpack.c.l.bf16 %v651
    %v653 = vunpack.c.h.bf16 %v651
    %s654 = scalar_lea.vmem [#allocation7], 272
    %v655 = vpack.c.bf16 0.0, %v652
    %657 = vst [vmem:[%s654] sm:$0xf] %v655
    %s658 = scalar_lea.vmem %s3, 208
    %v659 = vld [vmem:[%s658] sm:$0xf]
    %v660 = vunpack.c.l.bf16 %v659
    %v661 = vunpack.c.h.bf16 %v659
    %s662 = scalar_lea.vmem [#allocation7], 276
    %v663 = vpack.c.bf16 0.0, %v660
    %665 = vst [vmem:[%s662] sm:$0xf] %v663
    %s666 = scalar_lea.vmem %s3, 212
    %s668 = sor.u32 255, 127
    %s669 = sand.u32 %s668, 85
    %s670 = sshrl.u32 %s669, 1
    %s671 = sor.u32 %s669, %s670
    %s672 = sand.u32 51, %s671
    %s673 = sshrl.u32 %s672, 2
    %s674 = sor.u32 %s672, %s673
    %s675 = sand.u32 15, %s674
    %v676 = vld [vmem:[%s666] sm:%s675]
    %v677 = vunpack.c.l.bf16 %v676
    %v678 = vunpack.c.h.bf16 %v676
    %s679 = scalar_lea.vmem [#allocation7], 280
    %v680 = vpack.c.bf16 0.0, %v677
    %682 = vst [vmem:[%s679] sm:$0xf] %v680
    %s683 = scalar_lea.vmem [#allocation7], 284
    %v684 = vpack.c.bf16 0.0, %v11
    %686 = vst [vmem:[%s683] sm:$0xf] %v684
    %s687 = scalar_lea.vmem %s3, 216
    %v688 = vld [vmem:[%s687] sm:$0xf]
    %v689 = vunpack.c.l.bf16 %v688
    %v690 = vunpack.c.h.bf16 %v688
    %s691 = scalar_lea.vmem [#allocation7], 288
    %v692 = vpack.c.bf16 0.0, %v689
    %694 = vst [vmem:[%s691] sm:$0xf] %v692
    %s695 = scalar_lea.vmem %s3, 220
    %v696 = vld [vmem:[%s695] sm:$0xf]
    %v697 = vunpack.c.l.bf16 %v696
    %v698 = vunpack.c.h.bf16 %v696
    %s699 = scalar_lea.vmem [#allocation7], 292
    %v700 = vpack.c.bf16 0.0, %v697
    %702 = vst [vmem:[%s699] sm:$0xf] %v700
    %s703 = scalar_lea.vmem %s3, 224
    %s705 = sor.u32 255, 127
    %s706 = sand.u32 %s705, 85
    %s707 = sshrl.u32 %s706, 1
    %s708 = sor.u32 %s706, %s707
    %s709 = sand.u32 51, %s708
    %s710 = sshrl.u32 %s709, 2
    %s711 = sor.u32 %s709, %s710
    %s712 = sand.u32 15, %s711
    %v713 = vld [vmem:[%s703] sm:%s712]
    %v714 = vunpack.c.l.bf16 %v713
    %v715 = vunpack.c.h.bf16 %v713
    %s716 = scalar_lea.vmem [#allocation7], 296
    %v717 = vpack.c.bf16 0.0, %v714
    %719 = vst [vmem:[%s716] sm:$0xf] %v717
    %s720 = scalar_lea.vmem [#allocation7], 300
    %v721 = vpack.c.bf16 0.0, %v11
    %723 = vst [vmem:[%s720] sm:$0xf] %v721
    %s724 = scalar_lea.vmem %s3, 228
    %v725 = vld [vmem:[%s724] sm:$0xf]
    %v726 = vunpack.c.l.bf16 %v725
    %v727 = vunpack.c.h.bf16 %v725
    %s728 = scalar_lea.vmem [#allocation7], 304
    %v729 = vpack.c.bf16 0.0, %v726
    %731 = vst [vmem:[%s728] sm:$0xf] %v729
    %s732 = scalar_lea.vmem %s3, 232
    %v733 = vld [vmem:[%s732] sm:$0xf]
    %v734 = vunpack.c.l.bf16 %v733
    %v735 = vunpack.c.h.bf16 %v733
    %s736 = scalar_lea.vmem [#allocation7], 308
    %v737 = vpack.c.bf16 0.0, %v734
    %739 = vst [vmem:[%s736] sm:$0xf] %v737
    %s740 = scalar_lea.vmem %s3, 236
    %s742 = sor.u32 255, 127
    %s743 = sand.u32 %s742, 85
    %s744 = sshrl.u32 %s743, 1
    %s745 = sor.u32 %s743, %s744
    %s746 = sand.u32 51, %s745
    %s747 = sshrl.u32 %s746, 2
    %s748 = sor.u32 %s746, %s747
    %s749 = sand.u32 15, %s748
    %v750 = vld [vmem:[%s740] sm:%s749]
    %v751 = vunpack.c.l.bf16 %v750
    %v752 = vunpack.c.h.bf16 %v750
    %s753 = scalar_lea.vmem [#allocation7], 312
    %v754 = vpack.c.bf16 0.0, %v751
    %756 = vst [vmem:[%s753] sm:$0xf] %v754
    %s757 = scalar_lea.vmem [#allocation7], 316
    %v758 = vpack.c.bf16 0.0, %v11
    %760 = vst [vmem:[%s757] sm:$0xf] %v758
    %s761 = scalar_lea.vmem %s3, 240
    %v762 = vld [vmem:[%s761] sm:$0xf]
    %v763 = vunpack.c.l.bf16 %v762
    %v764 = vunpack.c.h.bf16 %v762
    %s765 = scalar_lea.vmem [#allocation7], 320
    %v766 = vpack.c.bf16 0.0, %v763
    %768 = vst [vmem:[%s765] sm:$0xf] %v766
    %s769 = scalar_lea.vmem %s3, 244
    %v770 = vld [vmem:[%s769] sm:$0xf]
    %v771 = vunpack.c.l.bf16 %v770
    %v772 = vunpack.c.h.bf16 %v770
    %s773 = scalar_lea.vmem [#allocation7], 324
    %v774 = vpack.c.bf16 0.0, %v771
    %776 = vst [vmem:[%s773] sm:$0xf] %v774
    %s777 = scalar_lea.vmem %s3, 248
    %s779 = sor.u32 255, 127
    %s780 = sand.u32 %s779, 85
    %s781 = sshrl.u32 %s780, 1
    %s782 = sor.u32 %s780, %s781
    %s783 = sand.u32 51, %s782
    %s784 = sshrl.u32 %s783, 2
    %s785 = sor.u32 %s783, %s784
    %s786 = sand.u32 15, %s785
    %v787 = vld [vmem:[%s777] sm:%s786]
    %v788 = vunpack.c.l.bf16 %v787
    %v789 = vunpack.c.h.bf16 %v787
    %s790 = scalar_lea.vmem [#allocation7], 328
    %v791 = vpack.c.bf16 0.0, %v788
    %793 = vst [vmem:[%s790] sm:$0xf] %v791
    %s794 = scalar_lea.vmem [#allocation7], 332
    %v795 = vpack.c.bf16 0.0, %v11
    %797 = vst [vmem:[%s794] sm:$0xf] %v795
    %s798 = scalar_lea.vmem %s3, 252
    %v799 = vld [vmem:[%s798] sm:$0xf]
    %v800 = vunpack.c.l.bf16 %v799
    %v801 = vunpack.c.h.bf16 %v799
    %s802 = scalar_lea.vmem [#allocation7], 336
    %v803 = vpack.c.bf16 0.0, %v800
    %805 = vst [vmem:[%s802] sm:$0xf] %v803
    %s806 = scalar_lea.vmem %s3, 256
    %v807 = vld [vmem:[%s806] sm:$0xf]
    %v808 = vunpack.c.l.bf16 %v807
    %v809 = vunpack.c.h.bf16 %v807
    %s810 = scalar_lea.vmem [#allocation7], 340
    %v811 = vpack.c.bf16 0.0, %v808
    %813 = vst [vmem:[%s810] sm:$0xf] %v811
    %s814 = scalar_lea.vmem %s3, 260
    %s816 = sor.u32 255, 127
    %s817 = sand.u32 %s816, 85
    %s818 = sshrl.u32 %s817, 1
    %s819 = sor.u32 %s817, %s818
    %s820 = sand.u32 51, %s819
    %s821 = sshrl.u32 %s820, 2
    %s822 = sor.u32 %s820, %s821
    %s823 = sand.u32 15, %s822
    %v824 = vld [vmem:[%s814] sm:%s823]
    %v825 = vunpack.c.l.bf16 %v824
    %v826 = vunpack.c.h.bf16 %v824
    %s827 = scalar_lea.vmem [#allocation7], 344
    %v828 = vpack.c.bf16 0.0, %v825
    %830 = vst [vmem:[%s827] sm:$0xf] %v828
    %s831 = scalar_lea.vmem [#allocation7], 348
    %v832 = vpack.c.bf16 0.0, %v11
    %834 = vst [vmem:[%s831] sm:$0xf] %v832
    %s835 = scalar_lea.vmem %s3, 264
    %v836 = vld [vmem:[%s835] sm:$0xf]
    %v837 = vunpack.c.l.bf16 %v836
    %v838 = vunpack.c.h.bf16 %v836
    %s839 = scalar_lea.vmem [#allocation7], 352
    %v840 = vpack.c.bf16 0.0, %v837
    %842 = vst [vmem:[%s839] sm:$0xf] %v840
    %s843 = scalar_lea.vmem %s3, 268
    %v844 = vld [vmem:[%s843] sm:$0xf]
    %v845 = vunpack.c.l.bf16 %v844
    %v846 = vunpack.c.h.bf16 %v844
    %s847 = scalar_lea.vmem [#allocation7], 356
    %v848 = vpack.c.bf16 0.0, %v845
    %850 = vst [vmem:[%s847] sm:$0xf] %v848
    %s851 = scalar_lea.vmem %s3, 272
    %s853 = sor.u32 255, 127
    %s854 = sand.u32 %s853, 85
    %s855 = sshrl.u32 %s854, 1
    %s856 = sor.u32 %s854, %s855
    %s857 = sand.u32 51, %s856
    %s858 = sshrl.u32 %s857, 2
    %s859 = sor.u32 %s857, %s858
    %s860 = sand.u32 15, %s859
    %v861 = vld [vmem:[%s851] sm:%s860]
    %v862 = vunpack.c.l.bf16 %v861
    %v863 = vunpack.c.h.bf16 %v861
    %s864 = scalar_lea.vmem [#allocation7], 360
    %v865 = vpack.c.bf16 0.0, %v862
    %867 = vst [vmem:[%s864] sm:$0xf] %v865
    %s868 = scalar_lea.vmem [#allocation7], 364
    %v869 = vpack.c.bf16 0.0, %v11
    %871 = vst [vmem:[%s868] sm:$0xf] %v869
    %s872 = scalar_lea.vmem %s3, 276
    %v873 = vld [vmem:[%s872] sm:$0xf]
    %v874 = vunpack.c.l.bf16 %v873
    %v875 = vunpack.c.h.bf16 %v873
    %s876 = scalar_lea.vmem [#allocation7], 368
    %v877 = vpack.c.bf16 0.0, %v874
    %879 = vst [vmem:[%s876] sm:$0xf] %v877
    %s880 = scalar_lea.vmem %s3, 280
    %v881 = vld [vmem:[%s880] sm:$0xf]
    %v882 = vunpack.c.l.bf16 %v881
    %v883 = vunpack.c.h.bf16 %v881
    %s884 = scalar_lea.vmem [#allocation7], 372
    %v885 = vpack.c.bf16 0.0, %v882
    %887 = vst [vmem:[%s884] sm:$0xf] %v885
    %s888 = scalar_lea.vmem %s3, 284
    %s890 = sor.u32 255, 127
    %s891 = sand.u32 %s890, 85
    %s892 = sshrl.u32 %s891, 1
    %s893 = sor.u32 %s891, %s892
    %s894 = sand.u32 51, %s893
    %s895 = sshrl.u32 %s894, 2
    %s896 = sor.u32 %s894, %s895
    %s897 = sand.u32 15, %s896
    %v898 = vld [vmem:[%s888] sm:%s897]
    %v899 = vunpack.c.l.bf16 %v898
    %v900 = vunpack.c.h.bf16 %v898
    %s901 = scalar_lea.vmem [#allocation7], 376
    %v902 = vpack.c.bf16 0.0, %v899
    %904 = vst [vmem:[%s901] sm:$0xf] %v902
    %s905 = scalar_lea.vmem [#allocation7], 380
    %v906 = vpack.c.bf16 0.0, %v11
    %908 = vst [vmem:[%s905] sm:$0xf] %v906
    %s909 = scalar_lea.vmem %s3, 288
    %v910 = vld [vmem:[%s909] sm:$0xf]
    %v911 = vunpack.c.l.bf16 %v910
    %v912 = vunpack.c.h.bf16 %v910
    %s913 = scalar_lea.vmem [#allocation7], 384
    %v914 = vpack.c.bf16 0.0, %v911
    %916 = vst [vmem:[%s913] sm:$0xf] %v914
    %s917 = scalar_lea.vmem %s3, 292
    %v918 = vld [vmem:[%s917] sm:$0xf]
    %v919 = vunpack.c.l.bf16 %v918
    %v920 = vunpack.c.h.bf16 %v918
    %s921 = scalar_lea.vmem [#allocation7], 388
    %v922 = vpack.c.bf16 0.0, %v919
    %924 = vst [vmem:[%s921] sm:$0xf] %v922
    %s925 = scalar_lea.vmem %s3, 296
    %s927 = sor.u32 255, 127
    %s928 = sand.u32 %s927, 85
    %s929 = sshrl.u32 %s928, 1
    %s930 = sor.u32 %s928, %s929
    %s931 = sand.u32 51, %s930
    %s932 = sshrl.u32 %s931, 2
    %s933 = sor.u32 %s931, %s932
    %s934 = sand.u32 15, %s933
    %v935 = vld [vmem:[%s925] sm:%s934]
    %v936 = vunpack.c.l.bf16 %v935
    %v937 = vunpack.c.h.bf16 %v935
    %s938 = scalar_lea.vmem [#allocation7], 392
    %v939 = vpack.c.bf16 0.0, %v936
    %941 = vst [vmem:[%s938] sm:$0xf] %v939
    %s942 = scalar_lea.vmem [#allocation7], 396
    %v943 = vpack.c.bf16 0.0, %v11
    %945 = vst [vmem:[%s942] sm:$0xf] %v943
    %s946 = scalar_lea.vmem %s3, 300
    %v947 = vld [vmem:[%s946] sm:$0xf]
    %v948 = vunpack.c.l.bf16 %v947
    %v949 = vunpack.c.h.bf16 %v947
    %s950 = scalar_lea.vmem [#allocation7], 400
    %v951 = vpack.c.bf16 0.0, %v948
    %953 = vst [vmem:[%s950] sm:$0xf] %v951
    %s954 = scalar_lea.vmem %s3, 304
    %v955 = vld [vmem:[%s954] sm:$0xf]
    %v956 = vunpack.c.l.bf16 %v955
    %v957 = vunpack.c.h.bf16 %v955
    %s958 = scalar_lea.vmem [#allocation7], 404
    %v959 = vpack.c.bf16 0.0, %v956
    %961 = vst [vmem:[%s958] sm:$0xf] %v959
    %s962 = scalar_lea.vmem %s3, 308
    %s964 = sor.u32 255, 127
    %s965 = sand.u32 %s964, 85
    %s966 = sshrl.u32 %s965, 1
    %s967 = sor.u32 %s965, %s966
    %s968 = sand.u32 51, %s967
    %s969 = sshrl.u32 %s968, 2
    %s970 = sor.u32 %s968, %s969
    %s971 = sand.u32 15, %s970
    %v972 = vld [vmem:[%s962] sm:%s971]
    %v973 = vunpack.c.l.bf16 %v972
    %v974 = vunpack.c.h.bf16 %v972
    %s975 = scalar_lea.vmem [#allocation7], 408
    %v976 = vpack.c.bf16 0.0, %v973
    %978 = vst [vmem:[%s975] sm:$0xf] %v976
    %s979 = scalar_lea.vmem [#allocation7], 412
    %v980 = vpack.c.bf16 0.0, %v11
    %982 = vst [vmem:[%s979] sm:$0xf] %v980
    %s983 = scalar_lea.vmem %s3, 312
    %v984 = vld [vmem:[%s983] sm:$0xf]
    %v985 = vunpack.c.l.bf16 %v984
    %v986 = vunpack.c.h.bf16 %v984
    %s987 = scalar_lea.vmem [#allocation7], 416
    %v988 = vpack.c.bf16 0.0, %v985
    %990 = vst [vmem:[%s987] sm:$0xf] %v988
    %s991 = scalar_lea.vmem %s3, 316
    %v992 = vld [vmem:[%s991] sm:$0xf]
    %v993 = vunpack.c.l.bf16 %v992
    %v994 = vunpack.c.h.bf16 %v992
    %s995 = scalar_lea.vmem [#allocation7], 420
    %v996 = vpack.c.bf16 0.0, %v993
    %998 = vst [vmem:[%s995] sm:$0xf] %v996
    %s999 = scalar_lea.vmem %s3, 320
    %s1001 = sor.u32 255, 127
    %s1002 = sand.u32 %s1001, 85
    %s1003 = sshrl.u32 %s1002, 1
    %s1004 = sor.u32 %s1002, %s1003
    %s1005 = sand.u32 51, %s1004
    %s1006 = sshrl.u32 %s1005, 2
    %s1007 = sor.u32 %s1005, %s1006
    %s1008 = sand.u32 15, %s1007
    %v1009 = vld [vmem:[%s999] sm:%s1008]
    %v1010 = vunpack.c.l.bf16 %v1009
    %v1011 = vunpack.c.h.bf16 %v1009
    %s1012 = scalar_lea.vmem [#allocation7], 424
    %v1013 = vpack.c.bf16 0.0, %v1010
    %1015 = vst [vmem:[%s1012] sm:$0xf] %v1013
    %s1016 = scalar_lea.vmem [#allocation7], 428
    %v1017 = vpack.c.bf16 0.0, %v11
    %1019 = vst [vmem:[%s1016] sm:$0xf] %v1017
    %s1020 = scalar_lea.vmem %s3, 324
    %v1021 = vld [vmem:[%s1020] sm:$0xf]
    %v1022 = vunpack.c.l.bf16 %v1021
    %v1023 = vunpack.c.h.bf16 %v1021
    %s1024 = scalar_lea.vmem [#allocation7], 432
    %v1025 = vpack.c.bf16 0.0, %v1022
    %1027 = vst [vmem:[%s1024] sm:$0xf] %v1025
    %s1028 = scalar_lea.vmem %s3, 328
    %v1029 = vld [vmem:[%s1028] sm:$0xf]
    %v1030 = vunpack.c.l.bf16 %v1029
    %v1031 = vunpack.c.h.bf16 %v1029
    %s1032 = scalar_lea.vmem [#allocation7], 436
    %v1033 = vpack.c.bf16 0.0, %v1030
    %1035 = vst [vmem:[%s1032] sm:$0xf] %v1033
    %s1036 = scalar_lea.vmem %s3, 332
    %s1038 = sor.u32 255, 127
    %s1039 = sand.u32 %s1038, 85
    %s1040 = sshrl.u32 %s1039, 1
    %s1041 = sor.u32 %s1039, %s1040
    %s1042 = sand.u32 51, %s1041
    %s1043 = sshrl.u32 %s1042, 2
    %s1044 = sor.u32 %s1042, %s1043
    %s1045 = sand.u32 15, %s1044
    %v1046 = vld [vmem:[%s1036] sm:%s1045]
    %v1047 = vunpack.c.l.bf16 %v1046
    %v1048 = vunpack.c.h.bf16 %v1046
    %s1049 = scalar_lea.vmem [#allocation7], 440
    %v1050 = vpack.c.bf16 0.0, %v1047
    %1052 = vst [vmem:[%s1049] sm:$0xf] %v1050
    %s1053 = scalar_lea.vmem [#allocation7], 444
    %v1054 = vpack.c.bf16 0.0, %v11
    %1056 = vst [vmem:[%s1053] sm:$0xf] %v1054
    %s1057 = scalar_lea.vmem %s3, 336
    %v1058 = vld [vmem:[%s1057] sm:$0xf]
    %v1059 = vunpack.c.l.bf16 %v1058
    %v1060 = vunpack.c.h.bf16 %v1058
    %s1061 = scalar_lea.vmem [#allocation7], 448
    %v1062 = vpack.c.bf16 0.0, %v1059
    %1064 = vst [vmem:[%s1061] sm:$0xf] %v1062
    %s1065 = scalar_lea.vmem %s3, 340
    %v1066 = vld [vmem:[%s1065] sm:$0xf]
    %v1067 = vunpack.c.l.bf16 %v1066
    %v1068 = vunpack.c.h.bf16 %v1066
    %s1069 = scalar_lea.vmem [#allocation7], 452
    %v1070 = vpack.c.bf16 0.0, %v1067
    %1072 = vst [vmem:[%s1069] sm:$0xf] %v1070
    %s1073 = scalar_lea.vmem %s3, 344
    %s1075 = sor.u32 255, 127
    %s1076 = sand.u32 %s1075, 85
    %s1077 = sshrl.u32 %s1076, 1
    %s1078 = sor.u32 %s1076, %s1077
    %s1079 = sand.u32 51, %s1078
    %s1080 = sshrl.u32 %s1079, 2
    %s1081 = sor.u32 %s1079, %s1080
    %s1082 = sand.u32 15, %s1081
    %v1083 = vld [vmem:[%s1073] sm:%s1082]
    %v1084 = vunpack.c.l.bf16 %v1083
    %v1085 = vunpack.c.h.bf16 %v1083
    %s1086 = scalar_lea.vmem [#allocation7], 456
    %v1087 = vpack.c.bf16 0.0, %v1084
    %1089 = vst [vmem:[%s1086] sm:$0xf] %v1087
    %s1090 = scalar_lea.vmem [#allocation7], 460
    %v1091 = vpack.c.bf16 0.0, %v11
    %1093 = vst [vmem:[%s1090] sm:$0xf] %v1091
    %s1094 = scalar_lea.vmem %s3, 348
    %v1095 = vld [vmem:[%s1094] sm:$0xf]
    %v1096 = vunpack.c.l.bf16 %v1095
    %v1097 = vunpack.c.h.bf16 %v1095
    %s1098 = scalar_lea.vmem [#allocation7], 464
    %v1099 = vpack.c.bf16 0.0, %v1096
    %1101 = vst [vmem:[%s1098] sm:$0xf] %v1099
    %s1102 = scalar_lea.vmem %s3, 352
    %v1103 = vld [vmem:[%s1102] sm:$0xf]
    %v1104 = vunpack.c.l.bf16 %v1103
    %v1105 = vunpack.c.h.bf16 %v1103
    %s1106 = scalar_lea.vmem [#allocation7], 468
    %v1107 = vpack.c.bf16 0.0, %v1104
    %1109 = vst [vmem:[%s1106] sm:$0xf] %v1107
    %s1110 = scalar_lea.vmem %s3, 356
    %s1112 = sor.u32 255, 127
    %s1113 = sand.u32 %s1112, 85
    %s1114 = sshrl.u32 %s1113, 1
    %s1115 = sor.u32 %s1113, %s1114
    %s1116 = sand.u32 51, %s1115
    %s1117 = sshrl.u32 %s1116, 2
    %s1118 = sor.u32 %s1116, %s1117
    %s1119 = sand.u32 15, %s1118
    %v1120 = vld [vmem:[%s1110] sm:%s1119]
    %v1121 = vunpack.c.l.bf16 %v1120
    %v1122 = vunpack.c.h.bf16 %v1120
    %s1123 = scalar_lea.vmem [#allocation7], 472
    %v1124 = vpack.c.bf16 0.0, %v1121
    %1126 = vst [vmem:[%s1123] sm:$0xf] %v1124
    %s1127 = scalar_lea.vmem [#allocation7], 476
    %v1128 = vpack.c.bf16 0.0, %v11
    %1130 = vst [vmem:[%s1127] sm:$0xf] %v1128
    %s1131 = scalar_lea.vmem %s3, 360
    %v1132 = vld [vmem:[%s1131] sm:$0xf]
    %v1133 = vunpack.c.l.bf16 %v1132
    %v1134 = vunpack.c.h.bf16 %v1132
    %s1135 = scalar_lea.vmem [#allocation7], 480
    %v1136 = vpack.c.bf16 0.0, %v1133
    %1138 = vst [vmem:[%s1135] sm:$0xf] %v1136
    %s1139 = scalar_lea.vmem %s3, 364
    %v1140 = vld [vmem:[%s1139] sm:$0xf]
    %v1141 = vunpack.c.l.bf16 %v1140
    %v1142 = vunpack.c.h.bf16 %v1140
    %s1143 = scalar_lea.vmem [#allocation7], 484
    %v1144 = vpack.c.bf16 0.0, %v1141
    %1146 = vst [vmem:[%s1143] sm:$0xf] %v1144
    %s1147 = scalar_lea.vmem %s3, 368
    %s1149 = sor.u32 255, 127
    %s1150 = sand.u32 %s1149, 85
    %s1151 = sshrl.u32 %s1150, 1
    %s1152 = sor.u32 %s1150, %s1151
    %s1153 = sand.u32 51, %s1152
    %s1154 = sshrl.u32 %s1153, 2
    %s1155 = sor.u32 %s1153, %s1154
    %s1156 = sand.u32 15, %s1155
    %v1157 = vld [vmem:[%s1147] sm:%s1156]
    %v1158 = vunpack.c.l.bf16 %v1157
    %v1159 = vunpack.c.h.bf16 %v1157
    %s1160 = scalar_lea.vmem [#allocation7], 488
    %v1161 = vpack.c.bf16 0.0, %v1158
    %1163 = vst [vmem:[%s1160] sm:$0xf] %v1161
    %s1164 = scalar_lea.vmem [#allocation7], 492
    %v1165 = vpack.c.bf16 0.0, %v11
    %1167 = vst [vmem:[%s1164] sm:$0xf] %v1165
    %s1168 = scalar_lea.vmem %s3, 372
    %v1169 = vld [vmem:[%s1168] sm:$0xf]
    %v1170 = vunpack.c.l.bf16 %v1169
    %v1171 = vunpack.c.h.bf16 %v1169
    %s1172 = scalar_lea.vmem [#allocation7], 496
    %v1173 = vpack.c.bf16 0.0, %v1170
    %1175 = vst [vmem:[%s1172] sm:$0xf] %v1173
    %s1176 = scalar_lea.vmem %s3, 376
    %v1177 = vld [vmem:[%s1176] sm:$0xf]
    %v1178 = vunpack.c.l.bf16 %v1177
    %v1179 = vunpack.c.h.bf16 %v1177
    %s1180 = scalar_lea.vmem [#allocation7], 500
    %v1181 = vpack.c.bf16 0.0, %v1178
    %1183 = vst [vmem:[%s1180] sm:$0xf] %v1181
    %s1184 = scalar_lea.vmem %s3, 380
    %s1186 = sor.u32 255, 127
    %s1187 = sand.u32 %s1186, 85
    %s1188 = sshrl.u32 %s1187, 1
    %s1189 = sor.u32 %s1187, %s1188
    %s1190 = sand.u32 51, %s1189
    %s1191 = sshrl.u32 %s1190, 2
    %s1192 = sor.u32 %s1190, %s1191
    %s1193 = sand.u32 15, %s1192
    %v1194 = vld [vmem:[%s1184] sm:%s1193]
    %v1195 = vunpack.c.l.bf16 %v1194
    %v1196 = vunpack.c.h.bf16 %v1194
    %s1197 = scalar_lea.vmem [#allocation7], 504
    %v1198 = vpack.c.bf16 0.0, %v1195
    %1200 = vst [vmem:[%s1197] sm:$0xf] %v1198
    %s1201 = scalar_lea.vmem [#allocation7], 508
    %v1202 = vpack.c.bf16 0.0, %v11
    %1204 = vst [vmem:[%s1201] sm:$0xf] %v1202
    %s1205 = scalar_lea.vmem %s3, 384
    %v1206 = vld [vmem:[%s1205] sm:$0xf]
    %v1207 = vunpack.c.l.bf16 %v1206
    %v1208 = vunpack.c.h.bf16 %v1206
    %s1209 = scalar_lea.vmem [#allocation7], 512
    %v1210 = vpack.c.bf16 0.0, %v1207
    %1212 = vst [vmem:[%s1209] sm:$0xf] %v1210
    %s1213 = scalar_lea.vmem %s3, 388
    %v1214 = vld [vmem:[%s1213] sm:$0xf]
    %v1215 = vunpack.c.l.bf16 %v1214
    %v1216 = vunpack.c.h.bf16 %v1214
    %s1217 = scalar_lea.vmem [#allocation7], 516
    %v1218 = vpack.c.bf16 0.0, %v1215
    %1220 = vst [vmem:[%s1217] sm:$0xf] %v1218
    %s1221 = scalar_lea.vmem %s3, 392
    %s1223 = sor.u32 255, 127
    %s1224 = sand.u32 %s1223, 85
    %s1225 = sshrl.u32 %s1224, 1
    %s1226 = sor.u32 %s1224, %s1225
    %s1227 = sand.u32 51, %s1226
    %s1228 = sshrl.u32 %s1227, 2
    %s1229 = sor.u32 %s1227, %s1228
    %s1230 = sand.u32 15, %s1229
    %v1231 = vld [vmem:[%s1221] sm:%s1230]
    %v1232 = vunpack.c.l.bf16 %v1231
    %v1233 = vunpack.c.h.bf16 %v1231
    %s1234 = scalar_lea.vmem [#allocation7], 520
    %v1235 = vpack.c.bf16 0.0, %v1232
    %1237 = vst [vmem:[%s1234] sm:$0xf] %v1235
    %s1238 = scalar_lea.vmem [#allocation7], 524
    %v1239 = vpack.c.bf16 0.0, %v11
    %1241 = vst [vmem:[%s1238] sm:$0xf] %v1239
    %s1242 = scalar_lea.vmem %s3, 396
    %v1243 = vld [vmem:[%s1242] sm:$0xf]
    %v1244 = vunpack.c.l.bf16 %v1243
    %v1245 = vunpack.c.h.bf16 %v1243
    %s1246 = scalar_lea.vmem [#allocation7], 528
    %v1247 = vpack.c.bf16 0.0, %v1244
    %1249 = vst [vmem:[%s1246] sm:$0xf] %v1247
    %s1250 = scalar_lea.vmem %s3, 400
    %v1251 = vld [vmem:[%s1250] sm:$0xf]
    %v1252 = vunpack.c.l.bf16 %v1251
    %v1253 = vunpack.c.h.bf16 %v1251
    %s1254 = scalar_lea.vmem [#allocation7], 532
    %v1255 = vpack.c.bf16 0.0, %v1252
    %1257 = vst [vmem:[%s1254] sm:$0xf] %v1255
    %s1258 = scalar_lea.vmem %s3, 404
    %s1260 = sor.u32 255, 127
    %s1261 = sand.u32 %s1260, 85
    %s1262 = sshrl.u32 %s1261, 1
    %s1263 = sor.u32 %s1261, %s1262
    %s1264 = sand.u32 51, %s1263
    %s1265 = sshrl.u32 %s1264, 2
    %s1266 = sor.u32 %s1264, %s1265
    %s1267 = sand.u32 15, %s1266
    %v1268 = vld [vmem:[%s1258] sm:%s1267]
    %v1269 = vunpack.c.l.bf16 %v1268
    %v1270 = vunpack.c.h.bf16 %v1268
    %s1271 = scalar_lea.vmem [#allocation7], 536
    %v1272 = vpack.c.bf16 0.0, %v1269
    %1274 = vst [vmem:[%s1271] sm:$0xf] %v1272
    %s1275 = scalar_lea.vmem [#allocation7], 540
    %v1276 = vpack.c.bf16 0.0, %v11
    %1278 = vst [vmem:[%s1275] sm:$0xf] %v1276
    %s1279 = scalar_lea.vmem %s3, 408
    %v1280 = vld [vmem:[%s1279] sm:$0xf]
    %v1281 = vunpack.c.l.bf16 %v1280
    %v1282 = vunpack.c.h.bf16 %v1280
    %s1283 = scalar_lea.vmem [#allocation7], 544
    %v1284 = vpack.c.bf16 0.0, %v1281
    %1286 = vst [vmem:[%s1283] sm:$0xf] %v1284
    %s1287 = scalar_lea.vmem %s3, 412
    %v1288 = vld [vmem:[%s1287] sm:$0xf]
    %v1289 = vunpack.c.l.bf16 %v1288
    %v1290 = vunpack.c.h.bf16 %v1288
    %s1291 = scalar_lea.vmem [#allocation7], 548
    %v1292 = vpack.c.bf16 0.0, %v1289
    %1294 = vst [vmem:[%s1291] sm:$0xf] %v1292
    %s1295 = scalar_lea.vmem %s3, 416
    %s1297 = sor.u32 255, 127
    %s1298 = sand.u32 %s1297, 85
    %s1299 = sshrl.u32 %s1298, 1
    %s1300 = sor.u32 %s1298, %s1299
    %s1301 = sand.u32 51, %s1300
    %s1302 = sshrl.u32 %s1301, 2
    %s1303 = sor.u32 %s1301, %s1302
    %s1304 = sand.u32 15, %s1303
    %v1305 = vld [vmem:[%s1295] sm:%s1304]
    %v1306 = vunpack.c.l.bf16 %v1305
    %v1307 = vunpack.c.h.bf16 %v1305
    %s1308 = scalar_lea.vmem [#allocation7], 552
    %v1309 = vpack.c.bf16 0.0, %v1306
    %1311 = vst [vmem:[%s1308] sm:$0xf] %v1309
    %s1312 = scalar_lea.vmem [#allocation7], 556
    %v1313 = vpack.c.bf16 0.0, %v11
    %1315 = vst [vmem:[%s1312] sm:$0xf] %v1313
    %s1316 = scalar_lea.vmem %s3, 420
    %v1317 = vld [vmem:[%s1316] sm:$0xf]
    %v1318 = vunpack.c.l.bf16 %v1317
    %v1319 = vunpack.c.h.bf16 %v1317
    %s1320 = scalar_lea.vmem [#allocation7], 560
    %v1321 = vpack.c.bf16 0.0, %v1318
    %1323 = vst [vmem:[%s1320] sm:$0xf] %v1321
    %s1324 = scalar_lea.vmem %s3, 424
    %v1325 = vld [vmem:[%s1324] sm:$0xf]
    %v1326 = vunpack.c.l.bf16 %v1325
    %v1327 = vunpack.c.h.bf16 %v1325
    %s1328 = scalar_lea.vmem [#allocation7], 564
    %v1329 = vpack.c.bf16 0.0, %v1326
    %1331 = vst [vmem:[%s1328] sm:$0xf] %v1329
    %s1332 = scalar_lea.vmem %s3, 428
    %s1334 = sor.u32 255, 127
    %s1335 = sand.u32 %s1334, 85
    %s1336 = sshrl.u32 %s1335, 1
    %s1337 = sor.u32 %s1335, %s1336
    %s1338 = sand.u32 51, %s1337
    %s1339 = sshrl.u32 %s1338, 2
    %s1340 = sor.u32 %s1338, %s1339
    %s1341 = sand.u32 15, %s1340
    %v1342 = vld [vmem:[%s1332] sm:%s1341]
    %v1343 = vunpack.c.l.bf16 %v1342
    %v1344 = vunpack.c.h.bf16 %v1342
    %s1345 = scalar_lea.vmem [#allocation7], 568
    %v1346 = vpack.c.bf16 0.0, %v1343
    %1348 = vst [vmem:[%s1345] sm:$0xf] %v1346
    %s1349 = scalar_lea.vmem [#allocation7], 572
    %v1350 = vpack.c.bf16 0.0, %v11
    %1352 = vst [vmem:[%s1349] sm:$0xf] %v1350
    %s1353 = scalar_lea.vmem %s3, 432
    %v1354 = vld [vmem:[%s1353] sm:$0xf]
    %v1355 = vunpack.c.l.bf16 %v1354
    %v1356 = vunpack.c.h.bf16 %v1354
    %s1357 = scalar_lea.vmem [#allocation7], 576
    %v1358 = vpack.c.bf16 0.0, %v1355
    %1360 = vst [vmem:[%s1357] sm:$0xf] %v1358
    %s1361 = scalar_lea.vmem %s3, 436
    %v1362 = vld [vmem:[%s1361] sm:$0xf]
    %v1363 = vunpack.c.l.bf16 %v1362
    %v1364 = vunpack.c.h.bf16 %v1362
    %s1365 = scalar_lea.vmem [#allocation7], 580
    %v1366 = vpack.c.bf16 0.0, %v1363
    %1368 = vst [vmem:[%s1365] sm:$0xf] %v1366
    %s1369 = scalar_lea.vmem %s3, 440
    %s1371 = sor.u32 255, 127
    %s1372 = sand.u32 %s1371, 85
    %s1373 = sshrl.u32 %s1372, 1
    %s1374 = sor.u32 %s1372, %s1373
    %s1375 = sand.u32 51, %s1374
    %s1376 = sshrl.u32 %s1375, 2
    %s1377 = sor.u32 %s1375, %s1376
    %s1378 = sand.u32 15, %s1377
    %v1379 = vld [vmem:[%s1369] sm:%s1378]
    %v1380 = vunpack.c.l.bf16 %v1379
    %v1381 = vunpack.c.h.bf16 %v1379
    %s1382 = scalar_lea.vmem [#allocation7], 584
    %v1383 = vpack.c.bf16 0.0, %v1380
    %1385 = vst [vmem:[%s1382] sm:$0xf] %v1383
    %s1386 = scalar_lea.vmem [#allocation7], 588
    %v1387 = vpack.c.bf16 0.0, %v11
    %1389 = vst [vmem:[%s1386] sm:$0xf] %v1387
    %s1390 = scalar_lea.vmem %s3, 444
    %v1391 = vld [vmem:[%s1390] sm:$0xf]
    %v1392 = vunpack.c.l.bf16 %v1391
    %v1393 = vunpack.c.h.bf16 %v1391
    %s1394 = scalar_lea.vmem [#allocation7], 592
    %v1395 = vpack.c.bf16 0.0, %v1392
    %1397 = vst [vmem:[%s1394] sm:$0xf] %v1395
    %s1398 = scalar_lea.vmem %s3, 448
    %v1399 = vld [vmem:[%s1398] sm:$0xf]
    %v1400 = vunpack.c.l.bf16 %v1399
    %v1401 = vunpack.c.h.bf16 %v1399
    %s1402 = scalar_lea.vmem [#allocation7], 596
    %v1403 = vpack.c.bf16 0.0, %v1400
    %1405 = vst [vmem:[%s1402] sm:$0xf] %v1403
    %s1406 = scalar_lea.vmem %s3, 452
    %s1408 = sor.u32 255, 127
    %s1409 = sand.u32 %s1408, 85
    %s1410 = sshrl.u32 %s1409, 1
    %s1411 = sor.u32 %s1409, %s1410
    %s1412 = sand.u32 51, %s1411
    %s1413 = sshrl.u32 %s1412, 2
    %s1414 = sor.u32 %s1412, %s1413
    %s1415 = sand.u32 15, %s1414
    %v1416 = vld [vmem:[%s1406] sm:%s1415]
    %v1417 = vunpack.c.l.bf16 %v1416
    %v1418 = vunpack.c.h.bf16 %v1416
    %s1419 = scalar_lea.vmem [#allocation7], 600
    %v1420 = vpack.c.bf16 0.0, %v1417
    %1422 = vst [vmem:[%s1419] sm:$0xf] %v1420
    %s1423 = scalar_lea.vmem [#allocation7], 604
    %v1424 = vpack.c.bf16 0.0, %v11
    %1426 = vst [vmem:[%s1423] sm:$0xf] %v1424
    %s1427 = scalar_lea.vmem %s3, 456
    %v1428 = vld [vmem:[%s1427] sm:$0xf]
    %v1429 = vunpack.c.l.bf16 %v1428
    %v1430 = vunpack.c.h.bf16 %v1428
    %s1431 = scalar_lea.vmem [#allocation7], 608
    %v1432 = vpack.c.bf16 0.0, %v1429
    %1434 = vst [vmem:[%s1431] sm:$0xf] %v1432
    %s1435 = scalar_lea.vmem %s3, 460
    %v1436 = vld [vmem:[%s1435] sm:$0xf]
    %v1437 = vunpack.c.l.bf16 %v1436
    %v1438 = vunpack.c.h.bf16 %v1436
    %s1439 = scalar_lea.vmem [#allocation7], 612
    %v1440 = vpack.c.bf16 0.0, %v1437
    %1442 = vst [vmem:[%s1439] sm:$0xf] %v1440
    %s1443 = scalar_lea.vmem %s3, 464
    %s1445 = sor.u32 255, 127
    %s1446 = sand.u32 %s1445, 85
    %s1447 = sshrl.u32 %s1446, 1
    %s1448 = sor.u32 %s1446, %s1447
    %s1449 = sand.u32 51, %s1448
    %s1450 = sshrl.u32 %s1449, 2
    %s1451 = sor.u32 %s1449, %s1450
    %s1452 = sand.u32 15, %s1451
    %v1453 = vld [vmem:[%s1443] sm:%s1452]
    %v1454 = vunpack.c.l.bf16 %v1453
    %v1455 = vunpack.c.h.bf16 %v1453
    %s1456 = scalar_lea.vmem [#allocation7], 616
    %v1457 = vpack.c.bf16 0.0, %v1454
    %1459 = vst [vmem:[%s1456] sm:$0xf] %v1457
    %s1460 = scalar_lea.vmem [#allocation7], 620
    %v1461 = vpack.c.bf16 0.0, %v11
    %1463 = vst [vmem:[%s1460] sm:$0xf] %v1461
    %s1464 = scalar_lea.vmem %s3, 468
    %v1465 = vld [vmem:[%s1464] sm:$0xf]
    %v1466 = vunpack.c.l.bf16 %v1465
    %v1467 = vunpack.c.h.bf16 %v1465
    %s1468 = scalar_lea.vmem [#allocation7], 624
    %v1469 = vpack.c.bf16 0.0, %v1466
    %1471 = vst [vmem:[%s1468] sm:$0xf] %v1469
    %s1472 = scalar_lea.vmem %s3, 472
    %v1473 = vld [vmem:[%s1472] sm:$0xf]
    %v1474 = vunpack.c.l.bf16 %v1473
    %v1475 = vunpack.c.h.bf16 %v1473
    %s1476 = scalar_lea.vmem [#allocation7], 628
    %v1477 = vpack.c.bf16 0.0, %v1474
    %1479 = vst [vmem:[%s1476] sm:$0xf] %v1477
    %s1480 = scalar_lea.vmem %s3, 476
    %s1482 = sor.u32 255, 127
    %s1483 = sand.u32 %s1482, 85
    %s1484 = sshrl.u32 %s1483, 1
    %s1485 = sor.u32 %s1483, %s1484
    %s1486 = sand.u32 51, %s1485
    %s1487 = sshrl.u32 %s1486, 2
    %s1488 = sor.u32 %s1486, %s1487
    %s1489 = sand.u32 15, %s1488
    %v1490 = vld [vmem:[%s1480] sm:%s1489]
    %v1491 = vunpack.c.l.bf16 %v1490
    %v1492 = vunpack.c.h.bf16 %v1490
    %s1493 = scalar_lea.vmem [#allocation7], 632
    %v1494 = vpack.c.bf16 0.0, %v1491
    %1496 = vst [vmem:[%s1493] sm:$0xf] %v1494
    %s1497 = scalar_lea.vmem [#allocation7], 636
    %v1498 = vpack.c.bf16 0.0, %v11
    %1500 = vst [vmem:[%s1497] sm:$0xf] %v1498
    %s1501 = scalar_lea.vmem %s3, 480
    %v1502 = vld [vmem:[%s1501] sm:$0xf]
    %v1503 = vunpack.c.l.bf16 %v1502
    %v1504 = vunpack.c.h.bf16 %v1502
    %s1505 = scalar_lea.vmem [#allocation7], 640
    %v1506 = vpack.c.bf16 0.0, %v1503
    %1508 = vst [vmem:[%s1505] sm:$0xf] %v1506
    %s1509 = scalar_lea.vmem %s3, 484
    %v1510 = vld [vmem:[%s1509] sm:$0xf]
    %v1511 = vunpack.c.l.bf16 %v1510
    %v1512 = vunpack.c.h.bf16 %v1510
    %s1513 = scalar_lea.vmem [#allocation7], 644
    %v1514 = vpack.c.bf16 0.0, %v1511
    %1516 = vst [vmem:[%s1513] sm:$0xf] %v1514
    %s1517 = scalar_lea.vmem %s3, 488
    %s1519 = sor.u32 255, 127
    %s1520 = sand.u32 %s1519, 85
    %s1521 = sshrl.u32 %s1520, 1
    %s1522 = sor.u32 %s1520, %s1521
    %s1523 = sand.u32 51, %s1522
    %s1524 = sshrl.u32 %s1523, 2
    %s1525 = sor.u32 %s1523, %s1524
    %s1526 = sand.u32 15, %s1525
    %v1527 = vld [vmem:[%s1517] sm:%s1526]
    %v1528 = vunpack.c.l.bf16 %v1527
    %v1529 = vunpack.c.h.bf16 %v1527
    %s1530 = scalar_lea.vmem [#allocation7], 648
    %v1531 = vpack.c.bf16 0.0, %v1528
    %1533 = vst [vmem:[%s1530] sm:$0xf] %v1531
    %s1534 = scalar_lea.vmem [#allocation7], 652
    %v1535 = vpack.c.bf16 0.0, %v11
    %1537 = vst [vmem:[%s1534] sm:$0xf] %v1535
    %s1538 = scalar_lea.vmem %s3, 492
    %v1539 = vld [vmem:[%s1538] sm:$0xf]
    %v1540 = vunpack.c.l.bf16 %v1539
    %v1541 = vunpack.c.h.bf16 %v1539
    %s1542 = scalar_lea.vmem [#allocation7], 656
    %v1543 = vpack.c.bf16 0.0, %v1540
    %1545 = vst [vmem:[%s1542] sm:$0xf] %v1543
    %s1546 = scalar_lea.vmem %s3, 496
    %v1547 = vld [vmem:[%s1546] sm:$0xf]
    %v1548 = vunpack.c.l.bf16 %v1547
    %v1549 = vunpack.c.h.bf16 %v1547
    %s1550 = scalar_lea.vmem [#allocation7], 660
    %v1551 = vpack.c.bf16 0.0, %v1548
    %1553 = vst [vmem:[%s1550] sm:$0xf] %v1551
    %s1554 = scalar_lea.vmem %s3, 500
    %s1556 = sor.u32 255, 127
    %s1557 = sand.u32 %s1556, 85
    %s1558 = sshrl.u32 %s1557, 1
    %s1559 = sor.u32 %s1557, %s1558
    %s1560 = sand.u32 51, %s1559
    %s1561 = sshrl.u32 %s1560, 2
    %s1562 = sor.u32 %s1560, %s1561
    %s1563 = sand.u32 15, %s1562
    %v1564 = vld [vmem:[%s1554] sm:%s1563]
    %v1565 = vunpack.c.l.bf16 %v1564
    %v1566 = vunpack.c.h.bf16 %v1564
    %s1567 = scalar_lea.vmem [#allocation7], 664
    %v1568 = vpack.c.bf16 0.0, %v1565
    %1570 = vst [vmem:[%s1567] sm:$0xf] %v1568
    %s1571 = scalar_lea.vmem [#allocation7], 668
    %v1572 = vpack.c.bf16 0.0, %v11
    %1574 = vst [vmem:[%s1571] sm:$0xf] %v1572
    %s1575 = scalar_lea.vmem %s3, 504
    %v1576 = vld [vmem:[%s1575] sm:$0xf]
    %v1577 = vunpack.c.l.bf16 %v1576
    %v1578 = vunpack.c.h.bf16 %v1576
    %s1579 = scalar_lea.vmem [#allocation7], 672
    %v1580 = vpack.c.bf16 0.0, %v1577
    %1582 = vst [vmem:[%s1579] sm:$0xf] %v1580
    %s1583 = scalar_lea.vmem %s3, 508
    %v1584 = vld [vmem:[%s1583] sm:$0xf]
    %v1585 = vunpack.c.l.bf16 %v1584
    %v1586 = vunpack.c.h.bf16 %v1584
    %s1587 = scalar_lea.vmem [#allocation7], 676
    %v1588 = vpack.c.bf16 0.0, %v1585
    %1590 = vst [vmem:[%s1587] sm:$0xf] %v1588
    %s1591 = scalar_lea.vmem %s3, 512
    %s1593 = sor.u32 255, 127
    %s1594 = sand.u32 %s1593, 85
    %s1595 = sshrl.u32 %s1594, 1
    %s1596 = sor.u32 %s1594, %s1595
    %s1597 = sand.u32 51, %s1596
    %s1598 = sshrl.u32 %s1597, 2
    %s1599 = sor.u32 %s1597, %s1598
    %s1600 = sand.u32 15, %s1599
    %v1601 = vld [vmem:[%s1591] sm:%s1600]
    %v1602 = vunpack.c.l.bf16 %v1601
    %v1603 = vunpack.c.h.bf16 %v1601
    %s1604 = scalar_lea.vmem [#allocation7], 680
    %v1605 = vpack.c.bf16 0.0, %v1602
    %1607 = vst [vmem:[%s1604] sm:$0xf] %v1605
    %s1608 = scalar_lea.vmem [#allocation7], 684
    %v1609 = vpack.c.bf16 0.0, %v11
    %1611 = vst [vmem:[%s1608] sm:$0xf] %v1609
    %s1612 = scalar_lea.vmem %s3, 516
    %v1613 = vld [vmem:[%s1612] sm:$0xf]
    %v1614 = vunpack.c.l.bf16 %v1613
    %v1615 = vunpack.c.h.bf16 %v1613
    %s1616 = scalar_lea.vmem [#allocation7], 688
    %v1617 = vpack.c.bf16 0.0, %v1614
    %1619 = vst [vmem:[%s1616] sm:$0xf] %v1617
    %s1620 = scalar_lea.vmem %s3, 520
    %v1621 = vld [vmem:[%s1620] sm:$0xf]
    %v1622 = vunpack.c.l.bf16 %v1621
    %v1623 = vunpack.c.h.bf16 %v1621
    %s1624 = scalar_lea.vmem [#allocation7], 692
    %v1625 = vpack.c.bf16 0.0, %v1622
    %1627 = vst [vmem:[%s1624] sm:$0xf] %v1625
    %s1628 = scalar_lea.vmem %s3, 524
    %s1630 = sor.u32 255, 127
    %s1631 = sand.u32 %s1630, 85
    %s1632 = sshrl.u32 %s1631, 1
    %s1633 = sor.u32 %s1631, %s1632
    %s1634 = sand.u32 51, %s1633
    %s1635 = sshrl.u32 %s1634, 2
    %s1636 = sor.u32 %s1634, %s1635
    %s1637 = sand.u32 15, %s1636
    %v1638 = vld [vmem:[%s1628] sm:%s1637]
    %v1639 = vunpack.c.l.bf16 %v1638
    %v1640 = vunpack.c.h.bf16 %v1638
    %s1641 = scalar_lea.vmem [#allocation7], 696
    %v1642 = vpack.c.bf16 0.0, %v1639
    %1644 = vst [vmem:[%s1641] sm:$0xf] %v1642
    %s1645 = scalar_lea.vmem [#allocation7], 700
    %v1646 = vpack.c.bf16 0.0, %v11
    %1648 = vst [vmem:[%s1645] sm:$0xf] %v1646
    %s1649 = scalar_lea.vmem %s3, 528
    %v1650 = vld [vmem:[%s1649] sm:$0xf]
    %v1651 = vunpack.c.l.bf16 %v1650
    %v1652 = vunpack.c.h.bf16 %v1650
    %s1653 = scalar_lea.vmem [#allocation7], 704
    %v1654 = vpack.c.bf16 0.0, %v1651
    %1656 = vst [vmem:[%s1653] sm:$0xf] %v1654
    %s1657 = scalar_lea.vmem %s3, 532
    %v1658 = vld [vmem:[%s1657] sm:$0xf]
    %v1659 = vunpack.c.l.bf16 %v1658
    %v1660 = vunpack.c.h.bf16 %v1658
    %s1661 = scalar_lea.vmem [#allocation7], 708
    %v1662 = vpack.c.bf16 0.0, %v1659
    %1664 = vst [vmem:[%s1661] sm:$0xf] %v1662
    %s1665 = scalar_lea.vmem %s3, 536
    %s1667 = sor.u32 255, 127
    %s1668 = sand.u32 %s1667, 85
    %s1669 = sshrl.u32 %s1668, 1
    %s1670 = sor.u32 %s1668, %s1669
    %s1671 = sand.u32 51, %s1670
    %s1672 = sshrl.u32 %s1671, 2
    %s1673 = sor.u32 %s1671, %s1672
    %s1674 = sand.u32 15, %s1673
    %v1675 = vld [vmem:[%s1665] sm:%s1674]
    %v1676 = vunpack.c.l.bf16 %v1675
    %v1677 = vunpack.c.h.bf16 %v1675
    %s1678 = scalar_lea.vmem [#allocation7], 712
    %v1679 = vpack.c.bf16 0.0, %v1676
    %1681 = vst [vmem:[%s1678] sm:$0xf] %v1679
    %s1682 = scalar_lea.vmem [#allocation7], 716
    %v1683 = vpack.c.bf16 0.0, %v11
    %1685 = vst [vmem:[%s1682] sm:$0xf] %v1683
    %s1686 = scalar_lea.vmem %s3, 540
    %v1687 = vld [vmem:[%s1686] sm:$0xf]
    %v1688 = vunpack.c.l.bf16 %v1687
    %v1689 = vunpack.c.h.bf16 %v1687
    %s1690 = scalar_lea.vmem [#allocation7], 720
    %v1691 = vpack.c.bf16 0.0, %v1688
    %1693 = vst [vmem:[%s1690] sm:$0xf] %v1691
    %s1694 = scalar_lea.vmem %s3, 544
    %v1695 = vld [vmem:[%s1694] sm:$0xf]
    %v1696 = vunpack.c.l.bf16 %v1695
    %v1697 = vunpack.c.h.bf16 %v1695
    %s1698 = scalar_lea.vmem [#allocation7], 724
    %v1699 = vpack.c.bf16 0.0, %v1696
    %1701 = vst [vmem:[%s1698] sm:$0xf] %v1699
    %s1702 = scalar_lea.vmem %s3, 548
    %s1704 = sor.u32 255, 127
    %s1705 = sand.u32 %s1704, 85
    %s1706 = sshrl.u32 %s1705, 1
    %s1707 = sor.u32 %s1705, %s1706
    %s1708 = sand.u32 51, %s1707
    %s1709 = sshrl.u32 %s1708, 2
    %s1710 = sor.u32 %s1708, %s1709
    %s1711 = sand.u32 15, %s1710
    %v1712 = vld [vmem:[%s1702] sm:%s1711]
    %v1713 = vunpack.c.l.bf16 %v1712
    %v1714 = vunpack.c.h.bf16 %v1712
    %s1715 = scalar_lea.vmem [#allocation7], 728
    %v1716 = vpack.c.bf16 0.0, %v1713
    %1718 = vst [vmem:[%s1715] sm:$0xf] %v1716
    %s1719 = scalar_lea.vmem [#allocation7], 732
    %v1720 = vpack.c.bf16 0.0, %v11
    %1722 = vst [vmem:[%s1719] sm:$0xf] %v1720
    %s1723 = scalar_lea.vmem %s3, 552
    %v1724 = vld [vmem:[%s1723] sm:$0xf]
    %v1725 = vunpack.c.l.bf16 %v1724
    %v1726 = vunpack.c.h.bf16 %v1724
    %s1727 = scalar_lea.vmem [#allocation7], 736
    %v1728 = vpack.c.bf16 0.0, %v1725
    %1730 = vst [vmem:[%s1727] sm:$0xf] %v1728
    %s1731 = scalar_lea.vmem %s3, 556
    %v1732 = vld [vmem:[%s1731] sm:$0xf]
    %v1733 = vunpack.c.l.bf16 %v1732
    %v1734 = vunpack.c.h.bf16 %v1732
    %s1735 = scalar_lea.vmem [#allocation7], 740
    %v1736 = vpack.c.bf16 0.0, %v1733
    %1738 = vst [vmem:[%s1735] sm:$0xf] %v1736
    %s1739 = scalar_lea.vmem %s3, 560
    %s1741 = sor.u32 255, 127
    %s1742 = sand.u32 %s1741, 85
    %s1743 = sshrl.u32 %s1742, 1
    %s1744 = sor.u32 %s1742, %s1743
    %s1745 = sand.u32 51, %s1744
    %s1746 = sshrl.u32 %s1745, 2
    %s1747 = sor.u32 %s1745, %s1746
    %s1748 = sand.u32 15, %s1747
    %v1749 = vld [vmem:[%s1739] sm:%s1748]
    %v1750 = vunpack.c.l.bf16 %v1749
    %v1751 = vunpack.c.h.bf16 %v1749
    %s1752 = scalar_lea.vmem [#allocation7], 744
    %v1753 = vpack.c.bf16 0.0, %v1750
    %1755 = vst [vmem:[%s1752] sm:$0xf] %v1753
    %s1756 = scalar_lea.vmem [#allocation7], 748
    %v1757 = vpack.c.bf16 0.0, %v11
    %1759 = vst [vmem:[%s1756] sm:$0xf] %v1757
    %s1760 = scalar_lea.vmem %s3, 564
    %v1761 = vld [vmem:[%s1760] sm:$0xf]
    %v1762 = vunpack.c.l.bf16 %v1761
    %v1763 = vunpack.c.h.bf16 %v1761
    %s1764 = scalar_lea.vmem [#allocation7], 752
    %v1765 = vpack.c.bf16 0.0, %v1762
    %1767 = vst [vmem:[%s1764] sm:$0xf] %v1765
    %s1768 = scalar_lea.vmem %s3, 568
    %v1769 = vld [vmem:[%s1768] sm:$0xf]
    %v1770 = vunpack.c.l.bf16 %v1769
    %v1771 = vunpack.c.h.bf16 %v1769
    %s1772 = scalar_lea.vmem [#allocation7], 756
    %v1773 = vpack.c.bf16 0.0, %v1770
    %1775 = vst [vmem:[%s1772] sm:$0xf] %v1773
    %s1776 = scalar_lea.vmem %s3, 572
    %s1778 = sor.u32 255, 127
    %s1779 = sand.u32 %s1778, 85
    %s1780 = sshrl.u32 %s1779, 1
    %s1781 = sor.u32 %s1779, %s1780
    %s1782 = sand.u32 51, %s1781
    %s1783 = sshrl.u32 %s1782, 2
    %s1784 = sor.u32 %s1782, %s1783
    %s1785 = sand.u32 15, %s1784
    %v1786 = vld [vmem:[%s1776] sm:%s1785]
    %v1787 = vunpack.c.l.bf16 %v1786
    %v1788 = vunpack.c.h.bf16 %v1786
    %s1789 = scalar_lea.vmem [#allocation7], 760
    %v1790 = vpack.c.bf16 0.0, %v1787
    %1792 = vst [vmem:[%s1789] sm:$0xf] %v1790
    %s1793 = scalar_lea.vmem [#allocation7], 764
    %v1794 = vpack.c.bf16 0.0, %v11
    %1796 = vst [vmem:[%s1793] sm:$0xf] %v1794
    %s1797 = scalar_lea.vmem %s3, 576
    %v1798 = vld [vmem:[%s1797] sm:$0xf]
    %v1799 = vunpack.c.l.bf16 %v1798
    %v1800 = vunpack.c.h.bf16 %v1798
    %s1801 = scalar_lea.vmem [#allocation7], 768
    %v1802 = vpack.c.bf16 0.0, %v1799
    %1804 = vst [vmem:[%s1801] sm:$0xf] %v1802
    %s1805 = scalar_lea.vmem %s3, 580
    %v1806 = vld [vmem:[%s1805] sm:$0xf]
    %v1807 = vunpack.c.l.bf16 %v1806
    %v1808 = vunpack.c.h.bf16 %v1806
    %s1809 = scalar_lea.vmem [#allocation7], 772
    %v1810 = vpack.c.bf16 0.0, %v1807
    %1812 = vst [vmem:[%s1809] sm:$0xf] %v1810
    %s1813 = scalar_lea.vmem %s3, 584
    %s1815 = sor.u32 255, 127
    %s1816 = sand.u32 %s1815, 85
    %s1817 = sshrl.u32 %s1816, 1
    %s1818 = sor.u32 %s1816, %s1817
    %s1819 = sand.u32 51, %s1818
    %s1820 = sshrl.u32 %s1819, 2
    %s1821 = sor.u32 %s1819, %s1820
    %s1822 = sand.u32 15, %s1821
    %v1823 = vld [vmem:[%s1813] sm:%s1822]
    %v1824 = vunpack.c.l.bf16 %v1823
    %v1825 = vunpack.c.h.bf16 %v1823
    %s1826 = scalar_lea.vmem [#allocation7], 776
    %v1827 = vpack.c.bf16 0.0, %v1824
    %1829 = vst [vmem:[%s1826] sm:$0xf] %v1827
    %s1830 = scalar_lea.vmem [#allocation7], 780
    %v1831 = vpack.c.bf16 0.0, %v11
    %1833 = vst [vmem:[%s1830] sm:$0xf] %v1831
    %s1834 = scalar_lea.vmem %s3, 588
    %v1835 = vld [vmem:[%s1834] sm:$0xf]
    %v1836 = vunpack.c.l.bf16 %v1835
    %v1837 = vunpack.c.h.bf16 %v1835
    %s1838 = scalar_lea.vmem [#allocation7], 784
    %v1839 = vpack.c.bf16 0.0, %v1836
    %1841 = vst [vmem:[%s1838] sm:$0xf] %v1839
    %s1842 = scalar_lea.vmem %s3, 592
    %v1843 = vld [vmem:[%s1842] sm:$0xf]
    %v1844 = vunpack.c.l.bf16 %v1843
    %v1845 = vunpack.c.h.bf16 %v1843
    %s1846 = scalar_lea.vmem [#allocation7], 788
    %v1847 = vpack.c.bf16 0.0, %v1844
    %1849 = vst [vmem:[%s1846] sm:$0xf] %v1847
    %s1850 = scalar_lea.vmem %s3, 596
    %s1852 = sor.u32 255, 127
    %s1853 = sand.u32 %s1852, 85
    %s1854 = sshrl.u32 %s1853, 1
    %s1855 = sor.u32 %s1853, %s1854
    %s1856 = sand.u32 51, %s1855
    %s1857 = sshrl.u32 %s1856, 2
    %s1858 = sor.u32 %s1856, %s1857
    %s1859 = sand.u32 15, %s1858
    %v1860 = vld [vmem:[%s1850] sm:%s1859]
    %v1861 = vunpack.c.l.bf16 %v1860
    %v1862 = vunpack.c.h.bf16 %v1860
    %s1863 = scalar_lea.vmem [#allocation7], 792
    %v1864 = vpack.c.bf16 0.0, %v1861
    %1866 = vst [vmem:[%s1863] sm:$0xf] %v1864
    %s1867 = scalar_lea.vmem [#allocation7], 796
    %v1868 = vpack.c.bf16 0.0, %v11
    %1870 = vst [vmem:[%s1867] sm:$0xf] %v1868
    %s1871 = scalar_lea.vmem %s3, 600
    %v1872 = vld [vmem:[%s1871] sm:$0xf]
    %v1873 = vunpack.c.l.bf16 %v1872
    %v1874 = vunpack.c.h.bf16 %v1872
    %s1875 = scalar_lea.vmem [#allocation7], 800
    %v1876 = vpack.c.bf16 0.0, %v1873
    %1878 = vst [vmem:[%s1875] sm:$0xf] %v1876
    %s1879 = scalar_lea.vmem %s3, 604
    %v1880 = vld [vmem:[%s1879] sm:$0xf]
    %v1881 = vunpack.c.l.bf16 %v1880
    %v1882 = vunpack.c.h.bf16 %v1880
    %s1883 = scalar_lea.vmem [#allocation7], 804
    %v1884 = vpack.c.bf16 0.0, %v1881
    %1886 = vst [vmem:[%s1883] sm:$0xf] %v1884
    %s1887 = scalar_lea.vmem %s3, 608
    %s1889 = sor.u32 255, 127
    %s1890 = sand.u32 %s1889, 85
    %s1891 = sshrl.u32 %s1890, 1
    %s1892 = sor.u32 %s1890, %s1891
    %s1893 = sand.u32 51, %s1892
    %s1894 = sshrl.u32 %s1893, 2
    %s1895 = sor.u32 %s1893, %s1894
    %s1896 = sand.u32 15, %s1895
    %v1897 = vld [vmem:[%s1887] sm:%s1896]
    %v1898 = vunpack.c.l.bf16 %v1897
    %v1899 = vunpack.c.h.bf16 %v1897
    %s1900 = scalar_lea.vmem [#allocation7], 808
    %v1901 = vpack.c.bf16 0.0, %v1898
    %1903 = vst [vmem:[%s1900] sm:$0xf] %v1901
    %s1904 = scalar_lea.vmem [#allocation7], 812
    %v1905 = vpack.c.bf16 0.0, %v11
    %1907 = vst [vmem:[%s1904] sm:$0xf] %v1905
    %s1908 = scalar_lea.vmem %s3, 612
    %v1909 = vld [vmem:[%s1908] sm:$0xf]
    %v1910 = vunpack.c.l.bf16 %v1909
    %v1911 = vunpack.c.h.bf16 %v1909
    %s1912 = scalar_lea.vmem [#allocation7], 816
    %v1913 = vpack.c.bf16 0.0, %v1910
    %1915 = vst [vmem:[%s1912] sm:$0xf] %v1913
    %s1916 = scalar_lea.vmem %s3, 616
    %v1917 = vld [vmem:[%s1916] sm:$0xf]
    %v1918 = vunpack.c.l.bf16 %v1917
    %v1919 = vunpack.c.h.bf16 %v1917
    %s1920 = scalar_lea.vmem [#allocation7], 820
    %v1921 = vpack.c.bf16 0.0, %v1918
    %1923 = vst [vmem:[%s1920] sm:$0xf] %v1921
    %s1924 = scalar_lea.vmem %s3, 620
    %s1926 = sor.u32 255, 127
    %s1927 = sand.u32 %s1926, 85
    %s1928 = sshrl.u32 %s1927, 1
    %s1929 = sor.u32 %s1927, %s1928
    %s1930 = sand.u32 51, %s1929
    %s1931 = sshrl.u32 %s1930, 2
    %s1932 = sor.u32 %s1930, %s1931
    %s1933 = sand.u32 15, %s1932
    %v1934 = vld [vmem:[%s1924] sm:%s1933]
    %v1935 = vunpack.c.l.bf16 %v1934
    %v1936 = vunpack.c.h.bf16 %v1934
    %s1937 = scalar_lea.vmem [#allocation7], 824
    %v1938 = vpack.c.bf16 0.0, %v1935
    %1940 = vst [vmem:[%s1937] sm:$0xf] %v1938
    %s1941 = scalar_lea.vmem [#allocation7], 828
    %v1942 = vpack.c.bf16 0.0, %v11
    %1944 = vst [vmem:[%s1941] sm:$0xf] %v1942
    %s1945 = scalar_lea.vmem %s3, 624
    %v1946 = vld [vmem:[%s1945] sm:$0xf]
    %v1947 = vunpack.c.l.bf16 %v1946
    %v1948 = vunpack.c.h.bf16 %v1946
    %s1949 = scalar_lea.vmem [#allocation7], 832
    %v1950 = vpack.c.bf16 0.0, %v1947
    %1952 = vst [vmem:[%s1949] sm:$0xf] %v1950
    %s1953 = scalar_lea.vmem %s3, 628
    %v1954 = vld [vmem:[%s1953] sm:$0xf]
    %v1955 = vunpack.c.l.bf16 %v1954
    %v1956 = vunpack.c.h.bf16 %v1954
    %s1957 = scalar_lea.vmem [#allocation7], 836
    %v1958 = vpack.c.bf16 0.0, %v1955
    %1960 = vst [vmem:[%s1957] sm:$0xf] %v1958
    %s1961 = scalar_lea.vmem %s3, 632
    %s1963 = sor.u32 255, 127
    %s1964 = sand.u32 %s1963, 85
    %s1965 = sshrl.u32 %s1964, 1
    %s1966 = sor.u32 %s1964, %s1965
    %s1967 = sand.u32 51, %s1966
    %s1968 = sshrl.u32 %s1967, 2
    %s1969 = sor.u32 %s1967, %s1968
    %s1970 = sand.u32 15, %s1969
    %v1971 = vld [vmem:[%s1961] sm:%s1970]
    %v1972 = vunpack.c.l.bf16 %v1971
    %v1973 = vunpack.c.h.bf16 %v1971
    %s1974 = scalar_lea.vmem [#allocation7], 840
    %v1975 = vpack.c.bf16 0.0, %v1972
    %1977 = vst [vmem:[%s1974] sm:$0xf] %v1975
    %s1978 = scalar_lea.vmem [#allocation7], 844
    %v1979 = vpack.c.bf16 0.0, %v11
    %1981 = vst [vmem:[%s1978] sm:$0xf] %v1979
    %s1982 = scalar_lea.vmem %s3, 636
    %v1983 = vld [vmem:[%s1982] sm:$0xf]
    %v1984 = vunpack.c.l.bf16 %v1983
    %v1985 = vunpack.c.h.bf16 %v1983
    %s1986 = scalar_lea.vmem [#allocation7], 848
    %v1987 = vpack.c.bf16 0.0, %v1984
    %1989 = vst [vmem:[%s1986] sm:$0xf] %v1987
    %s1990 = scalar_lea.vmem %s3, 640
    %v1991 = vld [vmem:[%s1990] sm:$0xf]
    %v1992 = vunpack.c.l.bf16 %v1991
    %v1993 = vunpack.c.h.bf16 %v1991
    %s1994 = scalar_lea.vmem [#allocation7], 852
    %v1995 = vpack.c.bf16 0.0, %v1992
    %1997 = vst [vmem:[%s1994] sm:$0xf] %v1995
    %s1998 = scalar_lea.vmem %s3, 644
    %s2000 = sor.u32 255, 127
    %s2001 = sand.u32 %s2000, 85
    %s2002 = sshrl.u32 %s2001, 1
    %s2003 = sor.u32 %s2001, %s2002
    %s2004 = sand.u32 51, %s2003
    %s2005 = sshrl.u32 %s2004, 2
    %s2006 = sor.u32 %s2004, %s2005
    %s2007 = sand.u32 15, %s2006
    %v2008 = vld [vmem:[%s1998] sm:%s2007]
    %v2009 = vunpack.c.l.bf16 %v2008
    %v2010 = vunpack.c.h.bf16 %v2008
    %s2011 = scalar_lea.vmem [#allocation7], 856
    %v2012 = vpack.c.bf16 0.0, %v2009
    %2014 = vst [vmem:[%s2011] sm:$0xf] %v2012
    %s2015 = scalar_lea.vmem [#allocation7], 860
    %v2016 = vpack.c.bf16 0.0, %v11
    %2018 = vst [vmem:[%s2015] sm:$0xf] %v2016
    %s2019 = scalar_lea.vmem %s3, 648
    %v2020 = vld [vmem:[%s2019] sm:$0xf]
    %v2021 = vunpack.c.l.bf16 %v2020
    %v2022 = vunpack.c.h.bf16 %v2020
    %s2023 = scalar_lea.vmem [#allocation7], 864
    %v2024 = vpack.c.bf16 0.0, %v2021
    %2026 = vst [vmem:[%s2023] sm:$0xf] %v2024
    %s2027 = scalar_lea.vmem %s3, 652
    %v2028 = vld [vmem:[%s2027] sm:$0xf]
    %v2029 = vunpack.c.l.bf16 %v2028
    %v2030 = vunpack.c.h.bf16 %v2028
    %s2031 = scalar_lea.vmem [#allocation7], 868
    %v2032 = vpack.c.bf16 0.0, %v2029
    %2034 = vst [vmem:[%s2031] sm:$0xf] %v2032
    %s2035 = scalar_lea.vmem %s3, 656
    %s2037 = sor.u32 255, 127
    %s2038 = sand.u32 %s2037, 85
    %s2039 = sshrl.u32 %s2038, 1
    %s2040 = sor.u32 %s2038, %s2039
    %s2041 = sand.u32 51, %s2040
    %s2042 = sshrl.u32 %s2041, 2
    %s2043 = sor.u32 %s2041, %s2042
    %s2044 = sand.u32 15, %s2043
    %v2045 = vld [vmem:[%s2035] sm:%s2044]
    %v2046 = vunpack.c.l.bf16 %v2045
    %v2047 = vunpack.c.h.bf16 %v2045
    %s2048 = scalar_lea.vmem [#allocation7], 872
    %v2049 = vpack.c.bf16 0.0, %v2046
    %2051 = vst [vmem:[%s2048] sm:$0xf] %v2049
    %s2052 = scalar_lea.vmem [#allocation7], 876
    %v2053 = vpack.c.bf16 0.0, %v11
    %2055 = vst [vmem:[%s2052] sm:$0xf] %v2053
    %s2056 = scalar_lea.vmem %s3, 660
    %v2057 = vld [vmem:[%s2056] sm:$0xf]
    %v2058 = vunpack.c.l.bf16 %v2057
    %v2059 = vunpack.c.h.bf16 %v2057
    %s2060 = scalar_lea.vmem [#allocation7], 880
    %v2061 = vpack.c.bf16 0.0, %v2058
    %2063 = vst [vmem:[%s2060] sm:$0xf] %v2061
    %s2064 = scalar_lea.vmem %s3, 664
    %v2065 = vld [vmem:[%s2064] sm:$0xf]
    %v2066 = vunpack.c.l.bf16 %v2065
    %v2067 = vunpack.c.h.bf16 %v2065
    %s2068 = scalar_lea.vmem [#allocation7], 884
    %v2069 = vpack.c.bf16 0.0, %v2066
    %2071 = vst [vmem:[%s2068] sm:$0xf] %v2069
    %s2072 = scalar_lea.vmem %s3, 668
    %s2074 = sor.u32 255, 127
    %s2075 = sand.u32 %s2074, 85
    %s2076 = sshrl.u32 %s2075, 1
    %s2077 = sor.u32 %s2075, %s2076
    %s2078 = sand.u32 51, %s2077
    %s2079 = sshrl.u32 %s2078, 2
    %s2080 = sor.u32 %s2078, %s2079
    %s2081 = sand.u32 15, %s2080
    %v2082 = vld [vmem:[%s2072] sm:%s2081]
    %v2083 = vunpack.c.l.bf16 %v2082
    %v2084 = vunpack.c.h.bf16 %v2082
    %s2085 = scalar_lea.vmem [#allocation7], 888
    %v2086 = vpack.c.bf16 0.0, %v2083
    %2088 = vst [vmem:[%s2085] sm:$0xf] %v2086
    %s2089 = scalar_lea.vmem [#allocation7], 892
    %v2090 = vpack.c.bf16 0.0, %v11
    %2092 = vst [vmem:[%s2089] sm:$0xf] %v2090
    %s2093 = scalar_lea.vmem %s3, 672
    %v2094 = vld [vmem:[%s2093] sm:$0xf]
    %v2095 = vunpack.c.l.bf16 %v2094
    %v2096 = vunpack.c.h.bf16 %v2094
    %s2097 = scalar_lea.vmem [#allocation7], 896
    %v2098 = vpack.c.bf16 0.0, %v2095
    %2100 = vst [vmem:[%s2097] sm:$0xf] %v2098
    %s2101 = scalar_lea.vmem %s3, 676
    %v2102 = vld [vmem:[%s2101] sm:$0xf]
    %v2103 = vunpack.c.l.bf16 %v2102
    %v2104 = vunpack.c.h.bf16 %v2102
    %s2105 = scalar_lea.vmem [#allocation7], 900
    %v2106 = vpack.c.bf16 0.0, %v2103
    %2108 = vst [vmem:[%s2105] sm:$0xf] %v2106
    %s2109 = scalar_lea.vmem %s3, 680
    %s2111 = sor.u32 255, 127
    %s2112 = sand.u32 %s2111, 85
    %s2113 = sshrl.u32 %s2112, 1
    %s2114 = sor.u32 %s2112, %s2113
    %s2115 = sand.u32 51, %s2114
    %s2116 = sshrl.u32 %s2115, 2
    %s2117 = sor.u32 %s2115, %s2116
    %s2118 = sand.u32 15, %s2117
    %v2119 = vld [vmem:[%s2109] sm:%s2118]
    %v2120 = vunpack.c.l.bf16 %v2119
    %v2121 = vunpack.c.h.bf16 %v2119
    %s2122 = scalar_lea.vmem [#allocation7], 904
    %v2123 = vpack.c.bf16 0.0, %v2120
    %2125 = vst [vmem:[%s2122] sm:$0xf] %v2123
    %s2126 = scalar_lea.vmem [#allocation7], 908
    %v2127 = vpack.c.bf16 0.0, %v11
    %2129 = vst [vmem:[%s2126] sm:$0xf] %v2127
    %s2130 = scalar_lea.vmem %s3, 684
    %v2131 = vld [vmem:[%s2130] sm:$0xf]
    %v2132 = vunpack.c.l.bf16 %v2131
    %v2133 = vunpack.c.h.bf16 %v2131
    %s2134 = scalar_lea.vmem [#allocation7], 912
    %v2135 = vpack.c.bf16 0.0, %v2132
    %2137 = vst [vmem:[%s2134] sm:$0xf] %v2135
    %s2138 = scalar_lea.vmem %s3, 688
    %v2139 = vld [vmem:[%s2138] sm:$0xf]
    %v2140 = vunpack.c.l.bf16 %v2139
    %v2141 = vunpack.c.h.bf16 %v2139
    %s2142 = scalar_lea.vmem [#allocation7], 916
    %v2143 = vpack.c.bf16 0.0, %v2140
    %2145 = vst [vmem:[%s2142] sm:$0xf] %v2143
    %s2146 = scalar_lea.vmem %s3, 692
    %s2148 = sor.u32 255, 127
    %s2149 = sand.u32 %s2148, 85
    %s2150 = sshrl.u32 %s2149, 1
    %s2151 = sor.u32 %s2149, %s2150
    %s2152 = sand.u32 51, %s2151
    %s2153 = sshrl.u32 %s2152, 2
    %s2154 = sor.u32 %s2152, %s2153
    %s2155 = sand.u32 15, %s2154
    %v2156 = vld [vmem:[%s2146] sm:%s2155]
    %v2157 = vunpack.c.l.bf16 %v2156
    %v2158 = vunpack.c.h.bf16 %v2156
    %s2159 = scalar_lea.vmem [#allocation7], 920
    %v2160 = vpack.c.bf16 0.0, %v2157
    %2162 = vst [vmem:[%s2159] sm:$0xf] %v2160
    %s2163 = scalar_lea.vmem [#allocation7], 924
    %v2164 = vpack.c.bf16 0.0, %v11
    %2166 = vst [vmem:[%s2163] sm:$0xf] %v2164
    %s2167 = scalar_lea.vmem %s3, 696
    %v2168 = vld [vmem:[%s2167] sm:$0xf]
    %v2169 = vunpack.c.l.bf16 %v2168
    %v2170 = vunpack.c.h.bf16 %v2168
    %s2171 = scalar_lea.vmem [#allocation7], 928
    %v2172 = vpack.c.bf16 0.0, %v2169
    %2174 = vst [vmem:[%s2171] sm:$0xf] %v2172
    %s2175 = scalar_lea.vmem %s3, 700
    %v2176 = vld [vmem:[%s2175] sm:$0xf]
    %v2177 = vunpack.c.l.bf16 %v2176
    %v2178 = vunpack.c.h.bf16 %v2176
    %s2179 = scalar_lea.vmem [#allocation7], 932
    %v2180 = vpack.c.bf16 0.0, %v2177
    %2182 = vst [vmem:[%s2179] sm:$0xf] %v2180
    %s2183 = scalar_lea.vmem %s3, 704
    %s2185 = sor.u32 255, 127
    %s2186 = sand.u32 %s2185, 85
    %s2187 = sshrl.u32 %s2186, 1
    %s2188 = sor.u32 %s2186, %s2187
    %s2189 = sand.u32 51, %s2188
    %s2190 = sshrl.u32 %s2189, 2
    %s2191 = sor.u32 %s2189, %s2190
    %s2192 = sand.u32 15, %s2191
    %v2193 = vld [vmem:[%s2183] sm:%s2192]
    %v2194 = vunpack.c.l.bf16 %v2193
    %v2195 = vunpack.c.h.bf16 %v2193
    %s2196 = scalar_lea.vmem [#allocation7], 936
    %v2197 = vpack.c.bf16 0.0, %v2194
    %2199 = vst [vmem:[%s2196] sm:$0xf] %v2197
    %s2200 = scalar_lea.vmem [#allocation7], 940
    %v2201 = vpack.c.bf16 0.0, %v11
    %2203 = vst [vmem:[%s2200] sm:$0xf] %v2201
    %s2204 = scalar_lea.vmem %s3, 708
    %v2205 = vld [vmem:[%s2204] sm:$0xf]
    %v2206 = vunpack.c.l.bf16 %v2205
    %v2207 = vunpack.c.h.bf16 %v2205
    %s2208 = scalar_lea.vmem [#allocation7], 944
    %v2209 = vpack.c.bf16 0.0, %v2206
    %2211 = vst [vmem:[%s2208] sm:$0xf] %v2209
    %s2212 = scalar_lea.vmem %s3, 712
    %v2213 = vld [vmem:[%s2212] sm:$0xf]
    %v2214 = vunpack.c.l.bf16 %v2213
    %v2215 = vunpack.c.h.bf16 %v2213
    %s2216 = scalar_lea.vmem [#allocation7], 948
    %v2217 = vpack.c.bf16 0.0, %v2214
    %2219 = vst [vmem:[%s2216] sm:$0xf] %v2217
    %s2220 = scalar_lea.vmem %s3, 716
    %s2222 = sor.u32 255, 127
    %s2223 = sand.u32 %s2222, 85
    %s2224 = sshrl.u32 %s2223, 1
    %s2225 = sor.u32 %s2223, %s2224
    %s2226 = sand.u32 51, %s2225
    %s2227 = sshrl.u32 %s2226, 2
    %s2228 = sor.u32 %s2226, %s2227
    %s2229 = sand.u32 15, %s2228
    %v2230 = vld [vmem:[%s2220] sm:%s2229]
    %v2231 = vunpack.c.l.bf16 %v2230
    %v2232 = vunpack.c.h.bf16 %v2230
    %s2233 = scalar_lea.vmem [#allocation7], 952
    %v2234 = vpack.c.bf16 0.0, %v2231
    %2236 = vst [vmem:[%s2233] sm:$0xf] %v2234
    %s2237 = scalar_lea.vmem [#allocation7], 956
    %v2238 = vpack.c.bf16 0.0, %v11
    %2240 = vst [vmem:[%s2237] sm:$0xf] %v2238
    %s2241 = scalar_lea.vmem %s3, 720
    %v2242 = vld [vmem:[%s2241] sm:$0xf]
    %v2243 = vunpack.c.l.bf16 %v2242
    %v2244 = vunpack.c.h.bf16 %v2242
    %s2245 = scalar_lea.vmem [#allocation7], 960
    %v2246 = vpack.c.bf16 0.0, %v2243
    %2248 = vst [vmem:[%s2245] sm:$0xf] %v2246
    %s2249 = scalar_lea.vmem %s3, 724
    %v2250 = vld [vmem:[%s2249] sm:$0xf]
    %v2251 = vunpack.c.l.bf16 %v2250
    %v2252 = vunpack.c.h.bf16 %v2250
    %s2253 = scalar_lea.vmem [#allocation7], 964
    %v2254 = vpack.c.bf16 0.0, %v2251
    %2256 = vst [vmem:[%s2253] sm:$0xf] %v2254
    %s2257 = scalar_lea.vmem %s3, 728
    %s2259 = sor.u32 255, 127
    %s2260 = sand.u32 %s2259, 85
    %s2261 = sshrl.u32 %s2260, 1
    %s2262 = sor.u32 %s2260, %s2261
    %s2263 = sand.u32 51, %s2262
    %s2264 = sshrl.u32 %s2263, 2
    %s2265 = sor.u32 %s2263, %s2264
    %s2266 = sand.u32 15, %s2265
    %v2267 = vld [vmem:[%s2257] sm:%s2266]
    %v2268 = vunpack.c.l.bf16 %v2267
    %v2269 = vunpack.c.h.bf16 %v2267
    %s2270 = scalar_lea.vmem [#allocation7], 968
    %v2271 = vpack.c.bf16 0.0, %v2268
    %2273 = vst [vmem:[%s2270] sm:$0xf] %v2271
    %s2274 = scalar_lea.vmem [#allocation7], 972
    %v2275 = vpack.c.bf16 0.0, %v11
    %2277 = vst [vmem:[%s2274] sm:$0xf] %v2275
    %s2278 = scalar_lea.vmem %s3, 732
    %v2279 = vld [vmem:[%s2278] sm:$0xf]
    %v2280 = vunpack.c.l.bf16 %v2279
    %v2281 = vunpack.c.h.bf16 %v2279
    %s2282 = scalar_lea.vmem [#allocation7], 976
    %v2283 = vpack.c.bf16 0.0, %v2280
    %2285 = vst [vmem:[%s2282] sm:$0xf] %v2283
    %s2286 = scalar_lea.vmem %s3, 736
    %v2287 = vld [vmem:[%s2286] sm:$0xf]
    %v2288 = vunpack.c.l.bf16 %v2287
    %v2289 = vunpack.c.h.bf16 %v2287
    %s2290 = scalar_lea.vmem [#allocation7], 980
    %v2291 = vpack.c.bf16 0.0, %v2288
    %2293 = vst [vmem:[%s2290] sm:$0xf] %v2291
    %s2294 = scalar_lea.vmem %s3, 740
    %s2296 = sor.u32 255, 127
    %s2297 = sand.u32 %s2296, 85
    %s2298 = sshrl.u32 %s2297, 1
    %s2299 = sor.u32 %s2297, %s2298
    %s2300 = sand.u32 51, %s2299
    %s2301 = sshrl.u32 %s2300, 2
    %s2302 = sor.u32 %s2300, %s2301
    %s2303 = sand.u32 15, %s2302
    %v2304 = vld [vmem:[%s2294] sm:%s2303]
    %v2305 = vunpack.c.l.bf16 %v2304
    %v2306 = vunpack.c.h.bf16 %v2304
    %s2307 = scalar_lea.vmem [#allocation7], 984
    %v2308 = vpack.c.bf16 0.0, %v2305
    %2310 = vst [vmem:[%s2307] sm:$0xf] %v2308
    %s2311 = scalar_lea.vmem [#allocation7], 988
    %v2312 = vpack.c.bf16 0.0, %v11
    %2314 = vst [vmem:[%s2311] sm:$0xf] %v2312
    %s2315 = scalar_lea.vmem %s3, 744
    %v2316 = vld [vmem:[%s2315] sm:$0xf]
    %v2317 = vunpack.c.l.bf16 %v2316
    %v2318 = vunpack.c.h.bf16 %v2316
    %s2319 = scalar_lea.vmem [#allocation7], 992
    %v2320 = vpack.c.bf16 0.0, %v2317
    %2322 = vst [vmem:[%s2319] sm:$0xf] %v2320
    %s2323 = scalar_lea.vmem %s3, 748
    %v2324 = vld [vmem:[%s2323] sm:$0xf]
    %v2325 = vunpack.c.l.bf16 %v2324
    %v2326 = vunpack.c.h.bf16 %v2324
    %s2327 = scalar_lea.vmem [#allocation7], 996
    %v2328 = vpack.c.bf16 0.0, %v2325
    %2330 = vst [vmem:[%s2327] sm:$0xf] %v2328
    %s2331 = scalar_lea.vmem %s3, 752
    %s2333 = sor.u32 255, 127
    %s2334 = sand.u32 %s2333, 85
    %s2335 = sshrl.u32 %s2334, 1
    %s2336 = sor.u32 %s2334, %s2335
    %s2337 = sand.u32 51, %s2336
    %s2338 = sshrl.u32 %s2337, 2
    %s2339 = sor.u32 %s2337, %s2338
    %s2340 = sand.u32 15, %s2339
    %v2341 = vld [vmem:[%s2331] sm:%s2340]
    %v2342 = vunpack.c.l.bf16 %v2341
    %v2343 = vunpack.c.h.bf16 %v2341
    %s2344 = scalar_lea.vmem [#allocation7], 1000
    %v2345 = vpack.c.bf16 0.0, %v2342
    %2347 = vst [vmem:[%s2344] sm:$0xf] %v2345
    %s2348 = scalar_lea.vmem [#allocation7], 1004
    %v2349 = vpack.c.bf16 0.0, %v11
    %2351 = vst [vmem:[%s2348] sm:$0xf] %v2349
    %s2352 = scalar_lea.vmem %s3, 756
    %v2353 = vld [vmem:[%s2352] sm:$0xf]
    %v2354 = vunpack.c.l.bf16 %v2353
    %v2355 = vunpack.c.h.bf16 %v2353
    %s2356 = scalar_lea.vmem [#allocation7], 1008
    %v2357 = vpack.c.bf16 0.0, %v2354
    %2359 = vst [vmem:[%s2356] sm:$0xf] %v2357
    %s2360 = scalar_lea.vmem %s3, 760
    %v2361 = vld [vmem:[%s2360] sm:$0xf]
    %v2362 = vunpack.c.l.bf16 %v2361
    %v2363 = vunpack.c.h.bf16 %v2361
    %s2364 = scalar_lea.vmem [#allocation7], 1012
    %v2365 = vpack.c.bf16 0.0, %v2362
    %2367 = vst [vmem:[%s2364] sm:$0xf] %v2365
    %s2368 = scalar_lea.vmem %s3, 764
    %s2370 = sor.u32 255, 127
    %s2371 = sand.u32 %s2370, 85
    %s2372 = sshrl.u32 %s2371, 1
    %s2373 = sor.u32 %s2371, %s2372
    %s2374 = sand.u32 51, %s2373
    %s2375 = sshrl.u32 %s2374, 2
    %s2376 = sor.u32 %s2374, %s2375
    %s2377 = sand.u32 15, %s2376
    %v2378 = vld [vmem:[%s2368] sm:%s2377]
    %v2379 = vunpack.c.l.bf16 %v2378
    %v2380 = vunpack.c.h.bf16 %v2378
    %s2381 = scalar_lea.vmem [#allocation7], 1016
    %v2382 = vpack.c.bf16 0.0, %v2379
    %2384 = vst [vmem:[%s2381] sm:$0xf] %v2382
    %s2385 = scalar_lea.vmem [#allocation7], 1020
    %v2386 = vpack.c.bf16 0.0, %v11
    %2388 = vst [vmem:[%s2385] sm:$0xf] %v2386
    %v2389 = vld [vmem:[%s0] sm:$0xff]
    %v2390 = vld [vmem:[%s0 + $0x8] sm:$0xff]
    %v2391 = vld [vmem:[%s0 + $0x10] sm:$0xff]
    %v2392 = vld [vmem:[%s0 + $0x18] sm:$0xff]
    %v2393 = vld [vmem:[#allocation7] sm:$0xff]
    %v2394 = vld [vmem:[#allocation7 + $0x8] sm:$0xff]
    %v2395 = vld [vmem:[#allocation7 + $0x10] sm:$0xff]
    %v2396 = vld [vmem:[#allocation7 + $0x18] sm:$0xff]
    %v2397 = vld [vmem:[#allocation7 + $0x20] sm:$0xff]
    %v2398 = vld [vmem:[#allocation7 + $0x28] sm:$0xff]
    %v2399 = vld [vmem:[#allocation7 + $0x30] sm:$0xff]
    %v2400 = vld [vmem:[#allocation7 + $0x38] sm:$0xff]
    %v2401 = vld [vmem:[#allocation7 + $0x40] sm:$0xff]
    %v2402 = vld [vmem:[#allocation7 + $0x48] sm:$0xff]
    %v2403 = vld [vmem:[#allocation7 + $0x50] sm:$0xff]
    %v2404 = vld [vmem:[#allocation7 + $0x58] sm:$0xff]
    %v2405 = vld [vmem:[#allocation7 + $0x60] sm:$0xff]
    %v2406 = vld [vmem:[#allocation7 + $0x68] sm:$0xff]
    %v2407 = vld [vmem:[#allocation7 + $0x70] sm:$0xff]
    %v2408 = vld [vmem:[#allocation7 + $0x78] sm:$0xff]
    %v2409 = vld [vmem:[#allocation7 + $0x80] sm:$0xff]
    %v2410 = vld [vmem:[#allocation7 + $0x88] sm:$0xff]
    %v2411 = vld [vmem:[#allocation7 + $0x90] sm:$0xff]
    %v2412 = vld [vmem:[#allocation7 + $0x98] sm:$0xff]
    %v2413 = vld [vmem:[#allocation7 + $0xa0] sm:$0xff]
    %v2414 = vld [vmem:[#allocation7 + $0xa8] sm:$0xff]
    %v2415 = vld [vmem:[#allocation7 + $0xb0] sm:$0xff]
    %v2416 = vld [vmem:[#allocation7 + $0xb8] sm:$0xff]
    %v2417 = vld [vmem:[#allocation7 + $0xc0] sm:$0xff]
    %v2418 = vld [vmem:[#allocation7 + $0xc8] sm:$0xff]
    %v2419 = vld [vmem:[#allocation7 + $0xd0] sm:$0xff]
    %v2420 = vld [vmem:[#allocation7 + $0xd8] sm:$0xff]
    %v2421 = vld [vmem:[#allocation7 + $0xe0] sm:$0xff]
    %v2422 = vld [vmem:[#allocation7 + $0xe8] sm:$0xff]
    %v2423 = vld [vmem:[#allocation7 + $0xf0] sm:$0xff]
    %v2424 = vld [vmem:[#allocation7 + $0xf8] sm:$0xff]
    %v2425 = vld [vmem:[#allocation7 + $0x100] sm:$0xff]
    %v2426 = vld [vmem:[#allocation7 + $0x108] sm:$0xff]
    %v2427 = vld [vmem:[#allocation7 + $0x110] sm:$0xff]
    %v2428 = vld [vmem:[#allocation7 + $0x118] sm:$0xff]
    %v2429 = vld [vmem:[#allocation7 + $0x120] sm:$0xff]
    %v2430 = vld [vmem:[#allocation7 + $0x128] sm:$0xff]
    %v2431 = vld [vmem:[#allocation7 + $0x130] sm:$0xff]
    %v2432 = vld [vmem:[#allocation7 + $0x138] sm:$0xff]
    %v2433 = vld [vmem:[#allocation7 + $0x140] sm:$0xff]
    %v2434 = vld [vmem:[#allocation7 + $0x148] sm:$0xff]
    %v2435 = vld [vmem:[#allocation7 + $0x150] sm:$0xff]
    %v2436 = vld [vmem:[#allocation7 + $0x158] sm:$0xff]
    %v2437 = vld [vmem:[#allocation7 + $0x160] sm:$0xff]
    %v2438 = vld [vmem:[#allocation7 + $0x168] sm:$0xff]
    %v2439 = vld [vmem:[#allocation7 + $0x170] sm:$0xff]
    %v2440 = vld [vmem:[#allocation7 + $0x178] sm:$0xff]
    %v2441 = vld [vmem:[#allocation7 + $0x180] sm:$0xff]
    %v2442 = vld [vmem:[#allocation7 + $0x188] sm:$0xff]
    %v2443 = vld [vmem:[#allocation7 + $0x190] sm:$0xff]
    %v2444 = vld [vmem:[#allocation7 + $0x198] sm:$0xff]
    %v2445 = vld [vmem:[#allocation7 + $0x1a0] sm:$0xff]
    %v2446 = vld [vmem:[#allocation7 + $0x1a8] sm:$0xff]
    %v2447 = vld [vmem:[#allocation7 + $0x1b0] sm:$0xff]
    %v2448 = vld [vmem:[#allocation7 + $0x1b8] sm:$0xff]
    %v2449 = vld [vmem:[#allocation7 + $0x1c0] sm:$0xff]
    %v2450 = vld [vmem:[#allocation7 + $0x1c8] sm:$0xff]
    %v2451 = vld [vmem:[#allocation7 + $0x1d0] sm:$0xff]
    %v2452 = vld [vmem:[#allocation7 + $0x1d8] sm:$0xff]
    %v2453 = vld [vmem:[#allocation7 + $0x1e0] sm:$0xff]
    %v2454 = vld [vmem:[#allocation7 + $0x1e8] sm:$0xff]
    %v2455 = vld [vmem:[#allocation7 + $0x1f0] sm:$0xff]
    %v2456 = vld [vmem:[#allocation7 + $0x1f8] sm:$0xff]
    %v2457 = vld [vmem:[#allocation7 + $0x200] sm:$0xff]
    %v2458 = vld [vmem:[#allocation7 + $0x208] sm:$0xff]
    %v2459 = vld [vmem:[#allocation7 + $0x210] sm:$0xff]
    %v2460 = vld [vmem:[#allocation7 + $0x218] sm:$0xff]
    %v2461 = vld [vmem:[#allocation7 + $0x220] sm:$0xff]
    %v2462 = vld [vmem:[#allocation7 + $0x228] sm:$0xff]
    %v2463 = vld [vmem:[#allocation7 + $0x230] sm:$0xff]
    %v2464 = vld [vmem:[#allocation7 + $0x238] sm:$0xff]
    %v2465 = vld [vmem:[#allocation7 + $0x240] sm:$0xff]
    %v2466 = vld [vmem:[#allocation7 + $0x248] sm:$0xff]
    %v2467 = vld [vmem:[#allocation7 + $0x250] sm:$0xff]
    %v2468 = vld [vmem:[#allocation7 + $0x258] sm:$0xff]
    %v2469 = vld [vmem:[#allocation7 + $0x260] sm:$0xff]
    %v2470 = vld [vmem:[#allocation7 + $0x268] sm:$0xff]
    %v2471 = vld [vmem:[#allocation7 + $0x270] sm:$0xff]
    %v2472 = vld [vmem:[#allocation7 + $0x278] sm:$0xff]
    %v2473 = vld [vmem:[#allocation7 + $0x280] sm:$0xff]
    %v2474 = vld [vmem:[#allocation7 + $0x288] sm:$0xff]
    %v2475 = vld [vmem:[#allocation7 + $0x290] sm:$0xff]
    %v2476 = vld [vmem:[#allocation7 + $0x298] sm:$0xff]
    %v2477 = vld [vmem:[#allocation7 + $0x2a0] sm:$0xff]
    %v2478 = vld [vmem:[#allocation7 + $0x2a8] sm:$0xff]
    %v2479 = vld [vmem:[#allocation7 + $0x2b0] sm:$0xff]
    %v2480 = vld [vmem:[#allocation7 + $0x2b8] sm:$0xff]
    %v2481 = vld [vmem:[#allocation7 + $0x2c0] sm:$0xff]
    %v2482 = vld [vmem:[#allocation7 + $0x2c8] sm:$0xff]
    %v2483 = vld [vmem:[#allocation7 + $0x2d0] sm:$0xff]
    %v2484 = vld [vmem:[#allocation7 + $0x2d8] sm:$0xff]
    %v2485 = vld [vmem:[#allocation7 + $0x2e0] sm:$0xff]
    %v2486 = vld [vmem:[#allocation7 + $0x2e8] sm:$0xff]
    %v2487 = vld [vmem:[#allocation7 + $0x2f0] sm:$0xff]
    %v2488 = vld [vmem:[#allocation7 + $0x2f8] sm:$0xff]
    %v2489 = vld [vmem:[#allocation7 + $0x300] sm:$0xff]
    %v2490 = vld [vmem:[#allocation7 + $0x308] sm:$0xff]
    %v2491 = vld [vmem:[#allocation7 + $0x310] sm:$0xff]
    %v2492 = vld [vmem:[#allocation7 + $0x318] sm:$0xff]
    %v2493 = vld [vmem:[#allocation7 + $0x320] sm:$0xff]
    %v2494 = vld [vmem:[#allocation7 + $0x328] sm:$0xff]
    %v2495 = vld [vmem:[#allocation7 + $0x330] sm:$0xff]
    %v2496 = vld [vmem:[#allocation7 + $0x338] sm:$0xff]
    %v2497 = vld [vmem:[#allocation7 + $0x340] sm:$0xff]
    %v2498 = vld [vmem:[#allocation7 + $0x348] sm:$0xff]
    %v2499 = vld [vmem:[#allocation7 + $0x350] sm:$0xff]
    %v2500 = vld [vmem:[#allocation7 + $0x358] sm:$0xff]
    %v2501 = vld [vmem:[#allocation7 + $0x360] sm:$0xff]
    %v2502 = vld [vmem:[#allocation7 + $0x368] sm:$0xff]
    %v2503 = vld [vmem:[#allocation7 + $0x370] sm:$0xff]
    %v2504 = vld [vmem:[#allocation7 + $0x378] sm:$0xff]
    %v2505 = vld [vmem:[#allocation7 + $0x380] sm:$0xff]
    %v2506 = vld [vmem:[#allocation7 + $0x388] sm:$0xff]
    %v2507 = vld [vmem:[#allocation7 + $0x390] sm:$0xff]
    %v2508 = vld [vmem:[#allocation7 + $0x398] sm:$0xff]
    %v2509 = vld [vmem:[#allocation7 + $0x3a0] sm:$0xff]
    %v2510 = vld [vmem:[#allocation7 + $0x3a8] sm:$0xff]
    %v2511 = vld [vmem:[#allocation7 + $0x3b0] sm:$0xff]
    %v2512 = vld [vmem:[#allocation7 + $0x3b8] sm:$0xff]
    %v2513 = vld [vmem:[#allocation7 + $0x3c0] sm:$0xff]
    %v2514 = vld [vmem:[#allocation7 + $0x3c8] sm:$0xff]
    %v2515 = vld [vmem:[#allocation7 + $0x3d0] sm:$0xff]
    %v2516 = vld [vmem:[#allocation7 + $0x3d8] sm:$0xff]
    %v2517 = vld [vmem:[#allocation7 + $0x3e0] sm:$0xff]
    %v2518 = vld [vmem:[#allocation7 + $0x3e8] sm:$0xff]
    %v2519 = vld [vmem:[#allocation7 + $0x3f0] sm:$0xff]
    %v2520 = vld [vmem:[#allocation7 + $0x3f8] sm:$0xff]
    %v2525 = vunpack.c.l.b16 %v2389
    %v2526 = vunpack.c.h.b16 %v2389
    %v2527 = vunpack.c.l.b16 %v2390
    %v2528 = vunpack.c.h.b16 %v2390
    %v2529 = vunpack.c.l.b16 %v2391
    %v2530 = vunpack.c.h.b16 %v2391
    %v2531 = vunpack.c.l.b16 %v2392
    %v2532 = vunpack.c.h.b16 %v2392
    %v2533 = vpack.c.b16 %v2529, %v2525
    %v2534 = vpack.c.b16 %v2530, %v2526
    %v2535 = vpack.c.b16 %v2531, %v2527
    %v2536 = vpack.c.b16 %v2532, %v2528
    %v2669 = vunpack.c.l.b16 %v2393
    %v2670 = vunpack.c.h.b16 %v2393
    %v2671 = vunpack.c.l.b16 %v2394
    %v2672 = vunpack.c.h.b16 %v2394
    %v2673 = vunpack.c.l.b16 %v2395
    %v2674 = vunpack.c.h.b16 %v2395
    %v2675 = vunpack.c.l.b16 %v2396
    %v2676 = vunpack.c.h.b16 %v2396
    %v2677 = vunpack.c.l.b16 %v2397
    %v2678 = vunpack.c.h.b16 %v2397
    %v2679 = vunpack.c.l.b16 %v2398
    %v2680 = vunpack.c.h.b16 %v2398
    %v2681 = vunpack.c.l.b16 %v2399
    %v2682 = vunpack.c.h.b16 %v2399
    %v2683 = vunpack.c.l.b16 %v2400
    %v2684 = vunpack.c.h.b16 %v2400
    %v2685 = vunpack.c.l.b16 %v2401
    %v2686 = vunpack.c.h.b16 %v2401
    %v2687 = vunpack.c.l.b16 %v2402
    %v2688 = vunpack.c.h.b16 %v2402
    %v2689 = vunpack.c.l.b16 %v2403
    %v2690 = vunpack.c.h.b16 %v2403
    %v2691 = vunpack.c.l.b16 %v2404
    %v2692 = vunpack.c.h.b16 %v2404
    %v2693 = vunpack.c.l.b16 %v2405
    %v2694 = vunpack.c.h.b16 %v2405
    %v2695 = vunpack.c.l.b16 %v2406
    %v2696 = vunpack.c.h.b16 %v2406
    %v2697 = vunpack.c.l.b16 %v2407
    %v2698 = vunpack.c.h.b16 %v2407
    %v2699 = vunpack.c.l.b16 %v2408
    %v2700 = vunpack.c.h.b16 %v2408
    %v2701 = vunpack.c.l.b16 %v2409
    %v2702 = vunpack.c.h.b16 %v2409
    %v2703 = vunpack.c.l.b16 %v2410
    %v2704 = vunpack.c.h.b16 %v2410
    %v2705 = vunpack.c.l.b16 %v2411
    %v2706 = vunpack.c.h.b16 %v2411
    %v2707 = vunpack.c.l.b16 %v2412
    %v2708 = vunpack.c.h.b16 %v2412
    %v2709 = vunpack.c.l.b16 %v2413
    %v2710 = vunpack.c.h.b16 %v2413
    %v2711 = vunpack.c.l.b16 %v2414
    %v2712 = vunpack.c.h.b16 %v2414
    %v2713 = vunpack.c.l.b16 %v2415
    %v2714 = vunpack.c.h.b16 %v2415
    %v2715 = vunpack.c.l.b16 %v2416
    %v2716 = vunpack.c.h.b16 %v2416
    %v2717 = vunpack.c.l.b16 %v2417
    %v2718 = vunpack.c.h.b16 %v2417
    %v2719 = vunpack.c.l.b16 %v2418
    %v2720 = vunpack.c.h.b16 %v2418
    %v2721 = vunpack.c.l.b16 %v2419
    %v2722 = vunpack.c.h.b16 %v2419
    %v2723 = vunpack.c.l.b16 %v2420
    %v2724 = vunpack.c.h.b16 %v2420
    %v2725 = vunpack.c.l.b16 %v2421
    %v2726 = vunpack.c.h.b16 %v2421
    %v2727 = vunpack.c.l.b16 %v2422
    %v2728 = vunpack.c.h.b16 %v2422
    %v2729 = vunpack.c.l.b16 %v2423
    %v2730 = vunpack.c.h.b16 %v2423
    %v2731 = vunpack.c.l.b16 %v2424
    %v2732 = vunpack.c.h.b16 %v2424
    %v2733 = vunpack.c.l.b16 %v2425
    %v2734 = vunpack.c.h.b16 %v2425
    %v2735 = vunpack.c.l.b16 %v2426
    %v2736 = vunpack.c.h.b16 %v2426
    %v2737 = vunpack.c.l.b16 %v2427
    %v2738 = vunpack.c.h.b16 %v2427
    %v2739 = vunpack.c.l.b16 %v2428
    %v2740 = vunpack.c.h.b16 %v2428
    %v2741 = vunpack.c.l.b16 %v2429
    %v2742 = vunpack.c.h.b16 %v2429
    %v2743 = vunpack.c.l.b16 %v2430
    %v2744 = vunpack.c.h.b16 %v2430
    %v2745 = vunpack.c.l.b16 %v2431
    %v2746 = vunpack.c.h.b16 %v2431
    %v2747 = vunpack.c.l.b16 %v2432
    %v2748 = vunpack.c.h.b16 %v2432
    %v2749 = vunpack.c.l.b16 %v2433
    %v2750 = vunpack.c.h.b16 %v2433
    %v2751 = vunpack.c.l.b16 %v2434
    %v2752 = vunpack.c.h.b16 %v2434
    %v2753 = vunpack.c.l.b16 %v2435
    %v2754 = vunpack.c.h.b16 %v2435
    %v2755 = vunpack.c.l.b16 %v2436
    %v2756 = vunpack.c.h.b16 %v2436
    %v2757 = vunpack.c.l.b16 %v2437
    %v2758 = vunpack.c.h.b16 %v2437
    %v2759 = vunpack.c.l.b16 %v2438
    %v2760 = vunpack.c.h.b16 %v2438
    %v2761 = vunpack.c.l.b16 %v2439
    %v2762 = vunpack.c.h.b16 %v2439
    %v2763 = vunpack.c.l.b16 %v2440
    %v2764 = vunpack.c.h.b16 %v2440
    %v2765 = vunpack.c.l.b16 %v2441
    %v2766 = vunpack.c.h.b16 %v2441
    %v2767 = vunpack.c.l.b16 %v2442
    %v2768 = vunpack.c.h.b16 %v2442
    %v2769 = vunpack.c.l.b16 %v2443
    %v2770 = vunpack.c.h.b16 %v2443
    %v2771 = vunpack.c.l.b16 %v2444
    %v2772 = vunpack.c.h.b16 %v2444
    %v2773 = vunpack.c.l.b16 %v2445
    %v2774 = vunpack.c.h.b16 %v2445
    %v2775 = vunpack.c.l.b16 %v2446
    %v2776 = vunpack.c.h.b16 %v2446
    %v2777 = vunpack.c.l.b16 %v2447
    %v2778 = vunpack.c.h.b16 %v2447
    %v2779 = vunpack.c.l.b16 %v2448
    %v2780 = vunpack.c.h.b16 %v2448
    %v2781 = vunpack.c.l.b16 %v2449
    %v2782 = vunpack.c.h.b16 %v2449
    %v2783 = vunpack.c.l.b16 %v2450
    %v2784 = vunpack.c.h.b16 %v2450
    %v2785 = vunpack.c.l.b16 %v2451
    %v2786 = vunpack.c.h.b16 %v2451
    %v2787 = vunpack.c.l.b16 %v2452
    %v2788 = vunpack.c.h.b16 %v2452
    %v2789 = vunpack.c.l.b16 %v2453
    %v2790 = vunpack.c.h.b16 %v2453
    %v2791 = vunpack.c.l.b16 %v2454
    %v2792 = vunpack.c.h.b16 %v2454
    %v2793 = vunpack.c.l.b16 %v2455
    %v2794 = vunpack.c.h.b16 %v2455
    %v2795 = vunpack.c.l.b16 %v2456
    %v2796 = vunpack.c.h.b16 %v2456
    %v2797 = vunpack.c.l.b16 %v2457
    %v2798 = vunpack.c.h.b16 %v2457
    %v2799 = vunpack.c.l.b16 %v2458
    %v2800 = vunpack.c.h.b16 %v2458
    %v2801 = vunpack.c.l.b16 %v2459
    %v2802 = vunpack.c.h.b16 %v2459
    %v2803 = vunpack.c.l.b16 %v2460
    %v2804 = vunpack.c.h.b16 %v2460
    %v2805 = vunpack.c.l.b16 %v2461
    %v2806 = vunpack.c.h.b16 %v2461
    %v2807 = vunpack.c.l.b16 %v2462
    %v2808 = vunpack.c.h.b16 %v2462
    %v2809 = vunpack.c.l.b16 %v2463
    %v2810 = vunpack.c.h.b16 %v2463
    %v2811 = vunpack.c.l.b16 %v2464
    %v2812 = vunpack.c.h.b16 %v2464
    %v2813 = vunpack.c.l.b16 %v2465
    %v2814 = vunpack.c.h.b16 %v2465
    %v2815 = vunpack.c.l.b16 %v2466
    %v2816 = vunpack.c.h.b16 %v2466
    %v2817 = vunpack.c.l.b16 %v2467
    %v2818 = vunpack.c.h.b16 %v2467
    %v2819 = vunpack.c.l.b16 %v2468
    %v2820 = vunpack.c.h.b16 %v2468
    %v2821 = vunpack.c.l.b16 %v2469
    %v2822 = vunpack.c.h.b16 %v2469
    %v2823 = vunpack.c.l.b16 %v2470
    %v2824 = vunpack.c.h.b16 %v2470
    %v2825 = vunpack.c.l.b16 %v2471
    %v2826 = vunpack.c.h.b16 %v2471
    %v2827 = vunpack.c.l.b16 %v2472
    %v2828 = vunpack.c.h.b16 %v2472
    %v2829 = vunpack.c.l.b16 %v2473
    %v2830 = vunpack.c.h.b16 %v2473
    %v2831 = vunpack.c.l.b16 %v2474
    %v2832 = vunpack.c.h.b16 %v2474
    %v2833 = vunpack.c.l.b16 %v2475
    %v2834 = vunpack.c.h.b16 %v2475
    %v2835 = vunpack.c.l.b16 %v2476
    %v2836 = vunpack.c.h.b16 %v2476
    %v2837 = vunpack.c.l.b16 %v2477
    %v2838 = vunpack.c.h.b16 %v2477
    %v2839 = vunpack.c.l.b16 %v2478
    %v2840 = vunpack.c.h.b16 %v2478
    %v2841 = vunpack.c.l.b16 %v2479
    %v2842 = vunpack.c.h.b16 %v2479
    %v2843 = vunpack.c.l.b16 %v2480
    %v2844 = vunpack.c.h.b16 %v2480
    %v2845 = vunpack.c.l.b16 %v2481
    %v2846 = vunpack.c.h.b16 %v2481
    %v2847 = vunpack.c.l.b16 %v2482
    %v2848 = vunpack.c.h.b16 %v2482
    %v2849 = vunpack.c.l.b16 %v2483
    %v2850 = vunpack.c.h.b16 %v2483
    %v2851 = vunpack.c.l.b16 %v2484
    %v2852 = vunpack.c.h.b16 %v2484
    %v2853 = vunpack.c.l.b16 %v2485
    %v2854 = vunpack.c.h.b16 %v2485
    %v2855 = vunpack.c.l.b16 %v2486
    %v2856 = vunpack.c.h.b16 %v2486
    %v2857 = vunpack.c.l.b16 %v2487
    %v2858 = vunpack.c.h.b16 %v2487
    %v2859 = vunpack.c.l.b16 %v2488
    %v2860 = vunpack.c.h.b16 %v2488
    %v2861 = vunpack.c.l.b16 %v2489
    %v2862 = vunpack.c.h.b16 %v2489
    %v2863 = vunpack.c.l.b16 %v2490
    %v2864 = vunpack.c.h.b16 %v2490
    %v2865 = vunpack.c.l.b16 %v2491
    %v2866 = vunpack.c.h.b16 %v2491
    %v2867 = vunpack.c.l.b16 %v2492
    %v2868 = vunpack.c.h.b16 %v2492
    %v2869 = vunpack.c.l.b16 %v2493
    %v2870 = vunpack.c.h.b16 %v2493
    %v2871 = vunpack.c.l.b16 %v2494
    %v2872 = vunpack.c.h.b16 %v2494
    %v2873 = vunpack.c.l.b16 %v2495
    %v2874 = vunpack.c.h.b16 %v2495
    %v2875 = vunpack.c.l.b16 %v2496
    %v2876 = vunpack.c.h.b16 %v2496
    %v2877 = vunpack.c.l.b16 %v2497
    %v2878 = vunpack.c.h.b16 %v2497
    %v2879 = vunpack.c.l.b16 %v2498
    %v2880 = vunpack.c.h.b16 %v2498
    %v2881 = vunpack.c.l.b16 %v2499
    %v2882 = vunpack.c.h.b16 %v2499
    %v2883 = vunpack.c.l.b16 %v2500
    %v2884 = vunpack.c.h.b16 %v2500
    %v2885 = vunpack.c.l.b16 %v2501
    %v2886 = vunpack.c.h.b16 %v2501
    %v2887 = vunpack.c.l.b16 %v2502
    %v2888 = vunpack.c.h.b16 %v2502
    %v2889 = vunpack.c.l.b16 %v2503
    %v2890 = vunpack.c.h.b16 %v2503
    %v2891 = vunpack.c.l.b16 %v2504
    %v2892 = vunpack.c.h.b16 %v2504
    %v2893 = vunpack.c.l.b16 %v2505
    %v2894 = vunpack.c.h.b16 %v2505
    %v2895 = vunpack.c.l.b16 %v2506
    %v2896 = vunpack.c.h.b16 %v2506
    %v2897 = vunpack.c.l.b16 %v2507
    %v2898 = vunpack.c.h.b16 %v2507
    %v2899 = vunpack.c.l.b16 %v2508
    %v2900 = vunpack.c.h.b16 %v2508
    %v2901 = vunpack.c.l.b16 %v2509
    %v2902 = vunpack.c.h.b16 %v2509
    %v2903 = vunpack.c.l.b16 %v2510
    %v2904 = vunpack.c.h.b16 %v2510
    %v2905 = vunpack.c.l.b16 %v2511
    %v2906 = vunpack.c.h.b16 %v2511
    %v2907 = vunpack.c.l.b16 %v2512
    %v2908 = vunpack.c.h.b16 %v2512
    %v2909 = vunpack.c.l.b16 %v2513
    %v2910 = vunpack.c.h.b16 %v2513
    %v2911 = vunpack.c.l.b16 %v2514
    %v2912 = vunpack.c.h.b16 %v2514
    %v2913 = vunpack.c.l.b16 %v2515
    %v2914 = vunpack.c.h.b16 %v2515
    %v2915 = vunpack.c.l.b16 %v2516
    %v2916 = vunpack.c.h.b16 %v2516
    %v2917 = vunpack.c.l.b16 %v2517
    %v2918 = vunpack.c.h.b16 %v2517
    %v2919 = vunpack.c.l.b16 %v2518
    %v2920 = vunpack.c.h.b16 %v2518
    %v2921 = vunpack.c.l.b16 %v2519
    %v2922 = vunpack.c.h.b16 %v2519
    %v2923 = vunpack.c.l.b16 %v2520
    %v2924 = vunpack.c.h.b16 %v2520
    %v2925 = vpack.c.b16 %v2673, %v2669
    %v2926 = vpack.c.b16 %v2674, %v2670
    %v2927 = vpack.c.b16 %v2675, %v2671
    %v2928 = vpack.c.b16 %v2676, %v2672
    %v2929 = vpack.c.b16 %v2681, %v2677
    %v2930 = vpack.c.b16 %v2682, %v2678
    %v2931 = vpack.c.b16 %v2683, %v2679
    %v2932 = vpack.c.b16 %v2684, %v2680
    %v2933 = vpack.c.b16 %v2689, %v2685
    %v2934 = vpack.c.b16 %v2690, %v2686
    %v2935 = vpack.c.b16 %v2691, %v2687
    %v2936 = vpack.c.b16 %v2692, %v2688
    %v2937 = vpack.c.b16 %v2697, %v2693
    %v2938 = vpack.c.b16 %v2698, %v2694
    %v2939 = vpack.c.b16 %v2699, %v2695
    %v2940 = vpack.c.b16 %v2700, %v2696
    %v2941 = vpack.c.b16 %v2705, %v2701
    %v2942 = vpack.c.b16 %v2706, %v2702
    %v2943 = vpack.c.b16 %v2707, %v2703
    %v2944 = vpack.c.b16 %v2708, %v2704
    %v2945 = vpack.c.b16 %v2713, %v2709
    %v2946 = vpack.c.b16 %v2714, %v2710
    %v2947 = vpack.c.b16 %v2715, %v2711
    %v2948 = vpack.c.b16 %v2716, %v2712
    %v2949 = vpack.c.b16 %v2721, %v2717
    %v2950 = vpack.c.b16 %v2722, %v2718
    %v2951 = vpack.c.b16 %v2723, %v2719
    %v2952 = vpack.c.b16 %v2724, %v2720
    %v2953 = vpack.c.b16 %v2729, %v2725
    %v2954 = vpack.c.b16 %v2730, %v2726
    %v2955 = vpack.c.b16 %v2731, %v2727
    %v2956 = vpack.c.b16 %v2732, %v2728
    %v2957 = vpack.c.b16 %v2737, %v2733
    %v2958 = vpack.c.b16 %v2738, %v2734
    %v2959 = vpack.c.b16 %v2739, %v2735
    %v2960 = vpack.c.b16 %v2740, %v2736
    %v2961 = vpack.c.b16 %v2745, %v2741
    %v2962 = vpack.c.b16 %v2746, %v2742
    %v2963 = vpack.c.b16 %v2747, %v2743
    %v2964 = vpack.c.b16 %v2748, %v2744
    %v2965 = vpack.c.b16 %v2753, %v2749
    %v2966 = vpack.c.b16 %v2754, %v2750
    %v2967 = vpack.c.b16 %v2755, %v2751
    %v2968 = vpack.c.b16 %v2756, %v2752
    %v2969 = vpack.c.b16 %v2761, %v2757
    %v2970 = vpack.c.b16 %v2762, %v2758
    %v2971 = vpack.c.b16 %v2763, %v2759
    %v2972 = vpack.c.b16 %v2764, %v2760
    %v2973 = vpack.c.b16 %v2769, %v2765
    %v2974 = vpack.c.b16 %v2770, %v2766
    %v2975 = vpack.c.b16 %v2771, %v2767
    %v2976 = vpack.c.b16 %v2772, %v2768
    %v2977 = vpack.c.b16 %v2777, %v2773
    %v2978 = vpack.c.b16 %v2778, %v2774
    %v2979 = vpack.c.b16 %v2779, %v2775
    %v2980 = vpack.c.b16 %v2780, %v2776
    %v2981 = vpack.c.b16 %v2785, %v2781
    %v2982 = vpack.c.b16 %v2786, %v2782
    %v2983 = vpack.c.b16 %v2787, %v2783
    %v2984 = vpack.c.b16 %v2788, %v2784
    %v2985 = vpack.c.b16 %v2793, %v2789
    %v2986 = vpack.c.b16 %v2794, %v2790
    %v2987 = vpack.c.b16 %v2795, %v2791
    %v2988 = vpack.c.b16 %v2796, %v2792
    %v2989 = vpack.c.b16 %v2801, %v2797
    %v2990 = vpack.c.b16 %v2802, %v2798
    %v2991 = vpack.c.b16 %v2803, %v2799
    %v2992 = vpack.c.b16 %v2804, %v2800
    %v2993 = vpack.c.b16 %v2809, %v2805
    %v2994 = vpack.c.b16 %v2810, %v2806
    %v2995 = vpack.c.b16 %v2811, %v2807
    %v2996 = vpack.c.b16 %v2812, %v2808
    %v2997 = vpack.c.b16 %v2817, %v2813
    %v2998 = vpack.c.b16 %v2818, %v2814
    %v2999 = vpack.c.b16 %v2819, %v2815
    %v3000 = vpack.c.b16 %v2820, %v2816
    %v3001 = vpack.c.b16 %v2825, %v2821
    %v3002 = vpack.c.b16 %v2826, %v2822
    %v3003 = vpack.c.b16 %v2827, %v2823
    %v3004 = vpack.c.b16 %v2828, %v2824
    %v3005 = vpack.c.b16 %v2833, %v2829
    %v3006 = vpack.c.b16 %v2834, %v2830
    %v3007 = vpack.c.b16 %v2835, %v2831
    %v3008 = vpack.c.b16 %v2836, %v2832
    %v3009 = vpack.c.b16 %v2841, %v2837
    %v3010 = vpack.c.b16 %v2842, %v2838
    %v3011 = vpack.c.b16 %v2843, %v2839
    %v3012 = vpack.c.b16 %v2844, %v2840
    %v3013 = vpack.c.b16 %v2849, %v2845
    %v3014 = vpack.c.b16 %v2850, %v2846
    %v3015 = vpack.c.b16 %v2851, %v2847
    %v3016 = vpack.c.b16 %v2852, %v2848
    %v3017 = vpack.c.b16 %v2857, %v2853
    %v3018 = vpack.c.b16 %v2858, %v2854
    %v3019 = vpack.c.b16 %v2859, %v2855
    %v3020 = vpack.c.b16 %v2860, %v2856
    %v3021 = vpack.c.b16 %v2865, %v2861
    %v3022 = vpack.c.b16 %v2866, %v2862
    %v3023 = vpack.c.b16 %v2867, %v2863
    %v3024 = vpack.c.b16 %v2868, %v2864
    %v3025 = vpack.c.b16 %v2873, %v2869
    %v3026 = vpack.c.b16 %v2874, %v2870
    %v3027 = vpack.c.b16 %v2875, %v2871
    %v3028 = vpack.c.b16 %v2876, %v2872
    %v3029 = vpack.c.b16 %v2881, %v2877
    %v3030 = vpack.c.b16 %v2882, %v2878
    %v3031 = vpack.c.b16 %v2883, %v2879
    %v3032 = vpack.c.b16 %v2884, %v2880
    %v3033 = vpack.c.b16 %v2889, %v2885
    %v3034 = vpack.c.b16 %v2890, %v2886
    %v3035 = vpack.c.b16 %v2891, %v2887
    %v3036 = vpack.c.b16 %v2892, %v2888
    %v3037 = vpack.c.b16 %v2897, %v2893
    %v3038 = vpack.c.b16 %v2898, %v2894
    %v3039 = vpack.c.b16 %v2899, %v2895
    %v3040 = vpack.c.b16 %v2900, %v2896
    %v3041 = vpack.c.b16 %v2905, %v2901
    %v3042 = vpack.c.b16 %v2906, %v2902
    %v3043 = vpack.c.b16 %v2907, %v2903
    %v3044 = vpack.c.b16 %v2908, %v2904
    %v3045 = vpack.c.b16 %v2913, %v2909
    %v3046 = vpack.c.b16 %v2914, %v2910
    %v3047 = vpack.c.b16 %v2915, %v2911
    %v3048 = vpack.c.b16 %v2916, %v2912
    %v3049 = vpack.c.b16 %v2921, %v2917
    %v3050 = vpack.c.b16 %v2922, %v2918
    %v3051 = vpack.c.b16 %v2923, %v2919
    %v3052 = vpack.c.b16 %v2924, %v2920
    %3181 = vmatprep.subr.bf16.mxu0 %v2926
    %3182 = vmatpush1.bf16.msra.mxu0 %v2925
    %3183 = vmatprep.subr.bf16.mxu0 %v2930
    %3184 = vmatpush1.bf16.msra.mxu0 %v2929
    %3185 = vmatprep.subr.bf16.mxu0 %v2934
    %3186 = vmatpush1.bf16.msra.mxu0 %v2933
    %3187 = vmatprep.subr.bf16.mxu0 %v2938
    %3188 = vmatpush1.bf16.msra.mxu0 %v2937
    %3189 = vmatprep.subr.bf16.mxu0 %v2942
    %3190 = vmatpush1.bf16.msra.mxu0 %v2941
    %3191 = vmatprep.subr.bf16.mxu0 %v2946
    %3192 = vmatpush1.bf16.msra.mxu0 %v2945
    %3193 = vmatprep.subr.bf16.mxu0 %v2950
    %3194 = vmatpush1.bf16.msra.mxu0 %v2949
    %3195 = vmatprep.subr.bf16.mxu0 %v2954
    %3196 = vmatpush1.bf16.msra.mxu0 %v2953
    %3197 = vmatprep.subr.bf16.mxu0 %v2958
    %3198 = vmatpush1.bf16.msra.mxu0 %v2957
    %3199 = vmatprep.subr.bf16.mxu0 %v2962
    %3200 = vmatpush1.bf16.msra.mxu0 %v2961
    %3201 = vmatprep.subr.bf16.mxu0 %v2966
    %3202 = vmatpush1.bf16.msra.mxu0 %v2965
    %3203 = vmatprep.subr.bf16.mxu0 %v2970
    %3204 = vmatpush1.bf16.msra.mxu0 %v2969
    %3205 = vmatprep.subr.bf16.mxu0 %v2974
    %3206 = vmatpush1.bf16.msra.mxu0 %v2973
    %3207 = vmatprep.subr.bf16.mxu0 %v2978
    %3208 = vmatpush1.bf16.msra.mxu0 %v2977
    %3209 = vmatprep.subr.bf16.mxu0 %v2982
    %3210 = vmatpush1.bf16.msra.mxu0 %v2981
    %3211 = vmatprep.subr.bf16.mxu0 %v2986
    %3212 = vmatpush1.bf16.msra.mxu0 %v2985
    %3213 = vmatprep.mubr.bf16.mxu0 %v2534
    %3214 = vmatmul.mubr.bf16.gmra.mrb[0].mxu0 %v2533
    %v3215 = vpop.f32.mrb[0].mxu0
    %v3216 = vadd.f32 0.0, %v3215
    %v3217 = vpop.f32.mrb[0].mxu0
    %v3218 = vadd.f32 0.0, %v3217
    %v3219 = vpop.f32.mrb[0].mxu0
    %v3220 = vadd.f32 0.0, %v3219
    %v3221 = vpop.f32.mrb[0].mxu0
    %v3222 = vadd.f32 0.0, %v3221
    %3223 = vdwg.mxu0
    %3224 = vmatprep.subr.bf16.mxu0 %v2990
    %3225 = vmatpush1.bf16.msra.mxu0 %v2989
    %3226 = vmatprep.subr.bf16.mxu0 %v2994
    %3227 = vmatpush1.bf16.msra.mxu0 %v2993
    %3228 = vmatprep.subr.bf16.mxu0 %v2998
    %3229 = vmatpush1.bf16.msra.mxu0 %v2997
    %3230 = vmatprep.subr.bf16.mxu0 %v3002
    %3231 = vmatpush1.bf16.msra.mxu0 %v3001
    %3232 = vmatprep.subr.bf16.mxu0 %v3006
    %3233 = vmatpush1.bf16.msra.mxu0 %v3005
    %3234 = vmatprep.subr.bf16.mxu0 %v3010
    %3235 = vmatpush1.bf16.msra.mxu0 %v3009
    %3236 = vmatprep.subr.bf16.mxu0 %v3014
    %3237 = vmatpush1.bf16.msra.mxu0 %v3013
    %3238 = vmatprep.subr.bf16.mxu0 %v3018
    %3239 = vmatpush1.bf16.msra.mxu0 %v3017
    %3240 = vmatprep.subr.bf16.mxu0 %v3022
    %3241 = vmatpush1.bf16.msra.mxu0 %v3021
    %3242 = vmatprep.subr.bf16.mxu0 %v3026
    %3243 = vmatpush1.bf16.msra.mxu0 %v3025
    %3244 = vmatprep.subr.bf16.mxu0 %v3030
    %3245 = vmatpush1.bf16.msra.mxu0 %v3029
    %3246 = vmatprep.subr.bf16.mxu0 %v3034
    %3247 = vmatpush1.bf16.msra.mxu0 %v3033
    %3248 = vmatprep.subr.bf16.mxu0 %v3038
    %3249 = vmatpush1.bf16.msra.mxu0 %v3037
    %3250 = vmatprep.subr.bf16.mxu0 %v3042
    %3251 = vmatpush1.bf16.msra.mxu0 %v3041
    %3252 = vmatprep.subr.bf16.mxu0 %v3046
    %3253 = vmatpush1.bf16.msra.mxu0 %v3045
    %3254 = vmatprep.subr.bf16.mxu0 %v3050
    %3255 = vmatpush1.bf16.msra.mxu0 %v3049
    %3256 = vmatprep.mubr.bf16.mxu0 %v2536
    %3257 = vmatmul.mubr.bf16.gmra.mrb[0].mxu0 %v2535
    %v3258 = vpop.f32.mrb[0].mxu0
    %v3259 = vadd.f32 %v3216, %v3258
    %v3260 = vpop.f32.mrb[0].mxu0
    %v3261 = vadd.f32 %v3218, %v3260
    %v3262 = vpop.f32.mrb[0].mxu0
    %v3263 = vadd.f32 %v3220, %v3262
    %v3264 = vpop.f32.mrb[0].mxu0
    %v3265 = vadd.f32 %v3222, %v3264
    %3266 = vdwg.mxu0
    %3267 = vmatprep.subr.bf16.mxu0 %v2928
    %3268 = vmatpush1.bf16.msra.mxu0 %v2927
    %3269 = vmatprep.subr.bf16.mxu0 %v2932
    %3270 = vmatpush1.bf16.msra.mxu0 %v2931
    %3271 = vmatprep.subr.bf16.mxu0 %v2936
    %3272 = vmatpush1.bf16.msra.mxu0 %v2935
    %3273 = vmatprep.subr.bf16.mxu0 %v2940
    %3274 = vmatpush1.bf16.msra.mxu0 %v2939
    %3275 = vmatprep.subr.bf16.mxu0 %v2944
    %3276 = vmatpush1.bf16.msra.mxu0 %v2943
    %3277 = vmatprep.subr.bf16.mxu0 %v2948
    %3278 = vmatpush1.bf16.msra.mxu0 %v2947
    %3279 = vmatprep.subr.bf16.mxu0 %v2952
    %3280 = vmatpush1.bf16.msra.mxu0 %v2951
    %3281 = vmatprep.subr.bf16.mxu0 %v2956
    %3282 = vmatpush1.bf16.msra.mxu0 %v2955
    %3283 = vmatprep.subr.bf16.mxu0 %v2960
    %3284 = vmatpush1.bf16.msra.mxu0 %v2959
    %3285 = vmatprep.subr.bf16.mxu0 %v2964
    %3286 = vmatpush1.bf16.msra.mxu0 %v2963
    %3287 = vmatprep.subr.bf16.mxu0 %v2968
    %3288 = vmatpush1.bf16.msra.mxu0 %v2967
    %3289 = vmatprep.subr.bf16.mxu0 %v2972
    %3290 = vmatpush1.bf16.msra.mxu0 %v2971
    %3291 = vmatprep.subr.bf16.mxu0 %v2976
    %3292 = vmatpush1.bf16.msra.mxu0 %v2975
    %3293 = vmatprep.subr.bf16.mxu0 %v2980
    %3294 = vmatpush1.bf16.msra.mxu0 %v2979
    %3295 = vmatprep.subr.bf16.mxu0 %v2984
    %3296 = vmatpush1.bf16.msra.mxu0 %v2983
    %3297 = vmatprep.subr.bf16.mxu0 %v2988
    %3298 = vmatpush1.bf16.msra.mxu0 %v2987
    %3299 = vmatprep.mubr.bf16.mxu0 %v2534
    %3300 = vmatmul.mubr.bf16.gmra.mrb[0].mxu0 %v2533
    %v3301 = vpop.f32.mrb[0].mxu0
    %v3302 = vadd.f32 0.0, %v3301
    %v3303 = vpop.f32.mrb[0].mxu0
    %v3304 = vadd.f32 0.0, %v3303
    %v3305 = vpop.f32.mrb[0].mxu0
    %v3306 = vadd.f32 0.0, %v3305
    %v3307 = vpop.f32.mrb[0].mxu0
    %v3308 = vadd.f32 0.0, %v3307
    %3309 = vdwg.mxu0
    %3310 = vmatprep.subr.bf16.mxu0 %v2992
    %3311 = vmatpush1.bf16.msra.mxu0 %v2991
    %3312 = vmatprep.subr.bf16.mxu0 %v2996
    %3313 = vmatpush1.bf16.msra.mxu0 %v2995
    %3314 = vmatprep.subr.bf16.mxu0 %v3000
    %3315 = vmatpush1.bf16.msra.mxu0 %v2999
    %3316 = vmatprep.subr.bf16.mxu0 %v3004
    %3317 = vmatpush1.bf16.msra.mxu0 %v3003
    %3318 = vmatprep.subr.bf16.mxu0 %v3008
    %3319 = vmatpush1.bf16.msra.mxu0 %v3007
    %3320 = vmatprep.subr.bf16.mxu0 %v3012
    %3321 = vmatpush1.bf16.msra.mxu0 %v3011
    %3322 = vmatprep.subr.bf16.mxu0 %v3016
    %3323 = vmatpush1.bf16.msra.mxu0 %v3015
    %3324 = vmatprep.subr.bf16.mxu0 %v3020
    %3325 = vmatpush1.bf16.msra.mxu0 %v3019
    %3326 = vmatprep.subr.bf16.mxu0 %v3024
    %3327 = vmatpush1.bf16.msra.mxu0 %v3023
    %3328 = vmatprep.subr.bf16.mxu0 %v3028
    %3329 = vmatpush1.bf16.msra.mxu0 %v3027
    %3330 = vmatprep.subr.bf16.mxu0 %v3032
    %3331 = vmatpush1.bf16.msra.mxu0 %v3031
    %3332 = vmatprep.subr.bf16.mxu0 %v3036
    %3333 = vmatpush1.bf16.msra.mxu0 %v3035
    %3334 = vmatprep.subr.bf16.mxu0 %v3040
    %3335 = vmatpush1.bf16.msra.mxu0 %v3039
    %3336 = vmatprep.subr.bf16.mxu0 %v3044
    %3337 = vmatpush1.bf16.msra.mxu0 %v3043
    %3338 = vmatprep.subr.bf16.mxu0 %v3048
    %3339 = vmatpush1.bf16.msra.mxu0 %v3047
    %3340 = vmatprep.subr.bf16.mxu0 %v3052
    %3341 = vmatpush1.bf16.msra.mxu0 %v3051
    %3342 = vmatprep.mubr.bf16.mxu0 %v2536
    %3343 = vmatmul.mubr.bf16.gmra.mrb[0].mxu0 %v2535
    %v3344 = vpop.f32.mrb[0].mxu0
    %v3345 = vadd.f32 %v3302, %v3344
    %v3346 = vpop.f32.mrb[0].mxu0
    %v3347 = vadd.f32 %v3304, %v3346
    %v3348 = vpop.f32.mrb[0].mxu0
    %v3349 = vadd.f32 %v3306, %v3348
    %v3350 = vpop.f32.mrb[0].mxu0
    %v3351 = vadd.f32 %v3308, %v3350
    %3352 = vdwg.mxu0
    %v3353 = vadd.f32 %v3259, %v3261
    %v3354 = vadd.f32 %v3353, %v3345
    %v3355 = vadd.f32 %v3354, %v3347
    %3356 = vadd.xlane.f32.xlu0 %v3355
    %v3357 = vpop.xlane.xlu0 %3356
    %v3358 = vadd.f32 %v3263, %v3265
    %v3359 = vadd.f32 %v3358, %v3349
    %v3360 = vadd.f32 %v3359, %v3351
    %3361 = vadd.xlane.f32.xlu0 %v3360
    %v3362 = vpop.xlane.xlu0 %3361
    %v3363 = vmul.f32 %v3357, 0.0026041667
    %v3364 = vmul.f32 %v3362, 0.0026041667
    %v3365 = vmul.f32 %v3259, %v3259
    %v3366 = vmul.f32 %v3261, %v3261
    %v3367 = vmul.f32 %v3345, %v3345
    %v3368 = vmul.f32 %v3347, %v3347
    %v3369 = vmul.f32 %v3263, %v3263
    %v3370 = vmul.f32 %v3265, %v3265
    %v3371 = vmul.f32 %v3349, %v3349
    %v3372 = vmul.f32 %v3351, %v3351
    %v3373 = vadd.f32 %v3365, %v3366
    %v3374 = vadd.f32 %v3373, %v3367
    %v3375 = vadd.f32 %v3374, %v3368
    %3376 = vadd.xlane.f32.xlu0 %v3375
    %v3377 = vpop.xlane.xlu0 %3376
    %v3378 = vadd.f32 %v3369, %v3370
    %v3379 = vadd.f32 %v3378, %v3371
    %v3380 = vadd.f32 %v3379, %v3372
    %3381 = vadd.xlane.f32.xlu0 %v3380
    %v3382 = vpop.xlane.xlu0 %3381
    %v3383 = vmul.f32 %v3377, 0.0026041667
    %v3384 = vmul.f32 %v3382, 0.0026041667
    %v3385 = vmul.f32 %v3363, %v3363
    %v3386 = vmul.f32 %v3364, %v3364
    %v3387 = vsub.f32 %v3383, %v3385
    %v3388 = vsub.f32 %v3384, %v3386
    %v3389 = vmax.f32 %v3387, 0.0
    %v3390 = vmax.f32 %v3388, 0.0
    %v3391 = vld [vmem:[%s1] sm:$0xff]
    %v3392 = vld [vmem:[%s1 + $0x8] sm:$0xff]
    %v3393 = vadd.f32 %v3389, 1e-05
    %v3394 = vadd.f32 %v3390, 1e-05
    %v3395 = vrsqrt.pop %v3393
    %v3396 = vrsqrt.pop %v3394
    %v3397 = vmul.f32 %v3391, %v3395
    %v3398 = vmul.f32 %v3392, %v3396
    %v3399 = vld [vmem:[%s2] sm:$0xff]
    %v3400 = vld [vmem:[%s2 + $0x8] sm:$0xff]
    %v3401 = vmul.f32 %v3363, %v3397
    %v3402 = vmul.f32 %v3364, %v3398
    %v3403 = vsub.f32 %v3399, %v3401
    %v3404 = vsub.f32 %v3400, %v3402
    %3406 = vset.pattern.permute.xlu0 0
    %3407 = vperm.xlu0 %3406, %v3397
    %v3408 = vpop.permute.xlu0 %3407
    %3411 = vset.pattern.permute.xlu0 0
    %3412 = vperm.xlu0 %3411, %v3398
    %v3413 = vpop.permute.xlu0 %3412
    %v3415 = vmul.f32 %v3259, %v3408
    %v3416 = vmul.f32 %v3261, %v3408
    %v3417 = vmul.f32 %v3345, %v3408
    %v3418 = vmul.f32 %v3347, %v3408
    %v3419 = vmul.f32 %v3263, %v3413
    %v3420 = vmul.f32 %v3265, %v3413
    %v3421 = vmul.f32 %v3349, %v3413
    %v3422 = vmul.f32 %v3351, %v3413
    %3424 = vset.pattern.permute.xlu0 0
    %3425 = vperm.xlu0 %3424, %v3403
    %v3426 = vpop.permute.xlu0 %3425
    %3429 = vset.pattern.permute.xlu0 0
    %3430 = vperm.xlu0 %3429, %v3404
    %v3431 = vpop.permute.xlu0 %3430
    %v3433 = vadd.f32 %v3415, %v3426
    %v3434 = vadd.f32 %v3416, %v3426
    %v3435 = vadd.f32 %v3417, %v3426
    %v3436 = vadd.f32 %v3418, %v3426
    %v3437 = vadd.f32 %v3419, %v3431
    %v3438 = vadd.f32 %v3420, %v3431
    %v3439 = vadd.f32 %v3421, %v3431
    %v3440 = vadd.f32 %v3422, %v3431
    %v3441 = vmax.f32 %v3433, 0.0
    %v3442 = vmax.f32 %v3434, 0.0
    %v3443 = vmax.f32 %v3435, 0.0
    %v3444 = vmax.f32 %v3436, 0.0
    %v3445 = vmax.f32 %v3437, 0.0
    %v3446 = vmax.f32 %v3438, 0.0
    %v3447 = vmax.f32 %v3439, 0.0
    %v3448 = vmax.f32 %v3440, 0.0
    %v3449 = vpack.c.bf16 %v3445, %v3441
    %v3450 = vpack.c.bf16 %v3446, %v3442
    %v3451 = vpack.c.bf16 %v3447, %v3443
    %v3452 = vpack.c.bf16 %v3448, %v3444
    %v3457 = vunpack.c.l.b16 %v3449
    %v3458 = vunpack.c.l.b16 %v3450
    %v3459 = vunpack.c.l.b16 %v3451
    %v3460 = vunpack.c.l.b16 %v3452
    %v3461 = vunpack.c.h.b16 %v3449
    %v3462 = vunpack.c.h.b16 %v3450
    %v3463 = vunpack.c.h.b16 %v3451
    %v3464 = vunpack.c.h.b16 %v3452
    %v3465 = vpack.c.b16 %v3458, %v3457
    %v3466 = vpack.c.b16 %v3460, %v3459
    %v3467 = vpack.c.b16 %v3462, %v3461
    %v3468 = vpack.c.b16 %v3464, %v3463
    %3473 = vst [vmem:[%s5] sm:$0xff] %v3465
    %3474 = vst [vmem:[%s5 + $0x8] sm:$0xff] %v3466
    %3475 = vst [vmem:[%s5 + $0x10] sm:$0xff] %v3467
    %3476 = vst [vmem:[%s5 + $0x18] sm:$0xff] %v3468
    // Predicated region
    $region18: #{generator_forward.10} parent=1 // pred_check
      _
    $region19: #{generator_forward.10} parent=1 // pred_check_branch
      %3478 = sbr.rel (0) target = $region21
    $region20: #{generator_forward.10} parent=1 // pred_region
      _
    $region21: #{generator_forward.10} parent=1 // pred_fallthru
      _
    // Predicated region
    $region22: #{generator_forward.10} parent=1 // pred_check
      _
    $region23: #{generator_forward.10} parent=1 // pred_check_branch
      %3480 = sbr.rel (0) target = $region25
    $region24: #{generator_forward.10} parent=1 // pred_region
      _
    $region25: #{generator_forward.10} parent=1 // pred_fallthru
      _

// kernel: generator_forward.8
$region0: #{generator_forward.8}
  #allocation0 [shape = 'u32[]', space=smem, size = 0x4, offset = 0x4, fixed_abs, tag = 'smem constant byte address 0x4 - core index']
  #allocation1 [shape = 'u32[144,128]{1,0:T(1,128)}', space=vmem, size = 0x12000, scoped, tag = 'internal scratch']
  %s0 = inlined_call_operand.vmem [shape: bf16[8,256], index: 0, kind: input, shape index: {}]
  %s1 = inlined_call_operand.vmem [shape: bf16[256,1536], index: 1, kind: input, shape index: {}]
  %s2 = inlined_call_operand.vmem [shape: f32[8,1], index: 2, kind: input, shape index: {}]
  %s3 = inlined_call_operand.vmem [shape: f32[8,1], index: 3, kind: input, shape index: {}]
  %s4 = inlined_call_operand.vmem [shape: bf16[8,1536], index: 4, kind: output, shape index: {}]
  %s5 = sld [smem:[#allocation0]]
  $region26: #{generator_forward.8} parent=0
    _
  %s7 = ssub.s32 1, %s5
  %s8 = scalar_select 0, %s7, %s5
  // Predicated region
  $region2: #{generator_forward.8} parent=0 // pred_check
    _
  $region3: #{generator_forward.8} parent=0 // pred_check_branch
    %10 = sbr.rel (0) target = $region5
  $region4: #{generator_forward.8} parent=0 // pred_region
    _
  $region5: #{generator_forward.8} parent=0 // pred_fallthru
    _
  // Predicated region
  $region6: #{generator_forward.8} parent=0 // pred_check
    _
  $region7: #{generator_forward.8} parent=0 // pred_check_branch
    %12 = sbr.rel (0) target = $region9
  $region8: #{generator_forward.8} parent=0 // pred_region
    _
  $region9: #{generator_forward.8} parent=0 // pred_fallthru
    _
  // Predicated region
  $region10: #{generator_forward.8} parent=0 // pred_check
    _
  $region11: #{generator_forward.8} parent=0 // pred_check_branch
    %14 = sbr.rel (0) target = $region13
  $region12: #{generator_forward.8} parent=0 // pred_region
    _
  $region13: #{generator_forward.8} parent=0 // pred_fallthru
    _
  // Predicated region
  $region14: #{generator_forward.8} parent=0 // pred_check
    _
  $region15: #{generator_forward.8} parent=0 // pred_check_branch
    %16 = sbr.rel (0) target = $region17
  $region16: #{generator_forward.8} parent=0 // pred_region
    _
  $region17: #{generator_forward.8} parent=0 // pred_fallthru
    _
  %v17 = vld [vmem:[%s0] sm:$0xff]
  %v18 = vld [vmem:[%s1] sm:$0xff]
  %v19 = vld [vmem:[%s1 + $0x8] sm:$0xff]
  %v20 = vld [vmem:[%s1 + $0x10] sm:$0xff]
  %v21 = vld [vmem:[%s1 + $0x18] sm:$0xff]
  %v22 = vld [vmem:[%s1 + $0x20] sm:$0xff]
  %v23 = vld [vmem:[%s1 + $0x28] sm:$0xff]
  %v24 = vld [vmem:[%s1 + $0x30] sm:$0xff]
  %v25 = vld [vmem:[%s1 + $0x38] sm:$0xff]
  %v26 = vld [vmem:[%s1 + $0x40] sm:$0xff]
  %v27 = vld [vmem:[%s1 + $0x48] sm:$0xff]
  %v28 = vld [vmem:[%s1 + $0x50] sm:$0xff]
  %v29 = vld [vmem:[%s1 + $0x58] sm:$0xff]
  %v30 = vld [vmem:[%s1 + $0x60] sm:$0xff]
  %v31 = vld [vmem:[%s1 + $0x68] sm:$0xff]
  %v32 = vld [vmem:[%s1 + $0x70] sm:$0xff]
  %v33 = vld [vmem:[%s1 + $0x78] sm:$0xff]
  %v34 = vld [vmem:[%s1 + $0x80] sm:$0xff]
  %v35 = vld [vmem:[%s1 + $0x88] sm:$0xff]
  %v36 = vld [vmem:[%s1 + $0x90] sm:$0xff]
  %v37 = vld [vmem:[%s1 + $0x98] sm:$0xff]
  %v38 = vld [vmem:[%s1 + $0xa0] sm:$0xff]
  %v39 = vld [vmem:[%s1 + $0xa8] sm:$0xff]
  %v40 = vld [vmem:[%s1 + $0xb0] sm:$0xff]
  %v41 = vld [vmem:[%s1 + $0xb8] sm:$0xff]
  %v42 = vld [vmem:[%s1 + $0xc0] sm:$0xff]
  %v43 = vld [vmem:[%s1 + $0xc8] sm:$0xff]
  %v44 = vld [vmem:[%s1 + $0xd0] sm:$0xff]
  %v45 = vld [vmem:[%s1 + $0xd8] sm:$0xff]
  %v46 = vld [vmem:[%s1 + $0xe0] sm:$0xff]
  %v47 = vld [vmem:[%s1 + $0xe8] sm:$0xff]
  %v48 = vld [vmem:[%s1 + $0xf0] sm:$0xff]
  %v49 = vld [vmem:[%s1 + $0xf8] sm:$0xff]
  %v50 = vld [vmem:[%s1 + $0x100] sm:$0xff]
  %v51 = vld [vmem:[%s1 + $0x108] sm:$0xff]
  %v52 = vld [vmem:[%s1 + $0x110] sm:$0xff]
  %v53 = vld [vmem:[%s1 + $0x118] sm:$0xff]
  %v54 = vld [vmem:[%s1 + $0x120] sm:$0xff]
  %v55 = vld [vmem:[%s1 + $0x128] sm:$0xff]
  %v56 = vld [vmem:[%s1 + $0x130] sm:$0xff]
  %v57 = vld [vmem:[%s1 + $0x138] sm:$0xff]
  %v58 = vld [vmem:[%s1 + $0x140] sm:$0xff]
  %v59 = vld [vmem:[%s1 + $0x148] sm:$0xff]
  %v60 = vld [vmem:[%s1 + $0x150] sm:$0xff]
  %v61 = vld [vmem:[%s1 + $0x158] sm:$0xff]
  %v62 = vld [vmem:[%s1 + $0x160] sm:$0xff]
  %v63 = vld [vmem:[%s1 + $0x168] sm:$0xff]
  %v64 = vld [vmem:[%s1 + $0x170] sm:$0xff]
  %v65 = vld [vmem:[%s1 + $0x178] sm:$0xff]
  %v66 = vld [vmem:[%s1 + $0x180] sm:$0xff]
  %v67 = vld [vmem:[%s1 + $0x188] sm:$0xff]
  %v68 = vld [vmem:[%s1 + $0x190] sm:$0xff]
  %v69 = vld [vmem:[%s1 + $0x198] sm:$0xff]
  %v70 = vld [vmem:[%s1 + $0x1a0] sm:$0xff]
  %v71 = vld [vmem:[%s1 + $0x1a8] sm:$0xff]
  %v72 = vld [vmem:[%s1 + $0x1b0] sm:$0xff]
  %v73 = vld [vmem:[%s1 + $0x1b8] sm:$0xff]
  %v74 = vld [vmem:[%s1 + $0x1c0] sm:$0xff]
  %v75 = vld [vmem:[%s1 + $0x1c8] sm:$0xff]
  %v76 = vld [vmem:[%s1 + $0x1d0] sm:$0xff]
  %v77 = vld [vmem:[%s1 + $0x1d8] sm:$0xff]
  %v78 = vld [vmem:[%s1 + $0x1e0] sm:$0xff]
  %v79 = vld [vmem:[%s1 + $0x1e8] sm:$0xff]
  %v80 = vld [vmem:[%s1 + $0x1f0] sm:$0xff]
  %v81 = vld [vmem:[%s1 + $0x1f8] sm:$0xff]
  %v82 = vld [vmem:[%s1 + $0x200] sm:$0xff]
  %v83 = vld [vmem:[%s1 + $0x208] sm:$0xff]
  %v84 = vld [vmem:[%s1 + $0x210] sm:$0xff]
  %v85 = vld [vmem:[%s1 + $0x218] sm:$0xff]
  %v86 = vld [vmem:[%s1 + $0x220] sm:$0xff]
  %v87 = vld [vmem:[%s1 + $0x228] sm:$0xff]
  %v88 = vld [vmem:[%s1 + $0x230] sm:$0xff]
  %v89 = vld [vmem:[%s1 + $0x238] sm:$0xff]
  %v90 = vld [vmem:[%s1 + $0x240] sm:$0xff]
  %v91 = vld [vmem:[%s1 + $0x248] sm:$0xff]
  %v92 = vld [vmem:[%s1 + $0x250] sm:$0xff]
  %v93 = vld [vmem:[%s1 + $0x258] sm:$0xff]
  %v94 = vld [vmem:[%s1 + $0x260] sm:$0xff]
  %v95 = vld [vmem:[%s1 + $0x268] sm:$0xff]
  %v96 = vld [vmem:[%s1 + $0x270] sm:$0xff]
  %v97 = vld [vmem:[%s1 + $0x278] sm:$0xff]
  %v98 = vld [vmem:[%s1 + $0x280] sm:$0xff]
  %v99 = vld [vmem:[%s1 + $0x288] sm:$0xff]
  %v100 = vld [vmem:[%s1 + $0x290] sm:$0xff]
  %v101 = vld [vmem:[%s1 + $0x298] sm:$0xff]
  %v102 = vld [vmem:[%s1 + $0x2a0] sm:$0xff]
  %v103 = vld [vmem:[%s1 + $0x2a8] sm:$0xff]
  %v104 = vld [vmem:[%s1 + $0x2b0] sm:$0xff]
  %v105 = vld [vmem:[%s1 + $0x2b8] sm:$0xff]
  %v106 = vld [vmem:[%s1 + $0x2c0] sm:$0xff]
  %v107 = vld [vmem:[%s1 + $0x2c8] sm:$0xff]
  %v108 = vld [vmem:[%s1 + $0x2d0] sm:$0xff]
  %v109 = vld [vmem:[%s1 + $0x2d8] sm:$0xff]
  %v110 = vld [vmem:[%s1 + $0x2e0] sm:$0xff]
  %v111 = vld [vmem:[%s1 + $0x2e8] sm:$0xff]
  %v112 = vld [vmem:[%s1 + $0x2f0] sm:$0xff]
  %v113 = vld [vmem:[%s1 + $0x2f8] sm:$0xff]
  %v114 = vld [vmem:[%s1 + $0x300] sm:$0xff]
  %v115 = vld [vmem:[%s1 + $0x308] sm:$0xff]
  %v116 = vld [vmem:[%s1 + $0x310] sm:$0xff]
  %v117 = vld [vmem:[%s1 + $0x318] sm:$0xff]
  %v118 = vld [vmem:[%s1 + $0x320] sm:$0xff]
  %v119 = vld [vmem:[%s1 + $0x328] sm:$0xff]
  %v120 = vld [vmem:[%s1 + $0x330] sm:$0xff]
  %v121 = vld [vmem:[%s1 + $0x338] sm:$0xff]
  %v122 = vld [vmem:[%s1 + $0x340] sm:$0xff]
  %v123 = vld [vmem:[%s1 + $0x348] sm:$0xff]
  %v124 = vld [vmem:[%s1 + $0x350] sm:$0xff]
  %v125 = vld [vmem:[%s1 + $0x358] sm:$0xff]
  %v126 = vld [vmem:[%s1 + $0x360] sm:$0xff]
  %v127 = vld [vmem:[%s1 + $0x368] sm:$0xff]
  %v128 = vld [vmem:[%s1 + $0x370] sm:$0xff]
  %v129 = vld [vmem:[%s1 + $0x378] sm:$0xff]
  %v130 = vld [vmem:[%s1 + $0x380] sm:$0xff]
  %v131 = vld [vmem:[%s1 + $0x388] sm:$0xff]
  %v132 = vld [vmem:[%s1 + $0x390] sm:$0xff]
  %v133 = vld [vmem:[%s1 + $0x398] sm:$0xff]
  %v134 = vld [vmem:[%s1 + $0x3a0] sm:$0xff]
  %v135 = vld [vmem:[%s1 + $0x3a8] sm:$0xff]
  %v136 = vld [vmem:[%s1 + $0x3b0] sm:$0xff]
  %v137 = vld [vmem:[%s1 + $0x3b8] sm:$0xff]
  %v138 = vld [vmem:[%s1 + $0x3c0] sm:$0xff]
  %v139 = vld [vmem:[%s1 + $0x3c8] sm:$0xff]
  %v140 = vld [vmem:[%s1 + $0x3d0] sm:$0xff]
  %v141 = vld [vmem:[%s1 + $0x3d8] sm:$0xff]
  %v142 = vld [vmem:[%s1 + $0x3e0] sm:$0xff]
  %v143 = vld [vmem:[%s1 + $0x3e8] sm:$0xff]
  %v144 = vld [vmem:[%s1 + $0x3f0] sm:$0xff]
  %v145 = vld [vmem:[%s1 + $0x3f8] sm:$0xff]
  %v146 = vld [vmem:[%s1 + $0x400] sm:$0xff]
  %v147 = vld [vmem:[%s1 + $0x408] sm:$0xff]
  %v148 = vld [vmem:[%s1 + $0x410] sm:$0xff]
  %v149 = vld [vmem:[%s1 + $0x418] sm:$0xff]
  %v150 = vld [vmem:[%s1 + $0x420] sm:$0xff]
  %v151 = vld [vmem:[%s1 + $0x428] sm:$0xff]
  %v152 = vld [vmem:[%s1 + $0x430] sm:$0xff]
  %v153 = vld [vmem:[%s1 + $0x438] sm:$0xff]
  %v154 = vld [vmem:[%s1 + $0x440] sm:$0xff]
  %v155 = vld [vmem:[%s1 + $0x448] sm:$0xff]
  %v156 = vld [vmem:[%s1 + $0x450] sm:$0xff]
  %v157 = vld [vmem:[%s1 + $0x458] sm:$0xff]
  %v158 = vld [vmem:[%s1 + $0x460] sm:$0xff]
  %v159 = vld [vmem:[%s1 + $0x468] sm:$0xff]
  %v160 = vld [vmem:[%s1 + $0x470] sm:$0xff]
  %v161 = vld [vmem:[%s1 + $0x478] sm:$0xff]
  %v162 = vld [vmem:[%s1 + $0x480] sm:$0xff]
  %v163 = vld [vmem:[%s1 + $0x488] sm:$0xff]
  %v164 = vld [vmem:[%s1 + $0x490] sm:$0xff]
  %v165 = vld [vmem:[%s1 + $0x498] sm:$0xff]
  %v166 = vld [vmem:[%s1 + $0x4a0] sm:$0xff]
  %v167 = vld [vmem:[%s1 + $0x4a8] sm:$0xff]
  %v168 = vld [vmem:[%s1 + $0x4b0] sm:$0xff]
  %v169 = vld [vmem:[%s1 + $0x4b8] sm:$0xff]
  %v170 = vld [vmem:[%s1 + $0x4c0] sm:$0xff]
  %v171 = vld [vmem:[%s1 + $0x4c8] sm:$0xff]
  %v172 = vld [vmem:[%s1 + $0x4d0] sm:$0xff]
  %v173 = vld [vmem:[%s1 + $0x4d8] sm:$0xff]
  %v174 = vld [vmem:[%s1 + $0x4e0] sm:$0xff]
  %v175 = vld [vmem:[%s1 + $0x4e8] sm:$0xff]
  %v176 = vld [vmem:[%s1 + $0x4f0] sm:$0xff]
  %v177 = vld [vmem:[%s1 + $0x4f8] sm:$0xff]
  %v178 = vld [vmem:[%s1 + $0x500] sm:$0xff]
  %v179 = vld [vmem:[%s1 + $0x508] sm:$0xff]
  %v180 = vld [vmem:[%s1 + $0x510] sm:$0xff]
  %v181 = vld [vmem:[%s1 + $0x518] sm:$0xff]
  %v182 = vld [vmem:[%s1 + $0x520] sm:$0xff]
  %v183 = vld [vmem:[%s1 + $0x528] sm:$0xff]
  %v184 = vld [vmem:[%s1 + $0x530] sm:$0xff]
  %v185 = vld [vmem:[%s1 + $0x538] sm:$0xff]
  %v186 = vld [vmem:[%s1 + $0x540] sm:$0xff]
  %v187 = vld [vmem:[%s1 + $0x548] sm:$0xff]
  %v188 = vld [vmem:[%s1 + $0x550] sm:$0xff]
  %v189 = vld [vmem:[%s1 + $0x558] sm:$0xff]
  %v190 = vld [vmem:[%s1 + $0x560] sm:$0xff]
  %v191 = vld [vmem:[%s1 + $0x568] sm:$0xff]
  %v192 = vld [vmem:[%s1 + $0x570] sm:$0xff]
  %v193 = vld [vmem:[%s1 + $0x578] sm:$0xff]
  %v194 = vld [vmem:[%s1 + $0x580] sm:$0xff]
  %v195 = vld [vmem:[%s1 + $0x588] sm:$0xff]
  %v196 = vld [vmem:[%s1 + $0x590] sm:$0xff]
  %v197 = vld [vmem:[%s1 + $0x598] sm:$0xff]
  %v198 = vld [vmem:[%s1 + $0x5a0] sm:$0xff]
  %v199 = vld [vmem:[%s1 + $0x5a8] sm:$0xff]
  %v200 = vld [vmem:[%s1 + $0x5b0] sm:$0xff]
  %v201 = vld [vmem:[%s1 + $0x5b8] sm:$0xff]
  %v202 = vld [vmem:[%s1 + $0x5c0] sm:$0xff]
  %v203 = vld [vmem:[%s1 + $0x5c8] sm:$0xff]
  %v204 = vld [vmem:[%s1 + $0x5d0] sm:$0xff]
  %v205 = vld [vmem:[%s1 + $0x5d8] sm:$0xff]
  %v206 = vld [vmem:[%s1 + $0x5e0] sm:$0xff]
  %v207 = vld [vmem:[%s1 + $0x5e8] sm:$0xff]
  %v208 = vld [vmem:[%s1 + $0x5f0] sm:$0xff]
  %v209 = vld [vmem:[%s1 + $0x5f8] sm:$0xff]
  %v211 = vunpack.c.l.b16 %v17
  %v212 = vunpack.c.h.b16 %v17
  %v213 = vpack.c.b16 %v211, %v211
  %v214 = vpack.c.b16 %v212, %v212
  %v409 = vunpack.c.l.b16 %v18
  %v410 = vunpack.c.h.b16 %v18
  %v411 = vunpack.c.l.b16 %v19
  %v412 = vunpack.c.h.b16 %v19
  %v413 = vunpack.c.l.b16 %v20
  %v414 = vunpack.c.h.b16 %v20
  %v415 = vunpack.c.l.b16 %v21
  %v416 = vunpack.c.h.b16 %v21
  %v417 = vunpack.c.l.b16 %v22
  %v418 = vunpack.c.h.b16 %v22
  %v419 = vunpack.c.l.b16 %v23
  %v420 = vunpack.c.h.b16 %v23
  %v421 = vunpack.c.l.b16 %v24
  %v422 = vunpack.c.h.b16 %v24
  %v423 = vunpack.c.l.b16 %v25
  %v424 = vunpack.c.h.b16 %v25
  %v425 = vunpack.c.l.b16 %v26
  %v426 = vunpack.c.h.b16 %v26
  %v427 = vunpack.c.l.b16 %v27
  %v428 = vunpack.c.h.b16 %v27
  %v429 = vunpack.c.l.b16 %v28
  %v430 = vunpack.c.h.b16 %v28
  %v431 = vunpack.c.l.b16 %v29
  %v432 = vunpack.c.h.b16 %v29
  %v433 = vunpack.c.l.b16 %v30
  %v434 = vunpack.c.h.b16 %v30
  %v435 = vunpack.c.l.b16 %v31
  %v436 = vunpack.c.h.b16 %v31
  %v437 = vunpack.c.l.b16 %v32
  %v438 = vunpack.c.h.b16 %v32
  %v439 = vunpack.c.l.b16 %v33
  %v440 = vunpack.c.h.b16 %v33
  %v441 = vunpack.c.l.b16 %v34
  %v442 = vunpack.c.h.b16 %v34
  %v443 = vunpack.c.l.b16 %v35
  %v444 = vunpack.c.h.b16 %v35
  %v445 = vunpack.c.l.b16 %v36
  %v446 = vunpack.c.h.b16 %v36
  %v447 = vunpack.c.l.b16 %v37
  %v448 = vunpack.c.h.b16 %v37
  %v449 = vunpack.c.l.b16 %v38
  %v450 = vunpack.c.h.b16 %v38
  %v451 = vunpack.c.l.b16 %v39
  %v452 = vunpack.c.h.b16 %v39
  %v453 = vunpack.c.l.b16 %v40
  %v454 = vunpack.c.h.b16 %v40
  %v455 = vunpack.c.l.b16 %v41
  %v456 = vunpack.c.h.b16 %v41
  %v457 = vunpack.c.l.b16 %v42
  %v458 = vunpack.c.h.b16 %v42
  %v459 = vunpack.c.l.b16 %v43
  %v460 = vunpack.c.h.b16 %v43
  %v461 = vunpack.c.l.b16 %v44
  %v462 = vunpack.c.h.b16 %v44
  %v463 = vunpack.c.l.b16 %v45
  %v464 = vunpack.c.h.b16 %v45
  %v465 = vunpack.c.l.b16 %v46
  %v466 = vunpack.c.h.b16 %v46
  %v467 = vunpack.c.l.b16 %v47
  %v468 = vunpack.c.h.b16 %v47
  %v469 = vunpack.c.l.b16 %v48
  %v470 = vunpack.c.h.b16 %v48
  %v471 = vunpack.c.l.b16 %v49
  %v472 = vunpack.c.h.b16 %v49
  %v473 = vunpack.c.l.b16 %v50
  %v474 = vunpack.c.h.b16 %v50
  %v475 = vunpack.c.l.b16 %v51
  %v476 = vunpack.c.h.b16 %v51
  %v477 = vunpack.c.l.b16 %v52
  %v478 = vunpack.c.h.b16 %v52
  %v479 = vunpack.c.l.b16 %v53
  %v480 = vunpack.c.h.b16 %v53
  %v481 = vunpack.c.l.b16 %v54
  %v482 = vunpack.c.h.b16 %v54
  %v483 = vunpack.c.l.b16 %v55
  %v484 = vunpack.c.h.b16 %v55
  %v485 = vunpack.c.l.b16 %v56
  %v486 = vunpack.c.h.b16 %v56
  %v487 = vunpack.c.l.b16 %v57
  %v488 = vunpack.c.h.b16 %v57
  %v489 = vunpack.c.l.b16 %v58
  %v490 = vunpack.c.h.b16 %v58
  %v491 = vunpack.c.l.b16 %v59
  %v492 = vunpack.c.h.b16 %v59
  %v493 = vunpack.c.l.b16 %v60
  %v494 = vunpack.c.h.b16 %v60
  %v495 = vunpack.c.l.b16 %v61
  %v496 = vunpack.c.h.b16 %v61
  %v497 = vunpack.c.l.b16 %v62
  %v498 = vunpack.c.h.b16 %v62
  %v499 = vunpack.c.l.b16 %v63
  %v500 = vunpack.c.h.b16 %v63
  %v501 = vunpack.c.l.b16 %v64
  %v502 = vunpack.c.h.b16 %v64
  %v503 = vunpack.c.l.b16 %v65
  %v504 = vunpack.c.h.b16 %v65
  %v505 = vunpack.c.l.b16 %v66
  %v506 = vunpack.c.h.b16 %v66
  %v507 = vunpack.c.l.b16 %v67
  %v508 = vunpack.c.h.b16 %v67
  %v509 = vunpack.c.l.b16 %v68
  %v510 = vunpack.c.h.b16 %v68
  %v511 = vunpack.c.l.b16 %v69
  %v512 = vunpack.c.h.b16 %v69
  %v513 = vunpack.c.l.b16 %v70
  %v514 = vunpack.c.h.b16 %v70
  %v515 = vunpack.c.l.b16 %v71
  %v516 = vunpack.c.h.b16 %v71
  %v517 = vunpack.c.l.b16 %v72
  %v518 = vunpack.c.h.b16 %v72
  %v519 = vunpack.c.l.b16 %v73
  %v520 = vunpack.c.h.b16 %v73
  %v521 = vunpack.c.l.b16 %v74
  %v522 = vunpack.c.h.b16 %v74
  %v523 = vunpack.c.l.b16 %v75
  %v524 = vunpack.c.h.b16 %v75
  %v525 = vunpack.c.l.b16 %v76
  %v526 = vunpack.c.h.b16 %v76
  %v527 = vunpack.c.l.b16 %v77
  %v528 = vunpack.c.h.b16 %v77
  %v529 = vunpack.c.l.b16 %v78
  %v530 = vunpack.c.h.b16 %v78
  %v531 = vunpack.c.l.b16 %v79
  %v532 = vunpack.c.h.b16 %v79
  %v533 = vunpack.c.l.b16 %v80
  %v534 = vunpack.c.h.b16 %v80
  %v535 = vunpack.c.l.b16 %v81
  %v536 = vunpack.c.h.b16 %v81
  %v537 = vunpack.c.l.b16 %v82
  %v538 = vunpack.c.h.b16 %v82
  %v539 = vunpack.c.l.b16 %v83
  %v540 = vunpack.c.h.b16 %v83
  %v541 = vunpack.c.l.b16 %v84
  %v542 = vunpack.c.h.b16 %v84
  %v543 = vunpack.c.l.b16 %v85
  %v544 = vunpack.c.h.b16 %v85
  %v545 = vunpack.c.l.b16 %v86
  %v546 = vunpack.c.h.b16 %v86
  %v547 = vunpack.c.l.b16 %v87
  %v548 = vunpack.c.h.b16 %v87
  %v549 = vunpack.c.l.b16 %v88
  %v550 = vunpack.c.h.b16 %v88
  %v551 = vunpack.c.l.b16 %v89
  %v552 = vunpack.c.h.b16 %v89
  %v553 = vunpack.c.l.b16 %v90
  %v554 = vunpack.c.h.b16 %v90
  %v555 = vunpack.c.l.b16 %v91
  %v556 = vunpack.c.h.b16 %v91
  %v557 = vunpack.c.l.b16 %v92
  %v558 = vunpack.c.h.b16 %v92
  %v559 = vunpack.c.l.b16 %v93
  %v560 = vunpack.c.h.b16 %v93
  %v561 = vunpack.c.l.b16 %v94
  %v562 = vunpack.c.h.b16 %v94
  %v563 = vunpack.c.l.b16 %v95
  %v564 = vunpack.c.h.b16 %v95
  %v565 = vunpack.c.l.b16 %v96
  %v566 = vunpack.c.h.b16 %v96
  %v567 = vunpack.c.l.b16 %v97
  %v568 = vunpack.c.h.b16 %v97
  %v569 = vunpack.c.l.b16 %v98
  %v570 = vunpack.c.h.b16 %v98
  %v571 = vunpack.c.l.b16 %v99
  %v572 = vunpack.c.h.b16 %v99
  %v573 = vunpack.c.l.b16 %v100
  %v574 = vunpack.c.h.b16 %v100
  %v575 = vunpack.c.l.b16 %v101
  %v576 = vunpack.c.h.b16 %v101
  %v577 = vunpack.c.l.b16 %v102
  %v578 = vunpack.c.h.b16 %v102
  %v579 = vunpack.c.l.b16 %v103
  %v580 = vunpack.c.h.b16 %v103
  %v581 = vunpack.c.l.b16 %v104
  %v582 = vunpack.c.h.b16 %v104
  %v583 = vunpack.c.l.b16 %v105
  %v584 = vunpack.c.h.b16 %v105
  %v585 = vunpack.c.l.b16 %v106
  %v586 = vunpack.c.h.b16 %v106
  %v587 = vunpack.c.l.b16 %v107
  %v588 = vunpack.c.h.b16 %v107
  %v589 = vunpack.c.l.b16 %v108
  %v590 = vunpack.c.h.b16 %v108
  %v591 = vunpack.c.l.b16 %v109
  %v592 = vunpack.c.h.b16 %v109
  %v593 = vunpack.c.l.b16 %v110
  %v594 = vunpack.c.h.b16 %v110
  %v595 = vunpack.c.l.b16 %v111
  %v596 = vunpack.c.h.b16 %v111
  %v597 = vunpack.c.l.b16 %v112
  %v598 = vunpack.c.h.b16 %v112
  %v599 = vunpack.c.l.b16 %v113
  %v600 = vunpack.c.h.b16 %v113
  %v601 = vunpack.c.l.b16 %v114
  %v602 = vunpack.c.h.b16 %v114
  %v603 = vunpack.c.l.b16 %v115
  %v604 = vunpack.c.h.b16 %v115
  %v605 = vunpack.c.l.b16 %v116
  %v606 = vunpack.c.h.b16 %v116
  %v607 = vunpack.c.l.b16 %v117
  %v608 = vunpack.c.h.b16 %v117
  %v609 = vunpack.c.l.b16 %v118
  %v610 = vunpack.c.h.b16 %v118
  %v611 = vunpack.c.l.b16 %v119
  %v612 = vunpack.c.h.b16 %v119
  %v613 = vunpack.c.l.b16 %v120
  %v614 = vunpack.c.h.b16 %v120
  %v615 = vunpack.c.l.b16 %v121
  %v616 = vunpack.c.h.b16 %v121
  %v617 = vunpack.c.l.b16 %v122
  %v618 = vunpack.c.h.b16 %v122
  %v619 = vunpack.c.l.b16 %v123
  %v620 = vunpack.c.h.b16 %v123
  %v621 = vunpack.c.l.b16 %v124
  %v622 = vunpack.c.h.b16 %v124
  %v623 = vunpack.c.l.b16 %v125
  %v624 = vunpack.c.h.b16 %v125
  %v625 = vunpack.c.l.b16 %v126
  %v626 = vunpack.c.h.b16 %v126
  %v627 = vunpack.c.l.b16 %v127
  %v628 = vunpack.c.h.b16 %v127
  %v629 = vunpack.c.l.b16 %v128
  %v630 = vunpack.c.h.b16 %v128
  %v631 = vunpack.c.l.b16 %v129
  %v632 = vunpack.c.h.b16 %v129
  %v633 = vunpack.c.l.b16 %v130
  %v634 = vunpack.c.h.b16 %v130
  %v635 = vunpack.c.l.b16 %v131
  %v636 = vunpack.c.h.b16 %v131
  %v637 = vunpack.c.l.b16 %v132
  %v638 = vunpack.c.h.b16 %v132
  %v639 = vunpack.c.l.b16 %v133
  %v640 = vunpack.c.h.b16 %v133
  %v641 = vunpack.c.l.b16 %v134
  %v642 = vunpack.c.h.b16 %v134
  %v643 = vunpack.c.l.b16 %v135
  %v644 = vunpack.c.h.b16 %v135
  %v645 = vunpack.c.l.b16 %v136
  %v646 = vunpack.c.h.b16 %v136
  %v647 = vunpack.c.l.b16 %v137
  %v648 = vunpack.c.h.b16 %v137
  %v649 = vunpack.c.l.b16 %v138
  %v650 = vunpack.c.h.b16 %v138
  %v651 = vunpack.c.l.b16 %v139
  %v652 = vunpack.c.h.b16 %v139
  %v653 = vunpack.c.l.b16 %v140
  %v654 = vunpack.c.h.b16 %v140
  %v655 = vunpack.c.l.b16 %v141
  %v656 = vunpack.c.h.b16 %v141
  %v657 = vunpack.c.l.b16 %v142
  %v658 = vunpack.c.h.b16 %v142
  %v659 = vunpack.c.l.b16 %v143
  %v660 = vunpack.c.h.b16 %v143
  %v661 = vunpack.c.l.b16 %v144
  %v662 = vunpack.c.h.b16 %v144
  %v663 = vunpack.c.l.b16 %v145
  %v664 = vunpack.c.h.b16 %v145
  %v665 = vunpack.c.l.b16 %v146
  %v666 = vunpack.c.h.b16 %v146
  %v667 = vunpack.c.l.b16 %v147
  %v668 = vunpack.c.h.b16 %v147
  %v669 = vunpack.c.l.b16 %v148
  %v670 = vunpack.c.h.b16 %v148
  %v671 = vunpack.c.l.b16 %v149
  %v672 = vunpack.c.h.b16 %v149
  %v673 = vunpack.c.l.b16 %v150
  %v674 = vunpack.c.h.b16 %v150
  %v675 = vunpack.c.l.b16 %v151
  %v676 = vunpack.c.h.b16 %v151
  %v677 = vunpack.c.l.b16 %v152
  %v678 = vunpack.c.h.b16 %v152
  %v679 = vunpack.c.l.b16 %v153
  %v680 = vunpack.c.h.b16 %v153
  %v681 = vunpack.c.l.b16 %v154
  %v682 = vunpack.c.h.b16 %v154
  %v683 = vunpack.c.l.b16 %v155
  %v684 = vunpack.c.h.b16 %v155
  %v685 = vunpack.c.l.b16 %v156
  %v686 = vunpack.c.h.b16 %v156
  %v687 = vunpack.c.l.b16 %v157
  %v688 = vunpack.c.h.b16 %v157
  %v689 = vunpack.c.l.b16 %v158
  %v690 = vunpack.c.h.b16 %v158
  %v691 = vunpack.c.l.b16 %v159
  %v692 = vunpack.c.h.b16 %v159
  %v693 = vunpack.c.l.b16 %v160
  %v694 = vunpack.c.h.b16 %v160
  %v695 = vunpack.c.l.b16 %v161
  %v696 = vunpack.c.h.b16 %v161
  %v697 = vunpack.c.l.b16 %v162
  %v698 = vunpack.c.h.b16 %v162
  %v699 = vunpack.c.l.b16 %v163
  %v700 = vunpack.c.h.b16 %v163
  %v701 = vunpack.c.l.b16 %v164
  %v702 = vunpack.c.h.b16 %v164
  %v703 = vunpack.c.l.b16 %v165
  %v704 = vunpack.c.h.b16 %v165
  %v705 = vunpack.c.l.b16 %v166
  %v706 = vunpack.c.h.b16 %v166
  %v707 = vunpack.c.l.b16 %v167
  %v708 = vunpack.c.h.b16 %v167
  %v709 = vunpack.c.l.b16 %v168
  %v710 = vunpack.c.h.b16 %v168
  %v711 = vunpack.c.l.b16 %v169
  %v712 = vunpack.c.h.b16 %v169
  %v713 = vunpack.c.l.b16 %v170
  %v714 = vunpack.c.h.b16 %v170
  %v715 = vunpack.c.l.b16 %v171
  %v716 = vunpack.c.h.b16 %v171
  %v717 = vunpack.c.l.b16 %v172
  %v718 = vunpack.c.h.b16 %v172
  %v719 = vunpack.c.l.b16 %v173
  %v720 = vunpack.c.h.b16 %v173
  %v721 = vunpack.c.l.b16 %v174
  %v722 = vunpack.c.h.b16 %v174
  %v723 = vunpack.c.l.b16 %v175
  %v724 = vunpack.c.h.b16 %v175
  %v725 = vunpack.c.l.b16 %v176
  %v726 = vunpack.c.h.b16 %v176
  %v727 = vunpack.c.l.b16 %v177
  %v728 = vunpack.c.h.b16 %v177
  %v729 = vunpack.c.l.b16 %v178
  %v730 = vunpack.c.h.b16 %v178
  %v731 = vunpack.c.l.b16 %v179
  %v732 = vunpack.c.h.b16 %v179
  %v733 = vunpack.c.l.b16 %v180
  %v734 = vunpack.c.h.b16 %v180
  %v735 = vunpack.c.l.b16 %v181
  %v736 = vunpack.c.h.b16 %v181
  %v737 = vunpack.c.l.b16 %v182
  %v738 = vunpack.c.h.b16 %v182
  %v739 = vunpack.c.l.b16 %v183
  %v740 = vunpack.c.h.b16 %v183
  %v741 = vunpack.c.l.b16 %v184
  %v742 = vunpack.c.h.b16 %v184
  %v743 = vunpack.c.l.b16 %v185
  %v744 = vunpack.c.h.b16 %v185
  %v745 = vunpack.c.l.b16 %v186
  %v746 = vunpack.c.h.b16 %v186
  %v747 = vunpack.c.l.b16 %v187
  %v748 = vunpack.c.h.b16 %v187
  %v749 = vunpack.c.l.b16 %v188
  %v750 = vunpack.c.h.b16 %v188
  %v751 = vunpack.c.l.b16 %v189
  %v752 = vunpack.c.h.b16 %v189
  %v753 = vunpack.c.l.b16 %v190
  %v754 = vunpack.c.h.b16 %v190
  %v755 = vunpack.c.l.b16 %v191
  %v756 = vunpack.c.h.b16 %v191
  %v757 = vunpack.c.l.b16 %v192
  %v758 = vunpack.c.h.b16 %v192
  %v759 = vunpack.c.l.b16 %v193
  %v760 = vunpack.c.h.b16 %v193
  %v761 = vunpack.c.l.b16 %v194
  %v762 = vunpack.c.h.b16 %v194
  %v763 = vunpack.c.l.b16 %v195
  %v764 = vunpack.c.h.b16 %v195
  %v765 = vunpack.c.l.b16 %v196
  %v766 = vunpack.c.h.b16 %v196
  %v767 = vunpack.c.l.b16 %v197
  %v768 = vunpack.c.h.b16 %v197
  %v769 = vunpack.c.l.b16 %v198
  %v770 = vunpack.c.h.b16 %v198
  %v771 = vunpack.c.l.b16 %v199
  %v772 = vunpack.c.h.b16 %v199
  %v773 = vunpack.c.l.b16 %v200
  %v774 = vunpack.c.h.b16 %v200
  %v775 = vunpack.c.l.b16 %v201
  %v776 = vunpack.c.h.b16 %v201
  %v777 = vunpack.c.l.b16 %v202
  %v778 = vunpack.c.h.b16 %v202
  %v779 = vunpack.c.l.b16 %v203
  %v780 = vunpack.c.h.b16 %v203
  %v781 = vunpack.c.l.b16 %v204
  %v782 = vunpack.c.h.b16 %v204
  %v783 = vunpack.c.l.b16 %v205
  %v784 = vunpack.c.h.b16 %v205
  %v785 = vunpack.c.l.b16 %v206
  %v786 = vunpack.c.h.b16 %v206
  %v787 = vunpack.c.l.b16 %v207
  %v788 = vunpack.c.h.b16 %v207
  %v789 = vunpack.c.l.b16 %v208
  %v790 = vunpack.c.h.b16 %v208
  %v791 = vunpack.c.l.b16 %v209
  %v792 = vunpack.c.h.b16 %v209
  %v793 = vpack.c.b16 %v421, %v409
  %v794 = vpack.c.b16 %v422, %v410
  %v795 = vpack.c.b16 %v423, %v411
  %v796 = vpack.c.b16 %v424, %v412
  %v797 = vpack.c.b16 %v425, %v413
  %v798 = vpack.c.b16 %v426, %v414
  %v799 = vpack.c.b16 %v427, %v415
  %v800 = vpack.c.b16 %v428, %v416
  %v801 = vpack.c.b16 %v429, %v417
  %v802 = vpack.c.b16 %v430, %v418
  %v803 = vpack.c.b16 %v431, %v419
  %v804 = vpack.c.b16 %v432, %v420
  %v805 = vpack.c.b16 %v445, %v433
  %v806 = vpack.c.b16 %v446, %v434
  %v807 = vpack.c.b16 %v447, %v435
  %v808 = vpack.c.b16 %v448, %v436
  %v809 = vpack.c.b16 %v449, %v437
  %v810 = vpack.c.b16 %v450, %v438
  %v811 = vpack.c.b16 %v451, %v439
  %v812 = vpack.c.b16 %v452, %v440
  %v813 = vpack.c.b16 %v453, %v441
  %v814 = vpack.c.b16 %v454, %v442
  %v815 = vpack.c.b16 %v455, %v443
  %v816 = vpack.c.b16 %v456, %v444
  %v817 = vpack.c.b16 %v469, %v457
  %v818 = vpack.c.b16 %v470, %v458
  %v819 = vpack.c.b16 %v471, %v459
  %v820 = vpack.c.b16 %v472, %v460
  %v821 = vpack.c.b16 %v473, %v461
  %v822 = vpack.c.b16 %v474, %v462
  %v823 = vpack.c.b16 %v475, %v463
  %v824 = vpack.c.b16 %v476, %v464
  %v825 = vpack.c.b16 %v477, %v465
  %v826 = vpack.c.b16 %v478, %v466
  %v827 = vpack.c.b16 %v479, %v467
  %v828 = vpack.c.b16 %v480, %v468
  %v829 = vpack.c.b16 %v493, %v481
  %v830 = vpack.c.b16 %v494, %v482
  %v831 = vpack.c.b16 %v495, %v483
  %v832 = vpack.c.b16 %v496, %v484
  %v833 = vpack.c.b16 %v497, %v485
  %v834 = vpack.c.b16 %v498, %v486
  %v835 = vpack.c.b16 %v499, %v487
  %v836 = vpack.c.b16 %v500, %v488
  %v837 = vpack.c.b16 %v501, %v489
  %v838 = vpack.c.b16 %v502, %v490
  %v839 = vpack.c.b16 %v503, %v491
  %v840 = vpack.c.b16 %v504, %v492
  %v841 = vpack.c.b16 %v517, %v505
  %v842 = vpack.c.b16 %v518, %v506
  %v843 = vpack.c.b16 %v519, %v507
  %v844 = vpack.c.b16 %v520, %v508
  %v845 = vpack.c.b16 %v521, %v509
  %v846 = vpack.c.b16 %v522, %v510
  %v847 = vpack.c.b16 %v523, %v511
  %v848 = vpack.c.b16 %v524, %v512
  %v849 = vpack.c.b16 %v525, %v513
  %v850 = vpack.c.b16 %v526, %v514
  %v851 = vpack.c.b16 %v527, %v515
  %v852 = vpack.c.b16 %v528, %v516
  %v853 = vpack.c.b16 %v541, %v529
  %v854 = vpack.c.b16 %v542, %v530
  %v855 = vpack.c.b16 %v543, %v531
  %v856 = vpack.c.b16 %v544, %v532
  %v857 = vpack.c.b16 %v545, %v533
  %v858 = vpack.c.b16 %v546, %v534
  %v859 = vpack.c.b16 %v547, %v535
  %v860 = vpack.c.b16 %v548, %v536
  %v861 = vpack.c.b16 %v549, %v537
  %v862 = vpack.c.b16 %v550, %v538
  %v863 = vpack.c.b16 %v551, %v539
  %v864 = vpack.c.b16 %v552, %v540
  %v865 = vpack.c.b16 %v565, %v553
  %v866 = vpack.c.b16 %v566, %v554
  %v867 = vpack.c.b16 %v567, %v555
  %v868 = vpack.c.b16 %v568, %v556
  %v869 = vpack.c.b16 %v569, %v557
  %v870 = vpack.c.b16 %v570, %v558
  %v871 = vpack.c.b16 %v571, %v559
  %v872 = vpack.c.b16 %v572, %v560
  %v873 = vpack.c.b16 %v573, %v561
  %v874 = vpack.c.b16 %v574, %v562
  %v875 = vpack.c.b16 %v575, %v563
  %v876 = vpack.c.b16 %v576, %v564
  %v877 = vpack.c.b16 %v589, %v577
  %v878 = vpack.c.b16 %v590, %v578
  %v879 = vpack.c.b16 %v591, %v579
  %v880 = vpack.c.b16 %v592, %v580
  %v881 = vpack.c.b16 %v593, %v581
  %v882 = vpack.c.b16 %v594, %v582
  %v883 = vpack.c.b16 %v595, %v583
  %v884 = vpack.c.b16 %v596, %v584
  %v885 = vpack.c.b16 %v597, %v585
  %v886 = vpack.c.b16 %v598, %v586
  %v887 = vpack.c.b16 %v599, %v587
  %v888 = vpack.c.b16 %v600, %v588
  %v889 = vpack.c.b16 %v613, %v601
  %v890 = vpack.c.b16 %v614, %v602
  %v891 = vpack.c.b16 %v615, %v603
  %v892 = vpack.c.b16 %v616, %v604
  %v893 = vpack.c.b16 %v617, %v605
  %v894 = vpack.c.b16 %v618, %v606
  %v895 = vpack.c.b16 %v619, %v607
  %v896 = vpack.c.b16 %v620, %v608
  %v897 = vpack.c.b16 %v621, %v609
  %v898 = vpack.c.b16 %v622, %v610
  %v899 = vpack.c.b16 %v623, %v611
  %v900 = vpack.c.b16 %v624, %v612
  %v901 = vpack.c.b16 %v637, %v625
  %v902 = vpack.c.b16 %v638, %v626
  %v903 = vpack.c.b16 %v639, %v627
  %v904 = vpack.c.b16 %v640, %v628
  %v905 = vpack.c.b16 %v641, %v629
  %v906 = vpack.c.b16 %v642, %v630
  %v907 = vpack.c.b16 %v643, %v631
  %v908 = vpack.c.b16 %v644, %v632
  %v909 = vpack.c.b16 %v645, %v633
  %v910 = vpack.c.b16 %v646, %v634
  %v911 = vpack.c.b16 %v647, %v635
  %v912 = vpack.c.b16 %v648, %v636
  %v913 = vpack.c.b16 %v661, %v649
  %v914 = vpack.c.b16 %v662, %v650
  %v915 = vpack.c.b16 %v663, %v651
  %v916 = vpack.c.b16 %v664, %v652
  %v917 = vpack.c.b16 %v665, %v653
  %v918 = vpack.c.b16 %v666, %v654
  %v919 = vpack.c.b16 %v667, %v655
  %v920 = vpack.c.b16 %v668, %v656
  %v921 = vpack.c.b16 %v669, %v657
  %v922 = vpack.c.b16 %v670, %v658
  %v923 = vpack.c.b16 %v671, %v659
  %v924 = vpack.c.b16 %v672, %v660
  %v925 = vpack.c.b16 %v685, %v673
  %v926 = vpack.c.b16 %v686, %v674
  %v927 = vpack.c.b16 %v687, %v675
  %v928 = vpack.c.b16 %v688, %v676
  %v929 = vpack.c.b16 %v689, %v677
  %v930 = vpack.c.b16 %v690, %v678
  %v931 = vpack.c.b16 %v691, %v679
  %v932 = vpack.c.b16 %v692, %v680
  %v933 = vpack.c.b16 %v693, %v681
  %v934 = vpack.c.b16 %v694, %v682
  %v935 = vpack.c.b16 %v695, %v683
  %v936 = vpack.c.b16 %v696, %v684
  %v937 = vpack.c.b16 %v709, %v697
  %v938 = vpack.c.b16 %v710, %v698
  %v939 = vpack.c.b16 %v711, %v699
  %v940 = vpack.c.b16 %v712, %v700
  %v941 = vpack.c.b16 %v713, %v701
  %v942 = vpack.c.b16 %v714, %v702
  %v943 = vpack.c.b16 %v715, %v703
  %v944 = vpack.c.b16 %v716, %v704
  %v945 = vpack.c.b16 %v717, %v705
  %v946 = vpack.c.b16 %v718, %v706
  %v947 = vpack.c.b16 %v719, %v707
  %v948 = vpack.c.b16 %v720, %v708
  %v949 = vpack.c.b16 %v733, %v721
  %v950 = vpack.c.b16 %v734, %v722
  %v951 = vpack.c.b16 %v735, %v723
  %v952 = vpack.c.b16 %v736, %v724
  %v953 = vpack.c.b16 %v737, %v725
  %v954 = vpack.c.b16 %v738, %v726
  %v955 = vpack.c.b16 %v739, %v727
  %v956 = vpack.c.b16 %v740, %v728
  %v957 = vpack.c.b16 %v741, %v729
  %v958 = vpack.c.b16 %v742, %v730
  %v959 = vpack.c.b16 %v743, %v731
  %v960 = vpack.c.b16 %v744, %v732
  %v961 = vpack.c.b16 %v757, %v745
  %v962 = vpack.c.b16 %v758, %v746
  %v963 = vpack.c.b16 %v759, %v747
  %v964 = vpack.c.b16 %v760, %v748
  %v965 = vpack.c.b16 %v761, %v749
  %v966 = vpack.c.b16 %v762, %v750
  %v967 = vpack.c.b16 %v763, %v751
  %v968 = vpack.c.b16 %v764, %v752
  %v969 = vpack.c.b16 %v765, %v753
  %v970 = vpack.c.b16 %v766, %v754
  %v971 = vpack.c.b16 %v767, %v755
  %v972 = vpack.c.b16 %v768, %v756
  %v973 = vpack.c.b16 %v781, %v769
  %v974 = vpack.c.b16 %v782, %v770
  %v975 = vpack.c.b16 %v783, %v771
  %v976 = vpack.c.b16 %v784, %v772
  %v977 = vpack.c.b16 %v785, %v773
  %v978 = vpack.c.b16 %v786, %v774
  %v979 = vpack.c.b16 %v787, %v775
  %v980 = vpack.c.b16 %v788, %v776
  %v981 = vpack.c.b16 %v789, %v777
  %v982 = vpack.c.b16 %v790, %v778
  %v983 = vpack.c.b16 %v791, %v779
  %v984 = vpack.c.b16 %v792, %v780
  %1177 = vmatprep.subr.bf16.mxu0 %v794
  %1178 = vmatpush1.bf16.msra.mxu0 %v793
  %1179 = vmatprep.subr.bf16.mxu0 %v806
  %1180 = vmatpush1.bf16.msra.mxu0 %v805
  %1181 = vmatprep.subr.bf16.mxu0 %v818
  %1182 = vmatpush1.bf16.msra.mxu0 %v817
  %1183 = vmatprep.subr.bf16.mxu0 %v830
  %1184 = vmatpush1.bf16.msra.mxu0 %v829
  %1185 = vmatprep.subr.bf16.mxu0 %v842
  %1186 = vmatpush1.bf16.msra.mxu0 %v841
  %1187 = vmatprep.subr.bf16.mxu0 %v854
  %1188 = vmatpush1.bf16.msra.mxu0 %v853
  %1189 = vmatprep.subr.bf16.mxu0 %v866
  %1190 = vmatpush1.bf16.msra.mxu0 %v865
  %1191 = vmatprep.subr.bf16.mxu0 %v878
  %1192 = vmatpush1.bf16.msra.mxu0 %v877
  %1193 = vmatprep.subr.bf16.mxu0 %v890
  %1194 = vmatpush1.bf16.msra.mxu0 %v889
  %1195 = vmatprep.subr.bf16.mxu0 %v902
  %1196 = vmatpush1.bf16.msra.mxu0 %v901
  %1197 = vmatprep.subr.bf16.mxu0 %v914
  %1198 = vmatpush1.bf16.msra.mxu0 %v913
  %1199 = vmatprep.subr.bf16.mxu0 %v926
  %1200 = vmatpush1.bf16.msra.mxu0 %v925
  %1201 = vmatprep.subr.bf16.mxu0 %v938
  %1202 = vmatpush1.bf16.msra.mxu0 %v937
  %1203 = vmatprep.subr.bf16.mxu0 %v950
  %1204 = vmatpush1.bf16.msra.mxu0 %v949
  %1205 = vmatprep.subr.bf16.mxu0 %v962
  %1206 = vmatpush1.bf16.msra.mxu0 %v961
  %1207 = vmatprep.subr.bf16.mxu0 %v974
  %1208 = vmatpush1.bf16.msra.mxu0 %v973
  %1209 = vmatprep.mubr.bf16.mxu0 %v214
  %1210 = vmatmul.mubr.bf16.gmra.mrb[0].mxu0 %v213
  %v1211 = vpop.f32.mrb[0].mxu0
  %v1212 = vadd.f32 0.0, %v1211
  %v1213 = vpop.f32.mrb[0].mxu0
  %v1214 = vadd.f32 0.0, %v1213
  %v1215 = vpop.f32.mrb[0].mxu0
  %v1216 = vpop.f32.mrb[0].mxu0
  %1217 = vdwg.mxu0
  %1218 = vmatprep.subr.bf16.mxu0 %v796
  %1219 = vmatpush1.bf16.msra.mxu0 %v795
  %1220 = vmatprep.subr.bf16.mxu0 %v808
  %1221 = vmatpush1.bf16.msra.mxu0 %v807
  %1222 = vmatprep.subr.bf16.mxu0 %v820
  %1223 = vmatpush1.bf16.msra.mxu0 %v819
  %1224 = vmatprep.subr.bf16.mxu0 %v832
  %1225 = vmatpush1.bf16.msra.mxu0 %v831
  %1226 = vmatprep.subr.bf16.mxu0 %v844
  %1227 = vmatpush1.bf16.msra.mxu0 %v843
  %1228 = vmatprep.subr.bf16.mxu0 %v856
  %1229 = vmatpush1.bf16.msra.mxu0 %v855
  %1230 = vmatprep.subr.bf16.mxu0 %v868
  %1231 = vmatpush1.bf16.msra.mxu0 %v867
  %1232 = vmatprep.subr.bf16.mxu0 %v880
  %1233 = vmatpush1.bf16.msra.mxu0 %v879
  %1234 = vmatprep.subr.bf16.mxu0 %v892
  %1235 = vmatpush1.bf16.msra.mxu0 %v891
  %1236 = vmatprep.subr.bf16.mxu0 %v904
  %1237 = vmatpush1.bf16.msra.mxu0 %v903
  %1238 = vmatprep.subr.bf16.mxu0 %v916
  %1239 = vmatpush1.bf16.msra.mxu0 %v915
  %1240 = vmatprep.subr.bf16.mxu0 %v928
  %1241 = vmatpush1.bf16.msra.mxu0 %v927
  %1242 = vmatprep.subr.bf16.mxu0 %v940
  %1243 = vmatpush1.bf16.msra.mxu0 %v939
  %1244 = vmatprep.subr.bf16.mxu0 %v952
  %1245 = vmatpush1.bf16.msra.mxu0 %v951
  %1246 = vmatprep.subr.bf16.mxu0 %v964
  %1247 = vmatpush1.bf16.msra.mxu0 %v963
  %1248 = vmatprep.subr.bf16.mxu0 %v976
  %1249 = vmatpush1.bf16.msra.mxu0 %v975
  %1250 = vmatprep.mubr.bf16.mxu0 %v214
  %1251 = vmatmul.mubr.bf16.gmra.mrb[0].mxu0 %v213
  %v1252 = vpop.f32.mrb[0].mxu0
  %v1253 = vadd.f32 0.0, %v1252
  %v1254 = vpop.f32.mrb[0].mxu0
  %v1255 = vadd.f32 0.0, %v1254
  %v1256 = vpop.f32.mrb[0].mxu0
  %v1257 = vpop.f32.mrb[0].mxu0
  %1258 = vdwg.mxu0
  %1259 = vmatprep.subr.bf16.mxu0 %v798
  %1260 = vmatpush1.bf16.msra.mxu0 %v797
  %1261 = vmatprep.subr.bf16.mxu0 %v810
  %1262 = vmatpush1.bf16.msra.mxu0 %v809
  %1263 = vmatprep.subr.bf16.mxu0 %v822
  %1264 = vmatpush1.bf16.msra.mxu0 %v821
  %1265 = vmatprep.subr.bf16.mxu0 %v834
  %1266 = vmatpush1.bf16.msra.mxu0 %v833
  %1267 = vmatprep.subr.bf16.mxu0 %v846
  %1268 = vmatpush1.bf16.msra.mxu0 %v845
  %1269 = vmatprep.subr.bf16.mxu0 %v858
  %1270 = vmatpush1.bf16.msra.mxu0 %v857
  %1271 = vmatprep.subr.bf16.mxu0 %v870
  %1272 = vmatpush1.bf16.msra.mxu0 %v869
  %1273 = vmatprep.subr.bf16.mxu0 %v882
  %1274 = vmatpush1.bf16.msra.mxu0 %v881
  %1275 = vmatprep.subr.bf16.mxu0 %v894
  %1276 = vmatpush1.bf16.msra.mxu0 %v893
  %1277 = vmatprep.subr.bf16.mxu0 %v906
  %1278 = vmatpush1.bf16.msra.mxu0 %v905
  %1279 = vmatprep.subr.bf16.mxu0 %v918
  %1280 = vmatpush1.bf16.msra.mxu0 %v917
  %1281 = vmatprep.subr.bf16.mxu0 %v930
  %1282 = vmatpush1.bf16.msra.mxu0 %v929
  %1283 = vmatprep.subr.bf16.mxu0 %v942
  %1284 = vmatpush1.bf16.msra.mxu0 %v941
  %1285 = vmatprep.subr.bf16.mxu0 %v954
  %1286 = vmatpush1.bf16.msra.mxu0 %v953
  %1287 = vmatprep.subr.bf16.mxu0 %v966
  %1288 = vmatpush1.bf16.msra.mxu0 %v965
  %1289 = vmatprep.subr.bf16.mxu0 %v978
  %1290 = vmatpush1.bf16.msra.mxu0 %v977
  %1291 = vmatprep.mubr.bf16.mxu0 %v214
  %1292 = vmatmul.mubr.bf16.gmra.mrb[0].mxu0 %v213
  %v1293 = vpop.f32.mrb[0].mxu0
  %v1294 = vadd.f32 0.0, %v1293
  %v1295 = vpop.f32.mrb[0].mxu0
  %v1296 = vadd.f32 0.0, %v1295
  %v1297 = vpop.f32.mrb[0].mxu0
  %v1298 = vpop.f32.mrb[0].mxu0
  %1299 = vdwg.mxu0
  %1300 = vmatprep.subr.bf16.mxu0 %v800
  %1301 = vmatpush1.bf16.msra.mxu0 %v799
  %1302 = vmatprep.subr.bf16.mxu0 %v812
  %1303 = vmatpush1.bf16.msra.mxu0 %v811
  %1304 = vmatprep.subr.bf16.mxu0 %v824
  %1305 = vmatpush1.bf16.msra.mxu0 %v823
  %1306 = vmatprep.subr.bf16.mxu0 %v836
  %1307 = vmatpush1.bf16.msra.mxu0 %v835
  %1308 = vmatprep.subr.bf16.mxu0 %v848
  %1309 = vmatpush1.bf16.msra.mxu0 %v847
  %1310 = vmatprep.subr.bf16.mxu0 %v860
  %1311 = vmatpush1.bf16.msra.mxu0 %v859
  %1312 = vmatprep.subr.bf16.mxu0 %v872
  %1313 = vmatpush1.bf16.msra.mxu0 %v871
  %1314 = vmatprep.subr.bf16.mxu0 %v884
  %1315 = vmatpush1.bf16.msra.mxu0 %v883
  %1316 = vmatprep.subr.bf16.mxu0 %v896
  %1317 = vmatpush1.bf16.msra.mxu0 %v895
  %1318 = vmatprep.subr.bf16.mxu0 %v908
  %1319 = vmatpush1.bf16.msra.mxu0 %v907
  %1320 = vmatprep.subr.bf16.mxu0 %v920
  %1321 = vmatpush1.bf16.msra.mxu0 %v919
  %1322 = vmatprep.subr.bf16.mxu0 %v932
  %1323 = vmatpush1.bf16.msra.mxu0 %v931
  %1324 = vmatprep.subr.bf16.mxu0 %v944
  %1325 = vmatpush1.bf16.msra.mxu0 %v943
  %1326 = vmatprep.subr.bf16.mxu0 %v956
  %1327 = vmatpush1.bf16.msra.mxu0 %v955
  %1328 = vmatprep.subr.bf16.mxu0 %v968
  %1329 = vmatpush1.bf16.msra.mxu0 %v967
  %1330 = vmatprep.subr.bf16.mxu0 %v980
  %1331 = vmatpush1.bf16.msra.mxu0 %v979
  %1332 = vmatprep.mubr.bf16.mxu0 %v214
  %1333 = vmatmul.mubr.bf16.gmra.mrb[0].mxu0 %v213
  %v1334 = vpop.f32.mrb[0].mxu0
  %v1335 = vadd.f32 0.0, %v1334
  %v1336 = vpop.f32.mrb[0].mxu0
  %v1337 = vadd.f32 0.0, %v1336
  %v1338 = vpop.f32.mrb[0].mxu0
  %v1339 = vpop.f32.mrb[0].mxu0
  %1340 = vdwg.mxu0
  %1341 = vmatprep.subr.bf16.mxu0 %v802
  %1342 = vmatpush1.bf16.msra.mxu0 %v801
  %1343 = vmatprep.subr.bf16.mxu0 %v814
  %1344 = vmatpush1.bf16.msra.mxu0 %v813
  %1345 = vmatprep.subr.bf16.mxu0 %v826
  %1346 = vmatpush1.bf16.msra.mxu0 %v825
  %1347 = vmatprep.subr.bf16.mxu0 %v838
  %1348 = vmatpush1.bf16.msra.mxu0 %v837
  %1349 = vmatprep.subr.bf16.mxu0 %v850
  %1350 = vmatpush1.bf16.msra.mxu0 %v849
  %1351 = vmatprep.subr.bf16.mxu0 %v862
  %1352 = vmatpush1.bf16.msra.mxu0 %v861
  %1353 = vmatprep.subr.bf16.mxu0 %v874
  %1354 = vmatpush1.bf16.msra.mxu0 %v873
  %1355 = vmatprep.subr.bf16.mxu0 %v886
  %1356 = vmatpush1.bf16.msra.mxu0 %v885
  %1357 = vmatprep.subr.bf16.mxu0 %v898
  %1358 = vmatpush1.bf16.msra.mxu0 %v897
  %1359 = vmatprep.subr.bf16.mxu0 %v910
  %1360 = vmatpush1.bf16.msra.mxu0 %v909
  %1361 = vmatprep.subr.bf16.mxu0 %v922
  %1362 = vmatpush1.bf16.msra.mxu0 %v921
  %1363 = vmatprep.subr.bf16.mxu0 %v934
  %1364 = vmatpush1.bf16.msra.mxu0 %v933
  %1365 = vmatprep.subr.bf16.mxu0 %v946
  %1366 = vmatpush1.bf16.msra.mxu0 %v945
  %1367 = vmatprep.subr.bf16.mxu0 %v958
  %1368 = vmatpush1.bf16.msra.mxu0 %v957
  %1369 = vmatprep.subr.bf16.mxu0 %v970
  %1370 = vmatpush1.bf16.msra.mxu0 %v969
  %1371 = vmatprep.subr.bf16.mxu0 %v982
  %1372 = vmatpush1.bf16.msra.mxu0 %v981
  %1373 = vmatprep.mubr.bf16.mxu0 %v214
  %1374 = vmatmul.mubr.bf16.gmra.mrb[0].mxu0 %v213
  %v1375 = vpop.f32.mrb[0].mxu0
  %v1376 = vadd.f32 0.0, %v1375
  %v1377 = vpop.f32.mrb[0].mxu0
  %v1378 = vadd.f32 0.0, %v1377
  %v1379 = vpop.f32.mrb[0].mxu0
  %v1380 = vpop.f32.mrb[0].mxu0
  %1381 = vdwg.mxu0
  %1382 = vmatprep.subr.bf16.mxu0 %v804
  %1383 = vmatpush1.bf16.msra.mxu0 %v803
  %1384 = vmatprep.subr.bf16.mxu0 %v816
  %1385 = vmatpush1.bf16.msra.mxu0 %v815
  %1386 = vmatprep.subr.bf16.mxu0 %v828
  %1387 = vmatpush1.bf16.msra.mxu0 %v827
  %1388 = vmatprep.subr.bf16.mxu0 %v840
  %1389 = vmatpush1.bf16.msra.mxu0 %v839
  %1390 = vmatprep.subr.bf16.mxu0 %v852
  %1391 = vmatpush1.bf16.msra.mxu0 %v851
  %1392 = vmatprep.subr.bf16.mxu0 %v864
  %1393 = vmatpush1.bf16.msra.mxu0 %v863
  %1394 = vmatprep.subr.bf16.mxu0 %v876
  %1395 = vmatpush1.bf16.msra.mxu0 %v875
  %1396 = vmatprep.subr.bf16.mxu0 %v888
  %1397 = vmatpush1.bf16.msra.mxu0 %v887
  %1398 = vmatprep.subr.bf16.mxu0 %v900
  %1399 = vmatpush1.bf16.msra.mxu0 %v899
  %1400 = vmatprep.subr.bf16.mxu0 %v912
  %1401 = vmatpush1.bf16.msra.mxu0 %v911
  %1402 = vmatprep.subr.bf16.mxu0 %v924
  %1403 = vmatpush1.bf16.msra.mxu0 %v923
  %1404 = vmatprep.subr.bf16.mxu0 %v936
  %1405 = vmatpush1.bf16.msra.mxu0 %v935
  %1406 = vmatprep.subr.bf16.mxu0 %v948
  %1407 = vmatpush1.bf16.msra.mxu0 %v947
  %1408 = vmatprep.subr.bf16.mxu0 %v960
  %1409 = vmatpush1.bf16.msra.mxu0 %v959
  %1410 = vmatprep.subr.bf16.mxu0 %v972
  %1411 = vmatpush1.bf16.msra.mxu0 %v971
  %1412 = vmatprep.subr.bf16.mxu0 %v984
  %1413 = vmatpush1.bf16.msra.mxu0 %v983
  %1414 = vmatprep.mubr.bf16.mxu0 %v214
  %1415 = vmatmul.mubr.bf16.gmra.mrb[0].mxu0 %v213
  %v1416 = vpop.f32.mrb[0].mxu0
  %v1417 = vadd.f32 0.0, %v1416
  %v1418 = vpop.f32.mrb[0].mxu0
  %v1419 = vadd.f32 0.0, %v1418
  %v1420 = vpop.f32.mrb[0].mxu0
  %v1421 = vpop.f32.mrb[0].mxu0
  %1422 = vdwg.mxu0
  %v1423 = vadd.f32 %v1212, %v1214
  %v1424 = vadd.f32 %v1423, %v1253
  %v1425 = vadd.f32 %v1424, %v1255
  %v1426 = vadd.f32 %v1425, %v1294
  %v1427 = vadd.f32 %v1426, %v1296
  %v1428 = vadd.f32 %v1427, %v1335
  %v1429 = vadd.f32 %v1428, %v1337
  %v1430 = vadd.f32 %v1429, %v1376
  %v1431 = vadd.f32 %v1430, %v1378
  %v1432 = vadd.f32 %v1431, %v1417
  %v1433 = vadd.f32 %v1432, %v1419
  %1434 = vadd.xlane.f32.xlu0 %v1433
  %v1435 = vpop.xlane.xlu0 %1434
  %v1436 = vmul.f32 %v1435, 0.0006510417
  %v1437 = vmul.f32 %v1212, %v1212
  %v1438 = vmul.f32 %v1214, %v1214
  %v1439 = vmul.f32 %v1253, %v1253
  %v1440 = vmul.f32 %v1255, %v1255
  %v1441 = vmul.f32 %v1294, %v1294
  %v1442 = vmul.f32 %v1296, %v1296
  %v1443 = vmul.f32 %v1335, %v1335
  %v1444 = vmul.f32 %v1337, %v1337
  %v1445 = vmul.f32 %v1376, %v1376
  %v1446 = vmul.f32 %v1378, %v1378
  %v1447 = vmul.f32 %v1417, %v1417
  %v1448 = vmul.f32 %v1419, %v1419
  %v1449 = vadd.f32 %v1437, %v1438
  %v1450 = vadd.f32 %v1449, %v1439
  %v1451 = vadd.f32 %v1450, %v1440
  %v1452 = vadd.f32 %v1451, %v1441
  %v1453 = vadd.f32 %v1452, %v1442
  %v1454 = vadd.f32 %v1453, %v1443
  %v1455 = vadd.f32 %v1454, %v1444
  %v1456 = vadd.f32 %v1455, %v1445
  %v1457 = vadd.f32 %v1456, %v1446
  %v1458 = vadd.f32 %v1457, %v1447
  %v1459 = vadd.f32 %v1458, %v1448
  %1460 = vadd.xlane.f32.xlu0 %v1459
  %v1461 = vpop.xlane.xlu0 %1460
  %v1462 = vmul.f32 %v1461, 0.0006510417
  %v1463 = vmul.f32 %v1436, %v1436
  %v1464 = vsub.f32 %v1462, %v1463
  %v1465 = vmax.f32 %v1464, 0.0
  %v1466 = vld [vmem:[%s2] sm:$0xff]
  %v1467 = vadd.f32 %v1465, 1e-05
  %v1468 = vrsqrt.pop %v1467
  %v1469 = vmul.f32 %v1466, %v1468
  %v1470 = vld [vmem:[%s3] sm:$0xff]
  %v1471 = vmul.f32 %v1436, %v1469
  %v1472 = vsub.f32 %v1470, %v1471
  %1474 = vset.pattern.permute.xlu0 0
  %1475 = vperm.xlu0 %1474, %v1469
  %v1476 = vpop.permute.xlu0 %1475
  %v1478 = vmul.f32 %v1212, %v1476
  %v1479 = vmul.f32 %v1214, %v1476
  %v1480 = vmul.f32 %v1253, %v1476
  %v1481 = vmul.f32 %v1255, %v1476
  %v1482 = vmul.f32 %v1294, %v1476
  %v1483 = vmul.f32 %v1296, %v1476
  %v1484 = vmul.f32 %v1335, %v1476
  %v1485 = vmul.f32 %v1337, %v1476
  %v1486 = vmul.f32 %v1376, %v1476
  %v1487 = vmul.f32 %v1378, %v1476
  %v1488 = vmul.f32 %v1417, %v1476
  %v1489 = vmul.f32 %v1419, %v1476
  %1491 = vset.pattern.permute.xlu0 0
  %1492 = vperm.xlu0 %1491, %v1472
  %v1493 = vpop.permute.xlu0 %1492
  %v1495 = vadd.f32 %v1478, %v1493
  %v1496 = vadd.f32 %v1479, %v1493
  %v1497 = vadd.f32 %v1480, %v1493
  %v1498 = vadd.f32 %v1481, %v1493
  %v1499 = vadd.f32 %v1482, %v1493
  %v1500 = vadd.f32 %v1483, %v1493
  %v1501 = vadd.f32 %v1484, %v1493
  %v1502 = vadd.f32 %v1485, %v1493
  %v1503 = vadd.f32 %v1486, %v1493
  %v1504 = vadd.f32 %v1487, %v1493
  %v1505 = vadd.f32 %v1488, %v1493
  %v1506 = vadd.f32 %v1489, %v1493
  %v1507 = vmax.f32 %v1495, 0.0
  %v1508 = vmax.f32 %v1496, 0.0
  %v1509 = vmax.f32 %v1497, 0.0
  %v1510 = vmax.f32 %v1498, 0.0
  %v1511 = vmax.f32 %v1499, 0.0
  %v1512 = vmax.f32 %v1500, 0.0
  %v1513 = vmax.f32 %v1501, 0.0
  %v1514 = vmax.f32 %v1502, 0.0
  %v1515 = vmax.f32 %v1503, 0.0
  %v1516 = vmax.f32 %v1504, 0.0
  %v1517 = vmax.f32 %v1505, 0.0
  %v1518 = vmax.f32 %v1506, 0.0
  %v1519 = vpack.c.bf16 %v1507, %v1507
  %v1520 = vpack.c.bf16 %v1508, %v1508
  %v1521 = vpack.c.bf16 %v1509, %v1509
  %v1522 = vpack.c.bf16 %v1510, %v1510
  %v1523 = vpack.c.bf16 %v1511, %v1511
  %v1524 = vpack.c.bf16 %v1512, %v1512
  %v1525 = vpack.c.bf16 %v1513, %v1513
  %v1526 = vpack.c.bf16 %v1514, %v1514
  %v1527 = vpack.c.bf16 %v1515, %v1515
  %v1528 = vpack.c.bf16 %v1516, %v1516
  %v1529 = vpack.c.bf16 %v1517, %v1517
  %v1530 = vpack.c.bf16 %v1518, %v1518
  %v1543 = vunpack.c.l.b16 %v1519
  %v1544 = vunpack.c.l.b16 %v1520
  %v1545 = vunpack.c.l.b16 %v1521
  %v1546 = vunpack.c.l.b16 %v1522
  %v1547 = vunpack.c.l.b16 %v1523
  %v1548 = vunpack.c.l.b16 %v1524
  %v1549 = vunpack.c.l.b16 %v1525
  %v1550 = vunpack.c.l.b16 %v1526
  %v1551 = vunpack.c.l.b16 %v1527
  %v1552 = vunpack.c.l.b16 %v1528
  %v1553 = vunpack.c.l.b16 %v1529
  %v1554 = vunpack.c.l.b16 %v1530
  %v1555 = vpack.c.b16 %v1544, %v1543
  %v1556 = vpack.c.b16 %v1546, %v1545
  %v1557 = vpack.c.b16 %v1548, %v1547
  %v1558 = vpack.c.b16 %v1550, %v1549
  %v1559 = vpack.c.b16 %v1552, %v1551
  %v1560 = vpack.c.b16 %v1554, %v1553
  %1567 = vst [vmem:[%s4] sm:$0xff] %v1555
  %1568 = vst [vmem:[%s4 + $0x8] sm:$0xff] %v1556
  %1569 = vst [vmem:[%s4 + $0x10] sm:$0xff] %v1557
  %1570 = vst [vmem:[%s4 + $0x18] sm:$0xff] %v1558
  %1571 = vst [vmem:[%s4 + $0x20] sm:$0xff] %v1559
  %1572 = vst [vmem:[%s4 + $0x28] sm:$0xff] %v1560
  // Predicated region
  $region18: #{generator_forward.8} parent=0 // pred_check
    _
  $region19: #{generator_forward.8} parent=0 // pred_check_branch
    %1574 = sbr.rel (0) target = $region21
  $region20: #{generator_forward.8} parent=0 // pred_region
    _
  $region21: #{generator_forward.8} parent=0 // pred_fallthru
    _
  // Predicated region
  $region22: #{generator_forward.8} parent=0 // pred_check
    _
  $region23: #{generator_forward.8} parent=0 // pred_check_branch
    %1576 = sbr.rel (0) target = $region25
  $region24: #{generator_forward.8} parent=0 // pred_region
    _
  $region25: #{generator_forward.8} parent=0 // pred_fallthru
    _

// kernel: generator_forward.9
$region0: #{generator_forward.9}
  #allocation0 [shape = 'u32[]', space=smem, size = 0x4, offset = 0x4, fixed_abs, tag = 'smem constant byte address 0x4 - core index']
  #allocation1 [shape = 'u32[144,128]{1,0:T(1,128)}', space=vmem, size = 0x12000, scoped, tag = 'internal scratch']
  %s0 = inlined_call_operand.vmem [shape: bf16[8,128], index: 0, kind: input, shape index: {}]
  %s1 = inlined_call_operand.vmem [shape: bf16[128,6144], index: 1, kind: input, shape index: {}]
  %s2 = inlined_call_operand.vmem [shape: f32[8,6144], index: 2, kind: output, shape index: {}]
  %s3 = sld [smem:[#allocation0]]
  $region18: #{generator_forward.9} parent=0
    _
  %s5 = ssub.s32 1, %s3
  %s6 = scalar_select 0, %s5, %s3
  // Predicated region
  $region2: #{generator_forward.9} parent=0 // pred_check
    _
  $region3: #{generator_forward.9} parent=0 // pred_check_branch
    %8 = sbr.rel (0) target = $region5
  $region4: #{generator_forward.9} parent=0 // pred_region
    _
  $region5: #{generator_forward.9} parent=0 // pred_fallthru
    _
  // Predicated region
  $region6: #{generator_forward.9} parent=0 // pred_check
    _
  $region7: #{generator_forward.9} parent=0 // pred_check_branch
    %10 = sbr.rel (0) target = $region9
  $region8: #{generator_forward.9} parent=0 // pred_region
    _
  $region9: #{generator_forward.9} parent=0 // pred_fallthru
    _
  %v12 = vld [vmem:[%s0] sm:$0xf]
  %v13 = vld [vmem:[%s1] sm:$0xff]
  %v14 = vld [vmem:[%s1 + $0x8] sm:$0xff]
  %v15 = vld [vmem:[%s1 + $0x10] sm:$0xff]
  %v16 = vld [vmem:[%s1 + $0x18] sm:$0xff]
  %v17 = vld [vmem:[%s1 + $0x20] sm:$0xff]
  %v18 = vld [vmem:[%s1 + $0x28] sm:$0xff]
  %v19 = vld [vmem:[%s1 + $0x30] sm:$0xff]
  %v20 = vld [vmem:[%s1 + $0x38] sm:$0xff]
  %v21 = vld [vmem:[%s1 + $0x40] sm:$0xff]
  %v22 = vld [vmem:[%s1 + $0x48] sm:$0xff]
  %v23 = vld [vmem:[%s1 + $0x50] sm:$0xff]
  %v24 = vld [vmem:[%s1 + $0x58] sm:$0xff]
  %v25 = vld [vmem:[%s1 + $0x60] sm:$0xff]
  %v26 = vld [vmem:[%s1 + $0x68] sm:$0xff]
  %v27 = vld [vmem:[%s1 + $0x70] sm:$0xff]
  %v28 = vld [vmem:[%s1 + $0x78] sm:$0xff]
  %v29 = vld [vmem:[%s1 + $0x80] sm:$0xff]
  %v30 = vld [vmem:[%s1 + $0x88] sm:$0xff]
  %v31 = vld [vmem:[%s1 + $0x90] sm:$0xff]
  %v32 = vld [vmem:[%s1 + $0x98] sm:$0xff]
  %v33 = vld [vmem:[%s1 + $0xa0] sm:$0xff]
  %v34 = vld [vmem:[%s1 + $0xa8] sm:$0xff]
  %v35 = vld [vmem:[%s1 + $0xb0] sm:$0xff]
  %v36 = vld [vmem:[%s1 + $0xb8] sm:$0xff]
  %v37 = vld [vmem:[%s1 + $0xc0] sm:$0xff]
  %v38 = vld [vmem:[%s1 + $0xc8] sm:$0xff]
  %v39 = vld [vmem:[%s1 + $0xd0] sm:$0xff]
  %v40 = vld [vmem:[%s1 + $0xd8] sm:$0xff]
  %v41 = vld [vmem:[%s1 + $0xe0] sm:$0xff]
  %v42 = vld [vmem:[%s1 + $0xe8] sm:$0xff]
  %v43 = vld [vmem:[%s1 + $0xf0] sm:$0xff]
  %v44 = vld [vmem:[%s1 + $0xf8] sm:$0xff]
  %v45 = vld [vmem:[%s1 + $0x100] sm:$0xff]
  %v46 = vld [vmem:[%s1 + $0x108] sm:$0xff]
  %v47 = vld [vmem:[%s1 + $0x110] sm:$0xff]
  %v48 = vld [vmem:[%s1 + $0x118] sm:$0xff]
  %v49 = vld [vmem:[%s1 + $0x120] sm:$0xff]
  %v50 = vld [vmem:[%s1 + $0x128] sm:$0xff]
  %v51 = vld [vmem:[%s1 + $0x130] sm:$0xff]
  %v52 = vld [vmem:[%s1 + $0x138] sm:$0xff]
  %v53 = vld [vmem:[%s1 + $0x140] sm:$0xff]
  %v54 = vld [vmem:[%s1 + $0x148] sm:$0xff]
  %v55 = vld [vmem:[%s1 + $0x150] sm:$0xff]
  %v56 = vld [vmem:[%s1 + $0x158] sm:$0xff]
  %v57 = vld [vmem:[%s1 + $0x160] sm:$0xff]
  %v58 = vld [vmem:[%s1 + $0x168] sm:$0xff]
  %v59 = vld [vmem:[%s1 + $0x170] sm:$0xff]
  %v60 = vld [vmem:[%s1 + $0x178] sm:$0xff]
  %v61 = vld [vmem:[%s1 + $0x180] sm:$0xff]
  %v62 = vld [vmem:[%s1 + $0x188] sm:$0xff]
  %v63 = vld [vmem:[%s1 + $0x190] sm:$0xff]
  %v64 = vld [vmem:[%s1 + $0x198] sm:$0xff]
  %v65 = vld [vmem:[%s1 + $0x1a0] sm:$0xff]
  %v66 = vld [vmem:[%s1 + $0x1a8] sm:$0xff]
  %v67 = vld [vmem:[%s1 + $0x1b0] sm:$0xff]
  %v68 = vld [vmem:[%s1 + $0x1b8] sm:$0xff]
  %v69 = vld [vmem:[%s1 + $0x1c0] sm:$0xff]
  %v70 = vld [vmem:[%s1 + $0x1c8] sm:$0xff]
  %v71 = vld [vmem:[%s1 + $0x1d0] sm:$0xff]
  %v72 = vld [vmem:[%s1 + $0x1d8] sm:$0xff]
  %v73 = vld [vmem:[%s1 + $0x1e0] sm:$0xff]
  %v74 = vld [vmem:[%s1 + $0x1e8] sm:$0xff]
  %v75 = vld [vmem:[%s1 + $0x1f0] sm:$0xff]
  %v76 = vld [vmem:[%s1 + $0x1f8] sm:$0xff]
  %v77 = vld [vmem:[%s1 + $0x200] sm:$0xff]
  %v78 = vld [vmem:[%s1 + $0x208] sm:$0xff]
  %v79 = vld [vmem:[%s1 + $0x210] sm:$0xff]
  %v80 = vld [vmem:[%s1 + $0x218] sm:$0xff]
  %v81 = vld [vmem:[%s1 + $0x220] sm:$0xff]
  %v82 = vld [vmem:[%s1 + $0x228] sm:$0xff]
  %v83 = vld [vmem:[%s1 + $0x230] sm:$0xff]
  %v84 = vld [vmem:[%s1 + $0x238] sm:$0xff]
  %v85 = vld [vmem:[%s1 + $0x240] sm:$0xff]
  %v86 = vld [vmem:[%s1 + $0x248] sm:$0xff]
  %v87 = vld [vmem:[%s1 + $0x250] sm:$0xff]
  %v88 = vld [vmem:[%s1 + $0x258] sm:$0xff]
  %v89 = vld [vmem:[%s1 + $0x260] sm:$0xff]
  %v90 = vld [vmem:[%s1 + $0x268] sm:$0xff]
  %v91 = vld [vmem:[%s1 + $0x270] sm:$0xff]
  %v92 = vld [vmem:[%s1 + $0x278] sm:$0xff]
  %v93 = vld [vmem:[%s1 + $0x280] sm:$0xff]
  %v94 = vld [vmem:[%s1 + $0x288] sm:$0xff]
  %v95 = vld [vmem:[%s1 + $0x290] sm:$0xff]
  %v96 = vld [vmem:[%s1 + $0x298] sm:$0xff]
  %v97 = vld [vmem:[%s1 + $0x2a0] sm:$0xff]
  %v98 = vld [vmem:[%s1 + $0x2a8] sm:$0xff]
  %v99 = vld [vmem:[%s1 + $0x2b0] sm:$0xff]
  %v100 = vld [vmem:[%s1 + $0x2b8] sm:$0xff]
  %v101 = vld [vmem:[%s1 + $0x2c0] sm:$0xff]
  %v102 = vld [vmem:[%s1 + $0x2c8] sm:$0xff]
  %v103 = vld [vmem:[%s1 + $0x2d0] sm:$0xff]
  %v104 = vld [vmem:[%s1 + $0x2d8] sm:$0xff]
  %v105 = vld [vmem:[%s1 + $0x2e0] sm:$0xff]
  %v106 = vld [vmem:[%s1 + $0x2e8] sm:$0xff]
  %v107 = vld [vmem:[%s1 + $0x2f0] sm:$0xff]
  %v108 = vld [vmem:[%s1 + $0x2f8] sm:$0xff]
  %v109 = vld [vmem:[%s1 + $0x300] sm:$0xff]
  %v110 = vld [vmem:[%s1 + $0x308] sm:$0xff]
  %v111 = vld [vmem:[%s1 + $0x310] sm:$0xff]
  %v112 = vld [vmem:[%s1 + $0x318] sm:$0xff]
  %v113 = vld [vmem:[%s1 + $0x320] sm:$0xff]
  %v114 = vld [vmem:[%s1 + $0x328] sm:$0xff]
  %v115 = vld [vmem:[%s1 + $0x330] sm:$0xff]
  %v116 = vld [vmem:[%s1 + $0x338] sm:$0xff]
  %v117 = vld [vmem:[%s1 + $0x340] sm:$0xff]
  %v118 = vld [vmem:[%s1 + $0x348] sm:$0xff]
  %v119 = vld [vmem:[%s1 + $0x350] sm:$0xff]
  %v120 = vld [vmem:[%s1 + $0x358] sm:$0xff]
  %v121 = vld [vmem:[%s1 + $0x360] sm:$0xff]
  %v122 = vld [vmem:[%s1 + $0x368] sm:$0xff]
  %v123 = vld [vmem:[%s1 + $0x370] sm:$0xff]
  %v124 = vld [vmem:[%s1 + $0x378] sm:$0xff]
  %v125 = vld [vmem:[%s1 + $0x380] sm:$0xff]
  %v126 = vld [vmem:[%s1 + $0x388] sm:$0xff]
  %v127 = vld [vmem:[%s1 + $0x390] sm:$0xff]
  %v128 = vld [vmem:[%s1 + $0x398] sm:$0xff]
  %v129 = vld [vmem:[%s1 + $0x3a0] sm:$0xff]
  %v130 = vld [vmem:[%s1 + $0x3a8] sm:$0xff]
  %v131 = vld [vmem:[%s1 + $0x3b0] sm:$0xff]
  %v132 = vld [vmem:[%s1 + $0x3b8] sm:$0xff]
  %v133 = vld [vmem:[%s1 + $0x3c0] sm:$0xff]
  %v134 = vld [vmem:[%s1 + $0x3c8] sm:$0xff]
  %v135 = vld [vmem:[%s1 + $0x3d0] sm:$0xff]
  %v136 = vld [vmem:[%s1 + $0x3d8] sm:$0xff]
  %v137 = vld [vmem:[%s1 + $0x3e0] sm:$0xff]
  %v138 = vld [vmem:[%s1 + $0x3e8] sm:$0xff]
  %v139 = vld [vmem:[%s1 + $0x3f0] sm:$0xff]
  %v140 = vld [vmem:[%s1 + $0x3f8] sm:$0xff]
  %v141 = vld [vmem:[%s1 + $0x400] sm:$0xff]
  %v142 = vld [vmem:[%s1 + $0x408] sm:$0xff]
  %v143 = vld [vmem:[%s1 + $0x410] sm:$0xff]
  %v144 = vld [vmem:[%s1 + $0x418] sm:$0xff]
  %v145 = vld [vmem:[%s1 + $0x420] sm:$0xff]
  %v146 = vld [vmem:[%s1 + $0x428] sm:$0xff]
  %v147 = vld [vmem:[%s1 + $0x430] sm:$0xff]
  %v148 = vld [vmem:[%s1 + $0x438] sm:$0xff]
  %v149 = vld [vmem:[%s1 + $0x440] sm:$0xff]
  %v150 = vld [vmem:[%s1 + $0x448] sm:$0xff]
  %v151 = vld [vmem:[%s1 + $0x450] sm:$0xff]
  %v152 = vld [vmem:[%s1 + $0x458] sm:$0xff]
  %v153 = vld [vmem:[%s1 + $0x460] sm:$0xff]
  %v154 = vld [vmem:[%s1 + $0x468] sm:$0xff]
  %v155 = vld [vmem:[%s1 + $0x470] sm:$0xff]
  %v156 = vld [vmem:[%s1 + $0x478] sm:$0xff]
  %v157 = vld [vmem:[%s1 + $0x480] sm:$0xff]
  %v158 = vld [vmem:[%s1 + $0x488] sm:$0xff]
  %v159 = vld [vmem:[%s1 + $0x490] sm:$0xff]
  %v160 = vld [vmem:[%s1 + $0x498] sm:$0xff]
  %v161 = vld [vmem:[%s1 + $0x4a0] sm:$0xff]
  %v162 = vld [vmem:[%s1 + $0x4a8] sm:$0xff]
  %v163 = vld [vmem:[%s1 + $0x4b0] sm:$0xff]
  %v164 = vld [vmem:[%s1 + $0x4b8] sm:$0xff]
  %v165 = vld [vmem:[%s1 + $0x4c0] sm:$0xff]
  %v166 = vld [vmem:[%s1 + $0x4c8] sm:$0xff]
  %v167 = vld [vmem:[%s1 + $0x4d0] sm:$0xff]
  %v168 = vld [vmem:[%s1 + $0x4d8] sm:$0xff]
  %v169 = vld [vmem:[%s1 + $0x4e0] sm:$0xff]
  %v170 = vld [vmem:[%s1 + $0x4e8] sm:$0xff]
  %v171 = vld [vmem:[%s1 + $0x4f0] sm:$0xff]
  %v172 = vld [vmem:[%s1 + $0x4f8] sm:$0xff]
  %v173 = vld [vmem:[%s1 + $0x500] sm:$0xff]
  %v174 = vld [vmem:[%s1 + $0x508] sm:$0xff]
  %v175 = vld [vmem:[%s1 + $0x510] sm:$0xff]
  %v176 = vld [vmem:[%s1 + $0x518] sm:$0xff]
  %v177 = vld [vmem:[%s1 + $0x520] sm:$0xff]
  %v178 = vld [vmem:[%s1 + $0x528] sm:$0xff]
  %v179 = vld [vmem:[%s1 + $0x530] sm:$0xff]
  %v180 = vld [vmem:[%s1 + $0x538] sm:$0xff]
  %v181 = vld [vmem:[%s1 + $0x540] sm:$0xff]
  %v182 = vld [vmem:[%s1 + $0x548] sm:$0xff]
  %v183 = vld [vmem:[%s1 + $0x550] sm:$0xff]
  %v184 = vld [vmem:[%s1 + $0x558] sm:$0xff]
  %v185 = vld [vmem:[%s1 + $0x560] sm:$0xff]
  %v186 = vld [vmem:[%s1 + $0x568] sm:$0xff]
  %v187 = vld [vmem:[%s1 + $0x570] sm:$0xff]
  %v188 = vld [vmem:[%s1 + $0x578] sm:$0xff]
  %v189 = vld [vmem:[%s1 + $0x580] sm:$0xff]
  %v190 = vld [vmem:[%s1 + $0x588] sm:$0xff]
  %v191 = vld [vmem:[%s1 + $0x590] sm:$0xff]
  %v192 = vld [vmem:[%s1 + $0x598] sm:$0xff]
  %v193 = vld [vmem:[%s1 + $0x5a0] sm:$0xff]
  %v194 = vld [vmem:[%s1 + $0x5a8] sm:$0xff]
  %v195 = vld [vmem:[%s1 + $0x5b0] sm:$0xff]
  %v196 = vld [vmem:[%s1 + $0x5b8] sm:$0xff]
  %v197 = vld [vmem:[%s1 + $0x5c0] sm:$0xff]
  %v198 = vld [vmem:[%s1 + $0x5c8] sm:$0xff]
  %v199 = vld [vmem:[%s1 + $0x5d0] sm:$0xff]
  %v200 = vld [vmem:[%s1 + $0x5d8] sm:$0xff]
  %v201 = vld [vmem:[%s1 + $0x5e0] sm:$0xff]
  %v202 = vld [vmem:[%s1 + $0x5e8] sm:$0xff]
  %v203 = vld [vmem:[%s1 + $0x5f0] sm:$0xff]
  %v204 = vld [vmem:[%s1 + $0x5f8] sm:$0xff]
  %v205 = vld [vmem:[%s1 + $0x600] sm:$0xff]
  %v206 = vld [vmem:[%s1 + $0x608] sm:$0xff]
  %v207 = vld [vmem:[%s1 + $0x610] sm:$0xff]
  %v208 = vld [vmem:[%s1 + $0x618] sm:$0xff]
  %v209 = vld [vmem:[%s1 + $0x620] sm:$0xff]
  %v210 = vld [vmem:[%s1 + $0x628] sm:$0xff]
  %v211 = vld [vmem:[%s1 + $0x630] sm:$0xff]
  %v212 = vld [vmem:[%s1 + $0x638] sm:$0xff]
  %v213 = vld [vmem:[%s1 + $0x640] sm:$0xff]
  %v214 = vld [vmem:[%s1 + $0x648] sm:$0xff]
  %v215 = vld [vmem:[%s1 + $0x650] sm:$0xff]
  %v216 = vld [vmem:[%s1 + $0x658] sm:$0xff]
  %v217 = vld [vmem:[%s1 + $0x660] sm:$0xff]
  %v218 = vld [vmem:[%s1 + $0x668] sm:$0xff]
  %v219 = vld [vmem:[%s1 + $0x670] sm:$0xff]
  %v220 = vld [vmem:[%s1 + $0x678] sm:$0xff]
  %v221 = vld [vmem:[%s1 + $0x680] sm:$0xff]
  %v222 = vld [vmem:[%s1 + $0x688] sm:$0xff]
  %v223 = vld [vmem:[%s1 + $0x690] sm:$0xff]
  %v224 = vld [vmem:[%s1 + $0x698] sm:$0xff]
  %v225 = vld [vmem:[%s1 + $0x6a0] sm:$0xff]
  %v226 = vld [vmem:[%s1 + $0x6a8] sm:$0xff]
  %v227 = vld [vmem:[%s1 + $0x6b0] sm:$0xff]
  %v228 = vld [vmem:[%s1 + $0x6b8] sm:$0xff]
  %v229 = vld [vmem:[%s1 + $0x6c0] sm:$0xff]
  %v230 = vld [vmem:[%s1 + $0x6c8] sm:$0xff]
  %v231 = vld [vmem:[%s1 + $0x6d0] sm:$0xff]
  %v232 = vld [vmem:[%s1 + $0x6d8] sm:$0xff]
  %v233 = vld [vmem:[%s1 + $0x6e0] sm:$0xff]
  %v234 = vld [vmem:[%s1 + $0x6e8] sm:$0xff]
  %v235 = vld [vmem:[%s1 + $0x6f0] sm:$0xff]
  %v236 = vld [vmem:[%s1 + $0x6f8] sm:$0xff]
  %v237 = vld [vmem:[%s1 + $0x700] sm:$0xff]
  %v238 = vld [vmem:[%s1 + $0x708] sm:$0xff]
  %v239 = vld [vmem:[%s1 + $0x710] sm:$0xff]
  %v240 = vld [vmem:[%s1 + $0x718] sm:$0xff]
  %v241 = vld [vmem:[%s1 + $0x720] sm:$0xff]
  %v242 = vld [vmem:[%s1 + $0x728] sm:$0xff]
  %v243 = vld [vmem:[%s1 + $0x730] sm:$0xff]
  %v244 = vld [vmem:[%s1 + $0x738] sm:$0xff]
  %v245 = vld [vmem:[%s1 + $0x740] sm:$0xff]
  %v246 = vld [vmem:[%s1 + $0x748] sm:$0xff]
  %v247 = vld [vmem:[%s1 + $0x750] sm:$0xff]
  %v248 = vld [vmem:[%s1 + $0x758] sm:$0xff]
  %v249 = vld [vmem:[%s1 + $0x760] sm:$0xff]
  %v250 = vld [vmem:[%s1 + $0x768] sm:$0xff]
  %v251 = vld [vmem:[%s1 + $0x770] sm:$0xff]
  %v252 = vld [vmem:[%s1 + $0x778] sm:$0xff]
  %v253 = vld [vmem:[%s1 + $0x780] sm:$0xff]
  %v254 = vld [vmem:[%s1 + $0x788] sm:$0xff]
  %v255 = vld [vmem:[%s1 + $0x790] sm:$0xff]
  %v256 = vld [vmem:[%s1 + $0x798] sm:$0xff]
  %v257 = vld [vmem:[%s1 + $0x7a0] sm:$0xff]
  %v258 = vld [vmem:[%s1 + $0x7a8] sm:$0xff]
  %v259 = vld [vmem:[%s1 + $0x7b0] sm:$0xff]
  %v260 = vld [vmem:[%s1 + $0x7b8] sm:$0xff]
  %v261 = vld [vmem:[%s1 + $0x7c0] sm:$0xff]
  %v262 = vld [vmem:[%s1 + $0x7c8] sm:$0xff]
  %v263 = vld [vmem:[%s1 + $0x7d0] sm:$0xff]
  %v264 = vld [vmem:[%s1 + $0x7d8] sm:$0xff]
  %v265 = vld [vmem:[%s1 + $0x7e0] sm:$0xff]
  %v266 = vld [vmem:[%s1 + $0x7e8] sm:$0xff]
  %v267 = vld [vmem:[%s1 + $0x7f0] sm:$0xff]
  %v268 = vld [vmem:[%s1 + $0x7f8] sm:$0xff]
  %v269 = vld [vmem:[%s1 + $0x800] sm:$0xff]
  %v270 = vld [vmem:[%s1 + $0x808] sm:$0xff]
  %v271 = vld [vmem:[%s1 + $0x810] sm:$0xff]
  %v272 = vld [vmem:[%s1 + $0x818] sm:$0xff]
  %v273 = vld [vmem:[%s1 + $0x820] sm:$0xff]
  %v274 = vld [vmem:[%s1 + $0x828] sm:$0xff]
  %v275 = vld [vmem:[%s1 + $0x830] sm:$0xff]
  %v276 = vld [vmem:[%s1 + $0x838] sm:$0xff]
  %v277 = vld [vmem:[%s1 + $0x840] sm:$0xff]
  %v278 = vld [vmem:[%s1 + $0x848] sm:$0xff]
  %v279 = vld [vmem:[%s1 + $0x850] sm:$0xff]
  %v280 = vld [vmem:[%s1 + $0x858] sm:$0xff]
  %v281 = vld [vmem:[%s1 + $0x860] sm:$0xff]
  %v282 = vld [vmem:[%s1 + $0x868] sm:$0xff]
  %v283 = vld [vmem:[%s1 + $0x870] sm:$0xff]
  %v284 = vld [vmem:[%s1 + $0x878] sm:$0xff]
  %v285 = vld [vmem:[%s1 + $0x880] sm:$0xff]
  %v286 = vld [vmem:[%s1 + $0x888] sm:$0xff]
  %v287 = vld [vmem:[%s1 + $0x890] sm:$0xff]
  %v288 = vld [vmem:[%s1 + $0x898] sm:$0xff]
  %v289 = vld [vmem:[%s1 + $0x8a0] sm:$0xff]
  %v290 = vld [vmem:[%s1 + $0x8a8] sm:$0xff]
  %v291 = vld [vmem:[%s1 + $0x8b0] sm:$0xff]
  %v292 = vld [vmem:[%s1 + $0x8b8] sm:$0xff]
  %v293 = vld [vmem:[%s1 + $0x8c0] sm:$0xff]
  %v294 = vld [vmem:[%s1 + $0x8c8] sm:$0xff]
  %v295 = vld [vmem:[%s1 + $0x8d0] sm:$0xff]
  %v296 = vld [vmem:[%s1 + $0x8d8] sm:$0xff]
  %v297 = vld [vmem:[%s1 + $0x8e0] sm:$0xff]
  %v298 = vld [vmem:[%s1 + $0x8e8] sm:$0xff]
  %v299 = vld [vmem:[%s1 + $0x8f0] sm:$0xff]
  %v300 = vld [vmem:[%s1 + $0x8f8] sm:$0xff]
  %v301 = vld [vmem:[%s1 + $0x900] sm:$0xff]
  %v302 = vld [vmem:[%s1 + $0x908] sm:$0xff]
  %v303 = vld [vmem:[%s1 + $0x910] sm:$0xff]
  %v304 = vld [vmem:[%s1 + $0x918] sm:$0xff]
  %v305 = vld [vmem:[%s1 + $0x920] sm:$0xff]
  %v306 = vld [vmem:[%s1 + $0x928] sm:$0xff]
  %v307 = vld [vmem:[%s1 + $0x930] sm:$0xff]
  %v308 = vld [vmem:[%s1 + $0x938] sm:$0xff]
  %v309 = vld [vmem:[%s1 + $0x940] sm:$0xff]
  %v310 = vld [vmem:[%s1 + $0x948] sm:$0xff]
  %v311 = vld [vmem:[%s1 + $0x950] sm:$0xff]
  %v312 = vld [vmem:[%s1 + $0x958] sm:$0xff]
  %v313 = vld [vmem:[%s1 + $0x960] sm:$0xff]
  %v314 = vld [vmem:[%s1 + $0x968] sm:$0xff]
  %v315 = vld [vmem:[%s1 + $0x970] sm:$0xff]
  %v316 = vld [vmem:[%s1 + $0x978] sm:$0xff]
  %v317 = vld [vmem:[%s1 + $0x980] sm:$0xff]
  %v318 = vld [vmem:[%s1 + $0x988] sm:$0xff]
  %v319 = vld [vmem:[%s1 + $0x990] sm:$0xff]
  %v320 = vld [vmem:[%s1 + $0x998] sm:$0xff]
  %v321 = vld [vmem:[%s1 + $0x9a0] sm:$0xff]
  %v322 = vld [vmem:[%s1 + $0x9a8] sm:$0xff]
  %v323 = vld [vmem:[%s1 + $0x9b0] sm:$0xff]
  %v324 = vld [vmem:[%s1 + $0x9b8] sm:$0xff]
  %v325 = vld [vmem:[%s1 + $0x9c0] sm:$0xff]
  %v326 = vld [vmem:[%s1 + $0x9c8] sm:$0xff]
  %v327 = vld [vmem:[%s1 + $0x9d0] sm:$0xff]
  %v328 = vld [vmem:[%s1 + $0x9d8] sm:$0xff]
  %v329 = vld [vmem:[%s1 + $0x9e0] sm:$0xff]
  %v330 = vld [vmem:[%s1 + $0x9e8] sm:$0xff]
  %v331 = vld [vmem:[%s1 + $0x9f0] sm:$0xff]
  %v332 = vld [vmem:[%s1 + $0x9f8] sm:$0xff]
  %v333 = vld [vmem:[%s1 + $0xa00] sm:$0xff]
  %v334 = vld [vmem:[%s1 + $0xa08] sm:$0xff]
  %v335 = vld [vmem:[%s1 + $0xa10] sm:$0xff]
  %v336 = vld [vmem:[%s1 + $0xa18] sm:$0xff]
  %v337 = vld [vmem:[%s1 + $0xa20] sm:$0xff]
  %v338 = vld [vmem:[%s1 + $0xa28] sm:$0xff]
  %v339 = vld [vmem:[%s1 + $0xa30] sm:$0xff]
  %v340 = vld [vmem:[%s1 + $0xa38] sm:$0xff]
  %v341 = vld [vmem:[%s1 + $0xa40] sm:$0xff]
  %v342 = vld [vmem:[%s1 + $0xa48] sm:$0xff]
  %v343 = vld [vmem:[%s1 + $0xa50] sm:$0xff]
  %v344 = vld [vmem:[%s1 + $0xa58] sm:$0xff]
  %v345 = vld [vmem:[%s1 + $0xa60] sm:$0xff]
  %v346 = vld [vmem:[%s1 + $0xa68] sm:$0xff]
  %v347 = vld [vmem:[%s1 + $0xa70] sm:$0xff]
  %v348 = vld [vmem:[%s1 + $0xa78] sm:$0xff]
  %v349 = vld [vmem:[%s1 + $0xa80] sm:$0xff]
  %v350 = vld [vmem:[%s1 + $0xa88] sm:$0xff]
  %v351 = vld [vmem:[%s1 + $0xa90] sm:$0xff]
  %v352 = vld [vmem:[%s1 + $0xa98] sm:$0xff]
  %v353 = vld [vmem:[%s1 + $0xaa0] sm:$0xff]
  %v354 = vld [vmem:[%s1 + $0xaa8] sm:$0xff]
  %v355 = vld [vmem:[%s1 + $0xab0] sm:$0xff]
  %v356 = vld [vmem:[%s1 + $0xab8] sm:$0xff]
  %v357 = vld [vmem:[%s1 + $0xac0] sm:$0xff]
  %v358 = vld [vmem:[%s1 + $0xac8] sm:$0xff]
  %v359 = vld [vmem:[%s1 + $0xad0] sm:$0xff]
  %v360 = vld [vmem:[%s1 + $0xad8] sm:$0xff]
  %v361 = vld [vmem:[%s1 + $0xae0] sm:$0xff]
  %v362 = vld [vmem:[%s1 + $0xae8] sm:$0xff]
  %v363 = vld [vmem:[%s1 + $0xaf0] sm:$0xff]
  %v364 = vld [vmem:[%s1 + $0xaf8] sm:$0xff]
  %v365 = vld [vmem:[%s1 + $0xb00] sm:$0xff]
  %v366 = vld [vmem:[%s1 + $0xb08] sm:$0xff]
  %v367 = vld [vmem:[%s1 + $0xb10] sm:$0xff]
  %v368 = vld [vmem:[%s1 + $0xb18] sm:$0xff]
  %v369 = vld [vmem:[%s1 + $0xb20] sm:$0xff]
  %v370 = vld [vmem:[%s1 + $0xb28] sm:$0xff]
  %v371 = vld [vmem:[%s1 + $0xb30] sm:$0xff]
  %v372 = vld [vmem:[%s1 + $0xb38] sm:$0xff]
  %v373 = vld [vmem:[%s1 + $0xb40] sm:$0xff]
  %v374 = vld [vmem:[%s1 + $0xb48] sm:$0xff]
  %v375 = vld [vmem:[%s1 + $0xb50] sm:$0xff]
  %v376 = vld [vmem:[%s1 + $0xb58] sm:$0xff]
  %v377 = vld [vmem:[%s1 + $0xb60] sm:$0xff]
  %v378 = vld [vmem:[%s1 + $0xb68] sm:$0xff]
  %v379 = vld [vmem:[%s1 + $0xb70] sm:$0xff]
  %v380 = vld [vmem:[%s1 + $0xb78] sm:$0xff]
  %v381 = vld [vmem:[%s1 + $0xb80] sm:$0xff]
  %v382 = vld [vmem:[%s1 + $0xb88] sm:$0xff]
  %v383 = vld [vmem:[%s1 + $0xb90] sm:$0xff]
  %v384 = vld [vmem:[%s1 + $0xb98] sm:$0xff]
  %v385 = vld [vmem:[%s1 + $0xba0] sm:$0xff]
  %v386 = vld [vmem:[%s1 + $0xba8] sm:$0xff]
  %v387 = vld [vmem:[%s1 + $0xbb0] sm:$0xff]
  %v388 = vld [vmem:[%s1 + $0xbb8] sm:$0xff]
  %v389 = vld [vmem:[%s1 + $0xbc0] sm:$0xff]
  %v390 = vld [vmem:[%s1 + $0xbc8] sm:$0xff]
  %v391 = vld [vmem:[%s1 + $0xbd0] sm:$0xff]
  %v392 = vld [vmem:[%s1 + $0xbd8] sm:$0xff]
  %v393 = vld [vmem:[%s1 + $0xbe0] sm:$0xff]
  %v394 = vld [vmem:[%s1 + $0xbe8] sm:$0xff]
  %v395 = vld [vmem:[%s1 + $0xbf0] sm:$0xff]
  %v396 = vld [vmem:[%s1 + $0xbf8] sm:$0xff]
  %v781 = vunpack.c.l.b16 %v13
  %v782 = vunpack.c.h.b16 %v13
  %v783 = vunpack.c.l.b16 %v14
  %v784 = vunpack.c.h.b16 %v14
  %v785 = vunpack.c.l.b16 %v15
  %v786 = vunpack.c.h.b16 %v15
  %v787 = vunpack.c.l.b16 %v16
  %v788 = vunpack.c.h.b16 %v16
  %v789 = vunpack.c.l.b16 %v17
  %v790 = vunpack.c.h.b16 %v17
  %v791 = vunpack.c.l.b16 %v18
  %v792 = vunpack.c.h.b16 %v18
  %v793 = vunpack.c.l.b16 %v19
  %v794 = vunpack.c.h.b16 %v19
  %v795 = vunpack.c.l.b16 %v20
  %v796 = vunpack.c.h.b16 %v20
  %v797 = vunpack.c.l.b16 %v21
  %v798 = vunpack.c.h.b16 %v21
  %v799 = vunpack.c.l.b16 %v22
  %v800 = vunpack.c.h.b16 %v22
  %v801 = vunpack.c.l.b16 %v23
  %v802 = vunpack.c.h.b16 %v23
  %v803 = vunpack.c.l.b16 %v24
  %v804 = vunpack.c.h.b16 %v24
  %v805 = vunpack.c.l.b16 %v25
  %v806 = vunpack.c.h.b16 %v25
  %v807 = vunpack.c.l.b16 %v26
  %v808 = vunpack.c.h.b16 %v26
  %v809 = vunpack.c.l.b16 %v27
  %v810 = vunpack.c.h.b16 %v27
  %v811 = vunpack.c.l.b16 %v28
  %v812 = vunpack.c.h.b16 %v28
  %v813 = vunpack.c.l.b16 %v29
  %v814 = vunpack.c.h.b16 %v29
  %v815 = vunpack.c.l.b16 %v30
  %v816 = vunpack.c.h.b16 %v30
  %v817 = vunpack.c.l.b16 %v31
  %v818 = vunpack.c.h.b16 %v31
  %v819 = vunpack.c.l.b16 %v32
  %v820 = vunpack.c.h.b16 %v32
  %v821 = vunpack.c.l.b16 %v33
  %v822 = vunpack.c.h.b16 %v33
  %v823 = vunpack.c.l.b16 %v34
  %v824 = vunpack.c.h.b16 %v34
  %v825 = vunpack.c.l.b16 %v35
  %v826 = vunpack.c.h.b16 %v35
  %v827 = vunpack.c.l.b16 %v36
  %v828 = vunpack.c.h.b16 %v36
  %v829 = vunpack.c.l.b16 %v37
  %v830 = vunpack.c.h.b16 %v37
  %v831 = vunpack.c.l.b16 %v38
  %v832 = vunpack.c.h.b16 %v38
  %v833 = vunpack.c.l.b16 %v39
  %v834 = vunpack.c.h.b16 %v39
  %v835 = vunpack.c.l.b16 %v40
  %v836 = vunpack.c.h.b16 %v40
  %v837 = vunpack.c.l.b16 %v41
  %v838 = vunpack.c.h.b16 %v41
  %v839 = vunpack.c.l.b16 %v42
  %v840 = vunpack.c.h.b16 %v42
  %v841 = vunpack.c.l.b16 %v43
  %v842 = vunpack.c.h.b16 %v43
  %v843 = vunpack.c.l.b16 %v44
  %v844 = vunpack.c.h.b16 %v44
  %v845 = vunpack.c.l.b16 %v45
  %v846 = vunpack.c.h.b16 %v45
  %v847 = vunpack.c.l.b16 %v46
  %v848 = vunpack.c.h.b16 %v46
  %v849 = vunpack.c.l.b16 %v47
  %v850 = vunpack.c.h.b16 %v47
  %v851 = vunpack.c.l.b16 %v48
  %v852 = vunpack.c.h.b16 %v48
  %v853 = vunpack.c.l.b16 %v49
  %v854 = vunpack.c.h.b16 %v49
  %v855 = vunpack.c.l.b16 %v50
  %v856 = vunpack.c.h.b16 %v50
  %v857 = vunpack.c.l.b16 %v51
  %v858 = vunpack.c.h.b16 %v51
  %v859 = vunpack.c.l.b16 %v52
  %v860 = vunpack.c.h.b16 %v52
  %v861 = vunpack.c.l.b16 %v53
  %v862 = vunpack.c.h.b16 %v53
  %v863 = vunpack.c.l.b16 %v54
  %v864 = vunpack.c.h.b16 %v54
  %v865 = vunpack.c.l.b16 %v55
  %v866 = vunpack.c.h.b16 %v55
  %v867 = vunpack.c.l.b16 %v56
  %v868 = vunpack.c.h.b16 %v56
  %v869 = vunpack.c.l.b16 %v57
  %v870 = vunpack.c.h.b16 %v57
  %v871 = vunpack.c.l.b16 %v58
  %v872 = vunpack.c.h.b16 %v58
  %v873 = vunpack.c.l.b16 %v59
  %v874 = vunpack.c.h.b16 %v59
  %v875 = vunpack.c.l.b16 %v60
  %v876 = vunpack.c.h.b16 %v60
  %v877 = vunpack.c.l.b16 %v61
  %v878 = vunpack.c.h.b16 %v61
  %v879 = vunpack.c.l.b16 %v62
  %v880 = vunpack.c.h.b16 %v62
  %v881 = vunpack.c.l.b16 %v63
  %v882 = vunpack.c.h.b16 %v63
  %v883 = vunpack.c.l.b16 %v64
  %v884 = vunpack.c.h.b16 %v64
  %v885 = vunpack.c.l.b16 %v65
  %v886 = vunpack.c.h.b16 %v65
  %v887 = vunpack.c.l.b16 %v66
  %v888 = vunpack.c.h.b16 %v66
  %v889 = vunpack.c.l.b16 %v67
  %v890 = vunpack.c.h.b16 %v67
  %v891 = vunpack.c.l.b16 %v68
  %v892 = vunpack.c.h.b16 %v68
  %v893 = vunpack.c.l.b16 %v69
  %v894 = vunpack.c.h.b16 %v69
  %v895 = vunpack.c.l.b16 %v70
  %v896 = vunpack.c.h.b16 %v70
  %v897 = vunpack.c.l.b16 %v71
  %v898 = vunpack.c.h.b16 %v71
  %v899 = vunpack.c.l.b16 %v72
  %v900 = vunpack.c.h.b16 %v72
  %v901 = vunpack.c.l.b16 %v73
  %v902 = vunpack.c.h.b16 %v73
  %v903 = vunpack.c.l.b16 %v74
  %v904 = vunpack.c.h.b16 %v74
  %v905 = vunpack.c.l.b16 %v75
  %v906 = vunpack.c.h.b16 %v75
  %v907 = vunpack.c.l.b16 %v76
  %v908 = vunpack.c.h.b16 %v76
  %v909 = vunpack.c.l.b16 %v77
  %v910 = vunpack.c.h.b16 %v77
  %v911 = vunpack.c.l.b16 %v78
  %v912 = vunpack.c.h.b16 %v78
  %v913 = vunpack.c.l.b16 %v79
  %v914 = vunpack.c.h.b16 %v79
  %v915 = vunpack.c.l.b16 %v80
  %v916 = vunpack.c.h.b16 %v80
  %v917 = vunpack.c.l.b16 %v81
  %v918 = vunpack.c.h.b16 %v81
  %v919 = vunpack.c.l.b16 %v82
  %v920 = vunpack.c.h.b16 %v82
  %v921 = vunpack.c.l.b16 %v83
  %v922 = vunpack.c.h.b16 %v83
  %v923 = vunpack.c.l.b16 %v84
  %v924 = vunpack.c.h.b16 %v84
  %v925 = vunpack.c.l.b16 %v85
  %v926 = vunpack.c.h.b16 %v85
  %v927 = vunpack.c.l.b16 %v86
  %v928 = vunpack.c.h.b16 %v86
  %v929 = vunpack.c.l.b16 %v87
  %v930 = vunpack.c.h.b16 %v87
  %v931 = vunpack.c.l.b16 %v88
  %v932 = vunpack.c.h.b16 %v88
  %v933 = vunpack.c.l.b16 %v89
  %v934 = vunpack.c.h.b16 %v89
  %v935 = vunpack.c.l.b16 %v90
  %v936 = vunpack.c.h.b16 %v90
  %v937 = vunpack.c.l.b16 %v91
  %v938 = vunpack.c.h.b16 %v91
  %v939 = vunpack.c.l.b16 %v92
  %v940 = vunpack.c.h.b16 %v92
  %v941 = vunpack.c.l.b16 %v93
  %v942 = vunpack.c.h.b16 %v93
  %v943 = vunpack.c.l.b16 %v94
  %v944 = vunpack.c.h.b16 %v94
  %v945 = vunpack.c.l.b16 %v95
  %v946 = vunpack.c.h.b16 %v95
  %v947 = vunpack.c.l.b16 %v96
  %v948 = vunpack.c.h.b16 %v96
  %v949 = vunpack.c.l.b16 %v97
  %v950 = vunpack.c.h.b16 %v97
  %v951 = vunpack.c.l.b16 %v98
  %v952 = vunpack.c.h.b16 %v98
  %v953 = vunpack.c.l.b16 %v99
  %v954 = vunpack.c.h.b16 %v99
  %v955 = vunpack.c.l.b16 %v100
  %v956 = vunpack.c.h.b16 %v100
  %v957 = vunpack.c.l.b16 %v101
  %v958 = vunpack.c.h.b16 %v101
  %v959 = vunpack.c.l.b16 %v102
  %v960 = vunpack.c.h.b16 %v102
  %v961 = vunpack.c.l.b16 %v103
  %v962 = vunpack.c.h.b16 %v103
  %v963 = vunpack.c.l.b16 %v104
  %v964 = vunpack.c.h.b16 %v104
  %v965 = vunpack.c.l.b16 %v105
  %v966 = vunpack.c.h.b16 %v105
  %v967 = vunpack.c.l.b16 %v106
  %v968 = vunpack.c.h.b16 %v106
  %v969 = vunpack.c.l.b16 %v107
  %v970 = vunpack.c.h.b16 %v107
  %v971 = vunpack.c.l.b16 %v108
  %v972 = vunpack.c.h.b16 %v108
  %v973 = vunpack.c.l.b16 %v109
  %v974 = vunpack.c.h.b16 %v109
  %v975 = vunpack.c.l.b16 %v110
  %v976 = vunpack.c.h.b16 %v110
  %v977 = vunpack.c.l.b16 %v111
  %v978 = vunpack.c.h.b16 %v111
  %v979 = vunpack.c.l.b16 %v112
  %v980 = vunpack.c.h.b16 %v112
  %v981 = vunpack.c.l.b16 %v113
  %v982 = vunpack.c.h.b16 %v113
  %v983 = vunpack.c.l.b16 %v114
  %v984 = vunpack.c.h.b16 %v114
  %v985 = vunpack.c.l.b16 %v115
  %v986 = vunpack.c.h.b16 %v115
  %v987 = vunpack.c.l.b16 %v116
  %v988 = vunpack.c.h.b16 %v116
  %v989 = vunpack.c.l.b16 %v117
  %v990 = vunpack.c.h.b16 %v117
  %v991 = vunpack.c.l.b16 %v118
  %v992 = vunpack.c.h.b16 %v118
  %v993 = vunpack.c.l.b16 %v119
  %v994 = vunpack.c.h.b16 %v119
  %v995 = vunpack.c.l.b16 %v120
  %v996 = vunpack.c.h.b16 %v120
  %v997 = vunpack.c.l.b16 %v121
  %v998 = vunpack.c.h.b16 %v121
  %v999 = vunpack.c.l.b16 %v122
  %v1000 = vunpack.c.h.b16 %v122
  %v1001 = vunpack.c.l.b16 %v123
  %v1002 = vunpack.c.h.b16 %v123
  %v1003 = vunpack.c.l.b16 %v124
  %v1004 = vunpack.c.h.b16 %v124
  %v1005 = vunpack.c.l.b16 %v125
  %v1006 = vunpack.c.h.b16 %v125
  %v1007 = vunpack.c.l.b16 %v126
  %v1008 = vunpack.c.h.b16 %v126
  %v1009 = vunpack.c.l.b16 %v127
  %v1010 = vunpack.c.h.b16 %v127
  %v1011 = vunpack.c.l.b16 %v128
  %v1012 = vunpack.c.h.b16 %v128
  %v1013 = vunpack.c.l.b16 %v129
  %v1014 = vunpack.c.h.b16 %v129
  %v1015 = vunpack.c.l.b16 %v130
  %v1016 = vunpack.c.h.b16 %v130
  %v1017 = vunpack.c.l.b16 %v131
  %v1018 = vunpack.c.h.b16 %v131
  %v1019 = vunpack.c.l.b16 %v132
  %v1020 = vunpack.c.h.b16 %v132
  %v1021 = vunpack.c.l.b16 %v133
  %v1022 = vunpack.c.h.b16 %v133
  %v1023 = vunpack.c.l.b16 %v134
  %v1024 = vunpack.c.h.b16 %v134
  %v1025 = vunpack.c.l.b16 %v135
  %v1026 = vunpack.c.h.b16 %v135
  %v1027 = vunpack.c.l.b16 %v136
  %v1028 = vunpack.c.h.b16 %v136
  %v1029 = vunpack.c.l.b16 %v137
  %v1030 = vunpack.c.h.b16 %v137
  %v1031 = vunpack.c.l.b16 %v138
  %v1032 = vunpack.c.h.b16 %v138
  %v1033 = vunpack.c.l.b16 %v139
  %v1034 = vunpack.c.h.b16 %v139
  %v1035 = vunpack.c.l.b16 %v140
  %v1036 = vunpack.c.h.b16 %v140
  %v1037 = vunpack.c.l.b16 %v141
  %v1038 = vunpack.c.h.b16 %v141
  %v1039 = vunpack.c.l.b16 %v142
  %v1040 = vunpack.c.h.b16 %v142
  %v1041 = vunpack.c.l.b16 %v143
  %v1042 = vunpack.c.h.b16 %v143
  %v1043 = vunpack.c.l.b16 %v144
  %v1044 = vunpack.c.h.b16 %v144
  %v1045 = vunpack.c.l.b16 %v145
  %v1046 = vunpack.c.h.b16 %v145
  %v1047 = vunpack.c.l.b16 %v146
  %v1048 = vunpack.c.h.b16 %v146
  %v1049 = vunpack.c.l.b16 %v147
  %v1050 = vunpack.c.h.b16 %v147
  %v1051 = vunpack.c.l.b16 %v148
  %v1052 = vunpack.c.h.b16 %v148
  %v1053 = vunpack.c.l.b16 %v149
  %v1054 = vunpack.c.h.b16 %v149
  %v1055 = vunpack.c.l.b16 %v150
  %v1056 = vunpack.c.h.b16 %v150
  %v1057 = vunpack.c.l.b16 %v151
  %v1058 = vunpack.c.h.b16 %v151
  %v1059 = vunpack.c.l.b16 %v152
  %v1060 = vunpack.c.h.b16 %v152
  %v1061 = vunpack.c.l.b16 %v153
  %v1062 = vunpack.c.h.b16 %v153
  %v1063 = vunpack.c.l.b16 %v154
  %v1064 = vunpack.c.h.b16 %v154
  %v1065 = vunpack.c.l.b16 %v155
  %v1066 = vunpack.c.h.b16 %v155
  %v1067 = vunpack.c.l.b16 %v156
  %v1068 = vunpack.c.h.b16 %v156
  %v1069 = vunpack.c.l.b16 %v157
  %v1070 = vunpack.c.h.b16 %v157
  %v1071 = vunpack.c.l.b16 %v158
  %v1072 = vunpack.c.h.b16 %v158
  %v1073 = vunpack.c.l.b16 %v159
  %v1074 = vunpack.c.h.b16 %v159
  %v1075 = vunpack.c.l.b16 %v160
  %v1076 = vunpack.c.h.b16 %v160
  %v1077 = vunpack.c.l.b16 %v161
  %v1078 = vunpack.c.h.b16 %v161
  %v1079 = vunpack.c.l.b16 %v162
  %v1080 = vunpack.c.h.b16 %v162
  %v1081 = vunpack.c.l.b16 %v163
  %v1082 = vunpack.c.h.b16 %v163
  %v1083 = vunpack.c.l.b16 %v164
  %v1084 = vunpack.c.h.b16 %v164
  %v1085 = vunpack.c.l.b16 %v165
  %v1086 = vunpack.c.h.b16 %v165
  %v1087 = vunpack.c.l.b16 %v166
  %v1088 = vunpack.c.h.b16 %v166
  %v1089 = vunpack.c.l.b16 %v167
  %v1090 = vunpack.c.h.b16 %v167
  %v1091 = vunpack.c.l.b16 %v168
  %v1092 = vunpack.c.h.b16 %v168
  %v1093 = vunpack.c.l.b16 %v169
  %v1094 = vunpack.c.h.b16 %v169
  %v1095 = vunpack.c.l.b16 %v170
  %v1096 = vunpack.c.h.b16 %v170
  %v1097 = vunpack.c.l.b16 %v171
  %v1098 = vunpack.c.h.b16 %v171
  %v1099 = vunpack.c.l.b16 %v172
  %v1100 = vunpack.c.h.b16 %v172
  %v1101 = vunpack.c.l.b16 %v173
  %v1102 = vunpack.c.h.b16 %v173
  %v1103 = vunpack.c.l.b16 %v174
  %v1104 = vunpack.c.h.b16 %v174
  %v1105 = vunpack.c.l.b16 %v175
  %v1106 = vunpack.c.h.b16 %v175
  %v1107 = vunpack.c.l.b16 %v176
  %v1108 = vunpack.c.h.b16 %v176
  %v1109 = vunpack.c.l.b16 %v177
  %v1110 = vunpack.c.h.b16 %v177
  %v1111 = vunpack.c.l.b16 %v178
  %v1112 = vunpack.c.h.b16 %v178
  %v1113 = vunpack.c.l.b16 %v179
  %v1114 = vunpack.c.h.b16 %v179
  %v1115 = vunpack.c.l.b16 %v180
  %v1116 = vunpack.c.h.b16 %v180
  %v1117 = vunpack.c.l.b16 %v181
  %v1118 = vunpack.c.h.b16 %v181
  %v1119 = vunpack.c.l.b16 %v182
  %v1120 = vunpack.c.h.b16 %v182
  %v1121 = vunpack.c.l.b16 %v183
  %v1122 = vunpack.c.h.b16 %v183
  %v1123 = vunpack.c.l.b16 %v184
  %v1124 = vunpack.c.h.b16 %v184
  %v1125 = vunpack.c.l.b16 %v185
  %v1126 = vunpack.c.h.b16 %v185
  %v1127 = vunpack.c.l.b16 %v186
  %v1128 = vunpack.c.h.b16 %v186
  %v1129 = vunpack.c.l.b16 %v187
  %v1130 = vunpack.c.h.b16 %v187
  %v1131 = vunpack.c.l.b16 %v188
  %v1132 = vunpack.c.h.b16 %v188
  %v1133 = vunpack.c.l.b16 %v189
  %v1134 = vunpack.c.h.b16 %v189
  %v1135 = vunpack.c.l.b16 %v190
  %v1136 = vunpack.c.h.b16 %v190
  %v1137 = vunpack.c.l.b16 %v191
  %v1138 = vunpack.c.h.b16 %v191
  %v1139 = vunpack.c.l.b16 %v192
  %v1140 = vunpack.c.h.b16 %v192
  %v1141 = vunpack.c.l.b16 %v193
  %v1142 = vunpack.c.h.b16 %v193
  %v1143 = vunpack.c.l.b16 %v194
  %v1144 = vunpack.c.h.b16 %v194
  %v1145 = vunpack.c.l.b16 %v195
  %v1146 = vunpack.c.h.b16 %v195
  %v1147 = vunpack.c.l.b16 %v196
  %v1148 = vunpack.c.h.b16 %v196
  %v1149 = vunpack.c.l.b16 %v197
  %v1150 = vunpack.c.h.b16 %v197
  %v1151 = vunpack.c.l.b16 %v198
  %v1152 = vunpack.c.h.b16 %v198
  %v1153 = vunpack.c.l.b16 %v199
  %v1154 = vunpack.c.h.b16 %v199
  %v1155 = vunpack.c.l.b16 %v200
  %v1156 = vunpack.c.h.b16 %v200
  %v1157 = vunpack.c.l.b16 %v201
  %v1158 = vunpack.c.h.b16 %v201
  %v1159 = vunpack.c.l.b16 %v202
  %v1160 = vunpack.c.h.b16 %v202
  %v1161 = vunpack.c.l.b16 %v203
  %v1162 = vunpack.c.h.b16 %v203
  %v1163 = vunpack.c.l.b16 %v204
  %v1164 = vunpack.c.h.b16 %v204
  %v1165 = vunpack.c.l.b16 %v205
  %v1166 = vunpack.c.h.b16 %v205
  %v1167 = vunpack.c.l.b16 %v206
  %v1168 = vunpack.c.h.b16 %v206
  %v1169 = vunpack.c.l.b16 %v207
  %v1170 = vunpack.c.h.b16 %v207
  %v1171 = vunpack.c.l.b16 %v208
  %v1172 = vunpack.c.h.b16 %v208
  %v1173 = vunpack.c.l.b16 %v209
  %v1174 = vunpack.c.h.b16 %v209
  %v1175 = vunpack.c.l.b16 %v210
  %v1176 = vunpack.c.h.b16 %v210
  %v1177 = vunpack.c.l.b16 %v211
  %v1178 = vunpack.c.h.b16 %v211
  %v1179 = vunpack.c.l.b16 %v212
  %v1180 = vunpack.c.h.b16 %v212
  %v1181 = vunpack.c.l.b16 %v213
  %v1182 = vunpack.c.h.b16 %v213
  %v1183 = vunpack.c.l.b16 %v214
  %v1184 = vunpack.c.h.b16 %v214
  %v1185 = vunpack.c.l.b16 %v215
  %v1186 = vunpack.c.h.b16 %v215
  %v1187 = vunpack.c.l.b16 %v216
  %v1188 = vunpack.c.h.b16 %v216
  %v1189 = vunpack.c.l.b16 %v217
  %v1190 = vunpack.c.h.b16 %v217
  %v1191 = vunpack.c.l.b16 %v218
  %v1192 = vunpack.c.h.b16 %v218
  %v1193 = vunpack.c.l.b16 %v219
  %v1194 = vunpack.c.h.b16 %v219
  %v1195 = vunpack.c.l.b16 %v220
  %v1196 = vunpack.c.h.b16 %v220
  %v1197 = vunpack.c.l.b16 %v221
  %v1198 = vunpack.c.h.b16 %v221
  %v1199 = vunpack.c.l.b16 %v222
  %v1200 = vunpack.c.h.b16 %v222
  %v1201 = vunpack.c.l.b16 %v223
  %v1202 = vunpack.c.h.b16 %v223
  %v1203 = vunpack.c.l.b16 %v224
  %v1204 = vunpack.c.h.b16 %v224
  %v1205 = vunpack.c.l.b16 %v225
  %v1206 = vunpack.c.h.b16 %v225
  %v1207 = vunpack.c.l.b16 %v226
  %v1208 = vunpack.c.h.b16 %v226
  %v1209 = vunpack.c.l.b16 %v227
  %v1210 = vunpack.c.h.b16 %v227
  %v1211 = vunpack.c.l.b16 %v228
  %v1212 = vunpack.c.h.b16 %v228
  %v1213 = vunpack.c.l.b16 %v229
  %v1214 = vunpack.c.h.b16 %v229
  %v1215 = vunpack.c.l.b16 %v230
  %v1216 = vunpack.c.h.b16 %v230
  %v1217 = vunpack.c.l.b16 %v231
  %v1218 = vunpack.c.h.b16 %v231
  %v1219 = vunpack.c.l.b16 %v232
  %v1220 = vunpack.c.h.b16 %v232
  %v1221 = vunpack.c.l.b16 %v233
  %v1222 = vunpack.c.h.b16 %v233
  %v1223 = vunpack.c.l.b16 %v234
  %v1224 = vunpack.c.h.b16 %v234
  %v1225 = vunpack.c.l.b16 %v235
  %v1226 = vunpack.c.h.b16 %v235
  %v1227 = vunpack.c.l.b16 %v236
  %v1228 = vunpack.c.h.b16 %v236
  %v1229 = vunpack.c.l.b16 %v237
  %v1230 = vunpack.c.h.b16 %v237
  %v1231 = vunpack.c.l.b16 %v238
  %v1232 = vunpack.c.h.b16 %v238
  %v1233 = vunpack.c.l.b16 %v239
  %v1234 = vunpack.c.h.b16 %v239
  %v1235 = vunpack.c.l.b16 %v240
  %v1236 = vunpack.c.h.b16 %v240
  %v1237 = vunpack.c.l.b16 %v241
  %v1238 = vunpack.c.h.b16 %v241
  %v1239 = vunpack.c.l.b16 %v242
  %v1240 = vunpack.c.h.b16 %v242
  %v1241 = vunpack.c.l.b16 %v243
  %v1242 = vunpack.c.h.b16 %v243
  %v1243 = vunpack.c.l.b16 %v244
  %v1244 = vunpack.c.h.b16 %v244
  %v1245 = vunpack.c.l.b16 %v245
  %v1246 = vunpack.c.h.b16 %v245
  %v1247 = vunpack.c.l.b16 %v246
  %v1248 = vunpack.c.h.b16 %v246
  %v1249 = vunpack.c.l.b16 %v247
  %v1250 = vunpack.c.h.b16 %v247
  %v1251 = vunpack.c.l.b16 %v248
  %v1252 = vunpack.c.h.b16 %v248
  %v1253 = vunpack.c.l.b16 %v249
  %v1254 = vunpack.c.h.b16 %v249
  %v1255 = vunpack.c.l.b16 %v250
  %v1256 = vunpack.c.h.b16 %v250
  %v1257 = vunpack.c.l.b16 %v251
  %v1258 = vunpack.c.h.b16 %v251
  %v1259 = vunpack.c.l.b16 %v252
  %v1260 = vunpack.c.h.b16 %v252
  %v1261 = vunpack.c.l.b16 %v253
  %v1262 = vunpack.c.h.b16 %v253
  %v1263 = vunpack.c.l.b16 %v254
  %v1264 = vunpack.c.h.b16 %v254
  %v1265 = vunpack.c.l.b16 %v255
  %v1266 = vunpack.c.h.b16 %v255
  %v1267 = vunpack.c.l.b16 %v256
  %v1268 = vunpack.c.h.b16 %v256
  %v1269 = vunpack.c.l.b16 %v257
  %v1270 = vunpack.c.h.b16 %v257
  %v1271 = vunpack.c.l.b16 %v258
  %v1272 = vunpack.c.h.b16 %v258
  %v1273 = vunpack.c.l.b16 %v259
  %v1274 = vunpack.c.h.b16 %v259
  %v1275 = vunpack.c.l.b16 %v260
  %v1276 = vunpack.c.h.b16 %v260
  %v1277 = vunpack.c.l.b16 %v261
  %v1278 = vunpack.c.h.b16 %v261
  %v1279 = vunpack.c.l.b16 %v262
  %v1280 = vunpack.c.h.b16 %v262
  %v1281 = vunpack.c.l.b16 %v263
  %v1282 = vunpack.c.h.b16 %v263
  %v1283 = vunpack.c.l.b16 %v264
  %v1284 = vunpack.c.h.b16 %v264
  %v1285 = vunpack.c.l.b16 %v265
  %v1286 = vunpack.c.h.b16 %v265
  %v1287 = vunpack.c.l.b16 %v266
  %v1288 = vunpack.c.h.b16 %v266
  %v1289 = vunpack.c.l.b16 %v267
  %v1290 = vunpack.c.h.b16 %v267
  %v1291 = vunpack.c.l.b16 %v268
  %v1292 = vunpack.c.h.b16 %v268
  %v1293 = vunpack.c.l.b16 %v269
  %v1294 = vunpack.c.h.b16 %v269
  %v1295 = vunpack.c.l.b16 %v270
  %v1296 = vunpack.c.h.b16 %v270
  %v1297 = vunpack.c.l.b16 %v271
  %v1298 = vunpack.c.h.b16 %v271
  %v1299 = vunpack.c.l.b16 %v272
  %v1300 = vunpack.c.h.b16 %v272
  %v1301 = vunpack.c.l.b16 %v273
  %v1302 = vunpack.c.h.b16 %v273
  %v1303 = vunpack.c.l.b16 %v274
  %v1304 = vunpack.c.h.b16 %v274
  %v1305 = vunpack.c.l.b16 %v275
  %v1306 = vunpack.c.h.b16 %v275
  %v1307 = vunpack.c.l.b16 %v276
  %v1308 = vunpack.c.h.b16 %v276
  %v1309 = vunpack.c.l.b16 %v277
  %v1310 = vunpack.c.h.b16 %v277
  %v1311 = vunpack.c.l.b16 %v278
  %v1312 = vunpack.c.h.b16 %v278
  %v1313 = vunpack.c.l.b16 %v279
  %v1314 = vunpack.c.h.b16 %v279
  %v1315 = vunpack.c.l.b16 %v280
  %v1316 = vunpack.c.h.b16 %v280
  %v1317 = vunpack.c.l.b16 %v281
  %v1318 = vunpack.c.h.b16 %v281
  %v1319 = vunpack.c.l.b16 %v282
  %v1320 = vunpack.c.h.b16 %v282
  %v1321 = vunpack.c.l.b16 %v283
  %v1322 = vunpack.c.h.b16 %v283
  %v1323 = vunpack.c.l.b16 %v284
  %v1324 = vunpack.c.h.b16 %v284
  %v1325 = vunpack.c.l.b16 %v285
  %v1326 = vunpack.c.h.b16 %v285
  %v1327 = vunpack.c.l.b16 %v286
  %v1328 = vunpack.c.h.b16 %v286
  %v1329 = vunpack.c.l.b16 %v287
  %v1330 = vunpack.c.h.b16 %v287
  %v1331 = vunpack.c.l.b16 %v288
  %v1332 = vunpack.c.h.b16 %v288
  %v1333 = vunpack.c.l.b16 %v289
  %v1334 = vunpack.c.h.b16 %v289
  %v1335 = vunpack.c.l.b16 %v290
  %v1336 = vunpack.c.h.b16 %v290
  %v1337 = vunpack.c.l.b16 %v291
  %v1338 = vunpack.c.h.b16 %v291
  %v1339 = vunpack.c.l.b16 %v292
  %v1340 = vunpack.c.h.b16 %v292
  %v1341 = vunpack.c.l.b16 %v293
  %v1342 = vunpack.c.h.b16 %v293
  %v1343 = vunpack.c.l.b16 %v294
  %v1344 = vunpack.c.h.b16 %v294
  %v1345 = vunpack.c.l.b16 %v295
  %v1346 = vunpack.c.h.b16 %v295
  %v1347 = vunpack.c.l.b16 %v296
  %v1348 = vunpack.c.h.b16 %v296
  %v1349 = vunpack.c.l.b16 %v297
  %v1350 = vunpack.c.h.b16 %v297
  %v1351 = vunpack.c.l.b16 %v298
  %v1352 = vunpack.c.h.b16 %v298
  %v1353 = vunpack.c.l.b16 %v299
  %v1354 = vunpack.c.h.b16 %v299
  %v1355 = vunpack.c.l.b16 %v300
  %v1356 = vunpack.c.h.b16 %v300
  %v1357 = vunpack.c.l.b16 %v301
  %v1358 = vunpack.c.h.b16 %v301
  %v1359 = vunpack.c.l.b16 %v302
  %v1360 = vunpack.c.h.b16 %v302
  %v1361 = vunpack.c.l.b16 %v303
  %v1362 = vunpack.c.h.b16 %v303
  %v1363 = vunpack.c.l.b16 %v304
  %v1364 = vunpack.c.h.b16 %v304
  %v1365 = vunpack.c.l.b16 %v305
  %v1366 = vunpack.c.h.b16 %v305
  %v1367 = vunpack.c.l.b16 %v306
  %v1368 = vunpack.c.h.b16 %v306
  %v1369 = vunpack.c.l.b16 %v307
  %v1370 = vunpack.c.h.b16 %v307
  %v1371 = vunpack.c.l.b16 %v308
  %v1372 = vunpack.c.h.b16 %v308
  %v1373 = vunpack.c.l.b16 %v309
  %v1374 = vunpack.c.h.b16 %v309
  %v1375 = vunpack.c.l.b16 %v310
  %v1376 = vunpack.c.h.b16 %v310
  %v1377 = vunpack.c.l.b16 %v311
  %v1378 = vunpack.c.h.b16 %v311
  %v1379 = vunpack.c.l.b16 %v312
  %v1380 = vunpack.c.h.b16 %v312
  %v1381 = vunpack.c.l.b16 %v313
  %v1382 = vunpack.c.h.b16 %v313
  %v1383 = vunpack.c.l.b16 %v314
  %v1384 = vunpack.c.h.b16 %v314
  %v1385 = vunpack.c.l.b16 %v315
  %v1386 = vunpack.c.h.b16 %v315
  %v1387 = vunpack.c.l.b16 %v316
  %v1388 = vunpack.c.h.b16 %v316
  %v1389 = vunpack.c.l.b16 %v317
  %v1390 = vunpack.c.h.b16 %v317
  %v1391 = vunpack.c.l.b16 %v318
  %v1392 = vunpack.c.h.b16 %v318
  %v1393 = vunpack.c.l.b16 %v319
  %v1394 = vunpack.c.h.b16 %v319
  %v1395 = vunpack.c.l.b16 %v320
  %v1396 = vunpack.c.h.b16 %v320
  %v1397 = vunpack.c.l.b16 %v321
  %v1398 = vunpack.c.h.b16 %v321
  %v1399 = vunpack.c.l.b16 %v322
  %v1400 = vunpack.c.h.b16 %v322
  %v1401 = vunpack.c.l.b16 %v323
  %v1402 = vunpack.c.h.b16 %v323
  %v1403 = vunpack.c.l.b16 %v324
  %v1404 = vunpack.c.h.b16 %v324
  %v1405 = vunpack.c.l.b16 %v325
  %v1406 = vunpack.c.h.b16 %v325
  %v1407 = vunpack.c.l.b16 %v326
  %v1408 = vunpack.c.h.b16 %v326
  %v1409 = vunpack.c.l.b16 %v327
  %v1410 = vunpack.c.h.b16 %v327
  %v1411 = vunpack.c.l.b16 %v328
  %v1412 = vunpack.c.h.b16 %v328
  %v1413 = vunpack.c.l.b16 %v329
  %v1414 = vunpack.c.h.b16 %v329
  %v1415 = vunpack.c.l.b16 %v330
  %v1416 = vunpack.c.h.b16 %v330
  %v1417 = vunpack.c.l.b16 %v331
  %v1418 = vunpack.c.h.b16 %v331
  %v1419 = vunpack.c.l.b16 %v332
  %v1420 = vunpack.c.h.b16 %v332
  %v1421 = vunpack.c.l.b16 %v333
  %v1422 = vunpack.c.h.b16 %v333
  %v1423 = vunpack.c.l.b16 %v334
  %v1424 = vunpack.c.h.b16 %v334
  %v1425 = vunpack.c.l.b16 %v335
  %v1426 = vunpack.c.h.b16 %v335
  %v1427 = vunpack.c.l.b16 %v336
  %v1428 = vunpack.c.h.b16 %v336
  %v1429 = vunpack.c.l.b16 %v337
  %v1430 = vunpack.c.h.b16 %v337
  %v1431 = vunpack.c.l.b16 %v338
  %v1432 = vunpack.c.h.b16 %v338
  %v1433 = vunpack.c.l.b16 %v339
  %v1434 = vunpack.c.h.b16 %v339
  %v1435 = vunpack.c.l.b16 %v340
  %v1436 = vunpack.c.h.b16 %v340
  %v1437 = vunpack.c.l.b16 %v341
  %v1438 = vunpack.c.h.b16 %v341
  %v1439 = vunpack.c.l.b16 %v342
  %v1440 = vunpack.c.h.b16 %v342
  %v1441 = vunpack.c.l.b16 %v343
  %v1442 = vunpack.c.h.b16 %v343
  %v1443 = vunpack.c.l.b16 %v344
  %v1444 = vunpack.c.h.b16 %v344
  %v1445 = vunpack.c.l.b16 %v345
  %v1446 = vunpack.c.h.b16 %v345
  %v1447 = vunpack.c.l.b16 %v346
  %v1448 = vunpack.c.h.b16 %v346
  %v1449 = vunpack.c.l.b16 %v347
  %v1450 = vunpack.c.h.b16 %v347
  %v1451 = vunpack.c.l.b16 %v348
  %v1452 = vunpack.c.h.b16 %v348
  %v1453 = vunpack.c.l.b16 %v349
  %v1454 = vunpack.c.h.b16 %v349
  %v1455 = vunpack.c.l.b16 %v350
  %v1456 = vunpack.c.h.b16 %v350
  %v1457 = vunpack.c.l.b16 %v351
  %v1458 = vunpack.c.h.b16 %v351
  %v1459 = vunpack.c.l.b16 %v352
  %v1460 = vunpack.c.h.b16 %v352
  %v1461 = vunpack.c.l.b16 %v353
  %v1462 = vunpack.c.h.b16 %v353
  %v1463 = vunpack.c.l.b16 %v354
  %v1464 = vunpack.c.h.b16 %v354
  %v1465 = vunpack.c.l.b16 %v355
  %v1466 = vunpack.c.h.b16 %v355
  %v1467 = vunpack.c.l.b16 %v356
  %v1468 = vunpack.c.h.b16 %v356
  %v1469 = vunpack.c.l.b16 %v357
  %v1470 = vunpack.c.h.b16 %v357
  %v1471 = vunpack.c.l.b16 %v358
  %v1472 = vunpack.c.h.b16 %v358
  %v1473 = vunpack.c.l.b16 %v359
  %v1474 = vunpack.c.h.b16 %v359
  %v1475 = vunpack.c.l.b16 %v360
  %v1476 = vunpack.c.h.b16 %v360
  %v1477 = vunpack.c.l.b16 %v361
  %v1478 = vunpack.c.h.b16 %v361
  %v1479 = vunpack.c.l.b16 %v362
  %v1480 = vunpack.c.h.b16 %v362
  %v1481 = vunpack.c.l.b16 %v363
  %v1482 = vunpack.c.h.b16 %v363
  %v1483 = vunpack.c.l.b16 %v364
  %v1484 = vunpack.c.h.b16 %v364
  %v1485 = vunpack.c.l.b16 %v365
  %v1486 = vunpack.c.h.b16 %v365
  %v1487 = vunpack.c.l.b16 %v366
  %v1488 = vunpack.c.h.b16 %v366
  %v1489 = vunpack.c.l.b16 %v367
  %v1490 = vunpack.c.h.b16 %v367
  %v1491 = vunpack.c.l.b16 %v368
  %v1492 = vunpack.c.h.b16 %v368
  %v1493 = vunpack.c.l.b16 %v369
  %v1494 = vunpack.c.h.b16 %v369
  %v1495 = vunpack.c.l.b16 %v370
  %v1496 = vunpack.c.h.b16 %v370
  %v1497 = vunpack.c.l.b16 %v371
  %v1498 = vunpack.c.h.b16 %v371
  %v1499 = vunpack.c.l.b16 %v372
  %v1500 = vunpack.c.h.b16 %v372
  %v1501 = vunpack.c.l.b16 %v373
  %v1502 = vunpack.c.h.b16 %v373
  %v1503 = vunpack.c.l.b16 %v374
  %v1504 = vunpack.c.h.b16 %v374
  %v1505 = vunpack.c.l.b16 %v375
  %v1506 = vunpack.c.h.b16 %v375
  %v1507 = vunpack.c.l.b16 %v376
  %v1508 = vunpack.c.h.b16 %v376
  %v1509 = vunpack.c.l.b16 %v377
  %v1510 = vunpack.c.h.b16 %v377
  %v1511 = vunpack.c.l.b16 %v378
  %v1512 = vunpack.c.h.b16 %v378
  %v1513 = vunpack.c.l.b16 %v379
  %v1514 = vunpack.c.h.b16 %v379
  %v1515 = vunpack.c.l.b16 %v380
  %v1516 = vunpack.c.h.b16 %v380
  %v1517 = vunpack.c.l.b16 %v381
  %v1518 = vunpack.c.h.b16 %v381
  %v1519 = vunpack.c.l.b16 %v382
  %v1520 = vunpack.c.h.b16 %v382
  %v1521 = vunpack.c.l.b16 %v383
  %v1522 = vunpack.c.h.b16 %v383
  %v1523 = vunpack.c.l.b16 %v384
  %v1524 = vunpack.c.h.b16 %v384
  %v1525 = vunpack.c.l.b16 %v385
  %v1526 = vunpack.c.h.b16 %v385
  %v1527 = vunpack.c.l.b16 %v386
  %v1528 = vunpack.c.h.b16 %v386
  %v1529 = vunpack.c.l.b16 %v387
  %v1530 = vunpack.c.h.b16 %v387
  %v1531 = vunpack.c.l.b16 %v388
  %v1532 = vunpack.c.h.b16 %v388
  %v1533 = vunpack.c.l.b16 %v389
  %v1534 = vunpack.c.h.b16 %v389
  %v1535 = vunpack.c.l.b16 %v390
  %v1536 = vunpack.c.h.b16 %v390
  %v1537 = vunpack.c.l.b16 %v391
  %v1538 = vunpack.c.h.b16 %v391
  %v1539 = vunpack.c.l.b16 %v392
  %v1540 = vunpack.c.h.b16 %v392
  %v1541 = vunpack.c.l.b16 %v393
  %v1542 = vunpack.c.h.b16 %v393
  %v1543 = vunpack.c.l.b16 %v394
  %v1544 = vunpack.c.h.b16 %v394
  %v1545 = vunpack.c.l.b16 %v395
  %v1546 = vunpack.c.h.b16 %v395
  %v1547 = vunpack.c.l.b16 %v396
  %v1548 = vunpack.c.h.b16 %v396
  %v1549 = vpack.c.b16 %v829, %v781
  %v1550 = vpack.c.b16 %v830, %v782
  %v1551 = vpack.c.b16 %v831, %v783
  %v1552 = vpack.c.b16 %v832, %v784
  %v1553 = vpack.c.b16 %v833, %v785
  %v1554 = vpack.c.b16 %v834, %v786
  %v1555 = vpack.c.b16 %v835, %v787
  %v1556 = vpack.c.b16 %v836, %v788
  %v1557 = vpack.c.b16 %v837, %v789
  %v1558 = vpack.c.b16 %v838, %v790
  %v1559 = vpack.c.b16 %v839, %v791
  %v1560 = vpack.c.b16 %v840, %v792
  %v1561 = vpack.c.b16 %v841, %v793
  %v1562 = vpack.c.b16 %v842, %v794
  %v1563 = vpack.c.b16 %v843, %v795
  %v1564 = vpack.c.b16 %v844, %v796
  %v1565 = vpack.c.b16 %v845, %v797
  %v1566 = vpack.c.b16 %v846, %v798
  %v1567 = vpack.c.b16 %v847, %v799
  %v1568 = vpack.c.b16 %v848, %v800
  %v1569 = vpack.c.b16 %v849, %v801
  %v1570 = vpack.c.b16 %v850, %v802
  %v1571 = vpack.c.b16 %v851, %v803
  %v1572 = vpack.c.b16 %v852, %v804
  %v1573 = vpack.c.b16 %v853, %v805
  %v1574 = vpack.c.b16 %v854, %v806
  %v1575 = vpack.c.b16 %v855, %v807
  %v1576 = vpack.c.b16 %v856, %v808
  %v1577 = vpack.c.b16 %v857, %v809
  %v1578 = vpack.c.b16 %v858, %v810
  %v1579 = vpack.c.b16 %v859, %v811
  %v1580 = vpack.c.b16 %v860, %v812
  %v1581 = vpack.c.b16 %v861, %v813
  %v1582 = vpack.c.b16 %v862, %v814
  %v1583 = vpack.c.b16 %v863, %v815
  %v1584 = vpack.c.b16 %v864, %v816
  %v1585 = vpack.c.b16 %v865, %v817
  %v1586 = vpack.c.b16 %v866, %v818
  %v1587 = vpack.c.b16 %v867, %v819
  %v1588 = vpack.c.b16 %v868, %v820
  %v1589 = vpack.c.b16 %v869, %v821
  %v1590 = vpack.c.b16 %v870, %v822
  %v1591 = vpack.c.b16 %v871, %v823
  %v1592 = vpack.c.b16 %v872, %v824
  %v1593 = vpack.c.b16 %v873, %v825
  %v1594 = vpack.c.b16 %v874, %v826
  %v1595 = vpack.c.b16 %v875, %v827
  %v1596 = vpack.c.b16 %v876, %v828
  %v1597 = vpack.c.b16 %v925, %v877
  %v1598 = vpack.c.b16 %v926, %v878
  %v1599 = vpack.c.b16 %v927, %v879
  %v1600 = vpack.c.b16 %v928, %v880
  %v1601 = vpack.c.b16 %v929, %v881
  %v1602 = vpack.c.b16 %v930, %v882
  %v1603 = vpack.c.b16 %v931, %v883
  %v1604 = vpack.c.b16 %v932, %v884
  %v1605 = vpack.c.b16 %v933, %v885
  %v1606 = vpack.c.b16 %v934, %v886
  %v1607 = vpack.c.b16 %v935, %v887
  %v1608 = vpack.c.b16 %v936, %v888
  %v1609 = vpack.c.b16 %v937, %v889
  %v1610 = vpack.c.b16 %v938, %v890
  %v1611 = vpack.c.b16 %v939, %v891
  %v1612 = vpack.c.b16 %v940, %v892
  %v1613 = vpack.c.b16 %v941, %v893
  %v1614 = vpack.c.b16 %v942, %v894
  %v1615 = vpack.c.b16 %v943, %v895
  %v1616 = vpack.c.b16 %v944, %v896
  %v1617 = vpack.c.b16 %v945, %v897
  %v1618 = vpack.c.b16 %v946, %v898
  %v1619 = vpack.c.b16 %v947, %v899
  %v1620 = vpack.c.b16 %v948, %v900
  %v1621 = vpack.c.b16 %v949, %v901
  %v1622 = vpack.c.b16 %v950, %v902
  %v1623 = vpack.c.b16 %v951, %v903
  %v1624 = vpack.c.b16 %v952, %v904
  %v1625 = vpack.c.b16 %v953, %v905
  %v1626 = vpack.c.b16 %v954, %v906
  %v1627 = vpack.c.b16 %v955, %v907
  %v1628 = vpack.c.b16 %v956, %v908
  %v1629 = vpack.c.b16 %v957, %v909
  %v1630 = vpack.c.b16 %v958, %v910
  %v1631 = vpack.c.b16 %v959, %v911
  %v1632 = vpack.c.b16 %v960, %v912
  %v1633 = vpack.c.b16 %v961, %v913
  %v1634 = vpack.c.b16 %v962, %v914
  %v1635 = vpack.c.b16 %v963, %v915
  %v1636 = vpack.c.b16 %v964, %v916
  %v1637 = vpack.c.b16 %v965, %v917
  %v1638 = vpack.c.b16 %v966, %v918
  %v1639 = vpack.c.b16 %v967, %v919
  %v1640 = vpack.c.b16 %v968, %v920
  %v1641 = vpack.c.b16 %v969, %v921
  %v1642 = vpack.c.b16 %v970, %v922
  %v1643 = vpack.c.b16 %v971, %v923
  %v1644 = vpack.c.b16 %v972, %v924
  %v1645 = vpack.c.b16 %v1021, %v973
  %v1646 = vpack.c.b16 %v1022, %v974
  %v1647 = vpack.c.b16 %v1023, %v975
  %v1648 = vpack.c.b16 %v1024, %v976
  %v1649 = vpack.c.b16 %v1025, %v977
  %v1650 = vpack.c.b16 %v1026, %v978
  %v1651 = vpack.c.b16 %v1027, %v979
  %v1652 = vpack.c.b16 %v1028, %v980
  %v1653 = vpack.c.b16 %v1029, %v981
  %v1654 = vpack.c.b16 %v1030, %v982
  %v1655 = vpack.c.b16 %v1031, %v983
  %v1656 = vpack.c.b16 %v1032, %v984
  %v1657 = vpack.c.b16 %v1033, %v985
  %v1658 = vpack.c.b16 %v1034, %v986
  %v1659 = vpack.c.b16 %v1035, %v987
  %v1660 = vpack.c.b16 %v1036, %v988
  %v1661 = vpack.c.b16 %v1037, %v989
  %v1662 = vpack.c.b16 %v1038, %v990
  %v1663 = vpack.c.b16 %v1039, %v991
  %v1664 = vpack.c.b16 %v1040, %v992
  %v1665 = vpack.c.b16 %v1041, %v993
  %v1666 = vpack.c.b16 %v1042, %v994
  %v1667 = vpack.c.b16 %v1043, %v995
  %v1668 = vpack.c.b16 %v1044, %v996
  %v1669 = vpack.c.b16 %v1045, %v997
  %v1670 = vpack.c.b16 %v1046, %v998
  %v1671 = vpack.c.b16 %v1047, %v999
  %v1672 = vpack.c.b16 %v1048, %v1000
  %v1673 = vpack.c.b16 %v1049, %v1001
  %v1674 = vpack.c.b16 %v1050, %v1002
  %v1675 = vpack.c.b16 %v1051, %v1003
  %v1676 = vpack.c.b16 %v1052, %v1004
  %v1677 = vpack.c.b16 %v1053, %v1005
  %v1678 = vpack.c.b16 %v1054, %v1006
  %v1679 = vpack.c.b16 %v1055, %v1007
  %v1680 = vpack.c.b16 %v1056, %v1008
  %v1681 = vpack.c.b16 %v1057, %v1009
  %v1682 = vpack.c.b16 %v1058, %v1010
  %v1683 = vpack.c.b16 %v1059, %v1011
  %v1684 = vpack.c.b16 %v1060, %v1012
  %v1685 = vpack.c.b16 %v1061, %v1013
  %v1686 = vpack.c.b16 %v1062, %v1014
  %v1687 = vpack.c.b16 %v1063, %v1015
  %v1688 = vpack.c.b16 %v1064, %v1016
  %v1689 = vpack.c.b16 %v1065, %v1017
  %v1690 = vpack.c.b16 %v1066, %v1018
  %v1691 = vpack.c.b16 %v1067, %v1019
  %v1692 = vpack.c.b16 %v1068, %v1020
  %v1693 = vpack.c.b16 %v1117, %v1069
  %v1694 = vpack.c.b16 %v1118, %v1070
  %v1695 = vpack.c.b16 %v1119, %v1071
  %v1696 = vpack.c.b16 %v1120, %v1072
  %v1697 = vpack.c.b16 %v1121, %v1073
  %v1698 = vpack.c.b16 %v1122, %v1074
  %v1699 = vpack.c.b16 %v1123, %v1075
  %v1700 = vpack.c.b16 %v1124, %v1076
  %v1701 = vpack.c.b16 %v1125, %v1077
  %v1702 = vpack.c.b16 %v1126, %v1078
  %v1703 = vpack.c.b16 %v1127, %v1079
  %v1704 = vpack.c.b16 %v1128, %v1080
  %v1705 = vpack.c.b16 %v1129, %v1081
  %v1706 = vpack.c.b16 %v1130, %v1082
  %v1707 = vpack.c.b16 %v1131, %v1083
  %v1708 = vpack.c.b16 %v1132, %v1084
  %v1709 = vpack.c.b16 %v1133, %v1085
  %v1710 = vpack.c.b16 %v1134, %v1086
  %v1711 = vpack.c.b16 %v1135, %v1087
  %v1712 = vpack.c.b16 %v1136, %v1088
  %v1713 = vpack.c.b16 %v1137, %v1089
  %v1714 = vpack.c.b16 %v1138, %v1090
  %v1715 = vpack.c.b16 %v1139, %v1091
  %v1716 = vpack.c.b16 %v1140, %v1092
  %v1717 = vpack.c.b16 %v1141, %v1093
  %v1718 = vpack.c.b16 %v1142, %v1094
  %v1719 = vpack.c.b16 %v1143, %v1095
  %v1720 = vpack.c.b16 %v1144, %v1096
  %v1721 = vpack.c.b16 %v1145, %v1097
  %v1722 = vpack.c.b16 %v1146, %v1098
  %v1723 = vpack.c.b16 %v1147, %v1099
  %v1724 = vpack.c.b16 %v1148, %v1100
  %v1725 = vpack.c.b16 %v1149, %v1101
  %v1726 = vpack.c.b16 %v1150, %v1102
  %v1727 = vpack.c.b16 %v1151, %v1103
  %v1728 = vpack.c.b16 %v1152, %v1104
  %v1729 = vpack.c.b16 %v1153, %v1105
  %v1730 = vpack.c.b16 %v1154, %v1106
  %v1731 = vpack.c.b16 %v1155, %v1107
  %v1732 = vpack.c.b16 %v1156, %v1108
  %v1733 = vpack.c.b16 %v1157, %v1109
  %v1734 = vpack.c.b16 %v1158, %v1110
  %v1735 = vpack.c.b16 %v1159, %v1111
  %v1736 = vpack.c.b16 %v1160, %v1112
  %v1737 = vpack.c.b16 %v1161, %v1113
  %v1738 = vpack.c.b16 %v1162, %v1114
  %v1739 = vpack.c.b16 %v1163, %v1115
  %v1740 = vpack.c.b16 %v1164, %v1116
  %v1741 = vpack.c.b16 %v1213, %v1165
  %v1742 = vpack.c.b16 %v1214, %v1166
  %v1743 = vpack.c.b16 %v1215, %v1167
  %v1744 = vpack.c.b16 %v1216, %v1168
  %v1745 = vpack.c.b16 %v1217, %v1169
  %v1746 = vpack.c.b16 %v1218, %v1170
  %v1747 = vpack.c.b16 %v1219, %v1171
  %v1748 = vpack.c.b16 %v1220, %v1172
  %v1749 = vpack.c.b16 %v1221, %v1173
  %v1750 = vpack.c.b16 %v1222, %v1174
  %v1751 = vpack.c.b16 %v1223, %v1175
  %v1752 = vpack.c.b16 %v1224, %v1176
  %v1753 = vpack.c.b16 %v1225, %v1177
  %v1754 = vpack.c.b16 %v1226, %v1178
  %v1755 = vpack.c.b16 %v1227, %v1179
  %v1756 = vpack.c.b16 %v1228, %v1180
  %v1757 = vpack.c.b16 %v1229, %v1181
  %v1758 = vpack.c.b16 %v1230, %v1182
  %v1759 = vpack.c.b16 %v1231, %v1183
  %v1760 = vpack.c.b16 %v1232, %v1184
  %v1761 = vpack.c.b16 %v1233, %v1185
  %v1762 = vpack.c.b16 %v1234, %v1186
  %v1763 = vpack.c.b16 %v1235, %v1187
  %v1764 = vpack.c.b16 %v1236, %v1188
  %v1765 = vpack.c.b16 %v1237, %v1189
  %v1766 = vpack.c.b16 %v1238, %v1190
  %v1767 = vpack.c.b16 %v1239, %v1191
  %v1768 = vpack.c.b16 %v1240, %v1192
  %v1769 = vpack.c.b16 %v1241, %v1193
  %v1770 = vpack.c.b16 %v1242, %v1194
  %v1771 = vpack.c.b16 %v1243, %v1195
  %v1772 = vpack.c.b16 %v1244, %v1196
  %v1773 = vpack.c.b16 %v1245, %v1197
  %v1774 = vpack.c.b16 %v1246, %v1198
  %v1775 = vpack.c.b16 %v1247, %v1199
  %v1776 = vpack.c.b16 %v1248, %v1200
  %v1777 = vpack.c.b16 %v1249, %v1201
  %v1778 = vpack.c.b16 %v1250, %v1202
  %v1779 = vpack.c.b16 %v1251, %v1203
  %v1780 = vpack.c.b16 %v1252, %v1204
  %v1781 = vpack.c.b16 %v1253, %v1205
  %v1782 = vpack.c.b16 %v1254, %v1206
  %v1783 = vpack.c.b16 %v1255, %v1207
  %v1784 = vpack.c.b16 %v1256, %v1208
  %v1785 = vpack.c.b16 %v1257, %v1209
  %v1786 = vpack.c.b16 %v1258, %v1210
  %v1787 = vpack.c.b16 %v1259, %v1211
  %v1788 = vpack.c.b16 %v1260, %v1212
  %v1789 = vpack.c.b16 %v1309, %v1261
  %v1790 = vpack.c.b16 %v1310, %v1262
  %v1791 = vpack.c.b16 %v1311, %v1263
  %v1792 = vpack.c.b16 %v1312, %v1264
  %v1793 = vpack.c.b16 %v1313, %v1265
  %v1794 = vpack.c.b16 %v1314, %v1266
  %v1795 = vpack.c.b16 %v1315, %v1267
  %v1796 = vpack.c.b16 %v1316, %v1268
  %v1797 = vpack.c.b16 %v1317, %v1269
  %v1798 = vpack.c.b16 %v1318, %v1270
  %v1799 = vpack.c.b16 %v1319, %v1271
  %v1800 = vpack.c.b16 %v1320, %v1272
  %v1801 = vpack.c.b16 %v1321, %v1273
  %v1802 = vpack.c.b16 %v1322, %v1274
  %v1803 = vpack.c.b16 %v1323, %v1275
  %v1804 = vpack.c.b16 %v1324, %v1276
  %v1805 = vpack.c.b16 %v1325, %v1277
  %v1806 = vpack.c.b16 %v1326, %v1278
  %v1807 = vpack.c.b16 %v1327, %v1279
  %v1808 = vpack.c.b16 %v1328, %v1280
  %v1809 = vpack.c.b16 %v1329, %v1281
  %v1810 = vpack.c.b16 %v1330, %v1282
  %v1811 = vpack.c.b16 %v1331, %v1283
  %v1812 = vpack.c.b16 %v1332, %v1284
  %v1813 = vpack.c.b16 %v1333, %v1285
  %v1814 = vpack.c.b16 %v1334, %v1286
  %v1815 = vpack.c.b16 %v1335, %v1287
  %v1816 = vpack.c.b16 %v1336, %v1288
  %v1817 = vpack.c.b16 %v1337, %v1289
  %v1818 = vpack.c.b16 %v1338, %v1290
  %v1819 = vpack.c.b16 %v1339, %v1291
  %v1820 = vpack.c.b16 %v1340, %v1292
  %v1821 = vpack.c.b16 %v1341, %v1293
  %v1822 = vpack.c.b16 %v1342, %v1294
  %v1823 = vpack.c.b16 %v1343, %v1295
  %v1824 = vpack.c.b16 %v1344, %v1296
  %v1825 = vpack.c.b16 %v1345, %v1297
  %v1826 = vpack.c.b16 %v1346, %v1298
  %v1827 = vpack.c.b16 %v1347, %v1299
  %v1828 = vpack.c.b16 %v1348, %v1300
  %v1829 = vpack.c.b16 %v1349, %v1301
  %v1830 = vpack.c.b16 %v1350, %v1302
  %v1831 = vpack.c.b16 %v1351, %v1303
  %v1832 = vpack.c.b16 %v1352, %v1304
  %v1833 = vpack.c.b16 %v1353, %v1305
  %v1834 = vpack.c.b16 %v1354, %v1306
  %v1835 = vpack.c.b16 %v1355, %v1307
  %v1836 = vpack.c.b16 %v1356, %v1308
  %v1837 = vpack.c.b16 %v1405, %v1357
  %v1838 = vpack.c.b16 %v1406, %v1358
  %v1839 = vpack.c.b16 %v1407, %v1359
  %v1840 = vpack.c.b16 %v1408, %v1360
  %v1841 = vpack.c.b16 %v1409, %v1361
  %v1842 = vpack.c.b16 %v1410, %v1362
  %v1843 = vpack.c.b16 %v1411, %v1363
  %v1844 = vpack.c.b16 %v1412, %v1364
  %v1845 = vpack.c.b16 %v1413, %v1365
  %v1846 = vpack.c.b16 %v1414, %v1366
  %v1847 = vpack.c.b16 %v1415, %v1367
  %v1848 = vpack.c.b16 %v1416, %v1368
  %v1849 = vpack.c.b16 %v1417, %v1369
  %v1850 = vpack.c.b16 %v1418, %v1370
  %v1851 = vpack.c.b16 %v1419, %v1371
  %v1852 = vpack.c.b16 %v1420, %v1372
  %v1853 = vpack.c.b16 %v1421, %v1373
  %v1854 = vpack.c.b16 %v1422, %v1374
  %v1855 = vpack.c.b16 %v1423, %v1375
  %v1856 = vpack.c.b16 %v1424, %v1376
  %v1857 = vpack.c.b16 %v1425, %v1377
  %v1858 = vpack.c.b16 %v1426, %v1378
  %v1859 = vpack.c.b16 %v1427, %v1379
  %v1860 = vpack.c.b16 %v1428, %v1380
  %v1861 = vpack.c.b16 %v1429, %v1381
  %v1862 = vpack.c.b16 %v1430, %v1382
  %v1863 = vpack.c.b16 %v1431, %v1383
  %v1864 = vpack.c.b16 %v1432, %v1384
  %v1865 = vpack.c.b16 %v1433, %v1385
  %v1866 = vpack.c.b16 %v1434, %v1386
  %v1867 = vpack.c.b16 %v1435, %v1387
  %v1868 = vpack.c.b16 %v1436, %v1388
  %v1869 = vpack.c.b16 %v1437, %v1389
  %v1870 = vpack.c.b16 %v1438, %v1390
  %v1871 = vpack.c.b16 %v1439, %v1391
  %v1872 = vpack.c.b16 %v1440, %v1392
  %v1873 = vpack.c.b16 %v1441, %v1393
  %v1874 = vpack.c.b16 %v1442, %v1394
  %v1875 = vpack.c.b16 %v1443, %v1395
  %v1876 = vpack.c.b16 %v1444, %v1396
  %v1877 = vpack.c.b16 %v1445, %v1397
  %v1878 = vpack.c.b16 %v1446, %v1398
  %v1879 = vpack.c.b16 %v1447, %v1399
  %v1880 = vpack.c.b16 %v1448, %v1400
  %v1881 = vpack.c.b16 %v1449, %v1401
  %v1882 = vpack.c.b16 %v1450, %v1402
  %v1883 = vpack.c.b16 %v1451, %v1403
  %v1884 = vpack.c.b16 %v1452, %v1404
  %v1885 = vpack.c.b16 %v1501, %v1453
  %v1886 = vpack.c.b16 %v1502, %v1454
  %v1887 = vpack.c.b16 %v1503, %v1455
  %v1888 = vpack.c.b16 %v1504, %v1456
  %v1889 = vpack.c.b16 %v1505, %v1457
  %v1890 = vpack.c.b16 %v1506, %v1458
  %v1891 = vpack.c.b16 %v1507, %v1459
  %v1892 = vpack.c.b16 %v1508, %v1460
  %v1893 = vpack.c.b16 %v1509, %v1461
  %v1894 = vpack.c.b16 %v1510, %v1462
  %v1895 = vpack.c.b16 %v1511, %v1463
  %v1896 = vpack.c.b16 %v1512, %v1464
  %v1897 = vpack.c.b16 %v1513, %v1465
  %v1898 = vpack.c.b16 %v1514, %v1466
  %v1899 = vpack.c.b16 %v1515, %v1467
  %v1900 = vpack.c.b16 %v1516, %v1468
  %v1901 = vpack.c.b16 %v1517, %v1469
  %v1902 = vpack.c.b16 %v1518, %v1470
  %v1903 = vpack.c.b16 %v1519, %v1471
  %v1904 = vpack.c.b16 %v1520, %v1472
  %v1905 = vpack.c.b16 %v1521, %v1473
  %v1906 = vpack.c.b16 %v1522, %v1474
  %v1907 = vpack.c.b16 %v1523, %v1475
  %v1908 = vpack.c.b16 %v1524, %v1476
  %v1909 = vpack.c.b16 %v1525, %v1477
  %v1910 = vpack.c.b16 %v1526, %v1478
  %v1911 = vpack.c.b16 %v1527, %v1479
  %v1912 = vpack.c.b16 %v1528, %v1480
  %v1913 = vpack.c.b16 %v1529, %v1481
  %v1914 = vpack.c.b16 %v1530, %v1482
  %v1915 = vpack.c.b16 %v1531, %v1483
  %v1916 = vpack.c.b16 %v1532, %v1484
  %v1917 = vpack.c.b16 %v1533, %v1485
  %v1918 = vpack.c.b16 %v1534, %v1486
  %v1919 = vpack.c.b16 %v1535, %v1487
  %v1920 = vpack.c.b16 %v1536, %v1488
  %v1921 = vpack.c.b16 %v1537, %v1489
  %v1922 = vpack.c.b16 %v1538, %v1490
  %v1923 = vpack.c.b16 %v1539, %v1491
  %v1924 = vpack.c.b16 %v1540, %v1492
  %v1925 = vpack.c.b16 %v1541, %v1493
  %v1926 = vpack.c.b16 %v1542, %v1494
  %v1927 = vpack.c.b16 %v1543, %v1495
  %v1928 = vpack.c.b16 %v1544, %v1496
  %v1929 = vpack.c.b16 %v1545, %v1497
  %v1930 = vpack.c.b16 %v1546, %v1498
  %v1931 = vpack.c.b16 %v1547, %v1499
  %v1932 = vpack.c.b16 %v1548, %v1500
  %2317 = vmatprep.subr.bf16.mxu0 %v1550
  %2318 = vmatpush1.bf16.msra.mxu0 %v1549
  %2319 = vmatprep.subr.bf16.mxu0 %v1598
  %2320 = vmatpush1.bf16.msra.mxu0 %v1597
  %2321 = vmatprep.subr.bf16.mxu0 %v1646
  %2322 = vmatpush1.bf16.msra.mxu0 %v1645
  %2323 = vmatprep.subr.bf16.mxu0 %v1694
  %2324 = vmatpush1.bf16.msra.mxu0 %v1693
  %2325 = vmatprep.subr.bf16.mxu0 %v1742
  %2326 = vmatpush1.bf16.msra.mxu0 %v1741
  %2327 = vmatprep.subr.bf16.mxu0 %v1790
  %2328 = vmatpush1.bf16.msra.mxu0 %v1789
  %2329 = vmatprep.subr.bf16.mxu0 %v1838
  %2330 = vmatpush1.bf16.msra.mxu0 %v1837
  %2331 = vmatprep.subr.bf16.mxu0 %v1886
  %2332 = vmatpush1.bf16.msra.mxu0 %v1885
  %2333 = vmatprep.subr.bf16.mxu0 0
  %2334 = vmatpush1.bf16.msra.mxu0 0
  %2335 = vmatprep.subr.bf16.mxu0 0
  %2336 = vmatpush1.bf16.msra.mxu0 0
  %2337 = vmatprep.subr.bf16.mxu0 0
  %2338 = vmatpush1.bf16.msra.mxu0 0
  %2339 = vmatprep.subr.bf16.mxu0 0
  %2340 = vmatpush1.bf16.msra.mxu0 0
  %2341 = vmatprep.subr.bf16.mxu0 0
  %2342 = vmatpush1.bf16.msra.mxu0 0
  %2343 = vmatprep.subr.bf16.mxu0 0
  %2344 = vmatpush1.bf16.msra.mxu0 0
  %2345 = vmatprep.subr.bf16.mxu0 0
  %2346 = vmatpush1.bf16.msra.mxu0 0
  %2347 = vmatprep.subr.bf16.mxu0 0
  %2348 = vmatpush1.bf16.msra.mxu0 0
  %2349 = vmatprep.mubr.bf16.mxu0 0
  %2350 = vmatmul.mubr.bf16.gmra.mrb[0].mxu0 %v12
  %v2351 = vpop.f32.mrb[0].mxu0
  %v2352 = vadd.f32 0.0, %v2351
  %v2353 = vpop.f32.mrb[0].mxu0
  %v2354 = vadd.f32 0.0, %v2353
  %v2355 = vpop.f32.mrb[0].mxu0
  %v2356 = vpop.f32.mrb[0].mxu0
  %2357 = vdwg.mxu0
  %2358 = vmatprep.subr.bf16.mxu0 %v1552
  %2359 = vmatpush1.bf16.msra.mxu0 %v1551
  %2360 = vmatprep.subr.bf16.mxu0 %v1600
  %2361 = vmatpush1.bf16.msra.mxu0 %v1599
  %2362 = vmatprep.subr.bf16.mxu0 %v1648
  %2363 = vmatpush1.bf16.msra.mxu0 %v1647
  %2364 = vmatprep.subr.bf16.mxu0 %v1696
  %2365 = vmatpush1.bf16.msra.mxu0 %v1695
  %2366 = vmatprep.subr.bf16.mxu0 %v1744
  %2367 = vmatpush1.bf16.msra.mxu0 %v1743
  %2368 = vmatprep.subr.bf16.mxu0 %v1792
  %2369 = vmatpush1.bf16.msra.mxu0 %v1791
  %2370 = vmatprep.subr.bf16.mxu0 %v1840
  %2371 = vmatpush1.bf16.msra.mxu0 %v1839
  %2372 = vmatprep.subr.bf16.mxu0 %v1888
  %2373 = vmatpush1.bf16.msra.mxu0 %v1887
  %2374 = vmatprep.subr.bf16.mxu0 0
  %2375 = vmatpush1.bf16.msra.mxu0 0
  %2376 = vmatprep.subr.bf16.mxu0 0
  %2377 = vmatpush1.bf16.msra.mxu0 0
  %2378 = vmatprep.subr.bf16.mxu0 0
  %2379 = vmatpush1.bf16.msra.mxu0 0
  %2380 = vmatprep.subr.bf16.mxu0 0
  %2381 = vmatpush1.bf16.msra.mxu0 0
  %2382 = vmatprep.subr.bf16.mxu0 0
  %2383 = vmatpush1.bf16.msra.mxu0 0
  %2384 = vmatprep.subr.bf16.mxu0 0
  %2385 = vmatpush1.bf16.msra.mxu0 0
  %2386 = vmatprep.subr.bf16.mxu0 0
  %2387 = vmatpush1.bf16.msra.mxu0 0
  %2388 = vmatprep.subr.bf16.mxu0 0
  %2389 = vmatpush1.bf16.msra.mxu0 0
  %2390 = vmatprep.mubr.bf16.mxu0 0
  %2391 = vmatmul.mubr.bf16.gmra.mrb[0].mxu0 %v12
  %v2392 = vpop.f32.mrb[0].mxu0
  %v2393 = vadd.f32 0.0, %v2392
  %v2394 = vpop.f32.mrb[0].mxu0
  %v2395 = vadd.f32 0.0, %v2394
  %v2396 = vpop.f32.mrb[0].mxu0
  %v2397 = vpop.f32.mrb[0].mxu0
  %2398 = vdwg.mxu0
  %2399 = vmatprep.subr.bf16.mxu0 %v1554
  %2400 = vmatpush1.bf16.msra.mxu0 %v1553
  %2401 = vmatprep.subr.bf16.mxu0 %v1602
  %2402 = vmatpush1.bf16.msra.mxu0 %v1601
  %2403 = vmatprep.subr.bf16.mxu0 %v1650
  %2404 = vmatpush1.bf16.msra.mxu0 %v1649
  %2405 = vmatprep.subr.bf16.mxu0 %v1698
  %2406 = vmatpush1.bf16.msra.mxu0 %v1697
  %2407 = vmatprep.subr.bf16.mxu0 %v1746
  %2408 = vmatpush1.bf16.msra.mxu0 %v1745
  %2409 = vmatprep.subr.bf16.mxu0 %v1794
  %2410 = vmatpush1.bf16.msra.mxu0 %v1793
  %2411 = vmatprep.subr.bf16.mxu0 %v1842
  %2412 = vmatpush1.bf16.msra.mxu0 %v1841
  %2413 = vmatprep.subr.bf16.mxu0 %v1890
  %2414 = vmatpush1.bf16.msra.mxu0 %v1889
  %2415 = vmatprep.subr.bf16.mxu0 0
  %2416 = vmatpush1.bf16.msra.mxu0 0
  %2417 = vmatprep.subr.bf16.mxu0 0
  %2418 = vmatpush1.bf16.msra.mxu0 0
  %2419 = vmatprep.subr.bf16.mxu0 0
  %2420 = vmatpush1.bf16.msra.mxu0 0
  %2421 = vmatprep.subr.bf16.mxu0 0
  %2422 = vmatpush1.bf16.msra.mxu0 0
  %2423 = vmatprep.subr.bf16.mxu0 0
  %2424 = vmatpush1.bf16.msra.mxu0 0
  %2425 = vmatprep.subr.bf16.mxu0 0
  %2426 = vmatpush1.bf16.msra.mxu0 0
  %2427 = vmatprep.subr.bf16.mxu0 0
  %2428 = vmatpush1.bf16.msra.mxu0 0
  %2429 = vmatprep.subr.bf16.mxu0 0
  %2430 = vmatpush1.bf16.msra.mxu0 0
  %2431 = vmatprep.mubr.bf16.mxu0 0
  %2432 = vmatmul.mubr.bf16.gmra.mrb[0].mxu0 %v12
  %v2433 = vpop.f32.mrb[0].mxu0
  %v2434 = vadd.f32 0.0, %v2433
  %v2435 = vpop.f32.mrb[0].mxu0
  %v2436 = vadd.f32 0.0, %v2435
  %v2437 = vpop.f32.mrb[0].mxu0
  %v2438 = vpop.f32.mrb[0].mxu0
  %2439 = vdwg.mxu0
  %2440 = vmatprep.subr.bf16.mxu0 %v1556
  %2441 = vmatpush1.bf16.msra.mxu0 %v1555
  %2442 = vmatprep.subr.bf16.mxu0 %v1604
  %2443 = vmatpush1.bf16.msra.mxu0 %v1603
  %2444 = vmatprep.subr.bf16.mxu0 %v1652
  %2445 = vmatpush1.bf16.msra.mxu0 %v1651
  %2446 = vmatprep.subr.bf16.mxu0 %v1700
  %2447 = vmatpush1.bf16.msra.mxu0 %v1699
  %2448 = vmatprep.subr.bf16.mxu0 %v1748
  %2449 = vmatpush1.bf16.msra.mxu0 %v1747
  %2450 = vmatprep.subr.bf16.mxu0 %v1796
  %2451 = vmatpush1.bf16.msra.mxu0 %v1795
  %2452 = vmatprep.subr.bf16.mxu0 %v1844
  %2453 = vmatpush1.bf16.msra.mxu0 %v1843
  %2454 = vmatprep.subr.bf16.mxu0 %v1892
  %2455 = vmatpush1.bf16.msra.mxu0 %v1891
  %2456 = vmatprep.subr.bf16.mxu0 0
  %2457 = vmatpush1.bf16.msra.mxu0 0
  %2458 = vmatprep.subr.bf16.mxu0 0
  %2459 = vmatpush1.bf16.msra.mxu0 0
  %2460 = vmatprep.subr.bf16.mxu0 0
  %2461 = vmatpush1.bf16.msra.mxu0 0
  %2462 = vmatprep.subr.bf16.mxu0 0
  %2463 = vmatpush1.bf16.msra.mxu0 0
  %2464 = vmatprep.subr.bf16.mxu0 0
  %2465 = vmatpush1.bf16.msra.mxu0 0
  %2466 = vmatprep.subr.bf16.mxu0 0
  %2467 = vmatpush1.bf16.msra.mxu0 0
  %2468 = vmatprep.subr.bf16.mxu0 0
  %2469 = vmatpush1.bf16.msra.mxu0 0
  %2470 = vmatprep.subr.bf16.mxu0 0
  %2471 = vmatpush1.bf16.msra.mxu0 0
  %2472 = vmatprep.mubr.bf16.mxu0 0
  %2473 = vmatmul.mubr.bf16.gmra.mrb[0].mxu0 %v12
  %v2474 = vpop.f32.mrb[0].mxu0
  %v2475 = vadd.f32 0.0, %v2474
  %v2476 = vpop.f32.mrb[0].mxu0
  %v2477 = vadd.f32 0.0, %v2476
  %v2478 = vpop.f32.mrb[0].mxu0
  %v2479 = vpop.f32.mrb[0].mxu0
  %2480 = vdwg.mxu0
  %2481 = vmatprep.subr.bf16.mxu0 %v1558
  %2482 = vmatpush1.bf16.msra.mxu0 %v1557
  %2483 = vmatprep.subr.bf16.mxu0 %v1606
  %2484 = vmatpush1.bf16.msra.mxu0 %v1605
  %2485 = vmatprep.subr.bf16.mxu0 %v1654
  %2486 = vmatpush1.bf16.msra.mxu0 %v1653
  %2487 = vmatprep.subr.bf16.mxu0 %v1702
  %2488 = vmatpush1.bf16.msra.mxu0 %v1701
  %2489 = vmatprep.subr.bf16.mxu0 %v1750
  %2490 = vmatpush1.bf16.msra.mxu0 %v1749
  %2491 = vmatprep.subr.bf16.mxu0 %v1798
  %2492 = vmatpush1.bf16.msra.mxu0 %v1797
  %2493 = vmatprep.subr.bf16.mxu0 %v1846
  %2494 = vmatpush1.bf16.msra.mxu0 %v1845
  %2495 = vmatprep.subr.bf16.mxu0 %v1894
  %2496 = vmatpush1.bf16.msra.mxu0 %v1893
  %2497 = vmatprep.subr.bf16.mxu0 0
  %2498 = vmatpush1.bf16.msra.mxu0 0
  %2499 = vmatprep.subr.bf16.mxu0 0
  %2500 = vmatpush1.bf16.msra.mxu0 0
  %2501 = vmatprep.subr.bf16.mxu0 0
  %2502 = vmatpush1.bf16.msra.mxu0 0
  %2503 = vmatprep.subr.bf16.mxu0 0
  %2504 = vmatpush1.bf16.msra.mxu0 0
  %2505 = vmatprep.subr.bf16.mxu0 0
  %2506 = vmatpush1.bf16.msra.mxu0 0
  %2507 = vmatprep.subr.bf16.mxu0 0
  %2508 = vmatpush1.bf16.msra.mxu0 0
  %2509 = vmatprep.subr.bf16.mxu0 0
  %2510 = vmatpush1.bf16.msra.mxu0 0
  %2511 = vmatprep.subr.bf16.mxu0 0
  %2512 = vmatpush1.bf16.msra.mxu0 0
  %2513 = vmatprep.mubr.bf16.mxu0 0
  %2514 = vmatmul.mubr.bf16.gmra.mrb[0].mxu0 %v12
  %v2515 = vpop.f32.mrb[0].mxu0
  %v2516 = vadd.f32 0.0, %v2515
  %v2517 = vpop.f32.mrb[0].mxu0
  %v2518 = vadd.f32 0.0, %v2517
  %v2519 = vpop.f32.mrb[0].mxu0
  %v2520 = vpop.f32.mrb[0].mxu0
  %2521 = vdwg.mxu0
  %2522 = vmatprep.subr.bf16.mxu0 %v1560
  %2523 = vmatpush1.bf16.msra.mxu0 %v1559
  %2524 = vmatprep.subr.bf16.mxu0 %v1608
  %2525 = vmatpush1.bf16.msra.mxu0 %v1607
  %2526 = vmatprep.subr.bf16.mxu0 %v1656
  %2527 = vmatpush1.bf16.msra.mxu0 %v1655
  %2528 = vmatprep.subr.bf16.mxu0 %v1704
  %2529 = vmatpush1.bf16.msra.mxu0 %v1703
  %2530 = vmatprep.subr.bf16.mxu0 %v1752
  %2531 = vmatpush1.bf16.msra.mxu0 %v1751
  %2532 = vmatprep.subr.bf16.mxu0 %v1800
  %2533 = vmatpush1.bf16.msra.mxu0 %v1799
  %2534 = vmatprep.subr.bf16.mxu0 %v1848
  %2535 = vmatpush1.bf16.msra.mxu0 %v1847
  %2536 = vmatprep.subr.bf16.mxu0 %v1896
  %2537 = vmatpush1.bf16.msra.mxu0 %v1895
  %2538 = vmatprep.subr.bf16.mxu0 0
  %2539 = vmatpush1.bf16.msra.mxu0 0
  %2540 = vmatprep.subr.bf16.mxu0 0
  %2541 = vmatpush1.bf16.msra.mxu0 0
  %2542 = vmatprep.subr.bf16.mxu0 0
  %2543 = vmatpush1.bf16.msra.mxu0 0
  %2544 = vmatprep.subr.bf16.mxu0 0
  %2545 = vmatpush1.bf16.msra.mxu0 0
  %2546 = vmatprep.subr.bf16.mxu0 0
  %2547 = vmatpush1.bf16.msra.mxu0 0
  %2548 = vmatprep.subr.bf16.mxu0 0
  %2549 = vmatpush1.bf16.msra.mxu0 0
  %2550 = vmatprep.subr.bf16.mxu0 0
  %2551 = vmatpush1.bf16.msra.mxu0 0
  %2552 = vmatprep.subr.bf16.mxu0 0
  %2553 = vmatpush1.bf16.msra.mxu0 0
  %2554 = vmatprep.mubr.bf16.mxu0 0
  %2555 = vmatmul.mubr.bf16.gmra.mrb[0].mxu0 %v12
  %v2556 = vpop.f32.mrb[0].mxu0
  %v2557 = vadd.f32 0.0, %v2556
  %v2558 = vpop.f32.mrb[0].mxu0
  %v2559 = vadd.f32 0.0, %v2558
  %v2560 = vpop.f32.mrb[0].mxu0
  %v2561 = vpop.f32.mrb[0].mxu0
  %2562 = vdwg.mxu0
  %2563 = vmatprep.subr.bf16.mxu0 %v1562
  %2564 = vmatpush1.bf16.msra.mxu0 %v1561
  %2565 = vmatprep.subr.bf16.mxu0 %v1610
  %2566 = vmatpush1.bf16.msra.mxu0 %v1609
  %2567 = vmatprep.subr.bf16.mxu0 %v1658
  %2568 = vmatpush1.bf16.msra.mxu0 %v1657
  %2569 = vmatprep.subr.bf16.mxu0 %v1706
  %2570 = vmatpush1.bf16.msra.mxu0 %v1705
  %2571 = vmatprep.subr.bf16.mxu0 %v1754
  %2572 = vmatpush1.bf16.msra.mxu0 %v1753
  %2573 = vmatprep.subr.bf16.mxu0 %v1802
  %2574 = vmatpush1.bf16.msra.mxu0 %v1801
  %2575 = vmatprep.subr.bf16.mxu0 %v1850
  %2576 = vmatpush1.bf16.msra.mxu0 %v1849
  %2577 = vmatprep.subr.bf16.mxu0 %v1898
  %2578 = vmatpush1.bf16.msra.mxu0 %v1897
  %2579 = vmatprep.subr.bf16.mxu0 0
  %2580 = vmatpush1.bf16.msra.mxu0 0
  %2581 = vmatprep.subr.bf16.mxu0 0
  %2582 = vmatpush1.bf16.msra.mxu0 0
  %2583 = vmatprep.subr.bf16.mxu0 0
  %2584 = vmatpush1.bf16.msra.mxu0 0
  %2585 = vmatprep.subr.bf16.mxu0 0
  %2586 = vmatpush1.bf16.msra.mxu0 0
  %2587 = vmatprep.subr.bf16.mxu0 0
  %2588 = vmatpush1.bf16.msra.mxu0 0
  %2589 = vmatprep.subr.bf16.mxu0 0
  %2590 = vmatpush1.bf16.msra.mxu0 0
  %2591 = vmatprep.subr.bf16.mxu0 0
  %2592 = vmatpush1.bf16.msra.mxu0 0
  %2593 = vmatprep.subr.bf16.mxu0 0
  %2594 = vmatpush1.bf16.msra.mxu0 0
  %2595 = vmatprep.mubr.bf16.mxu0 0
  %2596 = vmatmul.mubr.bf16.gmra.mrb[0].mxu0 %v12
  %v2597 = vpop.f32.mrb[0].mxu0
  %v2598 = vadd.f32 0.0, %v2597
  %v2599 = vpop.f32.mrb[0].mxu0
  %v2600 = vadd.f32 0.0, %v2599
  %v2601 = vpop.f32.mrb[0].mxu0
  %v2602 = vpop.f32.mrb[0].mxu0
  %2603 = vdwg.mxu0
  %2604 = vmatprep.subr.bf16.mxu0 %v1564
  %2605 = vmatpush1.bf16.msra.mxu0 %v1563
  %2606 = vmatprep.subr.bf16.mxu0 %v1612
  %2607 = vmatpush1.bf16.msra.mxu0 %v1611
  %2608 = vmatprep.subr.bf16.mxu0 %v1660
  %2609 = vmatpush1.bf16.msra.mxu0 %v1659
  %2610 = vmatprep.subr.bf16.mxu0 %v1708
  %2611 = vmatpush1.bf16.msra.mxu0 %v1707
  %2612 = vmatprep.subr.bf16.mxu0 %v1756
  %2613 = vmatpush1.bf16.msra.mxu0 %v1755
  %2614 = vmatprep.subr.bf16.mxu0 %v1804
  %2615 = vmatpush1.bf16.msra.mxu0 %v1803
  %2616 = vmatprep.subr.bf16.mxu0 %v1852
  %2617 = vmatpush1.bf16.msra.mxu0 %v1851
  %2618 = vmatprep.subr.bf16.mxu0 %v1900
  %2619 = vmatpush1.bf16.msra.mxu0 %v1899
  %2620 = vmatprep.subr.bf16.mxu0 0
  %2621 = vmatpush1.bf16.msra.mxu0 0
  %2622 = vmatprep.subr.bf16.mxu0 0
  %2623 = vmatpush1.bf16.msra.mxu0 0
  %2624 = vmatprep.subr.bf16.mxu0 0
  %2625 = vmatpush1.bf16.msra.mxu0 0
  %2626 = vmatprep.subr.bf16.mxu0 0
  %2627 = vmatpush1.bf16.msra.mxu0 0
  %2628 = vmatprep.subr.bf16.mxu0 0
  %2629 = vmatpush1.bf16.msra.mxu0 0
  %2630 = vmatprep.subr.bf16.mxu0 0
  %2631 = vmatpush1.bf16.msra.mxu0 0
  %2632 = vmatprep.subr.bf16.mxu0 0
  %2633 = vmatpush1.bf16.msra.mxu0 0
  %2634 = vmatprep.subr.bf16.mxu0 0
  %2635 = vmatpush1.bf16.msra.mxu0 0
  %2636 = vmatprep.mubr.bf16.mxu0 0
  %2637 = vmatmul.mubr.bf16.gmra.mrb[0].mxu0 %v12
  %v2638 = vpop.f32.mrb[0].mxu0
  %v2639 = vadd.f32 0.0, %v2638
  %v2640 = vpop.f32.mrb[0].mxu0
  %v2641 = vadd.f32 0.0, %v2640
  %v2642 = vpop.f32.mrb[0].mxu0
  %v2643 = vpop.f32.mrb[0].mxu0
  %2644 = vdwg.mxu0
  %2645 = vmatprep.subr.bf16.mxu0 %v1566
  %2646 = vmatpush1.bf16.msra.mxu0 %v1565
  %2647 = vmatprep.subr.bf16.mxu0 %v1614
  %2648 = vmatpush1.bf16.msra.mxu0 %v1613
  %2649 = vmatprep.subr.bf16.mxu0 %v1662
  %2650 = vmatpush1.bf16.msra.mxu0 %v1661
  %2651 = vmatprep.subr.bf16.mxu0 %v1710
  %2652 = vmatpush1.bf16.msra.mxu0 %v1709
  %2653 = vmatprep.subr.bf16.mxu0 %v1758
  %2654 = vmatpush1.bf16.msra.mxu0 %v1757
  %2655 = vmatprep.subr.bf16.mxu0 %v1806
  %2656 = vmatpush1.bf16.msra.mxu0 %v1805
  %2657 = vmatprep.subr.bf16.mxu0 %v1854
  %2658 = vmatpush1.bf16.msra.mxu0 %v1853
  %2659 = vmatprep.subr.bf16.mxu0 %v1902
  %2660 = vmatpush1.bf16.msra.mxu0 %v1901
  %2661 = vmatprep.subr.bf16.mxu0 0
  %2662 = vmatpush1.bf16.msra.mxu0 0
  %2663 = vmatprep.subr.bf16.mxu0 0
  %2664 = vmatpush1.bf16.msra.mxu0 0
  %2665 = vmatprep.subr.bf16.mxu0 0
  %2666 = vmatpush1.bf16.msra.mxu0 0
  %2667 = vmatprep.subr.bf16.mxu0 0
  %2668 = vmatpush1.bf16.msra.mxu0 0
  %2669 = vmatprep.subr.bf16.mxu0 0
  %2670 = vmatpush1.bf16.msra.mxu0 0
  %2671 = vmatprep.subr.bf16.mxu0 0
  %2672 = vmatpush1.bf16.msra.mxu0 0
  %2673 = vmatprep.subr.bf16.mxu0 0
  %2674 = vmatpush1.bf16.msra.mxu0 0
  %2675 = vmatprep.subr.bf16.mxu0 0
  %2676 = vmatpush1.bf16.msra.mxu0 0
  %2677 = vmatprep.mubr.bf16.mxu0 0
  %2678 = vmatmul.mubr.bf16.gmra.mrb[0].mxu0 %v12
  %v2679 = vpop.f32.mrb[0].mxu0
  %v2680 = vadd.f32 0.0, %v2679
  %v2681 = vpop.f32.mrb[0].mxu0
  %v2682 = vadd.f32 0.0, %v2681
  %v2683 = vpop.f32.mrb[0].mxu0
  %v2684 = vpop.f32.mrb[0].mxu0
  %2685 = vdwg.mxu0
  %2686 = vmatprep.subr.bf16.mxu0 %v1568
  %2687 = vmatpush1.bf16.msra.mxu0 %v1567
  %2688 = vmatprep.subr.bf16.mxu0 %v1616
  %2689 = vmatpush1.bf16.msra.mxu0 %v1615
  %2690 = vmatprep.subr.bf16.mxu0 %v1664
  %2691 = vmatpush1.bf16.msra.mxu0 %v1663
  %2692 = vmatprep.subr.bf16.mxu0 %v1712
  %2693 = vmatpush1.bf16.msra.mxu0 %v1711
  %2694 = vmatprep.subr.bf16.mxu0 %v1760
  %2695 = vmatpush1.bf16.msra.mxu0 %v1759
  %2696 = vmatprep.subr.bf16.mxu0 %v1808
  %2697 = vmatpush1.bf16.msra.mxu0 %v1807
  %2698 = vmatprep.subr.bf16.mxu0 %v1856
  %2699 = vmatpush1.bf16.msra.mxu0 %v1855
  %2700 = vmatprep.subr.bf16.mxu0 %v1904
  %2701 = vmatpush1.bf16.msra.mxu0 %v1903
  %2702 = vmatprep.subr.bf16.mxu0 0
  %2703 = vmatpush1.bf16.msra.mxu0 0
  %2704 = vmatprep.subr.bf16.mxu0 0
  %2705 = vmatpush1.bf16.msra.mxu0 0
  %2706 = vmatprep.subr.bf16.mxu0 0
  %2707 = vmatpush1.bf16.msra.mxu0 0
  %2708 = vmatprep.subr.bf16.mxu0 0
  %2709 = vmatpush1.bf16.msra.mxu0 0
  %2710 = vmatprep.subr.bf16.mxu0 0
  %2711 = vmatpush1.bf16.msra.mxu0 0
  %2712 = vmatprep.subr.bf16.mxu0 0
  %2713 = vmatpush1.bf16.msra.mxu0 0
  %2714 = vmatprep.subr.bf16.mxu0 0
  %2715 = vmatpush1.bf16.msra.mxu0 0
  %2716 = vmatprep.subr.bf16.mxu0 0
  %2717 = vmatpush1.bf16.msra.mxu0 0
  %2718 = vmatprep.mubr.bf16.mxu0 0
  %2719 = vmatmul.mubr.bf16.gmra.mrb[0].mxu0 %v12
  %v2720 = vpop.f32.mrb[0].mxu0
  %v2721 = vadd.f32 0.0, %v2720
  %v2722 = vpop.f32.mrb[0].mxu0
  %v2723 = vadd.f32 0.0, %v2722
  %v2724 = vpop.f32.mrb[0].mxu0
  %v2725 = vpop.f32.mrb[0].mxu0
  %2726 = vdwg.mxu0
  %2727 = vmatprep.subr.bf16.mxu0 %v1570
  %2728 = vmatpush1.bf16.msra.mxu0 %v1569
  %2729 = vmatprep.subr.bf16.mxu0 %v1618
  %2730 = vmatpush1.bf16.msra.mxu0 %v1617
  %2731 = vmatprep.subr.bf16.mxu0 %v1666
  %2732 = vmatpush1.bf16.msra.mxu0 %v1665
  %2733 = vmatprep.subr.bf16.mxu0 %v1714
  %2734 = vmatpush1.bf16.msra.mxu0 %v1713
  %2735 = vmatprep.subr.bf16.mxu0 %v1762
  %2736 = vmatpush1.bf16.msra.mxu0 %v1761
  %2737 = vmatprep.subr.bf16.mxu0 %v1810
  %2738 = vmatpush1.bf16.msra.mxu0 %v1809
  %2739 = vmatprep.subr.bf16.mxu0 %v1858
  %2740 = vmatpush1.bf16.msra.mxu0 %v1857
  %2741 = vmatprep.subr.bf16.mxu0 %v1906
  %2742 = vmatpush1.bf16.msra.mxu0 %v1905
  %2743 = vmatprep.subr.bf16.mxu0 0
  %2744 = vmatpush1.bf16.msra.mxu0 0
  %2745 = vmatprep.subr.bf16.mxu0 0
  %2746 = vmatpush1.bf16.msra.mxu0 0
  %2747 = vmatprep.subr.bf16.mxu0 0
  %2748 = vmatpush1.bf16.msra.mxu0 0
  %2749 = vmatprep.subr.bf16.mxu0 0
  %2750 = vmatpush1.bf16.msra.mxu0 0
  %2751 = vmatprep.subr.bf16.mxu0 0
  %2752 = vmatpush1.bf16.msra.mxu0 0
  %2753 = vmatprep.subr.bf16.mxu0 0
  %2754 = vmatpush1.bf16.msra.mxu0 0
  %2755 = vmatprep.subr.bf16.mxu0 0
  %2756 = vmatpush1.bf16.msra.mxu0 0
  %2757 = vmatprep.subr.bf16.mxu0 0
  %2758 = vmatpush1.bf16.msra.mxu0 0
  %2759 = vmatprep.mubr.bf16.mxu0 0
  %2760 = vmatmul.mubr.bf16.gmra.mrb[0].mxu0 %v12
  %v2761 = vpop.f32.mrb[0].mxu0
  %v2762 = vadd.f32 0.0, %v2761
  %v2763 = vpop.f32.mrb[0].mxu0
  %v2764 = vadd.f32 0.0, %v2763
  %v2765 = vpop.f32.mrb[0].mxu0
  %v2766 = vpop.f32.mrb[0].mxu0
  %2767 = vdwg.mxu0
  %2768 = vmatprep.subr.bf16.mxu0 %v1572
  %2769 = vmatpush1.bf16.msra.mxu0 %v1571
  %2770 = vmatprep.subr.bf16.mxu0 %v1620
  %2771 = vmatpush1.bf16.msra.mxu0 %v1619
  %2772 = vmatprep.subr.bf16.mxu0 %v1668
  %2773 = vmatpush1.bf16.msra.mxu0 %v1667
  %2774 = vmatprep.subr.bf16.mxu0 %v1716
  %2775 = vmatpush1.bf16.msra.mxu0 %v1715
  %2776 = vmatprep.subr.bf16.mxu0 %v1764
  %2777 = vmatpush1.bf16.msra.mxu0 %v1763
  %2778 = vmatprep.subr.bf16.mxu0 %v1812
  %2779 = vmatpush1.bf16.msra.mxu0 %v1811
  %2780 = vmatprep.subr.bf16.mxu0 %v1860
  %2781 = vmatpush1.bf16.msra.mxu0 %v1859
  %2782 = vmatprep.subr.bf16.mxu0 %v1908
  %2783 = vmatpush1.bf16.msra.mxu0 %v1907
  %2784 = vmatprep.subr.bf16.mxu0 0
  %2785 = vmatpush1.bf16.msra.mxu0 0
  %2786 = vmatprep.subr.bf16.mxu0 0
  %2787 = vmatpush1.bf16.msra.mxu0 0
  %2788 = vmatprep.subr.bf16.mxu0 0
  %2789 = vmatpush1.bf16.msra.mxu0 0
  %2790 = vmatprep.subr.bf16.mxu0 0
  %2791 = vmatpush1.bf16.msra.mxu0 0
  %2792 = vmatprep.subr.bf16.mxu0 0
  %2793 = vmatpush1.bf16.msra.mxu0 0
  %2794 = vmatprep.subr.bf16.mxu0 0
  %2795 = vmatpush1.bf16.msra.mxu0 0
  %2796 = vmatprep.subr.bf16.mxu0 0
  %2797 = vmatpush1.bf16.msra.mxu0 0
  %2798 = vmatprep.subr.bf16.mxu0 0
  %2799 = vmatpush1.bf16.msra.mxu0 0
  %2800 = vmatprep.mubr.bf16.mxu0 0
  %2801 = vmatmul.mubr.bf16.gmra.mrb[0].mxu0 %v12
  %v2802 = vpop.f32.mrb[0].mxu0
  %v2803 = vadd.f32 0.0, %v2802
  %v2804 = vpop.f32.mrb[0].mxu0
  %v2805 = vadd.f32 0.0, %v2804
  %v2806 = vpop.f32.mrb[0].mxu0
  %v2807 = vpop.f32.mrb[0].mxu0
  %2808 = vdwg.mxu0
  %2809 = vmatprep.subr.bf16.mxu0 %v1574
  %2810 = vmatpush1.bf16.msra.mxu0 %v1573
  %2811 = vmatprep.subr.bf16.mxu0 %v1622
  %2812 = vmatpush1.bf16.msra.mxu0 %v1621
  %2813 = vmatprep.subr.bf16.mxu0 %v1670
  %2814 = vmatpush1.bf16.msra.mxu0 %v1669
  %2815 = vmatprep.subr.bf16.mxu0 %v1718
  %2816 = vmatpush1.bf16.msra.mxu0 %v1717
  %2817 = vmatprep.subr.bf16.mxu0 %v1766
  %2818 = vmatpush1.bf16.msra.mxu0 %v1765
  %2819 = vmatprep.subr.bf16.mxu0 %v1814
  %2820 = vmatpush1.bf16.msra.mxu0 %v1813
  %2821 = vmatprep.subr.bf16.mxu0 %v1862
  %2822 = vmatpush1.bf16.msra.mxu0 %v1861
  %2823 = vmatprep.subr.bf16.mxu0 %v1910
  %2824 = vmatpush1.bf16.msra.mxu0 %v1909
  %2825 = vmatprep.subr.bf16.mxu0 0
  %2826 = vmatpush1.bf16.msra.mxu0 0
  %2827 = vmatprep.subr.bf16.mxu0 0
  %2828 = vmatpush1.bf16.msra.mxu0 0
  %2829 = vmatprep.subr.bf16.mxu0 0
  %2830 = vmatpush1.bf16.msra.mxu0 0
  %2831 = vmatprep.subr.bf16.mxu0 0
  %2832 = vmatpush1.bf16.msra.mxu0 0
  %2833 = vmatprep.subr.bf16.mxu0 0
  %2834 = vmatpush1.bf16.msra.mxu0 0
  %2835 = vmatprep.subr.bf16.mxu0 0
  %2836 = vmatpush1.bf16.msra.mxu0 0
  %2837 = vmatprep.subr.bf16.mxu0 0
  %2838 = vmatpush1.bf16.msra.mxu0 0
  %2839 = vmatprep.subr.bf16.mxu0 0
  %2840 = vmatpush1.bf16.msra.mxu0 0
  %2841 = vmatprep.mubr.bf16.mxu0 0
  %2842 = vmatmul.mubr.bf16.gmra.mrb[0].mxu0 %v12
  %v2843 = vpop.f32.mrb[0].mxu0
  %v2844 = vadd.f32 0.0, %v2843
  %v2845 = vpop.f32.mrb[0].mxu0
  %v2846 = vadd.f32 0.0, %v2845
  %v2847 = vpop.f32.mrb[0].mxu0
  %v2848 = vpop.f32.mrb[0].mxu0
  %2849 = vdwg.mxu0
  %2850 = vmatprep.subr.bf16.mxu0 %v1576
  %2851 = vmatpush1.bf16.msra.mxu0 %v1575
  %2852 = vmatprep.subr.bf16.mxu0 %v1624
  %2853 = vmatpush1.bf16.msra.mxu0 %v1623
  %2854 = vmatprep.subr.bf16.mxu0 %v1672
  %2855 = vmatpush1.bf16.msra.mxu0 %v1671
  %2856 = vmatprep.subr.bf16.mxu0 %v1720
  %2857 = vmatpush1.bf16.msra.mxu0 %v1719
  %2858 = vmatprep.subr.bf16.mxu0 %v1768
  %2859 = vmatpush1.bf16.msra.mxu0 %v1767
  %2860 = vmatprep.subr.bf16.mxu0 %v1816
  %2861 = vmatpush1.bf16.msra.mxu0 %v1815
  %2862 = vmatprep.subr.bf16.mxu0 %v1864
  %2863 = vmatpush1.bf16.msra.mxu0 %v1863
  %2864 = vmatprep.subr.bf16.mxu0 %v1912
  %2865 = vmatpush1.bf16.msra.mxu0 %v1911
  %2866 = vmatprep.subr.bf16.mxu0 0
  %2867 = vmatpush1.bf16.msra.mxu0 0
  %2868 = vmatprep.subr.bf16.mxu0 0
  %2869 = vmatpush1.bf16.msra.mxu0 0
  %2870 = vmatprep.subr.bf16.mxu0 0
  %2871 = vmatpush1.bf16.msra.mxu0 0
  %2872 = vmatprep.subr.bf16.mxu0 0
  %2873 = vmatpush1.bf16.msra.mxu0 0
  %2874 = vmatprep.subr.bf16.mxu0 0
  %2875 = vmatpush1.bf16.msra.mxu0 0
  %2876 = vmatprep.subr.bf16.mxu0 0
  %2877 = vmatpush1.bf16.msra.mxu0 0
  %2878 = vmatprep.subr.bf16.mxu0 0
  %2879 = vmatpush1.bf16.msra.mxu0 0
  %2880 = vmatprep.subr.bf16.mxu0 0
  %2881 = vmatpush1.bf16.msra.mxu0 0
  %2882 = vmatprep.mubr.bf16.mxu0 0
  %2883 = vmatmul.mubr.bf16.gmra.mrb[0].mxu0 %v12
  %v2884 = vpop.f32.mrb[0].mxu0
  %v2885 = vadd.f32 0.0, %v2884
  %v2886 = vpop.f32.mrb[0].mxu0
  %v2887 = vadd.f32 0.0, %v2886
  %v2888 = vpop.f32.mrb[0].mxu0
  %v2889 = vpop.f32.mrb[0].mxu0
  %2890 = vdwg.mxu0
  %2891 = vmatprep.subr.bf16.mxu0 %v1578
  %2892 = vmatpush1.bf16.msra.mxu0 %v1577
  %2893 = vmatprep.subr.bf16.mxu0 %v1626
  %2894 = vmatpush1.bf16.msra.mxu0 %v1625
  %2895 = vmatprep.subr.bf16.mxu0 %v1674
  %2896 = vmatpush1.bf16.msra.mxu0 %v1673
  %2897 = vmatprep.subr.bf16.mxu0 %v1722
  %2898 = vmatpush1.bf16.msra.mxu0 %v1721
  %2899 = vmatprep.subr.bf16.mxu0 %v1770
  %2900 = vmatpush1.bf16.msra.mxu0 %v1769
  %2901 = vmatprep.subr.bf16.mxu0 %v1818
  %2902 = vmatpush1.bf16.msra.mxu0 %v1817
  %2903 = vmatprep.subr.bf16.mxu0 %v1866
  %2904 = vmatpush1.bf16.msra.mxu0 %v1865
  %2905 = vmatprep.subr.bf16.mxu0 %v1914
  %2906 = vmatpush1.bf16.msra.mxu0 %v1913
  %2907 = vmatprep.subr.bf16.mxu0 0
  %2908 = vmatpush1.bf16.msra.mxu0 0
  %2909 = vmatprep.subr.bf16.mxu0 0
  %2910 = vmatpush1.bf16.msra.mxu0 0
  %2911 = vmatprep.subr.bf16.mxu0 0
  %2912 = vmatpush1.bf16.msra.mxu0 0
  %2913 = vmatprep.subr.bf16.mxu0 0
  %2914 = vmatpush1.bf16.msra.mxu0 0
  %2915 = vmatprep.subr.bf16.mxu0 0
  %2916 = vmatpush1.bf16.msra.mxu0 0
  %2917 = vmatprep.subr.bf16.mxu0 0
  %2918 = vmatpush1.bf16.msra.mxu0 0
  %2919 = vmatprep.subr.bf16.mxu0 0
  %2920 = vmatpush1.bf16.msra.mxu0 0
  %2921 = vmatprep.subr.bf16.mxu0 0
  %2922 = vmatpush1.bf16.msra.mxu0 0
  %2923 = vmatprep.mubr.bf16.mxu0 0
  %2924 = vmatmul.mubr.bf16.gmra.mrb[0].mxu0 %v12
  %v2925 = vpop.f32.mrb[0].mxu0
  %v2926 = vadd.f32 0.0, %v2925
  %v2927 = vpop.f32.mrb[0].mxu0
  %v2928 = vadd.f32 0.0, %v2927
  %v2929 = vpop.f32.mrb[0].mxu0
  %v2930 = vpop.f32.mrb[0].mxu0
  %2931 = vdwg.mxu0
  %2932 = vmatprep.subr.bf16.mxu0 %v1580
  %2933 = vmatpush1.bf16.msra.mxu0 %v1579
  %2934 = vmatprep.subr.bf16.mxu0 %v1628
  %2935 = vmatpush1.bf16.msra.mxu0 %v1627
  %2936 = vmatprep.subr.bf16.mxu0 %v1676
  %2937 = vmatpush1.bf16.msra.mxu0 %v1675
  %2938 = vmatprep.subr.bf16.mxu0 %v1724
  %2939 = vmatpush1.bf16.msra.mxu0 %v1723
  %2940 = vmatprep.subr.bf16.mxu0 %v1772
  %2941 = vmatpush1.bf16.msra.mxu0 %v1771
  %2942 = vmatprep.subr.bf16.mxu0 %v1820
  %2943 = vmatpush1.bf16.msra.mxu0 %v1819
  %2944 = vmatprep.subr.bf16.mxu0 %v1868
  %2945 = vmatpush1.bf16.msra.mxu0 %v1867
  %2946 = vmatprep.subr.bf16.mxu0 %v1916
  %2947 = vmatpush1.bf16.msra.mxu0 %v1915
  %2948 = vmatprep.subr.bf16.mxu0 0
  %2949 = vmatpush1.bf16.msra.mxu0 0
  %2950 = vmatprep.subr.bf16.mxu0 0
  %2951 = vmatpush1.bf16.msra.mxu0 0
  %2952 = vmatprep.subr.bf16.mxu0 0
  %2953 = vmatpush1.bf16.msra.mxu0 0
  %2954 = vmatprep.subr.bf16.mxu0 0
  %2955 = vmatpush1.bf16.msra.mxu0 0
  %2956 = vmatprep.subr.bf16.mxu0 0
  %2957 = vmatpush1.bf16.msra.mxu0 0
  %2958 = vmatprep.subr.bf16.mxu0 0
  %2959 = vmatpush1.bf16.msra.mxu0 0
  %2960 = vmatprep.subr.bf16.mxu0 0
  %2961 = vmatpush1.bf16.msra.mxu0 0
  %2962 = vmatprep.subr.bf16.mxu0 0
  %2963 = vmatpush1.bf16.msra.mxu0 0
  %2964 = vmatprep.mubr.bf16.mxu0 0
  %2965 = vmatmul.mubr.bf16.gmra.mrb[0].mxu0 %v12
  %v2966 = vpop.f32.mrb[0].mxu0
  %v2967 = vadd.f32 0.0, %v2966
  %v2968 = vpop.f32.mrb[0].mxu0
  %v2969 = vadd.f32 0.0, %v2968
  %v2970 = vpop.f32.mrb[0].mxu0
  %v2971 = vpop.f32.mrb[0].mxu0
  %2972 = vdwg.mxu0
  %2973 = vmatprep.subr.bf16.mxu0 %v1582
  %2974 = vmatpush1.bf16.msra.mxu0 %v1581
  %2975 = vmatprep.subr.bf16.mxu0 %v1630
  %2976 = vmatpush1.bf16.msra.mxu0 %v1629
  %2977 = vmatprep.subr.bf16.mxu0 %v1678
  %2978 = vmatpush1.bf16.msra.mxu0 %v1677
  %2979 = vmatprep.subr.bf16.mxu0 %v1726
  %2980 = vmatpush1.bf16.msra.mxu0 %v1725
  %2981 = vmatprep.subr.bf16.mxu0 %v1774
  %2982 = vmatpush1.bf16.msra.mxu0 %v1773
  %2983 = vmatprep.subr.bf16.mxu0 %v1822
  %2984 = vmatpush1.bf16.msra.mxu0 %v1821
  %2985 = vmatprep.subr.bf16.mxu0 %v1870
  %2986 = vmatpush1.bf16.msra.mxu0 %v1869
  %2987 = vmatprep.subr.bf16.mxu0 %v1918
  %2988 = vmatpush1.bf16.msra.mxu0 %v1917
  %2989 = vmatprep.subr.bf16.mxu0 0
  %2990 = vmatpush1.bf16.msra.mxu0 0
  %2991 = vmatprep.subr.bf16.mxu0 0
  %2992 = vmatpush1.bf16.msra.mxu0 0
  %2993 = vmatprep.subr.bf16.mxu0 0
  %2994 = vmatpush1.bf16.msra.mxu0 0
  %2995 = vmatprep.subr.bf16.mxu0 0
  %2996 = vmatpush1.bf16.msra.mxu0 0
  %2997 = vmatprep.subr.bf16.mxu0 0
  %2998 = vmatpush1.bf16.msra.mxu0 0
  %2999 = vmatprep.subr.bf16.mxu0 0
  %3000 = vmatpush1.bf16.msra.mxu0 0
  %3001 = vmatprep.subr.bf16.mxu0 0
  %3002 = vmatpush1.bf16.msra.mxu0 0
  %3003 = vmatprep.subr.bf16.mxu0 0
  %3004 = vmatpush1.bf16.msra.mxu0 0
  %3005 = vmatprep.mubr.bf16.mxu0 0
  %3006 = vmatmul.mubr.bf16.gmra.mrb[0].mxu0 %v12
  %v3007 = vpop.f32.mrb[0].mxu0
  %v3008 = vadd.f32 0.0, %v3007
  %v3009 = vpop.f32.mrb[0].mxu0
  %v3010 = vadd.f32 0.0, %v3009
  %v3011 = vpop.f32.mrb[0].mxu0
  %v3012 = vpop.f32.mrb[0].mxu0
  %3013 = vdwg.mxu0
  %3014 = vmatprep.subr.bf16.mxu0 %v1584
  %3015 = vmatpush1.bf16.msra.mxu0 %v1583
  %3016 = vmatprep.subr.bf16.mxu0 %v1632
  %3017 = vmatpush1.bf16.msra.mxu0 %v1631
  %3018 = vmatprep.subr.bf16.mxu0 %v1680
  %3019 = vmatpush1.bf16.msra.mxu0 %v1679
  %3020 = vmatprep.subr.bf16.mxu0 %v1728
  %3021 = vmatpush1.bf16.msra.mxu0 %v1727
  %3022 = vmatprep.subr.bf16.mxu0 %v1776
  %3023 = vmatpush1.bf16.msra.mxu0 %v1775
  %3024 = vmatprep.subr.bf16.mxu0 %v1824
  %3025 = vmatpush1.bf16.msra.mxu0 %v1823
  %3026 = vmatprep.subr.bf16.mxu0 %v1872
  %3027 = vmatpush1.bf16.msra.mxu0 %v1871
  %3028 = vmatprep.subr.bf16.mxu0 %v1920
  %3029 = vmatpush1.bf16.msra.mxu0 %v1919
  %3030 = vmatprep.subr.bf16.mxu0 0
  %3031 = vmatpush1.bf16.msra.mxu0 0
  %3032 = vmatprep.subr.bf16.mxu0 0
  %3033 = vmatpush1.bf16.msra.mxu0 0
  %3034 = vmatprep.subr.bf16.mxu0 0
  %3035 = vmatpush1.bf16.msra.mxu0 0
  %3036 = vmatprep.subr.bf16.mxu0 0
  %3037 = vmatpush1.bf16.msra.mxu0 0
  %3038 = vmatprep.subr.bf16.mxu0 0
  %3039 = vmatpush1.bf16.msra.mxu0 0
  %3040 = vmatprep.subr.bf16.mxu0 0
  %3041 = vmatpush1.bf16.msra.mxu0 0
  %3042 = vmatprep.subr.bf16.mxu0 0
  %3043 = vmatpush1.bf16.msra.mxu0 0
  %3044 = vmatprep.subr.bf16.mxu0 0
  %3045 = vmatpush1.bf16.msra.mxu0 0
  %3046 = vmatprep.mubr.bf16.mxu0 0
  %3047 = vmatmul.mubr.bf16.gmra.mrb[0].mxu0 %v12
  %v3048 = vpop.f32.mrb[0].mxu0
  %v3049 = vadd.f32 0.0, %v3048
  %v3050 = vpop.f32.mrb[0].mxu0
  %v3051 = vadd.f32 0.0, %v3050
  %v3052 = vpop.f32.mrb[0].mxu0
  %v3053 = vpop.f32.mrb[0].mxu0
  %3054 = vdwg.mxu0
  %3055 = vmatprep.subr.bf16.mxu0 %v1586
  %3056 = vmatpush1.bf16.msra.mxu0 %v1585
  %3057 = vmatprep.subr.bf16.mxu0 %v1634
  %3058 = vmatpush1.bf16.msra.mxu0 %v1633
  %3059 = vmatprep.subr.bf16.mxu0 %v1682
  %3060 = vmatpush1.bf16.msra.mxu0 %v1681
  %3061 = vmatprep.subr.bf16.mxu0 %v1730
  %3062 = vmatpush1.bf16.msra.mxu0 %v1729
  %3063 = vmatprep.subr.bf16.mxu0 %v1778
  %3064 = vmatpush1.bf16.msra.mxu0 %v1777
  %3065 = vmatprep.subr.bf16.mxu0 %v1826
  %3066 = vmatpush1.bf16.msra.mxu0 %v1825
  %3067 = vmatprep.subr.bf16.mxu0 %v1874
  %3068 = vmatpush1.bf16.msra.mxu0 %v1873
  %3069 = vmatprep.subr.bf16.mxu0 %v1922
  %3070 = vmatpush1.bf16.msra.mxu0 %v1921
  %3071 = vmatprep.subr.bf16.mxu0 0
  %3072 = vmatpush1.bf16.msra.mxu0 0
  %3073 = vmatprep.subr.bf16.mxu0 0
  %3074 = vmatpush1.bf16.msra.mxu0 0
  %3075 = vmatprep.subr.bf16.mxu0 0
  %3076 = vmatpush1.bf16.msra.mxu0 0
  %3077 = vmatprep.subr.bf16.mxu0 0
  %3078 = vmatpush1.bf16.msra.mxu0 0
  %3079 = vmatprep.subr.bf16.mxu0 0
  %3080 = vmatpush1.bf16.msra.mxu0 0
  %3081 = vmatprep.subr.bf16.mxu0 0
  %3082 = vmatpush1.bf16.msra.mxu0 0
  %3083 = vmatprep.subr.bf16.mxu0 0
  %3084 = vmatpush1.bf16.msra.mxu0 0
  %3085 = vmatprep.subr.bf16.mxu0 0
  %3086 = vmatpush1.bf16.msra.mxu0 0
  %3087 = vmatprep.mubr.bf16.mxu0 0
  %3088 = vmatmul.mubr.bf16.gmra.mrb[0].mxu0 %v12
  %v3089 = vpop.f32.mrb[0].mxu0
  %v3090 = vadd.f32 0.0, %v3089
  %v3091 = vpop.f32.mrb[0].mxu0
  %v3092 = vadd.f32 0.0, %v3091
  %v3093 = vpop.f32.mrb[0].mxu0
  %v3094 = vpop.f32.mrb[0].mxu0
  %3095 = vdwg.mxu0
  %3096 = vmatprep.subr.bf16.mxu0 %v1588
  %3097 = vmatpush1.bf16.msra.mxu0 %v1587
  %3098 = vmatprep.subr.bf16.mxu0 %v1636
  %3099 = vmatpush1.bf16.msra.mxu0 %v1635
  %3100 = vmatprep.subr.bf16.mxu0 %v1684
  %3101 = vmatpush1.bf16.msra.mxu0 %v1683
  %3102 = vmatprep.subr.bf16.mxu0 %v1732
  %3103 = vmatpush1.bf16.msra.mxu0 %v1731
  %3104 = vmatprep.subr.bf16.mxu0 %v1780
  %3105 = vmatpush1.bf16.msra.mxu0 %v1779
  %3106 = vmatprep.subr.bf16.mxu0 %v1828
  %3107 = vmatpush1.bf16.msra.mxu0 %v1827
  %3108 = vmatprep.subr.bf16.mxu0 %v1876
  %3109 = vmatpush1.bf16.msra.mxu0 %v1875
  %3110 = vmatprep.subr.bf16.mxu0 %v1924
  %3111 = vmatpush1.bf16.msra.mxu0 %v1923
  %3112 = vmatprep.subr.bf16.mxu0 0
  %3113 = vmatpush1.bf16.msra.mxu0 0
  %3114 = vmatprep.subr.bf16.mxu0 0
  %3115 = vmatpush1.bf16.msra.mxu0 0
  %3116 = vmatprep.subr.bf16.mxu0 0
  %3117 = vmatpush1.bf16.msra.mxu0 0
  %3118 = vmatprep.subr.bf16.mxu0 0
  %3119 = vmatpush1.bf16.msra.mxu0 0
  %3120 = vmatprep.subr.bf16.mxu0 0
  %3121 = vmatpush1.bf16.msra.mxu0 0
  %3122 = vmatprep.subr.bf16.mxu0 0
  %3123 = vmatpush1.bf16.msra.mxu0 0
  %3124 = vmatprep.subr.bf16.mxu0 0
  %3125 = vmatpush1.bf16.msra.mxu0 0
  %3126 = vmatprep.subr.bf16.mxu0 0
  %3127 = vmatpush1.bf16.msra.mxu0 0
  %3128 = vmatprep.mubr.bf16.mxu0 0
  %3129 = vmatmul.mubr.bf16.gmra.mrb[0].mxu0 %v12
  %v3130 = vpop.f32.mrb[0].mxu0
  %v3131 = vadd.f32 0.0, %v3130
  %v3132 = vpop.f32.mrb[0].mxu0
  %v3133 = vadd.f32 0.0, %v3132
  %v3134 = vpop.f32.mrb[0].mxu0
  %v3135 = vpop.f32.mrb[0].mxu0
  %3136 = vdwg.mxu0
  %3137 = vmatprep.subr.bf16.mxu0 %v1590
  %3138 = vmatpush1.bf16.msra.mxu0 %v1589
  %3139 = vmatprep.subr.bf16.mxu0 %v1638
  %3140 = vmatpush1.bf16.msra.mxu0 %v1637
  %3141 = vmatprep.subr.bf16.mxu0 %v1686
  %3142 = vmatpush1.bf16.msra.mxu0 %v1685
  %3143 = vmatprep.subr.bf16.mxu0 %v1734
  %3144 = vmatpush1.bf16.msra.mxu0 %v1733
  %3145 = vmatprep.subr.bf16.mxu0 %v1782
  %3146 = vmatpush1.bf16.msra.mxu0 %v1781
  %3147 = vmatprep.subr.bf16.mxu0 %v1830
  %3148 = vmatpush1.bf16.msra.mxu0 %v1829
  %3149 = vmatprep.subr.bf16.mxu0 %v1878
  %3150 = vmatpush1.bf16.msra.mxu0 %v1877
  %3151 = vmatprep.subr.bf16.mxu0 %v1926
  %3152 = vmatpush1.bf16.msra.mxu0 %v1925
  %3153 = vmatprep.subr.bf16.mxu0 0
  %3154 = vmatpush1.bf16.msra.mxu0 0
  %3155 = vmatprep.subr.bf16.mxu0 0
  %3156 = vmatpush1.bf16.msra.mxu0 0
  %3157 = vmatprep.subr.bf16.mxu0 0
  %3158 = vmatpush1.bf16.msra.mxu0 0
  %3159 = vmatprep.subr.bf16.mxu0 0
  %3160 = vmatpush1.bf16.msra.mxu0 0
  %3161 = vmatprep.subr.bf16.mxu0 0
  %3162 = vmatpush1.bf16.msra.mxu0 0
  %3163 = vmatprep.subr.bf16.mxu0 0
  %3164 = vmatpush1.bf16.msra.mxu0 0
  %3165 = vmatprep.subr.bf16.mxu0 0
  %3166 = vmatpush1.bf16.msra.mxu0 0
  %3167 = vmatprep.subr.bf16.mxu0 0
  %3168 = vmatpush1.bf16.msra.mxu0 0
  %3169 = vmatprep.mubr.bf16.mxu0 0
  %3170 = vmatmul.mubr.bf16.gmra.mrb[0].mxu0 %v12
  %v3171 = vpop.f32.mrb[0].mxu0
  %v3172 = vadd.f32 0.0, %v3171
  %v3173 = vpop.f32.mrb[0].mxu0
  %v3174 = vadd.f32 0.0, %v3173
  %v3175 = vpop.f32.mrb[0].mxu0
  %v3176 = vpop.f32.mrb[0].mxu0
  %3177 = vdwg.mxu0
  %3178 = vmatprep.subr.bf16.mxu0 %v1592
  %3179 = vmatpush1.bf16.msra.mxu0 %v1591
  %3180 = vmatprep.subr.bf16.mxu0 %v1640
  %3181 = vmatpush1.bf16.msra.mxu0 %v1639
  %3182 = vmatprep.subr.bf16.mxu0 %v1688
  %3183 = vmatpush1.bf16.msra.mxu0 %v1687
  %3184 = vmatprep.subr.bf16.mxu0 %v1736
  %3185 = vmatpush1.bf16.msra.mxu0 %v1735
  %3186 = vmatprep.subr.bf16.mxu0 %v1784
  %3187 = vmatpush1.bf16.msra.mxu0 %v1783
  %3188 = vmatprep.subr.bf16.mxu0 %v1832
  %3189 = vmatpush1.bf16.msra.mxu0 %v1831
  %3190 = vmatprep.subr.bf16.mxu0 %v1880
  %3191 = vmatpush1.bf16.msra.mxu0 %v1879
  %3192 = vmatprep.subr.bf16.mxu0 %v1928
  %3193 = vmatpush1.bf16.msra.mxu0 %v1927
  %3194 = vmatprep.subr.bf16.mxu0 0
  %3195 = vmatpush1.bf16.msra.mxu0 0
  %3196 = vmatprep.subr.bf16.mxu0 0
  %3197 = vmatpush1.bf16.msra.mxu0 0
  %3198 = vmatprep.subr.bf16.mxu0 0
  %3199 = vmatpush1.bf16.msra.mxu0 0
  %3200 = vmatprep.subr.bf16.mxu0 0
  %3201 = vmatpush1.bf16.msra.mxu0 0
  %3202 = vmatprep.subr.bf16.mxu0 0
  %3203 = vmatpush1.bf16.msra.mxu0 0
  %3204 = vmatprep.subr.bf16.mxu0 0
  %3205 = vmatpush1.bf16.msra.mxu0 0
  %3206 = vmatprep.subr.bf16.mxu0 0
  %3207 = vmatpush1.bf16.msra.mxu0 0
  %3208 = vmatprep.subr.bf16.mxu0 0
  %3209 = vmatpush1.bf16.msra.mxu0 0
  %3210 = vmatprep.mubr.bf16.mxu0 0
  %3211 = vmatmul.mubr.bf16.gmra.mrb[0].mxu0 %v12
  %v3212 = vpop.f32.mrb[0].mxu0
  %v3213 = vadd.f32 0.0, %v3212
  %v3214 = vpop.f32.mrb[0].mxu0
  %v3215 = vadd.f32 0.0, %v3214
  %v3216 = vpop.f32.mrb[0].mxu0
  %v3217 = vpop.f32.mrb[0].mxu0
  %3218 = vdwg.mxu0
  %3219 = vmatprep.subr.bf16.mxu0 %v1594
  %3220 = vmatpush1.bf16.msra.mxu0 %v1593
  %3221 = vmatprep.subr.bf16.mxu0 %v1642
  %3222 = vmatpush1.bf16.msra.mxu0 %v1641
  %3223 = vmatprep.subr.bf16.mxu0 %v1690
  %3224 = vmatpush1.bf16.msra.mxu0 %v1689
  %3225 = vmatprep.subr.bf16.mxu0 %v1738
  %3226 = vmatpush1.bf16.msra.mxu0 %v1737
  %3227 = vmatprep.subr.bf16.mxu0 %v1786
  %3228 = vmatpush1.bf16.msra.mxu0 %v1785
  %3229 = vmatprep.subr.bf16.mxu0 %v1834
  %3230 = vmatpush1.bf16.msra.mxu0 %v1833
  %3231 = vmatprep.subr.bf16.mxu0 %v1882
  %3232 = vmatpush1.bf16.msra.mxu0 %v1881
  %3233 = vmatprep.subr.bf16.mxu0 %v1930
  %3234 = vmatpush1.bf16.msra.mxu0 %v1929
  %3235 = vmatprep.subr.bf16.mxu0 0
  %3236 = vmatpush1.bf16.msra.mxu0 0
  %3237 = vmatprep.subr.bf16.mxu0 0
  %3238 = vmatpush1.bf16.msra.mxu0 0
  %3239 = vmatprep.subr.bf16.mxu0 0
  %3240 = vmatpush1.bf16.msra.mxu0 0
  %3241 = vmatprep.subr.bf16.mxu0 0
  %3242 = vmatpush1.bf16.msra.mxu0 0
  %3243 = vmatprep.subr.bf16.mxu0 0
  %3244 = vmatpush1.bf16.msra.mxu0 0
  %3245 = vmatprep.subr.bf16.mxu0 0
  %3246 = vmatpush1.bf16.msra.mxu0 0
  %3247 = vmatprep.subr.bf16.mxu0 0
  %3248 = vmatpush1.bf16.msra.mxu0 0
  %3249 = vmatprep.subr.bf16.mxu0 0
  %3250 = vmatpush1.bf16.msra.mxu0 0
  %3251 = vmatprep.mubr.bf16.mxu0 0
  %3252 = vmatmul.mubr.bf16.gmra.mrb[0].mxu0 %v12
  %v3253 = vpop.f32.mrb[0].mxu0
  %v3254 = vadd.f32 0.0, %v3253
  %v3255 = vpop.f32.mrb[0].mxu0
  %v3256 = vadd.f32 0.0, %v3255
  %v3257 = vpop.f32.mrb[0].mxu0
  %v3258 = vpop.f32.mrb[0].mxu0
  %3259 = vdwg.mxu0
  %3260 = vmatprep.subr.bf16.mxu0 %v1596
  %3261 = vmatpush1.bf16.msra.mxu0 %v1595
  %3262 = vmatprep.subr.bf16.mxu0 %v1644
  %3263 = vmatpush1.bf16.msra.mxu0 %v1643
  %3264 = vmatprep.subr.bf16.mxu0 %v1692
  %3265 = vmatpush1.bf16.msra.mxu0 %v1691
  %3266 = vmatprep.subr.bf16.mxu0 %v1740
  %3267 = vmatpush1.bf16.msra.mxu0 %v1739
  %3268 = vmatprep.subr.bf16.mxu0 %v1788
  %3269 = vmatpush1.bf16.msra.mxu0 %v1787
  %3270 = vmatprep.subr.bf16.mxu0 %v1836
  %3271 = vmatpush1.bf16.msra.mxu0 %v1835
  %3272 = vmatprep.subr.bf16.mxu0 %v1884
  %3273 = vmatpush1.bf16.msra.mxu0 %v1883
  %3274 = vmatprep.subr.bf16.mxu0 %v1932
  %3275 = vmatpush1.bf16.msra.mxu0 %v1931
  %3276 = vmatprep.subr.bf16.mxu0 0
  %3277 = vmatpush1.bf16.msra.mxu0 0
  %3278 = vmatprep.subr.bf16.mxu0 0
  %3279 = vmatpush1.bf16.msra.mxu0 0
  %3280 = vmatprep.subr.bf16.mxu0 0
  %3281 = vmatpush1.bf16.msra.mxu0 0
  %3282 = vmatprep.subr.bf16.mxu0 0
  %3283 = vmatpush1.bf16.msra.mxu0 0
  %3284 = vmatprep.subr.bf16.mxu0 0
  %3285 = vmatpush1.bf16.msra.mxu0 0
  %3286 = vmatprep.subr.bf16.mxu0 0
  %3287 = vmatpush1.bf16.msra.mxu0 0
  %3288 = vmatprep.subr.bf16.mxu0 0
  %3289 = vmatpush1.bf16.msra.mxu0 0
  %3290 = vmatprep.subr.bf16.mxu0 0
  %3291 = vmatpush1.bf16.msra.mxu0 0
  %3292 = vmatprep.mubr.bf16.mxu0 0
  %3293 = vmatmul.mubr.bf16.gmra.mrb[0].mxu0 %v12
  %v3294 = vpop.f32.mrb[0].mxu0
  %v3295 = vadd.f32 0.0, %v3294
  %v3296 = vpop.f32.mrb[0].mxu0
  %v3297 = vadd.f32 0.0, %v3296
  %v3298 = vpop.f32.mrb[0].mxu0
  %v3299 = vpop.f32.mrb[0].mxu0
  %3300 = vdwg.mxu0
  %v3301 = vtanh.pop %v2352
  %v3302 = vtanh.pop %v2354
  %v3303 = vtanh.pop %v2393
  %v3304 = vtanh.pop %v2395
  %v3305 = vtanh.pop %v2434
  %v3306 = vtanh.pop %v2436
  %v3307 = vtanh.pop %v2475
  %v3308 = vtanh.pop %v2477
  %v3309 = vtanh.pop %v2516
  %v3310 = vtanh.pop %v2518
  %v3311 = vtanh.pop %v2557
  %v3312 = vtanh.pop %v2559
  %v3313 = vtanh.pop %v2598
  %v3314 = vtanh.pop %v2600
  %v3315 = vtanh.pop %v2639
  %v3316 = vtanh.pop %v2641
  %v3317 = vtanh.pop %v2680
  %v3318 = vtanh.pop %v2682
  %v3319 = vtanh.pop %v2721
  %v3320 = vtanh.pop %v2723
  %v3321 = vtanh.pop %v2762
  %v3322 = vtanh.pop %v2764
  %v3323 = vtanh.pop %v2803
  %v3324 = vtanh.pop %v2805
  %v3325 = vtanh.pop %v2844
  %v3326 = vtanh.pop %v2846
  %v3327 = vtanh.pop %v2885
  %v3328 = vtanh.pop %v2887
  %v3329 = vtanh.pop %v2926
  %v3330 = vtanh.pop %v2928
  %v3331 = vtanh.pop %v2967
  %v3332 = vtanh.pop %v2969
  %v3333 = vtanh.pop %v3008
  %v3334 = vtanh.pop %v3010
  %v3335 = vtanh.pop %v3049
  %v3336 = vtanh.pop %v3051
  %v3337 = vtanh.pop %v3090
  %v3338 = vtanh.pop %v3092
  %v3339 = vtanh.pop %v3131
  %v3340 = vtanh.pop %v3133
  %v3341 = vtanh.pop %v3172
  %v3342 = vtanh.pop %v3174
  %v3343 = vtanh.pop %v3213
  %v3344 = vtanh.pop %v3215
  %v3345 = vtanh.pop %v3254
  %v3346 = vtanh.pop %v3256
  %v3347 = vtanh.pop %v3295
  %v3348 = vtanh.pop %v3297
  %3349 = vst [vmem:[%s2] sm:$0xff] %v3301
  %3350 = vst [vmem:[%s2 + $0x8] sm:$0xff] %v3302
  %3351 = vst [vmem:[%s2 + $0x10] sm:$0xff] %v3303
  %3352 = vst [vmem:[%s2 + $0x18] sm:$0xff] %v3304
  %3353 = vst [vmem:[%s2 + $0x20] sm:$0xff] %v3305
  %3354 = vst [vmem:[%s2 + $0x28] sm:$0xff] %v3306
  %3355 = vst [vmem:[%s2 + $0x30] sm:$0xff] %v3307
  %3356 = vst [vmem:[%s2 + $0x38] sm:$0xff] %v3308
  %3357 = vst [vmem:[%s2 + $0x40] sm:$0xff] %v3309
  %3358 = vst [vmem:[%s2 + $0x48] sm:$0xff] %v3310
  %3359 = vst [vmem:[%s2 + $0x50] sm:$0xff] %v3311
  %3360 = vst [vmem:[%s2 + $0x58] sm:$0xff] %v3312
  %3361 = vst [vmem:[%s2 + $0x60] sm:$0xff] %v3313
  %3362 = vst [vmem:[%s2 + $0x68] sm:$0xff] %v3314
  %3363 = vst [vmem:[%s2 + $0x70] sm:$0xff] %v3315
  %3364 = vst [vmem:[%s2 + $0x78] sm:$0xff] %v3316
  %3365 = vst [vmem:[%s2 + $0x80] sm:$0xff] %v3317
  %3366 = vst [vmem:[%s2 + $0x88] sm:$0xff] %v3318
  %3367 = vst [vmem:[%s2 + $0x90] sm:$0xff] %v3319
  %3368 = vst [vmem:[%s2 + $0x98] sm:$0xff] %v3320
  %3369 = vst [vmem:[%s2 + $0xa0] sm:$0xff] %v3321
  %3370 = vst [vmem:[%s2 + $0xa8] sm:$0xff] %v3322
  %3371 = vst [vmem:[%s2 + $0xb0] sm:$0xff] %v3323
  %3372 = vst [vmem:[%s2 + $0xb8] sm:$0xff] %v3324
  %3373 = vst [vmem:[%s2 + $0xc0] sm:$0xff] %v3325
  %3374 = vst [vmem:[%s2 + $0xc8] sm:$0xff] %v3326
  %3375 = vst [vmem:[%s2 + $0xd0] sm:$0xff] %v3327
  %3376 = vst [vmem:[%s2 + $0xd8] sm:$0xff] %v3328
  %3377 = vst [vmem:[%s2 + $0xe0] sm:$0xff] %v3329
  %3378 = vst [vmem:[%s2 + $0xe8] sm:$0xff] %v3330
  %3379 = vst [vmem:[%s2 + $0xf0] sm:$0xff] %v3331
  %3380 = vst [vmem:[%s2 + $0xf8] sm:$0xff] %v3332
  %3381 = vst [vmem:[%s2 + $0x100] sm:$0xff] %v3333
  %3382 = vst [vmem:[%s2 + $0x108] sm:$0xff] %v3334
  %3383 = vst [vmem:[%s2 + $0x110] sm:$0xff] %v3335
  %3384 = vst [vmem:[%s2 + $0x118] sm:$0xff] %v3336
  %3385 = vst [vmem:[%s2 + $0x120] sm:$0xff] %v3337
  %3386 = vst [vmem:[%s2 + $0x128] sm:$0xff] %v3338
  %3387 = vst [vmem:[%s2 + $0x130] sm:$0xff] %v3339
  %3388 = vst [vmem:[%s2 + $0x138] sm:$0xff] %v3340
  %3389 = vst [vmem:[%s2 + $0x140] sm:$0xff] %v3341
  %3390 = vst [vmem:[%s2 + $0x148] sm:$0xff] %v3342
  %3391 = vst [vmem:[%s2 + $0x150] sm:$0xff] %v3343
  %3392 = vst [vmem:[%s2 + $0x158] sm:$0xff] %v3344
  %3393 = vst [vmem:[%s2 + $0x160] sm:$0xff] %v3345
  %3394 = vst [vmem:[%s2 + $0x168] sm:$0xff] %v3346
  %3395 = vst [vmem:[%s2 + $0x170] sm:$0xff] %v3347
  %3396 = vst [vmem:[%s2 + $0x178] sm:$0xff] %v3348
  // Predicated region
  $region10: #{generator_forward.9} parent=0 // pred_check
    _
  $region11: #{generator_forward.9} parent=0 // pred_check_branch
    %3398 = sbr.rel (0) target = $region13
  $region12: #{generator_forward.9} parent=0 // pred_region
    _
  $region13: #{generator_forward.9} parent=0 // pred_fallthru
    _
  // Predicated region
  $region14: #{generator_forward.9} parent=0 // pred_check
    _
  $region15: #{generator_forward.9} parent=0 // pred_check_branch
    %3400 = sbr.rel (0) target = $region17
  $region16: #{generator_forward.9} parent=0 // pred_region
    _
  $region17: #{generator_forward.9} parent=0 // pred_fallthru
    _

</llo_original>
